<compile_context>
chip_gen: v6e
topology: v6e:2x2x1
jax: 0.10.0
libtpu: 0.0.40
codegen_flags: <defaults>
</compile_context>

<pallas_src>
import jax
import jax.numpy as jnp
from jax.experimental import pallas as pl
from jax.experimental.pallas import tpu as pltpu

CIN_PAD = 8      # pad the 3 xyz input channels to 8 for the first matmul
OUT_PAD = 128    # lane-dense padded logit width (sliced back to 40 in wrapper)

_VMEM_TARGET = 24 << 20   # per-step working-set target (fits v5e/v6e/v7x)
_MAX_ROWS = 8192          # cap on matmul M (= bt*nt) per grid step


# --------------------------------------------------------------------------
# Kernels
# --------------------------------------------------------------------------
def _mm_bias_relu(h_bf16, w_ref, b_ref):
    # bf16 x bf16 -> f32 accumulate on the MXU; bias + ReLU stay in f32 on the
    # VPU with a single bf16 cast afterwards (v5e has no native bf16 VALU).
    y = jnp.dot(h_bf16, w_ref[...], preferred_element_type=jnp.float32)
    return jnp.maximum(y + b_ref[...], 0.0)


def pointnet_features_kernel(x_ref,
                             w1, b1, w2, b2, w3, b3, w4, b4, w5, b5,
                             pooled_ref):
    """One grid step = (batch tile i, point chunk j).

    x_ref     : (bt, nt, CIN_PAD) bf16 -- eval BN scale folded into weights.
    pooled_ref: (bt, emb) f32          -- running max over point chunks
                                          (block is resident across axis j).
    """
    j = pl.program_id(1)
    bt, nt, cin = x_ref.shape
    emb = pooled_ref.shape[-1]

    h = x_ref[...].reshape(bt * nt, cin)                      # bf16 rows, M=bt*nt
    h = _mm_bias_relu(h, w1, b1).astype(jnp.bfloat16)         # (bt*nt, 64)
    h = _mm_bias_relu(h, w2, b2).astype(jnp.bfloat16)         # (bt*nt, 64)
    h = _mm_bias_relu(h, w3, b3).astype(jnp.bfloat16)         # (bt*nt, 64)
    h = _mm_bias_relu(h, w4, b4).astype(jnp.bfloat16)         # (bt*nt, 128)
    # bf16 pool: monotone rounding commutes with max and pooled is consumed in
    # bf16 by linear1, so this is bit-identical to pooling in f32 and halves
    # the largest live tensor.
    h = _mm_bias_relu(h, w5, b5).astype(jnp.bfloat16)         # (bt*nt, emb)

    chunk_max = jnp.max(h.reshape(bt, nt, emb), axis=1)       # (bt, emb) bf16

    @pl.when(j == 0)
    def _():
        pooled_ref[...] = jnp.full(pooled_ref.shape, -jnp.inf, pooled_ref.dtype)

    pooled_ref[...] = jnp.maximum(pooled_ref[...],
                                  chunk_max.astype(pooled_ref.dtype))


def pointnet_head_kernel(pooled_ref, w6, b6, w7, b7, out_ref):
    """Head runs once over the whole (padded) batch: M = Bp for both GEMMs."""
    f = pooled_ref[...].astype(jnp.bfloat16)                  # (Bp, emb)
    f = _mm_bias_relu(f, w6, b6).astype(jnp.bfloat16)         # (Bp, 512)
    # TODO(synk): nn.Dropout() is identity in eval mode; training-mode dropout
    # and batch-statistics BatchNorm are not modeled.
    out = jnp.dot(f, w7[...], preferred_element_type=jnp.float32) + b7[...]
    out_ref[...] = out.astype(out_ref.dtype)                  # (Bp, OUT_PAD)


# --------------------------------------------------------------------------
# Tile selection (VMEM- and core-aware)
# --------------------------------------------------------------------------
def _rup(x, m):
    return (x + m - 1) // m * m


def _largest_nice_divisor(n, cap):
    """Largest multiple of 8 dividing n with value <= cap (None if none)."""
    best = None
    for cand in range(8, min(cap, n) + 1, 8):
        if n % cand == 0:
            best = cand
    return best


def _feature_footprint_bytes(bt, nt, emb):
    """Generous per-grid-step VMEM estimate for the feature kernel."""
    rows = bt * nt
    conv_widths = (64, 64, 64, 128, emb)
    # x tile: minor dim 8 is lane-padded to 128 in VMEM; double-buffered.
    x_tile = rows * 128 * 2 * 2
    # Activation chain: count every layer at bf16 + f32 (compiler temporaries).
    acts = rows * sum(w * 6 for w in conv_widths)
    # Weights/biases (sublane/lane padded); x2 in case single-buffering is off.
    w_shapes = ((CIN_PAD, 64), (64, 64), (64, 64), (64, 128), (128, emb))
    weights = 2 * sum(_rup(ci, 16) * _rup(co, 128) * 2 for ci, co in w_shapes)
    biases = 2 * sum(8 * _rup(co, 128) * 4 for co in conv_widths)
    pooled = bt * _rup(emb, 128) * 4 * 2
    return x_tile + acts + weights + biases + pooled


def _pick_tiles(batch, n_points, emb):
    """Pick (bt, nt, Bp): fit the VMEM budget, keep >=2 batch tiles when
    possible (v7x megacore), keep rows-per-matmul large for MXU fill."""
    nt = _largest_nice_divisor(n_points, cap=min(n_points, 1024)) or n_points

    b_pad8 = _rup(batch, 8)
    if batch <= 8:
        bt = batch                      # a single block covers the whole batch
    else:
        bt = 8
        cand = 16
        # Grow bt in multiples of 8 while the footprint fits and at least two
        # batch tiles remain (so the "parallel" batch axis can split across
        # v7x's two TensorCores; extra grid steps are ~free on 1-TC v5e/v6e).
        while cand <= b_pad8 // 2:
            if (b_pad8 % cand == 0
                    and cand * nt <= _MAX_ROWS
                    and _feature_footprint_bytes(cand, nt, emb) <= _VMEM_TARGET):
                bt = cand
            cand += 8

    # Shrink the point chunk if even this bt does not fit the budget.
    while nt > 8 and (bt * nt > _MAX_ROWS
                      or _feature_footprint_bytes(bt, nt, emb) > _VMEM_TARGET):
        cand = _largest_nice_divisor(n_points, cap=nt - 8)
        if cand is None:
            break
        nt = cand

    b_pad = int(pl.cdiv(batch, bt)) * bt
    return bt, nt, b_pad


# --------------------------------------------------------------------------
# Wrapper
# --------------------------------------------------------------------------
def pointnet_forward(x, prep, *, bt=None, nt=None):
    """x: (B, N, 3) float32; prep: prepared (BN-folded, padded, bf16) params.

    Returns (B, output_channels) float32 logits (eval-mode forward).
    """
    B, N, _ = x.shape
    out_ch = prep["out_channels"]
    emb = prep["w5"].shape[1]

    auto_bt, auto_nt, _ = _pick_tiles(B, N, emb)
    bt = auto_bt if bt is None else bt
    nt = auto_nt if nt is None else nt
    assert N % nt == 0, "point chunk must divide N"
    assert bt % 8 == 0 or bt == B, "batch tile must be a multiple of 8 (or B)"
    Bp = int(pl.cdiv(B, bt)) * bt

    if Bp != B:
        # Padded batch rows flow through the net and are sliced off at the end.
        x = jnp.pad(x, ((0, Bp - B), (0, 0), (0, 0)))

    # channels-last, zero-pad 3 -> CIN_PAD xyz channels, cast to bf16.
    x_pad = jnp.pad(x, ((0, 0), (0, 0), (0, CIN_PAD - 3))).astype(jnp.bfloat16)

    conv_args = [prep[k] for k in
                 ("w1", "b1", "w2", "b2", "w3", "b3", "w4", "b4", "w5", "b5")]
    head_args = [prep[k] for k in ("w6", "b6", "w7", "b7")]

    def const_spec(a):
        # Constant-index operands only need a single VMEM buffer.
        nd = a.ndim
        idx = lambda i, j, _nd=nd: (0,) * _nd
        if hasattr(pl, "Buffered"):
            try:
                return pl.BlockSpec(a.shape, idx, pipeline_mode=pl.Buffered(1))
            except TypeError:
                pass
        return pl.BlockSpec(a.shape, idx)

    # ---- feature kernel: conv1..conv5 + streamed max-pool ------------------
    feat_vmem = int(min(48 << 20,
                        max(24 << 20,
                            _feature_footprint_bytes(bt, nt, emb) + (8 << 20))))
    conv_dims = [(CIN_PAD, 64), (64, 64), (64, 64), (64, 128), (128, emb)]
    feat_flops = 2 * Bp * N * sum(ci * co for ci, co in conv_dims)
    feat_bytes = (int(x_pad.size) * 2
                  + sum(int(a.size) * a.dtype.itemsize for a in conv_args)
                  + Bp * emb * 4)

    pooled = pl.pallas_call(
        pointnet_features_kernel,
        out_shape=jax.ShapeDtypeStruct((Bp, emb), jnp.float32),
        grid_spec=pltpu.PrefetchScalarGridSpec(
            num_scalar_prefetch=0,
            grid=(Bp // bt, N // nt),
            in_specs=[pl.BlockSpec((bt, nt, CIN_PAD), lambda i, j: (i, j, 0))]
                     + [const_spec(a) for a in conv_args],
            out_specs=pl.BlockSpec((bt, emb), lambda i, j: (i, 0)),
        ),
        compiler_params=pltpu.CompilerParams(
            dimension_semantics=("parallel", "arbitrary"),
            vmem_limit_bytes=feat_vmem),
        cost_estimate=pl.CostEstimate(
            flops=int(feat_flops), transcendentals=0,
            bytes_accessed=int(feat_bytes)),
    )(x_pad, *conv_args)

    # ---- head kernel: linear1 + bn6 + ReLU + linear2, once with M = Bp -----
    head_weight_bytes = sum(int(a.size) * a.dtype.itemsize for a in head_args)
    head_vmem = int(min(48 << 20,
                        max(16 << 20,
                            Bp * (emb * 6 + 512 * 6 + OUT_PAD * 8)
                            + 2 * head_weight_bytes + (4 << 20))))
    head_flops = 2 * Bp * (emb * 512 + 512 * OUT_PAD)
    head_bytes = Bp * (emb * 4 + OUT_PAD * 4) + head_weight_bytes

    def head_spec(a):
        return pl.BlockSpec(a.shape, lambda i, _nd=a.ndim: (0,) * _nd)

    out = pl.pallas_call(
        pointnet_head_kernel,
        out_shape=jax.ShapeDtypeStruct((Bp, OUT_PAD), jnp.float32),
        grid_spec=pltpu.PrefetchScalarGridSpec(
            num_scalar_prefetch=0,
            grid=(1,),
            in_specs=[head_spec(pooled)] + [head_spec(a) for a in head_args],
            out_specs=pl.BlockSpec((Bp, OUT_PAD), lambda i: (0, 0)),
        ),
        compiler_params=pltpu.CompilerParams(
            dimension_semantics=("arbitrary",),
            vmem_limit_bytes=head_vmem),
        cost_estimate=pl.CostEstimate(
            flops=int(head_flops), transcendentals=0,
            bytes_accessed=int(head_bytes)),
    )(pooled, *head_args)

    return out[:B, :out_ch]


# --------------------------------------------------------------------------
# Parameters (synthetic, matching the PyTorch module shapes)
# --------------------------------------------------------------------------
def init_params(key, emb_dims=64, output_channels=40):
    """Deterministic synthetic params. Conv1d/Linear weights are stored as
    (in_features, out_features); BN layers as eval-mode (scale, shift)."""
    eps = 1e-5
    chans = [(3, 64), (64, 64), (64, 64), (64, 128), (128, emb_dims)]
    params = {}
    keys = jax.random.split(key, 40)
    ki = 0

    def bn_fold(cout, k_g, k_b, k_m, k_v):
        gamma = 1.0 + 0.1 * jax.random.normal(k_g, (1, cout), jnp.float32)
        beta = 0.1 * jax.random.normal(k_b, (1, cout), jnp.float32)
        mean = 0.1 * jax.random.normal(k_m, (1, cout), jnp.float32)
        var = jnp.abs(jax.random.normal(k_v, (1, cout), jnp.float32)) + 1.0
        scale = gamma / jnp.sqrt(var + eps)
        shift = beta - mean * scale
        return scale, shift

    for i, (cin, cout) in enumerate(chans, start=1):
        w = jax.random.normal(keys[ki], (cin, cout), jnp.float32) * (cin ** -0.5)
        ki += 1
        s, b = bn_fold(cout, *keys[ki:ki + 4])
        ki += 4
        params[f"w{i}"], params[f"s{i}"], params[f"b{i}"] = w, s, b

    # linear1: emb_dims -> 512 (no bias) + bn6
    params["w6"] = jax.random.normal(keys[ki], (emb_dims, 512), jnp.float32) * (emb_dims ** -0.5)
    ki += 1
    params["s6"], params["b6"] = bn_fold(512, *keys[ki:ki + 4])
    ki += 4

    # linear2: 512 -> output_channels (with bias)
    params["w7"] = jax.random.normal(keys[ki], (512, output_channels), jnp.float32) * (512 ** -0.5)
    ki += 1
    params["b7"] = 0.1 * jax.random.normal(keys[ki], (1, output_channels), jnp.float32)
    return params


def prepare_params(params):
    """Fold eval-mode BN scales into weights, pad to TPU shapes, cast to bf16.

    NOTE: BN scale is folded into bf16 weights; accuracy vs. the original f32
    PyTorch model should be validated separately for production use.
    """
    out_ch = params["w7"].shape[1]
    prep = {"out_channels": out_ch}
    for i in range(1, 7):
        w = params[f"w{i}"] * params[f"s{i}"]                    # fold BN scale
        if i == 1:
            w = jnp.pad(w, ((0, CIN_PAD - w.shape[0]), (0, 0)))  # 3 -> 8 chans
        prep[f"w{i}"] = w.astype(jnp.bfloat16)
        prep[f"b{i}"] = params[f"b{i}"].astype(jnp.float32)      # BN shift
    # linear2: pad output columns out_ch -> OUT_PAD for lane-dense stores.
    prep["w7"] = jnp.pad(params["w7"], ((0, 0), (0, OUT_PAD - out_ch))).astype(jnp.bfloat16)
    prep["b7"] = jnp.pad(params["b7"], ((0, 0), (0, OUT_PAD - out_ch))).astype(jnp.float32)
    return prep


def pointnet_reference(x, prep):
    """Pure-JAX mirror of the kernel math (same bf16/f32 dtype flow)."""
    B, N, _ = x.shape
    h = jnp.pad(x, ((0, 0), (0, 0), (0, CIN_PAD - 3)))
    h = h.astype(jnp.bfloat16).reshape(B * N, CIN_PAD)

    def mm_bias_relu(h, w, b):
        y = jnp.dot(h, w, preferred_element_type=jnp.float32)
        return jnp.maximum(y + b, 0.0)

    for i in range(1, 6):
        h = mm_bias_relu(h, prep[f"w{i}"], prep[f"b{i}"]).astype(jnp.bfloat16)
    pooled = jnp.max(h.reshape(B, N, -1), axis=1)                  # bf16 pool
    f = mm_bias_relu(pooled, prep["w6"], prep["b6"]).astype(jnp.bfloat16)
    out = jnp.dot(f, prep["w7"], preferred_element_type=jnp.float32) + prep["b7"]
    return out[:, :prep["out_channels"]]


# --------------------------------------------------------------------------
if __name__ == "__main__":
    B, N = 12, 256         # batch (not a tile multiple -> tests padding), points
    EMB_DIMS = 64          # args.emb_dims (real model uses 1024)
    OUT_CH = 40            # output_channels default

    key = jax.random.PRNGKey(0)
    k_x, k_p = jax.random.split(key)

    # PyTorch forward takes (B, 3, N); the kernel layout is channels-last.
    x_ncw = jax.random.normal(k_x, (B, 3, N), jnp.float32)
    x = jnp.transpose(x_ncw, (0, 2, 1))                            # (B, N, 3)

    params = init_params(k_p, emb_dims=EMB_DIMS, output_channels=OUT_CH)
    prep = prepare_params(params)
    ref = pointnet_reference(x, prep)

    # 1) auto-picked (VMEM-/core-aware) tiles.
    out = jax.block_until_ready(pointnet_forward(x, prep))
    assert out.shape == (B, OUT_CH), out.shape
    diff = float(jnp.max(jnp.abs(out - ref)))
    assert jnp.allclose(out, ref, atol=5e-3, rtol=5e-3), f"auto tiles: {diff}"

    # 2) explicit small tiles: exercises the streamed point-chunk running max
    #    (grid = (2, 4)) and the padded-batch path (B=12 -> Bp=16).
    out2 = jax.block_until_ready(pointnet_forward(x, prep, bt=8, nt=64))
    diff2 = float(jnp.max(jnp.abs(out2 - ref)))
    assert jnp.allclose(out2, ref, atol=5e-3, rtol=5e-3), f"small tiles: {diff2}"

    print("KERNEL_OK")
</pallas_src>

<mosaic_0001>
module attributes {stable_mosaic.version = 11 : i64} {
  func.func @pointnet_features_kernel(%arg0: i32, %arg1: i32, %arg2: memref<8x256x8xbf16, #tpu.memory_space<vmem>>, %arg3: memref<8x64xbf16, #tpu.memory_space<vmem>>, %arg4: memref<1x64xf32, #tpu.memory_space<vmem>>, %arg5: memref<64x64xbf16, #tpu.memory_space<vmem>>, %arg6: memref<1x64xf32, #tpu.memory_space<vmem>>, %arg7: memref<64x64xbf16, #tpu.memory_space<vmem>>, %arg8: memref<1x64xf32, #tpu.memory_space<vmem>>, %arg9: memref<64x128xbf16, #tpu.memory_space<vmem>>, %arg10: memref<1x128xf32, #tpu.memory_space<vmem>>, %arg11: memref<128x64xbf16, #tpu.memory_space<vmem>>, %arg12: memref<1x64xf32, #tpu.memory_space<vmem>>, %arg13: memref<8x64xf32, #tpu.memory_space<vmem>>) attributes {dimension_semantics = [#tpu.dimension_semantics<parallel>, #tpu.dimension_semantics<arbitrary>], iteration_bounds = array<i64: 2, 1>, scalar_prefetch = 0 : i64, scratch_operands = 0 : i64, tpu.core_type = #tpu.core_type<tc>, window_params = [{transform_indices = @transform_0, window_bounds = array<i64: 8, 256, 8>}, {pipeline_mode = #tpu.pipeline_mode<synchronous>, transform_indices = @transform_1, window_bounds = array<i64: 8, 64>}, {pipeline_mode = #tpu.pipeline_mode<synchronous>, transform_indices = @transform_2, window_bounds = array<i64: 1, 64>}, {pipeline_mode = #tpu.pipeline_mode<synchronous>, transform_indices = @transform_3, window_bounds = array<i64: 64, 64>}, {pipeline_mode = #tpu.pipeline_mode<synchronous>, transform_indices = @transform_4, window_bounds = array<i64: 1, 64>}, {pipeline_mode = #tpu.pipeline_mode<synchronous>, transform_indices = @transform_5, window_bounds = array<i64: 64, 64>}, {pipeline_mode = #tpu.pipeline_mode<synchronous>, transform_indices = @transform_6, window_bounds = array<i64: 1, 64>}, {pipeline_mode = #tpu.pipeline_mode<synchronous>, transform_indices = @transform_7, window_bounds = array<i64: 64, 128>}, {pipeline_mode = #tpu.pipeline_mode<synchronous>, transform_indices = @transform_8, window_bounds = array<i64: 1, 128>}, {pipeline_mode = #tpu.pipeline_mode<synchronous>, transform_indices = @transform_9, window_bounds = array<i64: 128, 64>}, {pipeline_mode = #tpu.pipeline_mode<synchronous>, transform_indices = @transform_10, window_bounds = array<i64: 1, 64>}, {transform_indices = @transform_11, window_bounds = array<i64: 8, 64>}]} {
    %c0 = arith.constant 0 : index
    %c0_0 = arith.constant 0 : index
    %c0_1 = arith.constant 0 : index
    %0 = vector.load %arg2[%c0, %c0_0, %c0_1] : memref<8x256x8xbf16, #tpu.memory_space<vmem>>, vector<8x256x8xbf16>
    %1 = vector.shape_cast %0 : vector<8x256x8xbf16> to vector<2048x8xbf16>
    %c0_2 = arith.constant 0 : index
    %c0_3 = arith.constant 0 : index
    %2 = vector.load %arg3[%c0_2, %c0_3] : memref<8x64xbf16, #tpu.memory_space<vmem>>, vector<8x64xbf16>
    %cst = arith.constant dense<0.000000e+00> : vector<2048x64xf32>
    %3 = tpu.matmul %1, %2, %cst {dimension_numbers = #tpu.dot_dimension_numbers<[1], [0], [0], [1], [0, 0, 1, 1], [], []>} : vector<2048x8xbf16>, vector<8x64xbf16>, vector<2048x64xf32> -> vector<2048x64xf32>
    %c0_4 = arith.constant 0 : index
    %c0_5 = arith.constant 0 : index
    %4 = vector.load %arg4[%c0_4, %c0_5] : memref<1x64xf32, #tpu.memory_space<vmem>>, vector<1x64xf32>
    %5 = vector.broadcast %4 : vector<1x64xf32> to vector<2048x64xf32>
    %6 = arith.addf %3, %5 : vector<2048x64xf32>
    %cst_6 = arith.constant 0.000000e+00 : f32
    %7 = vector.broadcast %cst_6 : f32 to vector<2048x64xf32>
    %8 = arith.maximumf %6, %7 : vector<2048x64xf32>
    %9 = arith.truncf %8 : vector<2048x64xf32> to vector<2048x64xbf16>
    %c0_7 = arith.constant 0 : index
    %c0_8 = arith.constant 0 : index
    %10 = vector.load %arg5[%c0_7, %c0_8] : memref<64x64xbf16, #tpu.memory_space<vmem>>, vector<64x64xbf16>
    %cst_9 = arith.constant dense<0.000000e+00> : vector<2048x64xf32>
    %11 = tpu.matmul %9, %10, %cst_9 {dimension_numbers = #tpu.dot_dimension_numbers<[1], [0], [0], [1], [0, 0, 1, 1], [], []>} : vector<2048x64xbf16>, vector<64x64xbf16>, vector<2048x64xf32> -> vector<2048x64xf32>
    %c0_10 = arith.constant 0 : index
    %c0_11 = arith.constant 0 : index
    %12 = vector.load %arg6[%c0_10, %c0_11] : memref<1x64xf32, #tpu.memory_space<vmem>>, vector<1x64xf32>
    %13 = vector.broadcast %12 : vector<1x64xf32> to vector<2048x64xf32>
    %14 = arith.addf %11, %13 : vector<2048x64xf32>
    %cst_12 = arith.constant 0.000000e+00 : f32
    %15 = vector.broadcast %cst_12 : f32 to vector<2048x64xf32>
    %16 = arith.maximumf %14, %15 : vector<2048x64xf32>
    %17 = arith.truncf %16 : vector<2048x64xf32> to vector<2048x64xbf16>
    %c0_13 = arith.constant 0 : index
    %c0_14 = arith.constant 0 : index
    %18 = vector.load %arg7[%c0_13, %c0_14] : memref<64x64xbf16, #tpu.memory_space<vmem>>, vector<64x64xbf16>
    %cst_15 = arith.constant dense<0.000000e+00> : vector<2048x64xf32>
    %19 = tpu.matmul %17, %18, %cst_15 {dimension_numbers = #tpu.dot_dimension_numbers<[1], [0], [0], [1], [0, 0, 1, 1], [], []>} : vector<2048x64xbf16>, vector<64x64xbf16>, vector<2048x64xf32> -> vector<2048x64xf32>
    %c0_16 = arith.constant 0 : index
    %c0_17 = arith.constant 0 : index
    %20 = vector.load %arg8[%c0_16, %c0_17] : memref<1x64xf32, #tpu.memory_space<vmem>>, vector<1x64xf32>
    %21 = vector.broadcast %20 : vector<1x64xf32> to vector<2048x64xf32>
    %22 = arith.addf %19, %21 : vector<2048x64xf32>
    %cst_18 = arith.constant 0.000000e+00 : f32
    %23 = vector.broadcast %cst_18 : f32 to vector<2048x64xf32>
    %24 = arith.maximumf %22, %23 : vector<2048x64xf32>
    %25 = arith.truncf %24 : vector<2048x64xf32> to vector<2048x64xbf16>
    %c0_19 = arith.constant 0 : index
    %c0_20 = arith.constant 0 : index
    %26 = vector.load %arg9[%c0_19, %c0_20] : memref<64x128xbf16, #tpu.memory_space<vmem>>, vector<64x128xbf16>
    %cst_21 = arith.constant dense<0.000000e+00> : vector<2048x128xf32>
    %27 = tpu.matmul %25, %26, %cst_21 {dimension_numbers = #tpu.dot_dimension_numbers<[1], [0], [0], [1], [0, 0, 1, 1], [], []>} : vector<2048x64xbf16>, vector<64x128xbf16>, vector<2048x128xf32> -> vector<2048x128xf32>
    %c0_22 = arith.constant 0 : index
    %c0_23 = arith.constant 0 : index
    %28 = vector.load %arg10[%c0_22, %c0_23] : memref<1x128xf32, #tpu.memory_space<vmem>>, vector<1x128xf32>
    %29 = vector.broadcast %28 : vector<1x128xf32> to vector<2048x128xf32>
    %30 = arith.addf %27, %29 : vector<2048x128xf32>
    %cst_24 = arith.constant 0.000000e+00 : f32
    %31 = vector.broadcast %cst_24 : f32 to vector<2048x128xf32>
    %32 = arith.maximumf %30, %31 : vector<2048x128xf32>
    %33 = arith.truncf %32 : vector<2048x128xf32> to vector<2048x128xbf16>
    %c0_25 = arith.constant 0 : index
    %c0_26 = arith.constant 0 : index
    %34 = vector.load %arg11[%c0_25, %c0_26] : memref<128x64xbf16, #tpu.memory_space<vmem>>, vector<128x64xbf16>
    %cst_27 = arith.constant dense<0.000000e+00> : vector<2048x64xf32>
    %35 = tpu.matmul %33, %34, %cst_27 {dimension_numbers = #tpu.dot_dimension_numbers<[1], [0], [0], [1], [0, 0, 1, 1], [], []>} : vector<2048x128xbf16>, vector<128x64xbf16>, vector<2048x64xf32> -> vector<2048x64xf32>
    %c0_28 = arith.constant 0 : index
    %c0_29 = arith.constant 0 : index
    %36 = vector.load %arg12[%c0_28, %c0_29] : memref<1x64xf32, #tpu.memory_space<vmem>>, vector<1x64xf32>
    %37 = vector.broadcast %36 : vector<1x64xf32> to vector<2048x64xf32>
    %38 = arith.addf %35, %37 : vector<2048x64xf32>
    %cst_30 = arith.constant 0.000000e+00 : f32
    %39 = vector.broadcast %cst_30 : f32 to vector<2048x64xf32>
    %40 = arith.maximumf %38, %39 : vector<2048x64xf32>
    %41 = arith.truncf %40 : vector<2048x64xf32> to vector<2048x64xbf16>
    %42 = vector.shape_cast %41 : vector<2048x64xbf16> to vector<8x256x64xbf16>
    %cst_31 = arith.constant dense<0xFF80> : vector<8x64xbf16>
    %43 = vector.multi_reduction <maximumf>, %42, %cst_31 [1] : vector<8x256x64xbf16> to vector<8x64xbf16>
    %c0_i32 = arith.constant 0 : i32
    %44 = arith.cmpi eq, %arg1, %c0_i32 : i32
    %45 = arith.extui %44 : i1 to i32
    %c0_i32_32 = arith.constant 0 : i32
    %46 = arith.cmpi ne, %45, %c0_i32_32 : i32
    scf.if %46 {
      %cst_37 = arith.constant 0xFF800000 : f32
      %51 = vector.broadcast %cst_37 : f32 to vector<8x64xf32>
      %c0_38 = arith.constant 0 : index
      %c0_39 = arith.constant 0 : index
      %52 = vector.load %arg13[%c0_38, %c0_39] : memref<8x64xf32, #tpu.memory_space<vmem>>, vector<8x64xf32>
      tpu.vector_store %arg13[%c0_38, %c0_39], %51 {strides = array<i32>} : memref<8x64xf32, #tpu.memory_space<vmem>>, vector<8x64xf32>,
    } else {
    }
    %c0_33 = arith.constant 0 : index
    %c0_34 = arith.constant 0 : index
    %47 = vector.load %arg13[%c0_33, %c0_34] : memref<8x64xf32, #tpu.memory_space<vmem>>, vector<8x64xf32>
    %48 = arith.extf %43 : vector<8x64xbf16> to vector<8x64xf32>
    %49 = arith.maximumf %47, %48 : vector<8x64xf32>
    %c0_35 = arith.constant 0 : index
    %c0_36 = arith.constant 0 : index
    %50 = vector.load %arg13[%c0_35, %c0_36] : memref<8x64xf32, #tpu.memory_space<vmem>>, vector<8x64xf32>
    tpu.vector_store %arg13[%c0_35, %c0_36], %49 {strides = array<i32>} : memref<8x64xf32, #tpu.memory_space<vmem>>, vector<8x64xf32>,
    return
  }
  func.func @transform_0(%arg0: i32, %arg1: i32) -> (i32, i32, i32) {
    %c0_i32 = arith.constant 0 : i32
    %c0_i32_0 = arith.constant 0 : i32
    return %arg0, %arg1, %c0_i32 : i32, i32, i32
  }
  func.func @transform_1(%arg0: i32, %arg1: i32) -> (i32, i32) {
    %c0_i32 = arith.constant 0 : i32
    %c0_i32_0 = arith.constant 0 : i32
    %c0_i32_1 = arith.constant 0 : i32
    return %c0_i32, %c0_i32_0 : i32, i32
  }
  func.func @transform_2(%arg0: i32, %arg1: i32) -> (i32, i32) {
    %c0_i32 = arith.constant 0 : i32
    %c0_i32_0 = arith.constant 0 : i32
    %c0_i32_1 = arith.constant 0 : i32
    return %c0_i32, %c0_i32_0 : i32, i32
  }
  func.func @transform_3(%arg0: i32, %arg1: i32) -> (i32, i32) {
    %c0_i32 = arith.constant 0 : i32
    %c0_i32_0 = arith.constant 0 : i32
    %c0_i32_1 = arith.constant 0 : i32
    return %c0_i32, %c0_i32_0 : i32, i32
  }
  func.func @transform_4(%arg0: i32, %arg1: i32) -> (i32, i32) {
    %c0_i32 = arith.constant 0 : i32
    %c0_i32_0 = arith.constant 0 : i32
    %c0_i32_1 = arith.constant 0 : i32
    return %c0_i32, %c0_i32_0 : i32, i32
  }
  func.func @transform_5(%arg0: i32, %arg1: i32) -> (i32, i32) {
    %c0_i32 = arith.constant 0 : i32
    %c0_i32_0 = arith.constant 0 : i32
    %c0_i32_1 = arith.constant 0 : i32
    return %c0_i32, %c0_i32_0 : i32, i32
  }
  func.func @transform_6(%arg0: i32, %arg1: i32) -> (i32, i32) {
    %c0_i32 = arith.constant 0 : i32
    %c0_i32_0 = arith.constant 0 : i32
    %c0_i32_1 = arith.constant 0 : i32
    return %c0_i32, %c0_i32_0 : i32, i32
  }
  func.func @transform_7(%arg0: i32, %arg1: i32) -> (i32, i32) {
    %c0_i32 = arith.constant 0 : i32
    %c0_i32_0 = arith.constant 0 : i32
    %c0_i32_1 = arith.constant 0 : i32
    return %c0_i32, %c0_i32_0 : i32, i32
  }
  func.func @transform_8(%arg0: i32, %arg1: i32) -> (i32, i32) {
    %c0_i32 = arith.constant 0 : i32
    %c0_i32_0 = arith.constant 0 : i32
    %c0_i32_1 = arith.constant 0 : i32
    return %c0_i32, %c0_i32_0 : i32, i32
  }
  func.func @transform_9(%arg0: i32, %arg1: i32) -> (i32, i32) {
    %c0_i32 = arith.constant 0 : i32
    %c0_i32_0 = arith.constant 0 : i32
    %c0_i32_1 = arith.constant 0 : i32
    return %c0_i32, %c0_i32_0 : i32, i32
  }
  func.func @transform_10(%arg0: i32, %arg1: i32) -> (i32, i32) {
    %c0_i32 = arith.constant 0 : i32
    %c0_i32_0 = arith.constant 0 : i32
    %c0_i32_1 = arith.constant 0 : i32
    return %c0_i32, %c0_i32_0 : i32, i32
  }
  func.func @transform_11(%arg0: i32, %arg1: i32) -> (i32, i32) {
    %c0_i32 = arith.constant 0 : i32
    %c0_i32_0 = arith.constant 0 : i32
    return %arg0, %c0_i32 : i32, i32
  }
}

</mosaic_0001>

<llo_original>
// kernel: tpu_custom_call.1
$region0: #{tpu_custom_call.1}
  #allocation0 [shape = 'u32[]', space=smem, size = 0x4, offset = 0x4, fixed_abs, tag = 'smem constant byte address 0x4 - core index']
  #allocation1 [shape = 'u32[144,128]{1,0:T(1,128)}', space=vmem, size = 0x12000, scoped, tag = 'internal scratch']
  %s0 = inlined_call_operand.vmem [shape: bf16[16,256,8], index: 0, kind: input, shape index: {}]
  %s1 = inlined_call_operand.vmem [shape: bf16[8,64], index: 1, kind: input, shape index: {}]
  %s2 = inlined_call_operand.vmem [shape: f32[1,64], index: 2, kind: input, shape index: {}]
  %s3 = inlined_call_operand.vmem [shape: bf16[64,64], index: 3, kind: input, shape index: {}]
  %s4 = inlined_call_operand.vmem [shape: f32[1,64], index: 4, kind: input, shape index: {}]
  %s5 = inlined_call_operand.vmem [shape: bf16[64,64], index: 5, kind: input, shape index: {}]
  %s6 = inlined_call_operand.vmem [shape: f32[1,64], index: 6, kind: input, shape index: {}]
  %s7 = inlined_call_operand.vmem [shape: bf16[64,128], index: 7, kind: input, shape index: {}]
  %s8 = inlined_call_operand.vmem [shape: f32[1,128], index: 8, kind: input, shape index: {}]
  %s9 = inlined_call_operand.vmem [shape: bf16[128,64], index: 9, kind: input, shape index: {}]
  %s10 = inlined_call_operand.vmem [shape: f32[1,64], index: 10, kind: input, shape index: {}]
  %s11 = inlined_call_operand.hbm [shape: f32[16,64], index: 11, kind: output, shape index: {}]
  %s12 = sld [smem:[#allocation0]]
  $region81: #{tpu_custom_call.1} parent=0
    _
  %s14 = ssub.s32 1, %s12
  %s15 = scalar_select 0, %s14, %s12
  $region1: #{tpu_custom_call.1} parent=0
    #allocation2 [shape = 'u8[8192]{0}', space=vmem, size = 0x2000, scoped, tag = 'output window, operand 0']
    #allocation3 [shape = 's32[2]{0}', space=sflag, size = 0x8, scoped, tag = 'scoped memory for tpu_custom_call.1']
    %16 = vsyncpa [#allocation3], 0
    %s17 = scalar_lea.sflag [#allocation3], 1
    %18 = vsyncpa %s17, 0
    loop: start=0, step=1, limit=4
    $region2: #{tpu_custom_call.1} parent=1 // loop_pre_header
      _
    $region3: #{tpu_custom_call.1} parent=1 // loop_header
      %s20 = sphi 0, %s24
      %p21 = scmp.ge.s32.totalorder %s20, 4
      %s27 = sphi 0, %s39
      %s28 = sphi 0, %s35
      %s29 = sphi 0, %s27
      %s30 = sphi 0, %s28
      %s31 = sphi 0, %s29
      %s32 = sphi 0, %s30
      %s44 = sphi 0, %s46
      %s47 = sphi 0, %s44
      %s48 = sphi 0, %s47
      %s64 = sphi 0, %s48
      %s68 = sphi 0, %s68
      %s70 = sphi 0, %s68
      %s71 = sphi 0, %s70
      %s85 = sphi 0, %s71
      %s89 = sphi 0, %s89
      %s91 = sphi 0, %s89
      %s92 = sphi 0, %s91
      %s106 = sphi 0, %s92
      %s110 = sphi 0, %s110
      %s112 = sphi 0, %s110
      %s113 = sphi 0, %s112
      %s127 = sphi 0, %s113
      %s131 = sphi 0, %s131
      %s133 = sphi 0, %s131
      %s134 = sphi 0, %s133
      %s148 = sphi 0, %s134
      %s152 = sphi 0, %s152
      %s154 = sphi 0, %s152
      %s155 = sphi 0, %s154
      %s169 = sphi 0, %s155
      %s173 = sphi 0, %s173
      %s175 = sphi 0, %s173
      %s176 = sphi 0, %s175
      %s190 = sphi 0, %s176
      %s194 = sphi 0, %s194
      %s196 = sphi 0, %s194
      %s197 = sphi 0, %s196
      %s211 = sphi 0, %s197
      %s215 = sphi 0, %s215
      %s217 = sphi 0, %s215
      %s218 = sphi 0, %s217
      %s232 = sphi 0, %s218
      %s236 = sphi 0, %s236
      %s238 = sphi 0, %s236
      %s239 = sphi 0, %s238
      %s253 = sphi 0, %s239
      %s257 = sphi 0, %s257
      %s259 = sphi 0, %s257
      %s260 = sphi 0, %s259
      %s274 = sphi 0, %s260
      %s280 = sphi 0, %s282
      %s283 = sphi 0, %s280
      %s284 = sphi 0, %s283
      %s300 = sphi 0, %s284
    $region4: #{tpu_custom_call.1} parent=1 // loop_header_branch
      %23 = sbr.rel (%p21) target = $region8
    $region5: #{tpu_custom_call.1} parent=1 // loop_body
      %s25 = ssub.s32 %s20, 1
      %s26 = ssub.s32 %s20, 2
      %s33 = sadd.s32 1, %s28
      %p34 = scmp.ge.s32.totalorder %s33, 1
      %s35 = scalar_select %p34, 0, %s33
      %s36 = sadd.s32 1, %s27
      %s37 = scalar_select %p34, %s36, %s27
      %p38 = scmp.ge.s32.totalorder %s37, 2
      %s39 = scalar_select %p38, 0, %s37
      %s40 = ssub.s32 %s27, %s39
      %s41 = ssub.s32 %s28, %s35
      %s42 = sor.u32 %s40, %s41
      %p43 = scmp.eq.s32.totalorder %s42, 0
      %s45 = sadd.s32 %s44, 1
      %s46 = scalar_select %p43, %s44, %s45
      %p49 = pneg %p43
      %p50 = scmp.eq.s32.totalorder %s20, 1
      %p51 = por %p49, %p50
      %p52 = scmp.ne.s32.totalorder %s44, %s47
      %p53 = scmp.eq.s32.totalorder %s20, 0
      %p54 = por %p52, %p53
      %p55 = scmp.ne.s32.totalorder %s44, %s47
      %p56 = scmp.eq.s32.totalorder %s25, 1
      %p57 = por %p55, %p56
      %p58 = scmp.ne.s32.totalorder %s47, %s48
      %p59 = scmp.eq.s32.totalorder %s25, 0
      %p60 = por %p58, %p59
      %p61 = scmp.ne.s32.totalorder %s47, %s48
      %p62 = scmp.eq.s32.totalorder %s26, 1
      %p63 = por %p61, %p62
      %p65 = scmp.ne.s32.totalorder %s48, %s64
      %p66 = scmp.eq.s32.totalorder %s26, 0
      %p67 = por %p65, %p66
      %s69 = sadd.s32 %s68, 1
      %p72 = scmp.eq.s32.totalorder %s20, 1
      %p73 = scmp.ne.s32.totalorder %s68, %s70
      %p74 = scmp.eq.s32.totalorder %s20, 0
      %p75 = por %p73, %p74
      %p76 = scmp.ne.s32.totalorder %s68, %s70
      %p77 = scmp.eq.s32.totalorder %s25, 1
      %p78 = por %p76, %p77
      %p79 = scmp.ne.s32.totalorder %s70, %s71
      %p80 = scmp.eq.s32.totalorder %s25, 0
      %p81 = por %p79, %p80
      %p82 = scmp.ne.s32.totalorder %s70, %s71
      %p83 = scmp.eq.s32.totalorder %s26, 1
      %p84 = por %p82, %p83
      %p86 = scmp.ne.s32.totalorder %s71, %s85
      %p87 = scmp.eq.s32.totalorder %s26, 0
      %p88 = por %p86, %p87
      %s90 = sadd.s32 %s89, 1
      %p93 = scmp.eq.s32.totalorder %s20, 1
      %p94 = scmp.ne.s32.totalorder %s89, %s91
      %p95 = scmp.eq.s32.totalorder %s20, 0
      %p96 = por %p94, %p95
      %p97 = scmp.ne.s32.totalorder %s89, %s91
      %p98 = scmp.eq.s32.totalorder %s25, 1
      %p99 = por %p97, %p98
      %p100 = scmp.ne.s32.totalorder %s91, %s92
      %p101 = scmp.eq.s32.totalorder %s25, 0
      %p102 = por %p100, %p101
      %p103 = scmp.ne.s32.totalorder %s91, %s92
      %p104 = scmp.eq.s32.totalorder %s26, 1
      %p105 = por %p103, %p104
      %p107 = scmp.ne.s32.totalorder %s92, %s106
      %p108 = scmp.eq.s32.totalorder %s26, 0
      %p109 = por %p107, %p108
      %s111 = sadd.s32 %s110, 1
      %p114 = scmp.eq.s32.totalorder %s20, 1
      %p115 = scmp.ne.s32.totalorder %s110, %s112
      %p116 = scmp.eq.s32.totalorder %s20, 0
      %p117 = por %p115, %p116
      %p118 = scmp.ne.s32.totalorder %s110, %s112
      %p119 = scmp.eq.s32.totalorder %s25, 1
      %p120 = por %p118, %p119
      %p121 = scmp.ne.s32.totalorder %s112, %s113
      %p122 = scmp.eq.s32.totalorder %s25, 0
      %p123 = por %p121, %p122
      %p124 = scmp.ne.s32.totalorder %s112, %s113
      %p125 = scmp.eq.s32.totalorder %s26, 1
      %p126 = por %p124, %p125
      %p128 = scmp.ne.s32.totalorder %s113, %s127
      %p129 = scmp.eq.s32.totalorder %s26, 0
      %p130 = por %p128, %p129
      %s132 = sadd.s32 %s131, 1
      %p135 = scmp.eq.s32.totalorder %s20, 1
      %p136 = scmp.ne.s32.totalorder %s131, %s133
      %p137 = scmp.eq.s32.totalorder %s20, 0
      %p138 = por %p136, %p137
      %p139 = scmp.ne.s32.totalorder %s131, %s133
      %p140 = scmp.eq.s32.totalorder %s25, 1
      %p141 = por %p139, %p140
      %p142 = scmp.ne.s32.totalorder %s133, %s134
      %p143 = scmp.eq.s32.totalorder %s25, 0
      %p144 = por %p142, %p143
      %p145 = scmp.ne.s32.totalorder %s133, %s134
      %p146 = scmp.eq.s32.totalorder %s26, 1
      %p147 = por %p145, %p146
      %p149 = scmp.ne.s32.totalorder %s134, %s148
      %p150 = scmp.eq.s32.totalorder %s26, 0
      %p151 = por %p149, %p150
      %s153 = sadd.s32 %s152, 1
      %p156 = scmp.eq.s32.totalorder %s20, 1
      %p157 = scmp.ne.s32.totalorder %s152, %s154
      %p158 = scmp.eq.s32.totalorder %s20, 0
      %p159 = por %p157, %p158
      %p160 = scmp.ne.s32.totalorder %s152, %s154
      %p161 = scmp.eq.s32.totalorder %s25, 1
      %p162 = por %p160, %p161
      %p163 = scmp.ne.s32.totalorder %s154, %s155
      %p164 = scmp.eq.s32.totalorder %s25, 0
      %p165 = por %p163, %p164
      %p166 = scmp.ne.s32.totalorder %s154, %s155
      %p167 = scmp.eq.s32.totalorder %s26, 1
      %p168 = por %p166, %p167
      %p170 = scmp.ne.s32.totalorder %s155, %s169
      %p171 = scmp.eq.s32.totalorder %s26, 0
      %p172 = por %p170, %p171
      %s174 = sadd.s32 %s173, 1
      %p177 = scmp.eq.s32.totalorder %s20, 1
      %p178 = scmp.ne.s32.totalorder %s173, %s175
      %p179 = scmp.eq.s32.totalorder %s20, 0
      %p180 = por %p178, %p179
      %p181 = scmp.ne.s32.totalorder %s173, %s175
      %p182 = scmp.eq.s32.totalorder %s25, 1
      %p183 = por %p181, %p182
      %p184 = scmp.ne.s32.totalorder %s175, %s176
      %p185 = scmp.eq.s32.totalorder %s25, 0
      %p186 = por %p184, %p185
      %p187 = scmp.ne.s32.totalorder %s175, %s176
      %p188 = scmp.eq.s32.totalorder %s26, 1
      %p189 = por %p187, %p188
      %p191 = scmp.ne.s32.totalorder %s176, %s190
      %p192 = scmp.eq.s32.totalorder %s26, 0
      %p193 = por %p191, %p192
      %s195 = sadd.s32 %s194, 1
      %p198 = scmp.eq.s32.totalorder %s20, 1
      %p199 = scmp.ne.s32.totalorder %s194, %s196
      %p200 = scmp.eq.s32.totalorder %s20, 0
      %p201 = por %p199, %p200
      %p202 = scmp.ne.s32.totalorder %s194, %s196
      %p203 = scmp.eq.s32.totalorder %s25, 1
      %p204 = por %p202, %p203
      %p205 = scmp.ne.s32.totalorder %s196, %s197
      %p206 = scmp.eq.s32.totalorder %s25, 0
      %p207 = por %p205, %p206
      %p208 = scmp.ne.s32.totalorder %s196, %s197
      %p209 = scmp.eq.s32.totalorder %s26, 1
      %p210 = por %p208, %p209
      %p212 = scmp.ne.s32.totalorder %s197, %s211
      %p213 = scmp.eq.s32.totalorder %s26, 0
      %p214 = por %p212, %p213
      %s216 = sadd.s32 %s215, 1
      %p219 = scmp.eq.s32.totalorder %s20, 1
      %p220 = scmp.ne.s32.totalorder %s215, %s217
      %p221 = scmp.eq.s32.totalorder %s20, 0
      %p222 = por %p220, %p221
      %p223 = scmp.ne.s32.totalorder %s215, %s217
      %p224 = scmp.eq.s32.totalorder %s25, 1
      %p225 = por %p223, %p224
      %p226 = scmp.ne.s32.totalorder %s217, %s218
      %p227 = scmp.eq.s32.totalorder %s25, 0
      %p228 = por %p226, %p227
      %p229 = scmp.ne.s32.totalorder %s217, %s218
      %p230 = scmp.eq.s32.totalorder %s26, 1
      %p231 = por %p229, %p230
      %p233 = scmp.ne.s32.totalorder %s218, %s232
      %p234 = scmp.eq.s32.totalorder %s26, 0
      %p235 = por %p233, %p234
      %s237 = sadd.s32 %s236, 1
      %p240 = scmp.eq.s32.totalorder %s20, 1
      %p241 = scmp.ne.s32.totalorder %s236, %s238
      %p242 = scmp.eq.s32.totalorder %s20, 0
      %p243 = por %p241, %p242
      %p244 = scmp.ne.s32.totalorder %s236, %s238
      %p245 = scmp.eq.s32.totalorder %s25, 1
      %p246 = por %p244, %p245
      %p247 = scmp.ne.s32.totalorder %s238, %s239
      %p248 = scmp.eq.s32.totalorder %s25, 0
      %p249 = por %p247, %p248
      %p250 = scmp.ne.s32.totalorder %s238, %s239
      %p251 = scmp.eq.s32.totalorder %s26, 1
      %p252 = por %p250, %p251
      %p254 = scmp.ne.s32.totalorder %s239, %s253
      %p255 = scmp.eq.s32.totalorder %s26, 0
      %p256 = por %p254, %p255
      %s258 = sadd.s32 %s257, 1
      %p261 = scmp.eq.s32.totalorder %s20, 1
      %p262 = scmp.ne.s32.totalorder %s257, %s259
      %p263 = scmp.eq.s32.totalorder %s20, 0
      %p264 = por %p262, %p263
      %p265 = scmp.ne.s32.totalorder %s257, %s259
      %p266 = scmp.eq.s32.totalorder %s25, 1
      %p267 = por %p265, %p266
      %p268 = scmp.ne.s32.totalorder %s259, %s260
      %p269 = scmp.eq.s32.totalorder %s25, 0
      %p270 = por %p268, %p269
      %p271 = scmp.ne.s32.totalorder %s259, %s260
      %p272 = scmp.eq.s32.totalorder %s26, 1
      %p273 = por %p271, %p272
      %p275 = scmp.ne.s32.totalorder %s260, %s274
      %p276 = scmp.eq.s32.totalorder %s26, 0
      %p277 = por %p275, %p276
      %s278 = ssub.s32 %s27, %s39
      %p279 = scmp.eq.s32.totalorder %s278, 0
      %s281 = sadd.s32 %s280, 1
      %s282 = scalar_select %p279, %s280, %s281
      %p285 = pneg %p279
      %p286 = scmp.eq.s32.totalorder %s20, 1
      %p287 = por %p285, %p286
      %p288 = scmp.ne.s32.totalorder %s280, %s283
      %p289 = scmp.eq.s32.totalorder %s20, 0
      %p290 = por %p288, %p289
      %p291 = scmp.ne.s32.totalorder %s280, %s283
      %p292 = scmp.eq.s32.totalorder %s25, 1
      %p293 = por %p291, %p292
      %p294 = scmp.ne.s32.totalorder %s283, %s284
      %p295 = scmp.eq.s32.totalorder %s25, 0
      %p296 = por %p294, %p295
      %p297 = scmp.ne.s32.totalorder %s283, %s284
      %p298 = scmp.eq.s32.totalorder %s26, 1
      %p299 = por %p297, %p298
      %p301 = scmp.ne.s32.totalorder %s284, %s300
      %p302 = scmp.eq.s32.totalorder %s26, 0
      %p303 = por %p301, %p302
      %p304 = scmp.le.s32.totalorder 1, %s20
      %p305 = scmp.lt.s32.totalorder %s20, 3
      %p306 = pnand %p304, %p305
      %p307 = pneg %p306
      // Predicated region
      $region9: #{tpu_custom_call.1} parent=5 // pred_check
        _
      $region10: #{tpu_custom_call.1} parent=5 // pred_check_branch
        %309 = sbr.rel (%p306) target = $region12
      $region11: #{tpu_custom_call.1} parent=5 // pred_region
        %s310 = ssub.s32 %s20, 1
        // Predicated region
        $region13: #{tpu_custom_call.1} parent=11 // pred_check
          %p311 = pneg %p81
        $region14: #{tpu_custom_call.1} parent=11 // pred_check_branch
          %313 = sbr.rel (%p311) target = $region16
        $region15: #{tpu_custom_call.1} parent=11 // pred_region
          _
        $region16: #{tpu_custom_call.1} parent=11 // pred_fallthru
          _
        // Predicated region
        $region17: #{tpu_custom_call.1} parent=11 // pred_check
          %p314 = pneg %p102
        $region18: #{tpu_custom_call.1} parent=11 // pred_check_branch
          %316 = sbr.rel (%p314) target = $region20
        $region19: #{tpu_custom_call.1} parent=11 // pred_region
          _
        $region20: #{tpu_custom_call.1} parent=11 // pred_fallthru
          _
        // Predicated region
        $region21: #{tpu_custom_call.1} parent=11 // pred_check
          %p317 = pneg %p123
        $region22: #{tpu_custom_call.1} parent=11 // pred_check_branch
          %319 = sbr.rel (%p317) target = $region24
        $region23: #{tpu_custom_call.1} parent=11 // pred_region
          _
        $region24: #{tpu_custom_call.1} parent=11 // pred_fallthru
          _
        // Predicated region
        $region25: #{tpu_custom_call.1} parent=11 // pred_check
          %p320 = pneg %p144
        $region26: #{tpu_custom_call.1} parent=11 // pred_check_branch
          %322 = sbr.rel (%p320) target = $region28
        $region27: #{tpu_custom_call.1} parent=11 // pred_region
          _
        $region28: #{tpu_custom_call.1} parent=11 // pred_fallthru
          _
        // Predicated region
        $region29: #{tpu_custom_call.1} parent=11 // pred_check
          %p323 = pneg %p165
        $region30: #{tpu_custom_call.1} parent=11 // pred_check_branch
          %325 = sbr.rel (%p323) target = $region32
        $region31: #{tpu_custom_call.1} parent=11 // pred_region
          _
        $region32: #{tpu_custom_call.1} parent=11 // pred_fallthru
          _
        // Predicated region
        $region33: #{tpu_custom_call.1} parent=11 // pred_check
          %p326 = pneg %p186
        $region34: #{tpu_custom_call.1} parent=11 // pred_check_branch
          %328 = sbr.rel (%p326) target = $region36
        $region35: #{tpu_custom_call.1} parent=11 // pred_region
          _
        $region36: #{tpu_custom_call.1} parent=11 // pred_fallthru
          _
        // Predicated region
        $region37: #{tpu_custom_call.1} parent=11 // pred_check
          %p329 = pneg %p207
        $region38: #{tpu_custom_call.1} parent=11 // pred_check_branch
          %331 = sbr.rel (%p329) target = $region40
        $region39: #{tpu_custom_call.1} parent=11 // pred_region
          _
        $region40: #{tpu_custom_call.1} parent=11 // pred_fallthru
          _
        // Predicated region
        $region41: #{tpu_custom_call.1} parent=11 // pred_check
          %p332 = pneg %p228
        $region42: #{tpu_custom_call.1} parent=11 // pred_check_branch
          %334 = sbr.rel (%p332) target = $region44
        $region43: #{tpu_custom_call.1} parent=11 // pred_region
          _
        $region44: #{tpu_custom_call.1} parent=11 // pred_fallthru
          _
        // Predicated region
        $region45: #{tpu_custom_call.1} parent=11 // pred_check
          %p335 = pneg %p249
        $region46: #{tpu_custom_call.1} parent=11 // pred_check_branch
          %337 = sbr.rel (%p335) target = $region48
        $region47: #{tpu_custom_call.1} parent=11 // pred_region
          _
        $region48: #{tpu_custom_call.1} parent=11 // pred_fallthru
          _
        // Predicated region
        $region49: #{tpu_custom_call.1} parent=11 // pred_check
          %p338 = pneg %p270
        $region50: #{tpu_custom_call.1} parent=11 // pred_check_branch
          %340 = sbr.rel (%p338) target = $region52
        $region51: #{tpu_custom_call.1} parent=11 // pred_region
          _
        $region52: #{tpu_custom_call.1} parent=11 // pred_fallthru
          _
      $region12: #{tpu_custom_call.1} parent=5 // pred_fallthru
        _
      %p341 = scmp.lt.s32.totalorder %s20, 2
      // Predicated region
      $region53: #{tpu_custom_call.1} parent=5 // pred_check
        %p342 = pneg %p341
      $region54: #{tpu_custom_call.1} parent=5 // pred_check_branch
        %344 = sbr.rel (%p342) target = $region56
      $region55: #{tpu_custom_call.1} parent=5 // pred_region
        // Predicated region
        $region57: #{tpu_custom_call.1} parent=55 // pred_check
          %p345 = pneg %p54
        $region58: #{tpu_custom_call.1} parent=55 // pred_check_branch
          %347 = sbr.rel (%p345) target = $region60
        $region59: #{tpu_custom_call.1} parent=55 // pred_region
          %s348 = smul.u32 8, %s27
          %s349 = smul.u32 32, %s28
          %p350 = scmp.lt.s32.totalorder %s348, 15
          %s351 = scalar_select %p350, %s348, 15
          %p352 = scmp.lt.s32.totalorder %s349, 31
          %s353 = scalar_select %p352, %s349, 31
          %s354 = smul.addr %s351, 32
          %s355 = sadd.s32 %s353, %s354
          %s356 = smul.addr %s355, 4
          %s357 = scalar_lea.vmem %s0, %s356
          %s358 = smul.u32 8, %s27
          %s359 = smul.u32 32, %s28
        $region60: #{tpu_custom_call.1} parent=55 // pred_fallthru
          _
      $region56: #{tpu_custom_call.1} parent=5 // pred_fallthru
        _
      %p360 = scmp.le.s32.totalorder 1, %s20
      %p361 = scmp.lt.s32.totalorder %s20, 3
      %p362 = pnand %p360, %p361
      %p363 = pneg %p362
      // Predicated region
      $region61: #{tpu_custom_call.1} parent=5 // pred_check
        _
      $region62: #{tpu_custom_call.1} parent=5 // pred_check_branch
        %365 = sbr.rel (%p362) target = $region64
      $region63: #{tpu_custom_call.1} parent=5 // pred_region
        %s366 = ssub.s32 %s20, 1
        %s367 = smul.u32 8, %s29
        %s368 = smul.u32 32, %s30
        %p369 = scmp.lt.s32.totalorder %s367, 15
        %s370 = scalar_select %p369, %s367, 15
        %p371 = scmp.lt.s32.totalorder %s368, 31
        %s372 = scalar_select %p371, %s368, 31
        %s373 = smul.addr %s370, 32
        %s374 = sadd.s32 %s372, %s373
        %s375 = smul.addr %s374, 4
        %s376 = scalar_lea.vmem %s0, %s375
        %p377 = pneg %p60
        %p378 = pneg %p57
        %p379 = pneg %p81
        %p380 = pneg %p78
        %p381 = pneg %p102
        %p382 = pneg %p99
        %p383 = pneg %p123
        %p384 = pneg %p120
        %p385 = pneg %p144
        %p386 = pneg %p141
        %p387 = pneg %p165
        %p388 = pneg %p162
        %p389 = pneg %p186
        %p390 = pneg %p183
        %p391 = pneg %p207
        %p392 = pneg %p204
        %p393 = pneg %p228
        %p394 = pneg %p225
        %p395 = pneg %p249
        %p396 = pneg %p246
        %p397 = pneg %p270
        %p398 = pneg %p267
        %p399 = pneg %p296
        %p400 = pneg %p293
        %s401 = sand.u32 %s283, 1
        %s402 = scalar_lea.sflag [#allocation3], %s401
        %s403 = sand.u32 %s283, 1
        %s404 = smul.addr %s403, 8
        %s405 = scalar_lea.vmem [#allocation2], %s404
        %s406 = smul.u32 8, %s29
        %s407 = smul.u32 32, %s30
        %p408 = scmp.lt.s32.totalorder %s406, 15
        %s409 = scalar_select %p408, %s406, 15
        %p410 = scmp.lt.s32.totalorder %s407, 31
        %s411 = scalar_select %p410, %s407, 31
        %s412 = smul.addr %s409, 32
        %s413 = sadd.s32 %s411, %s412
        %s414 = smul.addr %s413, 4
        %s415 = scalar_lea.vmem %s0, %s414
        %s416 = smul.u32 8, %s29
        %s417 = smul.u32 32, %s30
        %v420 = vld [vmem:[%s415] sm:$0xf]
        %v421 = vld [vmem:[%s415 + $0x4] sm:$0xf]
        %v422 = vld [vmem:[%s415 + $0x8] sm:$0xf]
        %v423 = vld [vmem:[%s415 + $0xc] sm:$0xf]
        %v424 = vld [vmem:[%s415 + $0x10] sm:$0xf]
        %v425 = vld [vmem:[%s415 + $0x14] sm:$0xf]
        %v426 = vld [vmem:[%s415 + $0x18] sm:$0xf]
        %v427 = vld [vmem:[%s415 + $0x1c] sm:$0xf]
        %v428 = vld [vmem:[%s415 + $0x20] sm:$0xf]
        %v429 = vld [vmem:[%s415 + $0x24] sm:$0xf]
        %v430 = vld [vmem:[%s415 + $0x28] sm:$0xf]
        %v431 = vld [vmem:[%s415 + $0x2c] sm:$0xf]
        %v432 = vld [vmem:[%s415 + $0x30] sm:$0xf]
        %v433 = vld [vmem:[%s415 + $0x34] sm:$0xf]
        %v434 = vld [vmem:[%s415 + $0x38] sm:$0xf]
        %v435 = vld [vmem:[%s415 + $0x3c] sm:$0xf]
        %v436 = vld [vmem:[%s415 + $0x40] sm:$0xf]
        %v437 = vld [vmem:[%s415 + $0x44] sm:$0xf]
        %v438 = vld [vmem:[%s415 + $0x48] sm:$0xf]
        %v439 = vld [vmem:[%s415 + $0x4c] sm:$0xf]
        %v440 = vld [vmem:[%s415 + $0x50] sm:$0xf]
        %v441 = vld [vmem:[%s415 + $0x54] sm:$0xf]
        %v442 = vld [vmem:[%s415 + $0x58] sm:$0xf]
        %v443 = vld [vmem:[%s415 + $0x5c] sm:$0xf]
        %v444 = vld [vmem:[%s415 + $0x60] sm:$0xf]
        %v445 = vld [vmem:[%s415 + $0x64] sm:$0xf]
        %v446 = vld [vmem:[%s415 + $0x68] sm:$0xf]
        %v447 = vld [vmem:[%s415 + $0x6c] sm:$0xf]
        %v448 = vld [vmem:[%s415 + $0x70] sm:$0xf]
        %v449 = vld [vmem:[%s415 + $0x74] sm:$0xf]
        %v450 = vld [vmem:[%s415 + $0x78] sm:$0xf]
        %v451 = vld [vmem:[%s415 + $0x7c] sm:$0xf]
        %v452 = vld [vmem:[%s415 + $0x80] sm:$0xf]
        %v453 = vld [vmem:[%s415 + $0x84] sm:$0xf]
        %v454 = vld [vmem:[%s415 + $0x88] sm:$0xf]
        %v455 = vld [vmem:[%s415 + $0x8c] sm:$0xf]
        %v456 = vld [vmem:[%s415 + $0x90] sm:$0xf]
        %v457 = vld [vmem:[%s415 + $0x94] sm:$0xf]
        %v458 = vld [vmem:[%s415 + $0x98] sm:$0xf]
        %v459 = vld [vmem:[%s415 + $0x9c] sm:$0xf]
        %v460 = vld [vmem:[%s415 + $0xa0] sm:$0xf]
        %v461 = vld [vmem:[%s415 + $0xa4] sm:$0xf]
        %v462 = vld [vmem:[%s415 + $0xa8] sm:$0xf]
        %v463 = vld [vmem:[%s415 + $0xac] sm:$0xf]
        %v464 = vld [vmem:[%s415 + $0xb0] sm:$0xf]
        %v465 = vld [vmem:[%s415 + $0xb4] sm:$0xf]
        %v466 = vld [vmem:[%s415 + $0xb8] sm:$0xf]
        %v467 = vld [vmem:[%s415 + $0xbc] sm:$0xf]
        %v468 = vld [vmem:[%s415 + $0xc0] sm:$0xf]
        %v469 = vld [vmem:[%s415 + $0xc4] sm:$0xf]
        %v470 = vld [vmem:[%s415 + $0xc8] sm:$0xf]
        %v471 = vld [vmem:[%s415 + $0xcc] sm:$0xf]
        %v472 = vld [vmem:[%s415 + $0xd0] sm:$0xf]
        %v473 = vld [vmem:[%s415 + $0xd4] sm:$0xf]
        %v474 = vld [vmem:[%s415 + $0xd8] sm:$0xf]
        %v475 = vld [vmem:[%s415 + $0xdc] sm:$0xf]
        %v476 = vld [vmem:[%s415 + $0xe0] sm:$0xf]
        %v477 = vld [vmem:[%s415 + $0xe4] sm:$0xf]
        %v478 = vld [vmem:[%s415 + $0xe8] sm:$0xf]
        %v479 = vld [vmem:[%s415 + $0xec] sm:$0xf]
        %v480 = vld [vmem:[%s415 + $0xf0] sm:$0xf]
        %v481 = vld [vmem:[%s415 + $0xf4] sm:$0xf]
        %v482 = vld [vmem:[%s415 + $0xf8] sm:$0xf]
        %v483 = vld [vmem:[%s415 + $0xfc] sm:$0xf]
        %v484 = vld [vmem:[%s415 + $0x100] sm:$0xf]
        %v485 = vld [vmem:[%s415 + $0x104] sm:$0xf]
        %v486 = vld [vmem:[%s415 + $0x108] sm:$0xf]
        %v487 = vld [vmem:[%s415 + $0x10c] sm:$0xf]
        %v488 = vld [vmem:[%s415 + $0x110] sm:$0xf]
        %v489 = vld [vmem:[%s415 + $0x114] sm:$0xf]
        %v490 = vld [vmem:[%s415 + $0x118] sm:$0xf]
        %v491 = vld [vmem:[%s415 + $0x11c] sm:$0xf]
        %v492 = vld [vmem:[%s415 + $0x120] sm:$0xf]
        %v493 = vld [vmem:[%s415 + $0x124] sm:$0xf]
        %v494 = vld [vmem:[%s415 + $0x128] sm:$0xf]
        %v495 = vld [vmem:[%s415 + $0x12c] sm:$0xf]
        %v496 = vld [vmem:[%s415 + $0x130] sm:$0xf]
        %v497 = vld [vmem:[%s415 + $0x134] sm:$0xf]
        %v498 = vld [vmem:[%s415 + $0x138] sm:$0xf]
        %v499 = vld [vmem:[%s415 + $0x13c] sm:$0xf]
        %v500 = vld [vmem:[%s415 + $0x140] sm:$0xf]
        %v501 = vld [vmem:[%s415 + $0x144] sm:$0xf]
        %v502 = vld [vmem:[%s415 + $0x148] sm:$0xf]
        %v503 = vld [vmem:[%s415 + $0x14c] sm:$0xf]
        %v504 = vld [vmem:[%s415 + $0x150] sm:$0xf]
        %v505 = vld [vmem:[%s415 + $0x154] sm:$0xf]
        %v506 = vld [vmem:[%s415 + $0x158] sm:$0xf]
        %v507 = vld [vmem:[%s415 + $0x15c] sm:$0xf]
        %v508 = vld [vmem:[%s415 + $0x160] sm:$0xf]
        %v509 = vld [vmem:[%s415 + $0x164] sm:$0xf]
        %v510 = vld [vmem:[%s415 + $0x168] sm:$0xf]
        %v511 = vld [vmem:[%s415 + $0x16c] sm:$0xf]
        %v512 = vld [vmem:[%s415 + $0x170] sm:$0xf]
        %v513 = vld [vmem:[%s415 + $0x174] sm:$0xf]
        %v514 = vld [vmem:[%s415 + $0x178] sm:$0xf]
        %v515 = vld [vmem:[%s415 + $0x17c] sm:$0xf]
        %v516 = vld [vmem:[%s415 + $0x180] sm:$0xf]
        %v517 = vld [vmem:[%s415 + $0x184] sm:$0xf]
        %v518 = vld [vmem:[%s415 + $0x188] sm:$0xf]
        %v519 = vld [vmem:[%s415 + $0x18c] sm:$0xf]
        %v520 = vld [vmem:[%s415 + $0x190] sm:$0xf]
        %v521 = vld [vmem:[%s415 + $0x194] sm:$0xf]
        %v522 = vld [vmem:[%s415 + $0x198] sm:$0xf]
        %v523 = vld [vmem:[%s415 + $0x19c] sm:$0xf]
        %v524 = vld [vmem:[%s415 + $0x1a0] sm:$0xf]
        %v525 = vld [vmem:[%s415 + $0x1a4] sm:$0xf]
        %v526 = vld [vmem:[%s415 + $0x1a8] sm:$0xf]
        %v527 = vld [vmem:[%s415 + $0x1ac] sm:$0xf]
        %v528 = vld [vmem:[%s415 + $0x1b0] sm:$0xf]
        %v529 = vld [vmem:[%s415 + $0x1b4] sm:$0xf]
        %v530 = vld [vmem:[%s415 + $0x1b8] sm:$0xf]
        %v531 = vld [vmem:[%s415 + $0x1bc] sm:$0xf]
        %v532 = vld [vmem:[%s415 + $0x1c0] sm:$0xf]
        %v533 = vld [vmem:[%s415 + $0x1c4] sm:$0xf]
        %v534 = vld [vmem:[%s415 + $0x1c8] sm:$0xf]
        %v535 = vld [vmem:[%s415 + $0x1cc] sm:$0xf]
        %v536 = vld [vmem:[%s415 + $0x1d0] sm:$0xf]
        %v537 = vld [vmem:[%s415 + $0x1d4] sm:$0xf]
        %v538 = vld [vmem:[%s415 + $0x1d8] sm:$0xf]
        %v539 = vld [vmem:[%s415 + $0x1dc] sm:$0xf]
        %v540 = vld [vmem:[%s415 + $0x1e0] sm:$0xf]
        %v541 = vld [vmem:[%s415 + $0x1e4] sm:$0xf]
        %v542 = vld [vmem:[%s415 + $0x1e8] sm:$0xf]
        %v543 = vld [vmem:[%s415 + $0x1ec] sm:$0xf]
        %v544 = vld [vmem:[%s415 + $0x1f0] sm:$0xf]
        %v545 = vld [vmem:[%s415 + $0x1f4] sm:$0xf]
        %v546 = vld [vmem:[%s415 + $0x1f8] sm:$0xf]
        %v547 = vld [vmem:[%s415 + $0x1fc] sm:$0xf]
        %v548 = vld [vmem:[%s415 + $0x200] sm:$0xf]
        %v549 = vld [vmem:[%s415 + $0x204] sm:$0xf]
        %v550 = vld [vmem:[%s415 + $0x208] sm:$0xf]
        %v551 = vld [vmem:[%s415 + $0x20c] sm:$0xf]
        %v552 = vld [vmem:[%s415 + $0x210] sm:$0xf]
        %v553 = vld [vmem:[%s415 + $0x214] sm:$0xf]
        %v554 = vld [vmem:[%s415 + $0x218] sm:$0xf]
        %v555 = vld [vmem:[%s415 + $0x21c] sm:$0xf]
        %v556 = vld [vmem:[%s415 + $0x220] sm:$0xf]
        %v557 = vld [vmem:[%s415 + $0x224] sm:$0xf]
        %v558 = vld [vmem:[%s415 + $0x228] sm:$0xf]
        %v559 = vld [vmem:[%s415 + $0x22c] sm:$0xf]
        %v560 = vld [vmem:[%s415 + $0x230] sm:$0xf]
        %v561 = vld [vmem:[%s415 + $0x234] sm:$0xf]
        %v562 = vld [vmem:[%s415 + $0x238] sm:$0xf]
        %v563 = vld [vmem:[%s415 + $0x23c] sm:$0xf]
        %v564 = vld [vmem:[%s415 + $0x240] sm:$0xf]
        %v565 = vld [vmem:[%s415 + $0x244] sm:$0xf]
        %v566 = vld [vmem:[%s415 + $0x248] sm:$0xf]
        %v567 = vld [vmem:[%s415 + $0x24c] sm:$0xf]
        %v568 = vld [vmem:[%s415 + $0x250] sm:$0xf]
        %v569 = vld [vmem:[%s415 + $0x254] sm:$0xf]
        %v570 = vld [vmem:[%s415 + $0x258] sm:$0xf]
        %v571 = vld [vmem:[%s415 + $0x25c] sm:$0xf]
        %v572 = vld [vmem:[%s415 + $0x260] sm:$0xf]
        %v573 = vld [vmem:[%s415 + $0x264] sm:$0xf]
        %v574 = vld [vmem:[%s415 + $0x268] sm:$0xf]
        %v575 = vld [vmem:[%s415 + $0x26c] sm:$0xf]
        %v576 = vld [vmem:[%s415 + $0x270] sm:$0xf]
        %v577 = vld [vmem:[%s415 + $0x274] sm:$0xf]
        %v578 = vld [vmem:[%s415 + $0x278] sm:$0xf]
        %v579 = vld [vmem:[%s415 + $0x27c] sm:$0xf]
        %v580 = vld [vmem:[%s415 + $0x280] sm:$0xf]
        %v581 = vld [vmem:[%s415 + $0x284] sm:$0xf]
        %v582 = vld [vmem:[%s415 + $0x288] sm:$0xf]
        %v583 = vld [vmem:[%s415 + $0x28c] sm:$0xf]
        %v584 = vld [vmem:[%s415 + $0x290] sm:$0xf]
        %v585 = vld [vmem:[%s415 + $0x294] sm:$0xf]
        %v586 = vld [vmem:[%s415 + $0x298] sm:$0xf]
        %v587 = vld [vmem:[%s415 + $0x29c] sm:$0xf]
        %v588 = vld [vmem:[%s415 + $0x2a0] sm:$0xf]
        %v589 = vld [vmem:[%s415 + $0x2a4] sm:$0xf]
        %v590 = vld [vmem:[%s415 + $0x2a8] sm:$0xf]
        %v591 = vld [vmem:[%s415 + $0x2ac] sm:$0xf]
        %v592 = vld [vmem:[%s415 + $0x2b0] sm:$0xf]
        %v593 = vld [vmem:[%s415 + $0x2b4] sm:$0xf]
        %v594 = vld [vmem:[%s415 + $0x2b8] sm:$0xf]
        %v595 = vld [vmem:[%s415 + $0x2bc] sm:$0xf]
        %v596 = vld [vmem:[%s415 + $0x2c0] sm:$0xf]
        %v597 = vld [vmem:[%s415 + $0x2c4] sm:$0xf]
        %v598 = vld [vmem:[%s415 + $0x2c8] sm:$0xf]
        %v599 = vld [vmem:[%s415 + $0x2cc] sm:$0xf]
        %v600 = vld [vmem:[%s415 + $0x2d0] sm:$0xf]
        %v601 = vld [vmem:[%s415 + $0x2d4] sm:$0xf]
        %v602 = vld [vmem:[%s415 + $0x2d8] sm:$0xf]
        %v603 = vld [vmem:[%s415 + $0x2dc] sm:$0xf]
        %v604 = vld [vmem:[%s415 + $0x2e0] sm:$0xf]
        %v605 = vld [vmem:[%s415 + $0x2e4] sm:$0xf]
        %v606 = vld [vmem:[%s415 + $0x2e8] sm:$0xf]
        %v607 = vld [vmem:[%s415 + $0x2ec] sm:$0xf]
        %v608 = vld [vmem:[%s415 + $0x2f0] sm:$0xf]
        %v609 = vld [vmem:[%s415 + $0x2f4] sm:$0xf]
        %v610 = vld [vmem:[%s415 + $0x2f8] sm:$0xf]
        %v611 = vld [vmem:[%s415 + $0x2fc] sm:$0xf]
        %v612 = vld [vmem:[%s415 + $0x300] sm:$0xf]
        %v613 = vld [vmem:[%s415 + $0x304] sm:$0xf]
        %v614 = vld [vmem:[%s415 + $0x308] sm:$0xf]
        %v615 = vld [vmem:[%s415 + $0x30c] sm:$0xf]
        %v616 = vld [vmem:[%s415 + $0x310] sm:$0xf]
        %v617 = vld [vmem:[%s415 + $0x314] sm:$0xf]
        %v618 = vld [vmem:[%s415 + $0x318] sm:$0xf]
        %v619 = vld [vmem:[%s415 + $0x31c] sm:$0xf]
        %v620 = vld [vmem:[%s415 + $0x320] sm:$0xf]
        %v621 = vld [vmem:[%s415 + $0x324] sm:$0xf]
        %v622 = vld [vmem:[%s415 + $0x328] sm:$0xf]
        %v623 = vld [vmem:[%s415 + $0x32c] sm:$0xf]
        %v624 = vld [vmem:[%s415 + $0x330] sm:$0xf]
        %v625 = vld [vmem:[%s415 + $0x334] sm:$0xf]
        %v626 = vld [vmem:[%s415 + $0x338] sm:$0xf]
        %v627 = vld [vmem:[%s415 + $0x33c] sm:$0xf]
        %v628 = vld [vmem:[%s415 + $0x340] sm:$0xf]
        %v629 = vld [vmem:[%s415 + $0x344] sm:$0xf]
        %v630 = vld [vmem:[%s415 + $0x348] sm:$0xf]
        %v631 = vld [vmem:[%s415 + $0x34c] sm:$0xf]
        %v632 = vld [vmem:[%s415 + $0x350] sm:$0xf]
        %v633 = vld [vmem:[%s415 + $0x354] sm:$0xf]
        %v634 = vld [vmem:[%s415 + $0x358] sm:$0xf]
        %v635 = vld [vmem:[%s415 + $0x35c] sm:$0xf]
        %v636 = vld [vmem:[%s415 + $0x360] sm:$0xf]
        %v637 = vld [vmem:[%s415 + $0x364] sm:$0xf]
        %v638 = vld [vmem:[%s415 + $0x368] sm:$0xf]
        %v639 = vld [vmem:[%s415 + $0x36c] sm:$0xf]
        %v640 = vld [vmem:[%s415 + $0x370] sm:$0xf]
        %v641 = vld [vmem:[%s415 + $0x374] sm:$0xf]
        %v642 = vld [vmem:[%s415 + $0x378] sm:$0xf]
        %v643 = vld [vmem:[%s415 + $0x37c] sm:$0xf]
        %v644 = vld [vmem:[%s415 + $0x380] sm:$0xf]
        %v645 = vld [vmem:[%s415 + $0x384] sm:$0xf]
        %v646 = vld [vmem:[%s415 + $0x388] sm:$0xf]
        %v647 = vld [vmem:[%s415 + $0x38c] sm:$0xf]
        %v648 = vld [vmem:[%s415 + $0x390] sm:$0xf]
        %v649 = vld [vmem:[%s415 + $0x394] sm:$0xf]
        %v650 = vld [vmem:[%s415 + $0x398] sm:$0xf]
        %v651 = vld [vmem:[%s415 + $0x39c] sm:$0xf]
        %v652 = vld [vmem:[%s415 + $0x3a0] sm:$0xf]
        %v653 = vld [vmem:[%s415 + $0x3a4] sm:$0xf]
        %v654 = vld [vmem:[%s415 + $0x3a8] sm:$0xf]
        %v655 = vld [vmem:[%s415 + $0x3ac] sm:$0xf]
        %v656 = vld [vmem:[%s415 + $0x3b0] sm:$0xf]
        %v657 = vld [vmem:[%s415 + $0x3b4] sm:$0xf]
        %v658 = vld [vmem:[%s415 + $0x3b8] sm:$0xf]
        %v659 = vld [vmem:[%s415 + $0x3bc] sm:$0xf]
        %v660 = vld [vmem:[%s415 + $0x3c0] sm:$0xf]
        %v661 = vld [vmem:[%s415 + $0x3c4] sm:$0xf]
        %v662 = vld [vmem:[%s415 + $0x3c8] sm:$0xf]
        %v663 = vld [vmem:[%s415 + $0x3cc] sm:$0xf]
        %v664 = vld [vmem:[%s415 + $0x3d0] sm:$0xf]
        %v665 = vld [vmem:[%s415 + $0x3d4] sm:$0xf]
        %v666 = vld [vmem:[%s415 + $0x3d8] sm:$0xf]
        %v667 = vld [vmem:[%s415 + $0x3dc] sm:$0xf]
        %v668 = vld [vmem:[%s415 + $0x3e0] sm:$0xf]
        %v669 = vld [vmem:[%s415 + $0x3e4] sm:$0xf]
        %v670 = vld [vmem:[%s415 + $0x3e8] sm:$0xf]
        %v671 = vld [vmem:[%s415 + $0x3ec] sm:$0xf]
        %v672 = vld [vmem:[%s415 + $0x3f0] sm:$0xf]
        %v673 = vld [vmem:[%s415 + $0x3f4] sm:$0xf]
        %v674 = vld [vmem:[%s415 + $0x3f8] sm:$0xf]
        %v675 = vld [vmem:[%s415 + $0x3fc] sm:$0xf]
        %v676 = vld [vmem:[%s1] sm:$0xf]
        %v677 = vld [vmem:[%s2] sm:$0x1]
        %v679 = vlaneseq
        %v680 = vshrl.u32 %v679, 7
        %v681 = vsub.s32 0, %v680
        %v682 = vrot.slane %v677, %v681
        %v940 = vunpack.c.l.b16 %v420
        %v941 = vunpack.c.l.b16 %v421
        %v942 = vunpack.c.l.b16 %v422
        %v943 = vunpack.c.l.b16 %v423
        %v944 = vunpack.c.l.b16 %v424
        %v945 = vunpack.c.l.b16 %v425
        %v946 = vunpack.c.l.b16 %v426
        %v947 = vunpack.c.l.b16 %v427
        %v948 = vunpack.c.l.b16 %v428
        %v949 = vunpack.c.l.b16 %v429
        %v950 = vunpack.c.l.b16 %v430
        %v951 = vunpack.c.l.b16 %v431
        %v952 = vunpack.c.l.b16 %v432
        %v953 = vunpack.c.l.b16 %v433
        %v954 = vunpack.c.l.b16 %v434
        %v955 = vunpack.c.l.b16 %v435
        %v956 = vunpack.c.l.b16 %v436
        %v957 = vunpack.c.l.b16 %v437
        %v958 = vunpack.c.l.b16 %v438
        %v959 = vunpack.c.l.b16 %v439
        %v960 = vunpack.c.l.b16 %v440
        %v961 = vunpack.c.l.b16 %v441
        %v962 = vunpack.c.l.b16 %v442
        %v963 = vunpack.c.l.b16 %v443
        %v964 = vunpack.c.l.b16 %v444
        %v965 = vunpack.c.l.b16 %v445
        %v966 = vunpack.c.l.b16 %v446
        %v967 = vunpack.c.l.b16 %v447
        %v968 = vunpack.c.l.b16 %v448
        %v969 = vunpack.c.l.b16 %v449
        %v970 = vunpack.c.l.b16 %v450
        %v971 = vunpack.c.l.b16 %v451
        %v972 = vunpack.c.l.b16 %v452
        %v973 = vunpack.c.l.b16 %v453
        %v974 = vunpack.c.l.b16 %v454
        %v975 = vunpack.c.l.b16 %v455
        %v976 = vunpack.c.l.b16 %v456
        %v977 = vunpack.c.l.b16 %v457
        %v978 = vunpack.c.l.b16 %v458
        %v979 = vunpack.c.l.b16 %v459
        %v980 = vunpack.c.l.b16 %v460
        %v981 = vunpack.c.l.b16 %v461
        %v982 = vunpack.c.l.b16 %v462
        %v983 = vunpack.c.l.b16 %v463
        %v984 = vunpack.c.l.b16 %v464
        %v985 = vunpack.c.l.b16 %v465
        %v986 = vunpack.c.l.b16 %v466
        %v987 = vunpack.c.l.b16 %v467
        %v988 = vunpack.c.l.b16 %v468
        %v989 = vunpack.c.l.b16 %v469
        %v990 = vunpack.c.l.b16 %v470
        %v991 = vunpack.c.l.b16 %v471
        %v992 = vunpack.c.l.b16 %v472
        %v993 = vunpack.c.l.b16 %v473
        %v994 = vunpack.c.l.b16 %v474
        %v995 = vunpack.c.l.b16 %v475
        %v996 = vunpack.c.l.b16 %v476
        %v997 = vunpack.c.l.b16 %v477
        %v998 = vunpack.c.l.b16 %v478
        %v999 = vunpack.c.l.b16 %v479
        %v1000 = vunpack.c.l.b16 %v480
        %v1001 = vunpack.c.l.b16 %v481
        %v1002 = vunpack.c.l.b16 %v482
        %v1003 = vunpack.c.l.b16 %v483
        %v1004 = vunpack.c.l.b16 %v484
        %v1005 = vunpack.c.l.b16 %v485
        %v1006 = vunpack.c.l.b16 %v486
        %v1007 = vunpack.c.l.b16 %v487
        %v1008 = vunpack.c.l.b16 %v488
        %v1009 = vunpack.c.l.b16 %v489
        %v1010 = vunpack.c.l.b16 %v490
        %v1011 = vunpack.c.l.b16 %v491
        %v1012 = vunpack.c.l.b16 %v492
        %v1013 = vunpack.c.l.b16 %v493
        %v1014 = vunpack.c.l.b16 %v494
        %v1015 = vunpack.c.l.b16 %v495
        %v1016 = vunpack.c.l.b16 %v496
        %v1017 = vunpack.c.l.b16 %v497
        %v1018 = vunpack.c.l.b16 %v498
        %v1019 = vunpack.c.l.b16 %v499
        %v1020 = vunpack.c.l.b16 %v500
        %v1021 = vunpack.c.l.b16 %v501
        %v1022 = vunpack.c.l.b16 %v502
        %v1023 = vunpack.c.l.b16 %v503
        %v1024 = vunpack.c.l.b16 %v504
        %v1025 = vunpack.c.l.b16 %v505
        %v1026 = vunpack.c.l.b16 %v506
        %v1027 = vunpack.c.l.b16 %v507
        %v1028 = vunpack.c.l.b16 %v508
        %v1029 = vunpack.c.l.b16 %v509
        %v1030 = vunpack.c.l.b16 %v510
        %v1031 = vunpack.c.l.b16 %v511
        %v1032 = vunpack.c.l.b16 %v512
        %v1033 = vunpack.c.l.b16 %v513
        %v1034 = vunpack.c.l.b16 %v514
        %v1035 = vunpack.c.l.b16 %v515
        %v1036 = vunpack.c.l.b16 %v516
        %v1037 = vunpack.c.l.b16 %v517
        %v1038 = vunpack.c.l.b16 %v518
        %v1039 = vunpack.c.l.b16 %v519
        %v1040 = vunpack.c.l.b16 %v520
        %v1041 = vunpack.c.l.b16 %v521
        %v1042 = vunpack.c.l.b16 %v522
        %v1043 = vunpack.c.l.b16 %v523
        %v1044 = vunpack.c.l.b16 %v524
        %v1045 = vunpack.c.l.b16 %v525
        %v1046 = vunpack.c.l.b16 %v526
        %v1047 = vunpack.c.l.b16 %v527
        %v1048 = vunpack.c.l.b16 %v528
        %v1049 = vunpack.c.l.b16 %v529
        %v1050 = vunpack.c.l.b16 %v530
        %v1051 = vunpack.c.l.b16 %v531
        %v1052 = vunpack.c.l.b16 %v532
        %v1053 = vunpack.c.l.b16 %v533
        %v1054 = vunpack.c.l.b16 %v534
        %v1055 = vunpack.c.l.b16 %v535
        %v1056 = vunpack.c.l.b16 %v536
        %v1057 = vunpack.c.l.b16 %v537
        %v1058 = vunpack.c.l.b16 %v538
        %v1059 = vunpack.c.l.b16 %v539
        %v1060 = vunpack.c.l.b16 %v540
        %v1061 = vunpack.c.l.b16 %v541
        %v1062 = vunpack.c.l.b16 %v542
        %v1063 = vunpack.c.l.b16 %v543
        %v1064 = vunpack.c.l.b16 %v544
        %v1065 = vunpack.c.l.b16 %v545
        %v1066 = vunpack.c.l.b16 %v546
        %v1067 = vunpack.c.l.b16 %v547
        %v1068 = vunpack.c.l.b16 %v548
        %v1069 = vunpack.c.l.b16 %v549
        %v1070 = vunpack.c.l.b16 %v550
        %v1071 = vunpack.c.l.b16 %v551
        %v1072 = vunpack.c.l.b16 %v552
        %v1073 = vunpack.c.l.b16 %v553
        %v1074 = vunpack.c.l.b16 %v554
        %v1075 = vunpack.c.l.b16 %v555
        %v1076 = vunpack.c.l.b16 %v556
        %v1077 = vunpack.c.l.b16 %v557
        %v1078 = vunpack.c.l.b16 %v558
        %v1079 = vunpack.c.l.b16 %v559
        %v1080 = vunpack.c.l.b16 %v560
        %v1081 = vunpack.c.l.b16 %v561
        %v1082 = vunpack.c.l.b16 %v562
        %v1083 = vunpack.c.l.b16 %v563
        %v1084 = vunpack.c.l.b16 %v564
        %v1085 = vunpack.c.l.b16 %v565
        %v1086 = vunpack.c.l.b16 %v566
        %v1087 = vunpack.c.l.b16 %v567
        %v1088 = vunpack.c.l.b16 %v568
        %v1089 = vunpack.c.l.b16 %v569
        %v1090 = vunpack.c.l.b16 %v570
        %v1091 = vunpack.c.l.b16 %v571
        %v1092 = vunpack.c.l.b16 %v572
        %v1093 = vunpack.c.l.b16 %v573
        %v1094 = vunpack.c.l.b16 %v574
        %v1095 = vunpack.c.l.b16 %v575
        %v1096 = vunpack.c.l.b16 %v576
        %v1097 = vunpack.c.l.b16 %v577
        %v1098 = vunpack.c.l.b16 %v578
        %v1099 = vunpack.c.l.b16 %v579
        %v1100 = vunpack.c.l.b16 %v580
        %v1101 = vunpack.c.l.b16 %v581
        %v1102 = vunpack.c.l.b16 %v582
        %v1103 = vunpack.c.l.b16 %v583
        %v1104 = vunpack.c.l.b16 %v584
        %v1105 = vunpack.c.l.b16 %v585
        %v1106 = vunpack.c.l.b16 %v586
        %v1107 = vunpack.c.l.b16 %v587
        %v1108 = vunpack.c.l.b16 %v588
        %v1109 = vunpack.c.l.b16 %v589
        %v1110 = vunpack.c.l.b16 %v590
        %v1111 = vunpack.c.l.b16 %v591
        %v1112 = vunpack.c.l.b16 %v592
        %v1113 = vunpack.c.l.b16 %v593
        %v1114 = vunpack.c.l.b16 %v594
        %v1115 = vunpack.c.l.b16 %v595
        %v1116 = vunpack.c.l.b16 %v596
        %v1117 = vunpack.c.l.b16 %v597
        %v1118 = vunpack.c.l.b16 %v598
        %v1119 = vunpack.c.l.b16 %v599
        %v1120 = vunpack.c.l.b16 %v600
        %v1121 = vunpack.c.l.b16 %v601
        %v1122 = vunpack.c.l.b16 %v602
        %v1123 = vunpack.c.l.b16 %v603
        %v1124 = vunpack.c.l.b16 %v604
        %v1125 = vunpack.c.l.b16 %v605
        %v1126 = vunpack.c.l.b16 %v606
        %v1127 = vunpack.c.l.b16 %v607
        %v1128 = vunpack.c.l.b16 %v608
        %v1129 = vunpack.c.l.b16 %v609
        %v1130 = vunpack.c.l.b16 %v610
        %v1131 = vunpack.c.l.b16 %v611
        %v1132 = vunpack.c.l.b16 %v612
        %v1133 = vunpack.c.l.b16 %v613
        %v1134 = vunpack.c.l.b16 %v614
        %v1135 = vunpack.c.l.b16 %v615
        %v1136 = vunpack.c.l.b16 %v616
        %v1137 = vunpack.c.l.b16 %v617
        %v1138 = vunpack.c.l.b16 %v618
        %v1139 = vunpack.c.l.b16 %v619
        %v1140 = vunpack.c.l.b16 %v620
        %v1141 = vunpack.c.l.b16 %v621
        %v1142 = vunpack.c.l.b16 %v622
        %v1143 = vunpack.c.l.b16 %v623
        %v1144 = vunpack.c.l.b16 %v624
        %v1145 = vunpack.c.l.b16 %v625
        %v1146 = vunpack.c.l.b16 %v626
        %v1147 = vunpack.c.l.b16 %v627
        %v1148 = vunpack.c.l.b16 %v628
        %v1149 = vunpack.c.l.b16 %v629
        %v1150 = vunpack.c.l.b16 %v630
        %v1151 = vunpack.c.l.b16 %v631
        %v1152 = vunpack.c.l.b16 %v632
        %v1153 = vunpack.c.l.b16 %v633
        %v1154 = vunpack.c.l.b16 %v634
        %v1155 = vunpack.c.l.b16 %v635
        %v1156 = vunpack.c.l.b16 %v636
        %v1157 = vunpack.c.l.b16 %v637
        %v1158 = vunpack.c.l.b16 %v638
        %v1159 = vunpack.c.l.b16 %v639
        %v1160 = vunpack.c.l.b16 %v640
        %v1161 = vunpack.c.l.b16 %v641
        %v1162 = vunpack.c.l.b16 %v642
        %v1163 = vunpack.c.l.b16 %v643
        %v1164 = vunpack.c.l.b16 %v644
        %v1165 = vunpack.c.l.b16 %v645
        %v1166 = vunpack.c.l.b16 %v646
        %v1167 = vunpack.c.l.b16 %v647
        %v1168 = vunpack.c.l.b16 %v648
        %v1169 = vunpack.c.l.b16 %v649
        %v1170 = vunpack.c.l.b16 %v650
        %v1171 = vunpack.c.l.b16 %v651
        %v1172 = vunpack.c.l.b16 %v652
        %v1173 = vunpack.c.l.b16 %v653
        %v1174 = vunpack.c.l.b16 %v654
        %v1175 = vunpack.c.l.b16 %v655
        %v1176 = vunpack.c.l.b16 %v656
        %v1177 = vunpack.c.l.b16 %v657
        %v1178 = vunpack.c.l.b16 %v658
        %v1179 = vunpack.c.l.b16 %v659
        %v1180 = vunpack.c.l.b16 %v660
        %v1181 = vunpack.c.l.b16 %v661
        %v1182 = vunpack.c.l.b16 %v662
        %v1183 = vunpack.c.l.b16 %v663
        %v1184 = vunpack.c.l.b16 %v664
        %v1185 = vunpack.c.l.b16 %v665
        %v1186 = vunpack.c.l.b16 %v666
        %v1187 = vunpack.c.l.b16 %v667
        %v1188 = vunpack.c.l.b16 %v668
        %v1189 = vunpack.c.l.b16 %v669
        %v1190 = vunpack.c.l.b16 %v670
        %v1191 = vunpack.c.l.b16 %v671
        %v1192 = vunpack.c.l.b16 %v672
        %v1193 = vunpack.c.l.b16 %v673
        %v1194 = vunpack.c.l.b16 %v674
        %v1195 = vunpack.c.l.b16 %v675
        %v1196 = vpack.c.b16 %v941, %v940
        %v1197 = vpack.c.b16 %v943, %v942
        %v1198 = vpack.c.b16 %v945, %v944
        %v1199 = vpack.c.b16 %v947, %v946
        %v1200 = vpack.c.b16 %v949, %v948
        %v1201 = vpack.c.b16 %v951, %v950
        %v1202 = vpack.c.b16 %v953, %v952
        %v1203 = vpack.c.b16 %v955, %v954
        %v1204 = vpack.c.b16 %v957, %v956
        %v1205 = vpack.c.b16 %v959, %v958
        %v1206 = vpack.c.b16 %v961, %v960
        %v1207 = vpack.c.b16 %v963, %v962
        %v1208 = vpack.c.b16 %v965, %v964
        %v1209 = vpack.c.b16 %v967, %v966
        %v1210 = vpack.c.b16 %v969, %v968
        %v1211 = vpack.c.b16 %v971, %v970
        %v1212 = vpack.c.b16 %v973, %v972
        %v1213 = vpack.c.b16 %v975, %v974
        %v1214 = vpack.c.b16 %v977, %v976
        %v1215 = vpack.c.b16 %v979, %v978
        %v1216 = vpack.c.b16 %v981, %v980
        %v1217 = vpack.c.b16 %v983, %v982
        %v1218 = vpack.c.b16 %v985, %v984
        %v1219 = vpack.c.b16 %v987, %v986
        %v1220 = vpack.c.b16 %v989, %v988
        %v1221 = vpack.c.b16 %v991, %v990
        %v1222 = vpack.c.b16 %v993, %v992
        %v1223 = vpack.c.b16 %v995, %v994
        %v1224 = vpack.c.b16 %v997, %v996
        %v1225 = vpack.c.b16 %v999, %v998
        %v1226 = vpack.c.b16 %v1001, %v1000
        %v1227 = vpack.c.b16 %v1003, %v1002
        %v1228 = vpack.c.b16 %v1005, %v1004
        %v1229 = vpack.c.b16 %v1007, %v1006
        %v1230 = vpack.c.b16 %v1009, %v1008
        %v1231 = vpack.c.b16 %v1011, %v1010
        %v1232 = vpack.c.b16 %v1013, %v1012
        %v1233 = vpack.c.b16 %v1015, %v1014
        %v1234 = vpack.c.b16 %v1017, %v1016
        %v1235 = vpack.c.b16 %v1019, %v1018
        %v1236 = vpack.c.b16 %v1021, %v1020
        %v1237 = vpack.c.b16 %v1023, %v1022
        %v1238 = vpack.c.b16 %v1025, %v1024
        %v1239 = vpack.c.b16 %v1027, %v1026
        %v1240 = vpack.c.b16 %v1029, %v1028
        %v1241 = vpack.c.b16 %v1031, %v1030
        %v1242 = vpack.c.b16 %v1033, %v1032
        %v1243 = vpack.c.b16 %v1035, %v1034
        %v1244 = vpack.c.b16 %v1037, %v1036
        %v1245 = vpack.c.b16 %v1039, %v1038
        %v1246 = vpack.c.b16 %v1041, %v1040
        %v1247 = vpack.c.b16 %v1043, %v1042
        %v1248 = vpack.c.b16 %v1045, %v1044
        %v1249 = vpack.c.b16 %v1047, %v1046
        %v1250 = vpack.c.b16 %v1049, %v1048
        %v1251 = vpack.c.b16 %v1051, %v1050
        %v1252 = vpack.c.b16 %v1053, %v1052
        %v1253 = vpack.c.b16 %v1055, %v1054
        %v1254 = vpack.c.b16 %v1057, %v1056
        %v1255 = vpack.c.b16 %v1059, %v1058
        %v1256 = vpack.c.b16 %v1061, %v1060
        %v1257 = vpack.c.b16 %v1063, %v1062
        %v1258 = vpack.c.b16 %v1065, %v1064
        %v1259 = vpack.c.b16 %v1067, %v1066
        %v1260 = vpack.c.b16 %v1069, %v1068
        %v1261 = vpack.c.b16 %v1071, %v1070
        %v1262 = vpack.c.b16 %v1073, %v1072
        %v1263 = vpack.c.b16 %v1075, %v1074
        %v1264 = vpack.c.b16 %v1077, %v1076
        %v1265 = vpack.c.b16 %v1079, %v1078
        %v1266 = vpack.c.b16 %v1081, %v1080
        %v1267 = vpack.c.b16 %v1083, %v1082
        %v1268 = vpack.c.b16 %v1085, %v1084
        %v1269 = vpack.c.b16 %v1087, %v1086
        %v1270 = vpack.c.b16 %v1089, %v1088
        %v1271 = vpack.c.b16 %v1091, %v1090
        %v1272 = vpack.c.b16 %v1093, %v1092
        %v1273 = vpack.c.b16 %v1095, %v1094
        %v1274 = vpack.c.b16 %v1097, %v1096
        %v1275 = vpack.c.b16 %v1099, %v1098
        %v1276 = vpack.c.b16 %v1101, %v1100
        %v1277 = vpack.c.b16 %v1103, %v1102
        %v1278 = vpack.c.b16 %v1105, %v1104
        %v1279 = vpack.c.b16 %v1107, %v1106
        %v1280 = vpack.c.b16 %v1109, %v1108
        %v1281 = vpack.c.b16 %v1111, %v1110
        %v1282 = vpack.c.b16 %v1113, %v1112
        %v1283 = vpack.c.b16 %v1115, %v1114
        %v1284 = vpack.c.b16 %v1117, %v1116
        %v1285 = vpack.c.b16 %v1119, %v1118
        %v1286 = vpack.c.b16 %v1121, %v1120
        %v1287 = vpack.c.b16 %v1123, %v1122
        %v1288 = vpack.c.b16 %v1125, %v1124
        %v1289 = vpack.c.b16 %v1127, %v1126
        %v1290 = vpack.c.b16 %v1129, %v1128
        %v1291 = vpack.c.b16 %v1131, %v1130
        %v1292 = vpack.c.b16 %v1133, %v1132
        %v1293 = vpack.c.b16 %v1135, %v1134
        %v1294 = vpack.c.b16 %v1137, %v1136
        %v1295 = vpack.c.b16 %v1139, %v1138
        %v1296 = vpack.c.b16 %v1141, %v1140
        %v1297 = vpack.c.b16 %v1143, %v1142
        %v1298 = vpack.c.b16 %v1145, %v1144
        %v1299 = vpack.c.b16 %v1147, %v1146
        %v1300 = vpack.c.b16 %v1149, %v1148
        %v1301 = vpack.c.b16 %v1151, %v1150
        %v1302 = vpack.c.b16 %v1153, %v1152
        %v1303 = vpack.c.b16 %v1155, %v1154
        %v1304 = vpack.c.b16 %v1157, %v1156
        %v1305 = vpack.c.b16 %v1159, %v1158
        %v1306 = vpack.c.b16 %v1161, %v1160
        %v1307 = vpack.c.b16 %v1163, %v1162
        %v1308 = vpack.c.b16 %v1165, %v1164
        %v1309 = vpack.c.b16 %v1167, %v1166
        %v1310 = vpack.c.b16 %v1169, %v1168
        %v1311 = vpack.c.b16 %v1171, %v1170
        %v1312 = vpack.c.b16 %v1173, %v1172
        %v1313 = vpack.c.b16 %v1175, %v1174
        %v1314 = vpack.c.b16 %v1177, %v1176
        %v1315 = vpack.c.b16 %v1179, %v1178
        %v1316 = vpack.c.b16 %v1181, %v1180
        %v1317 = vpack.c.b16 %v1183, %v1182
        %v1318 = vpack.c.b16 %v1185, %v1184
        %v1319 = vpack.c.b16 %v1187, %v1186
        %v1320 = vpack.c.b16 %v1189, %v1188
        %v1321 = vpack.c.b16 %v1191, %v1190
        %v1322 = vpack.c.b16 %v1193, %v1192
        %v1323 = vpack.c.b16 %v1195, %v1194
        %vm1324 = vcmask 64512
        %v1326 = vsel %vm1324, %v1196, 0
        %v1329 = vsel %vm1324, %v1197, 0
        %v1332 = vsel %vm1324, %v1198, 0
        %v1335 = vsel %vm1324, %v1199, 0
        %v1338 = vsel %vm1324, %v1200, 0
        %v1341 = vsel %vm1324, %v1201, 0
        %v1344 = vsel %vm1324, %v1202, 0
        %v1347 = vsel %vm1324, %v1203, 0
        %v1350 = vsel %vm1324, %v1204, 0
        %v1353 = vsel %vm1324, %v1205, 0
        %v1356 = vsel %vm1324, %v1206, 0
        %v1359 = vsel %vm1324, %v1207, 0
        %v1362 = vsel %vm1324, %v1208, 0
        %v1365 = vsel %vm1324, %v1209, 0
        %v1368 = vsel %vm1324, %v1210, 0
        %v1371 = vsel %vm1324, %v1211, 0
        %v1374 = vsel %vm1324, %v1212, 0
        %v1377 = vsel %vm1324, %v1213, 0
        %v1380 = vsel %vm1324, %v1214, 0
        %v1383 = vsel %vm1324, %v1215, 0
        %v1386 = vsel %vm1324, %v1216, 0
        %v1389 = vsel %vm1324, %v1217, 0
        %v1392 = vsel %vm1324, %v1218, 0
        %v1395 = vsel %vm1324, %v1219, 0
        %v1398 = vsel %vm1324, %v1220, 0
        %v1401 = vsel %vm1324, %v1221, 0
        %v1404 = vsel %vm1324, %v1222, 0
        %v1407 = vsel %vm1324, %v1223, 0
        %v1410 = vsel %vm1324, %v1224, 0
        %v1413 = vsel %vm1324, %v1225, 0
        %v1416 = vsel %vm1324, %v1226, 0
        %v1419 = vsel %vm1324, %v1227, 0
        %v1422 = vsel %vm1324, %v1228, 0
        %v1425 = vsel %vm1324, %v1229, 0
        %v1428 = vsel %vm1324, %v1230, 0
        %v1431 = vsel %vm1324, %v1231, 0
        %v1434 = vsel %vm1324, %v1232, 0
        %v1437 = vsel %vm1324, %v1233, 0
        %v1440 = vsel %vm1324, %v1234, 0
        %v1443 = vsel %vm1324, %v1235, 0
        %v1446 = vsel %vm1324, %v1236, 0
        %v1449 = vsel %vm1324, %v1237, 0
        %v1452 = vsel %vm1324, %v1238, 0
        %v1455 = vsel %vm1324, %v1239, 0
        %v1458 = vsel %vm1324, %v1240, 0
        %v1461 = vsel %vm1324, %v1241, 0
        %v1464 = vsel %vm1324, %v1242, 0
        %v1467 = vsel %vm1324, %v1243, 0
        %v1470 = vsel %vm1324, %v1244, 0
        %v1473 = vsel %vm1324, %v1245, 0
        %v1476 = vsel %vm1324, %v1246, 0
        %v1479 = vsel %vm1324, %v1247, 0
        %v1482 = vsel %vm1324, %v1248, 0
        %v1485 = vsel %vm1324, %v1249, 0
        %v1488 = vsel %vm1324, %v1250, 0
        %v1491 = vsel %vm1324, %v1251, 0
        %v1494 = vsel %vm1324, %v1252, 0
        %v1497 = vsel %vm1324, %v1253, 0
        %v1500 = vsel %vm1324, %v1254, 0
        %v1503 = vsel %vm1324, %v1255, 0
        %v1506 = vsel %vm1324, %v1256, 0
        %v1509 = vsel %vm1324, %v1257, 0
        %v1512 = vsel %vm1324, %v1258, 0
        %v1515 = vsel %vm1324, %v1259, 0
        %v1518 = vsel %vm1324, %v1260, 0
        %v1521 = vsel %vm1324, %v1261, 0
        %v1524 = vsel %vm1324, %v1262, 0
        %v1527 = vsel %vm1324, %v1263, 0
        %v1530 = vsel %vm1324, %v1264, 0
        %v1533 = vsel %vm1324, %v1265, 0
        %v1536 = vsel %vm1324, %v1266, 0
        %v1539 = vsel %vm1324, %v1267, 0
        %v1542 = vsel %vm1324, %v1268, 0
        %v1545 = vsel %vm1324, %v1269, 0
        %v1548 = vsel %vm1324, %v1270, 0
        %v1551 = vsel %vm1324, %v1271, 0
        %v1554 = vsel %vm1324, %v1272, 0
        %v1557 = vsel %vm1324, %v1273, 0
        %v1560 = vsel %vm1324, %v1274, 0
        %v1563 = vsel %vm1324, %v1275, 0
        %v1566 = vsel %vm1324, %v1276, 0
        %v1569 = vsel %vm1324, %v1277, 0
        %v1572 = vsel %vm1324, %v1278, 0
        %v1575 = vsel %vm1324, %v1279, 0
        %v1578 = vsel %vm1324, %v1280, 0
        %v1581 = vsel %vm1324, %v1281, 0
        %v1584 = vsel %vm1324, %v1282, 0
        %v1587 = vsel %vm1324, %v1283, 0
        %v1590 = vsel %vm1324, %v1284, 0
        %v1593 = vsel %vm1324, %v1285, 0
        %v1596 = vsel %vm1324, %v1286, 0
        %v1599 = vsel %vm1324, %v1287, 0
        %v1602 = vsel %vm1324, %v1288, 0
        %v1605 = vsel %vm1324, %v1289, 0
        %v1608 = vsel %vm1324, %v1290, 0
        %v1611 = vsel %vm1324, %v1291, 0
        %v1614 = vsel %vm1324, %v1292, 0
        %v1617 = vsel %vm1324, %v1293, 0
        %v1620 = vsel %vm1324, %v1294, 0
        %v1623 = vsel %vm1324, %v1295, 0
        %v1626 = vsel %vm1324, %v1296, 0
        %v1629 = vsel %vm1324, %v1297, 0
        %v1632 = vsel %vm1324, %v1298, 0
        %v1635 = vsel %vm1324, %v1299, 0
        %v1638 = vsel %vm1324, %v1300, 0
        %v1641 = vsel %vm1324, %v1301, 0
        %v1644 = vsel %vm1324, %v1302, 0
        %v1647 = vsel %vm1324, %v1303, 0
        %v1650 = vsel %vm1324, %v1304, 0
        %v1653 = vsel %vm1324, %v1305, 0
        %v1656 = vsel %vm1324, %v1306, 0
        %v1659 = vsel %vm1324, %v1307, 0
        %v1662 = vsel %vm1324, %v1308, 0
        %v1665 = vsel %vm1324, %v1309, 0
        %v1668 = vsel %vm1324, %v1310, 0
        %v1671 = vsel %vm1324, %v1311, 0
        %v1674 = vsel %vm1324, %v1312, 0
        %v1677 = vsel %vm1324, %v1313, 0
        %v1680 = vsel %vm1324, %v1314, 0
        %v1683 = vsel %vm1324, %v1315, 0
        %v1686 = vsel %vm1324, %v1316, 0
        %v1689 = vsel %vm1324, %v1317, 0
        %v1692 = vsel %vm1324, %v1318, 0
        %v1695 = vsel %vm1324, %v1319, 0
        %v1698 = vsel %vm1324, %v1320, 0
        %v1701 = vsel %vm1324, %v1321, 0
        %v1704 = vsel %vm1324, %v1322, 0
        %v1707 = vsel %vm1324, %v1323, 0
        %vm1709 = vcmask 1043456
        %v1711 = vsel %vm1709, %v676, 0
        %1713 = vmatprep.subr.bf16.mxu0 0
        %1714 = vmatpush1.bf16.msra.mxu0 0
        %1715 = vmatprep.subr.bf16.mxu0 0
        %1716 = vmatpush1.bf16.msra.mxu0 0
        %1717 = vmatprep.subr.bf16.mxu0 0
        %1718 = vmatpush1.bf16.msra.mxu0 0
        %1719 = vmatprep.subr.bf16.mxu0 0
        %1720 = vmatpush1.bf16.msra.mxu0 0
        %1721 = vmatprep.subr.bf16.mxu0 0
        %1722 = vmatpush1.bf16.msra.mxu0 0
        %1723 = vmatprep.subr.bf16.mxu0 0
        %1724 = vmatpush1.bf16.msra.mxu0 0
        %1725 = vmatprep.subr.bf16.mxu0 0
        %1726 = vmatpush1.bf16.msra.mxu0 0
        %1727 = vmatprep.subr.bf16.mxu0 0
        %1728 = vmatpush1.bf16.msra.mxu0 %v1711
        %1729 = vmatprep.subr.bf16.mxu0 0
        %1730 = vmatpush2.bf16.msra.mxu0 0
        %1731 = vmatprep.subr.bf16.mxu0 0
        %1732 = vmatpush2.bf16.msra.mxu0 0
        %1733 = vmatprep.subr.bf16.mxu0 0
        %1734 = vmatpush2.bf16.msra.mxu0 0
        %1735 = vmatprep.subr.bf16.mxu0 0
        %1736 = vmatpush2.bf16.msra.mxu0 0
        %1737 = vmatprep.subr.bf16.mxu0 0
        %1738 = vmatpush2.bf16.msra.mxu0 0
        %1739 = vmatprep.subr.bf16.mxu0 0
        %1740 = vmatpush2.bf16.msra.mxu0 0
        %1741 = vmatprep.subr.bf16.mxu0 0
        %1742 = vmatpush2.bf16.msra.mxu0 0
        %1743 = vmatprep.subr.bf16.mxu0 0
        %1744 = vmatpush2.bf16.msra.mxu0 0
        %1745 = vmatprep.mubr.bf16.mxu0 0
        %1746 = vmatmul.mubr.bf16.gmra.mxu0 %v1326
        %v1747 = vpop.f32.mrf.mxu0
        %v1748 = vadd.f32 %v682, %v1747
        %v1749 = vpop.f32.mrf.mxu0
        %v1750 = vpop.f32.mrf.mxu0
        %v1751 = vadd.f32 %v682, %v1750
        %v1752 = vpop.f32.mrf.mxu0
        %1753 = vmatprep.mubr.bf16.mxu0 0
        %1754 = vmatmul.mubr.bf16.gmra.mxu0 %v1329
        %v1755 = vpop.f32.mrf.mxu0
        %v1756 = vadd.f32 %v682, %v1755
        %v1757 = vpop.f32.mrf.mxu0
        %v1758 = vpop.f32.mrf.mxu0
        %v1759 = vadd.f32 %v682, %v1758
        %v1760 = vpop.f32.mrf.mxu0
        %1761 = vmatprep.mubr.bf16.mxu0 0
        %1762 = vmatmul.mubr.bf16.gmra.mxu0 %v1332
        %v1763 = vpop.f32.mrf.mxu0
        %v1764 = vadd.f32 %v682, %v1763
        %v1765 = vpop.f32.mrf.mxu0
        %v1766 = vpop.f32.mrf.mxu0
        %v1767 = vadd.f32 %v682, %v1766
        %v1768 = vpop.f32.mrf.mxu0
        %1769 = vmatprep.mubr.bf16.mxu0 0
        %1770 = vmatmul.mubr.bf16.gmra.mxu0 %v1335
        %v1771 = vpop.f32.mrf.mxu0
        %v1772 = vadd.f32 %v682, %v1771
        %v1773 = vpop.f32.mrf.mxu0
        %v1774 = vpop.f32.mrf.mxu0
        %v1775 = vadd.f32 %v682, %v1774
        %v1776 = vpop.f32.mrf.mxu0
        %1777 = vmatprep.mubr.bf16.mxu0 0
        %1778 = vmatmul.mubr.bf16.gmra.mxu0 %v1338
        %v1779 = vpop.f32.mrf.mxu0
        %v1780 = vadd.f32 %v682, %v1779
        %v1781 = vpop.f32.mrf.mxu0
        %v1782 = vpop.f32.mrf.mxu0
        %v1783 = vadd.f32 %v682, %v1782
        %v1784 = vpop.f32.mrf.mxu0
        %1785 = vmatprep.mubr.bf16.mxu0 0
        %1786 = vmatmul.mubr.bf16.gmra.mxu0 %v1341
        %v1787 = vpop.f32.mrf.mxu0
        %v1788 = vadd.f32 %v682, %v1787
        %v1789 = vpop.f32.mrf.mxu0
        %v1790 = vpop.f32.mrf.mxu0
        %v1791 = vadd.f32 %v682, %v1790
        %v1792 = vpop.f32.mrf.mxu0
        %1793 = vmatprep.mubr.bf16.mxu0 0
        %1794 = vmatmul.mubr.bf16.gmra.mxu0 %v1344
        %v1795 = vpop.f32.mrf.mxu0
        %v1796 = vadd.f32 %v682, %v1795
        %v1797 = vpop.f32.mrf.mxu0
        %v1798 = vpop.f32.mrf.mxu0
        %v1799 = vadd.f32 %v682, %v1798
        %v1800 = vpop.f32.mrf.mxu0
        %1801 = vmatprep.mubr.bf16.mxu0 0
        %1802 = vmatmul.mubr.bf16.gmra.mxu0 %v1347
        %v1803 = vpop.f32.mrf.mxu0
        %v1804 = vadd.f32 %v682, %v1803
        %v1805 = vpop.f32.mrf.mxu0
        %v1806 = vpop.f32.mrf.mxu0
        %v1807 = vadd.f32 %v682, %v1806
        %v1808 = vpop.f32.mrf.mxu0
        %1809 = vmatprep.mubr.bf16.mxu0 0
        %1810 = vmatmul.mubr.bf16.gmra.mxu0 %v1350
        %v1811 = vpop.f32.mrf.mxu0
        %v1812 = vadd.f32 %v682, %v1811
        %v1813 = vpop.f32.mrf.mxu0
        %v1814 = vpop.f32.mrf.mxu0
        %v1815 = vadd.f32 %v682, %v1814
        %v1816 = vpop.f32.mrf.mxu0
        %1817 = vmatprep.mubr.bf16.mxu0 0
        %1818 = vmatmul.mubr.bf16.gmra.mxu0 %v1353
        %v1819 = vpop.f32.mrf.mxu0
        %v1820 = vadd.f32 %v682, %v1819
        %v1821 = vpop.f32.mrf.mxu0
        %v1822 = vpop.f32.mrf.mxu0
        %v1823 = vadd.f32 %v682, %v1822
        %v1824 = vpop.f32.mrf.mxu0
        %1825 = vmatprep.mubr.bf16.mxu0 0
        %1826 = vmatmul.mubr.bf16.gmra.mxu0 %v1356
        %v1827 = vpop.f32.mrf.mxu0
        %v1828 = vadd.f32 %v682, %v1827
        %v1829 = vpop.f32.mrf.mxu0
        %v1830 = vpop.f32.mrf.mxu0
        %v1831 = vadd.f32 %v682, %v1830
        %v1832 = vpop.f32.mrf.mxu0
        %1833 = vmatprep.mubr.bf16.mxu0 0
        %1834 = vmatmul.mubr.bf16.gmra.mxu0 %v1359
        %v1835 = vpop.f32.mrf.mxu0
        %v1836 = vadd.f32 %v682, %v1835
        %v1837 = vpop.f32.mrf.mxu0
        %v1838 = vpop.f32.mrf.mxu0
        %v1839 = vadd.f32 %v682, %v1838
        %v1840 = vpop.f32.mrf.mxu0
        %1841 = vmatprep.mubr.bf16.mxu0 0
        %1842 = vmatmul.mubr.bf16.gmra.mxu0 %v1362
        %v1843 = vpop.f32.mrf.mxu0
        %v1844 = vadd.f32 %v682, %v1843
        %v1845 = vpop.f32.mrf.mxu0
        %v1846 = vpop.f32.mrf.mxu0
        %v1847 = vadd.f32 %v682, %v1846
        %v1848 = vpop.f32.mrf.mxu0
        %1849 = vmatprep.mubr.bf16.mxu0 0
        %1850 = vmatmul.mubr.bf16.gmra.mxu0 %v1365
        %v1851 = vpop.f32.mrf.mxu0
        %v1852 = vadd.f32 %v682, %v1851
        %v1853 = vpop.f32.mrf.mxu0
        %v1854 = vpop.f32.mrf.mxu0
        %v1855 = vadd.f32 %v682, %v1854
        %v1856 = vpop.f32.mrf.mxu0
        %1857 = vmatprep.mubr.bf16.mxu0 0
        %1858 = vmatmul.mubr.bf16.gmra.mxu0 %v1368
        %v1859 = vpop.f32.mrf.mxu0
        %v1860 = vadd.f32 %v682, %v1859
        %v1861 = vpop.f32.mrf.mxu0
        %v1862 = vpop.f32.mrf.mxu0
        %v1863 = vadd.f32 %v682, %v1862
        %v1864 = vpop.f32.mrf.mxu0
        %1865 = vmatprep.mubr.bf16.mxu0 0
        %1866 = vmatmul.mubr.bf16.gmra.mxu0 %v1371
        %v1867 = vpop.f32.mrf.mxu0
        %v1868 = vadd.f32 %v682, %v1867
        %v1869 = vpop.f32.mrf.mxu0
        %v1870 = vpop.f32.mrf.mxu0
        %v1871 = vadd.f32 %v682, %v1870
        %v1872 = vpop.f32.mrf.mxu0
        %1873 = vmatprep.mubr.bf16.mxu0 0
        %1874 = vmatmul.mubr.bf16.gmra.mxu0 %v1374
        %v1875 = vpop.f32.mrf.mxu0
        %v1876 = vadd.f32 %v682, %v1875
        %v1877 = vpop.f32.mrf.mxu0
        %v1878 = vpop.f32.mrf.mxu0
        %v1879 = vadd.f32 %v682, %v1878
        %v1880 = vpop.f32.mrf.mxu0
        %1881 = vmatprep.mubr.bf16.mxu0 0
        %1882 = vmatmul.mubr.bf16.gmra.mxu0 %v1377
        %v1883 = vpop.f32.mrf.mxu0
        %v1884 = vadd.f32 %v682, %v1883
        %v1885 = vpop.f32.mrf.mxu0
        %v1886 = vpop.f32.mrf.mxu0
        %v1887 = vadd.f32 %v682, %v1886
        %v1888 = vpop.f32.mrf.mxu0
        %1889 = vmatprep.mubr.bf16.mxu0 0
        %1890 = vmatmul.mubr.bf16.gmra.mxu0 %v1380
        %v1891 = vpop.f32.mrf.mxu0
        %v1892 = vadd.f32 %v682, %v1891
        %v1893 = vpop.f32.mrf.mxu0
        %v1894 = vpop.f32.mrf.mxu0
        %v1895 = vadd.f32 %v682, %v1894
        %v1896 = vpop.f32.mrf.mxu0
        %1897 = vmatprep.mubr.bf16.mxu0 0
        %1898 = vmatmul.mubr.bf16.gmra.mxu0 %v1383
        %v1899 = vpop.f32.mrf.mxu0
        %v1900 = vadd.f32 %v682, %v1899
        %v1901 = vpop.f32.mrf.mxu0
        %v1902 = vpop.f32.mrf.mxu0
        %v1903 = vadd.f32 %v682, %v1902
        %v1904 = vpop.f32.mrf.mxu0
        %1905 = vmatprep.mubr.bf16.mxu0 0
        %1906 = vmatmul.mubr.bf16.gmra.mxu0 %v1386
        %v1907 = vpop.f32.mrf.mxu0
        %v1908 = vadd.f32 %v682, %v1907
        %v1909 = vpop.f32.mrf.mxu0
        %v1910 = vpop.f32.mrf.mxu0
        %v1911 = vadd.f32 %v682, %v1910
        %v1912 = vpop.f32.mrf.mxu0
        %1913 = vmatprep.mubr.bf16.mxu0 0
        %1914 = vmatmul.mubr.bf16.gmra.mxu0 %v1389
        %v1915 = vpop.f32.mrf.mxu0
        %v1916 = vadd.f32 %v682, %v1915
        %v1917 = vpop.f32.mrf.mxu0
        %v1918 = vpop.f32.mrf.mxu0
        %v1919 = vadd.f32 %v682, %v1918
        %v1920 = vpop.f32.mrf.mxu0
        %1921 = vmatprep.mubr.bf16.mxu0 0
        %1922 = vmatmul.mubr.bf16.gmra.mxu0 %v1392
        %v1923 = vpop.f32.mrf.mxu0
        %v1924 = vadd.f32 %v682, %v1923
        %v1925 = vpop.f32.mrf.mxu0
        %v1926 = vpop.f32.mrf.mxu0
        %v1927 = vadd.f32 %v682, %v1926
        %v1928 = vpop.f32.mrf.mxu0
        %1929 = vmatprep.mubr.bf16.mxu0 0
        %1930 = vmatmul.mubr.bf16.gmra.mxu0 %v1395
        %v1931 = vpop.f32.mrf.mxu0
        %v1932 = vadd.f32 %v682, %v1931
        %v1933 = vpop.f32.mrf.mxu0
        %v1934 = vpop.f32.mrf.mxu0
        %v1935 = vadd.f32 %v682, %v1934
        %v1936 = vpop.f32.mrf.mxu0
        %1937 = vmatprep.mubr.bf16.mxu0 0
        %1938 = vmatmul.mubr.bf16.gmra.mxu0 %v1398
        %v1939 = vpop.f32.mrf.mxu0
        %v1940 = vadd.f32 %v682, %v1939
        %v1941 = vpop.f32.mrf.mxu0
        %v1942 = vpop.f32.mrf.mxu0
        %v1943 = vadd.f32 %v682, %v1942
        %v1944 = vpop.f32.mrf.mxu0
        %1945 = vmatprep.mubr.bf16.mxu0 0
        %1946 = vmatmul.mubr.bf16.gmra.mxu0 %v1401
        %v1947 = vpop.f32.mrf.mxu0
        %v1948 = vadd.f32 %v682, %v1947
        %v1949 = vpop.f32.mrf.mxu0
        %v1950 = vpop.f32.mrf.mxu0
        %v1951 = vadd.f32 %v682, %v1950
        %v1952 = vpop.f32.mrf.mxu0
        %1953 = vmatprep.mubr.bf16.mxu0 0
        %1954 = vmatmul.mubr.bf16.gmra.mxu0 %v1404
        %v1955 = vpop.f32.mrf.mxu0
        %v1956 = vadd.f32 %v682, %v1955
        %v1957 = vpop.f32.mrf.mxu0
        %v1958 = vpop.f32.mrf.mxu0
        %v1959 = vadd.f32 %v682, %v1958
        %v1960 = vpop.f32.mrf.mxu0
        %1961 = vmatprep.mubr.bf16.mxu0 0
        %1962 = vmatmul.mubr.bf16.gmra.mxu0 %v1407
        %v1963 = vpop.f32.mrf.mxu0
        %v1964 = vadd.f32 %v682, %v1963
        %v1965 = vpop.f32.mrf.mxu0
        %v1966 = vpop.f32.mrf.mxu0
        %v1967 = vadd.f32 %v682, %v1966
        %v1968 = vpop.f32.mrf.mxu0
        %1969 = vmatprep.mubr.bf16.mxu0 0
        %1970 = vmatmul.mubr.bf16.gmra.mxu0 %v1410
        %v1971 = vpop.f32.mrf.mxu0
        %v1972 = vadd.f32 %v682, %v1971
        %v1973 = vpop.f32.mrf.mxu0
        %v1974 = vpop.f32.mrf.mxu0
        %v1975 = vadd.f32 %v682, %v1974
        %v1976 = vpop.f32.mrf.mxu0
        %1977 = vmatprep.mubr.bf16.mxu0 0
        %1978 = vmatmul.mubr.bf16.gmra.mxu0 %v1413
        %v1979 = vpop.f32.mrf.mxu0
        %v1980 = vadd.f32 %v682, %v1979
        %v1981 = vpop.f32.mrf.mxu0
        %v1982 = vpop.f32.mrf.mxu0
        %v1983 = vadd.f32 %v682, %v1982
        %v1984 = vpop.f32.mrf.mxu0
        %1985 = vmatprep.mubr.bf16.mxu0 0
        %1986 = vmatmul.mubr.bf16.gmra.mxu0 %v1416
        %v1987 = vpop.f32.mrf.mxu0
        %v1988 = vadd.f32 %v682, %v1987
        %v1989 = vpop.f32.mrf.mxu0
        %v1990 = vpop.f32.mrf.mxu0
        %v1991 = vadd.f32 %v682, %v1990
        %v1992 = vpop.f32.mrf.mxu0
        %1993 = vmatprep.mubr.bf16.mxu0 0
        %1994 = vmatmul.mubr.bf16.gmra.mxu0 %v1419
        %v1995 = vpop.f32.mrf.mxu0
        %v1996 = vadd.f32 %v682, %v1995
        %v1997 = vpop.f32.mrf.mxu0
        %v1998 = vpop.f32.mrf.mxu0
        %v1999 = vadd.f32 %v682, %v1998
        %v2000 = vpop.f32.mrf.mxu0
        %2001 = vmatprep.mubr.bf16.mxu0 0
        %2002 = vmatmul.mubr.bf16.gmra.mxu0 %v1422
        %v2003 = vpop.f32.mrf.mxu0
        %v2004 = vadd.f32 %v682, %v2003
        %v2005 = vpop.f32.mrf.mxu0
        %v2006 = vpop.f32.mrf.mxu0
        %v2007 = vadd.f32 %v682, %v2006
        %v2008 = vpop.f32.mrf.mxu0
        %2009 = vmatprep.mubr.bf16.mxu0 0
        %2010 = vmatmul.mubr.bf16.gmra.mxu0 %v1425
        %v2011 = vpop.f32.mrf.mxu0
        %v2012 = vadd.f32 %v682, %v2011
        %v2013 = vpop.f32.mrf.mxu0
        %v2014 = vpop.f32.mrf.mxu0
        %v2015 = vadd.f32 %v682, %v2014
        %v2016 = vpop.f32.mrf.mxu0
        %2017 = vmatprep.mubr.bf16.mxu0 0
        %2018 = vmatmul.mubr.bf16.gmra.mxu0 %v1428
        %v2019 = vpop.f32.mrf.mxu0
        %v2020 = vadd.f32 %v682, %v2019
        %v2021 = vpop.f32.mrf.mxu0
        %v2022 = vpop.f32.mrf.mxu0
        %v2023 = vadd.f32 %v682, %v2022
        %v2024 = vpop.f32.mrf.mxu0
        %2025 = vmatprep.mubr.bf16.mxu0 0
        %2026 = vmatmul.mubr.bf16.gmra.mxu0 %v1431
        %v2027 = vpop.f32.mrf.mxu0
        %v2028 = vadd.f32 %v682, %v2027
        %v2029 = vpop.f32.mrf.mxu0
        %v2030 = vpop.f32.mrf.mxu0
        %v2031 = vadd.f32 %v682, %v2030
        %v2032 = vpop.f32.mrf.mxu0
        %2033 = vmatprep.mubr.bf16.mxu0 0
        %2034 = vmatmul.mubr.bf16.gmra.mxu0 %v1434
        %v2035 = vpop.f32.mrf.mxu0
        %v2036 = vadd.f32 %v682, %v2035
        %v2037 = vpop.f32.mrf.mxu0
        %v2038 = vpop.f32.mrf.mxu0
        %v2039 = vadd.f32 %v682, %v2038
        %v2040 = vpop.f32.mrf.mxu0
        %2041 = vmatprep.mubr.bf16.mxu0 0
        %2042 = vmatmul.mubr.bf16.gmra.mxu0 %v1437
        %v2043 = vpop.f32.mrf.mxu0
        %v2044 = vadd.f32 %v682, %v2043
        %v2045 = vpop.f32.mrf.mxu0
        %v2046 = vpop.f32.mrf.mxu0
        %v2047 = vadd.f32 %v682, %v2046
        %v2048 = vpop.f32.mrf.mxu0
        %2049 = vmatprep.mubr.bf16.mxu0 0
        %2050 = vmatmul.mubr.bf16.gmra.mxu0 %v1440
        %v2051 = vpop.f32.mrf.mxu0
        %v2052 = vadd.f32 %v682, %v2051
        %v2053 = vpop.f32.mrf.mxu0
        %v2054 = vpop.f32.mrf.mxu0
        %v2055 = vadd.f32 %v682, %v2054
        %v2056 = vpop.f32.mrf.mxu0
        %2057 = vmatprep.mubr.bf16.mxu0 0
        %2058 = vmatmul.mubr.bf16.gmra.mxu0 %v1443
        %v2059 = vpop.f32.mrf.mxu0
        %v2060 = vadd.f32 %v682, %v2059
        %v2061 = vpop.f32.mrf.mxu0
        %v2062 = vpop.f32.mrf.mxu0
        %v2063 = vadd.f32 %v682, %v2062
        %v2064 = vpop.f32.mrf.mxu0
        %2065 = vmatprep.mubr.bf16.mxu0 0
        %2066 = vmatmul.mubr.bf16.gmra.mxu0 %v1446
        %v2067 = vpop.f32.mrf.mxu0
        %v2068 = vadd.f32 %v682, %v2067
        %v2069 = vpop.f32.mrf.mxu0
        %v2070 = vpop.f32.mrf.mxu0
        %v2071 = vadd.f32 %v682, %v2070
        %v2072 = vpop.f32.mrf.mxu0
        %2073 = vmatprep.mubr.bf16.mxu0 0
        %2074 = vmatmul.mubr.bf16.gmra.mxu0 %v1449
        %v2075 = vpop.f32.mrf.mxu0
        %v2076 = vadd.f32 %v682, %v2075
        %v2077 = vpop.f32.mrf.mxu0
        %v2078 = vpop.f32.mrf.mxu0
        %v2079 = vadd.f32 %v682, %v2078
        %v2080 = vpop.f32.mrf.mxu0
        %2081 = vmatprep.mubr.bf16.mxu0 0
        %2082 = vmatmul.mubr.bf16.gmra.mxu0 %v1452
        %v2083 = vpop.f32.mrf.mxu0
        %v2084 = vadd.f32 %v682, %v2083
        %v2085 = vpop.f32.mrf.mxu0
        %v2086 = vpop.f32.mrf.mxu0
        %v2087 = vadd.f32 %v682, %v2086
        %v2088 = vpop.f32.mrf.mxu0
        %2089 = vmatprep.mubr.bf16.mxu0 0
        %2090 = vmatmul.mubr.bf16.gmra.mxu0 %v1455
        %v2091 = vpop.f32.mrf.mxu0
        %v2092 = vadd.f32 %v682, %v2091
        %v2093 = vpop.f32.mrf.mxu0
        %v2094 = vpop.f32.mrf.mxu0
        %v2095 = vadd.f32 %v682, %v2094
        %v2096 = vpop.f32.mrf.mxu0
        %2097 = vmatprep.mubr.bf16.mxu0 0
        %2098 = vmatmul.mubr.bf16.gmra.mxu0 %v1458
        %v2099 = vpop.f32.mrf.mxu0
        %v2100 = vadd.f32 %v682, %v2099
        %v2101 = vpop.f32.mrf.mxu0
        %v2102 = vpop.f32.mrf.mxu0
        %v2103 = vadd.f32 %v682, %v2102
        %v2104 = vpop.f32.mrf.mxu0
        %2105 = vmatprep.mubr.bf16.mxu0 0
        %2106 = vmatmul.mubr.bf16.gmra.mxu0 %v1461
        %v2107 = vpop.f32.mrf.mxu0
        %v2108 = vadd.f32 %v682, %v2107
        %v2109 = vpop.f32.mrf.mxu0
        %v2110 = vpop.f32.mrf.mxu0
        %v2111 = vadd.f32 %v682, %v2110
        %v2112 = vpop.f32.mrf.mxu0
        %2113 = vmatprep.mubr.bf16.mxu0 0
        %2114 = vmatmul.mubr.bf16.gmra.mxu0 %v1464
        %v2115 = vpop.f32.mrf.mxu0
        %v2116 = vadd.f32 %v682, %v2115
        %v2117 = vpop.f32.mrf.mxu0
        %v2118 = vpop.f32.mrf.mxu0
        %v2119 = vadd.f32 %v682, %v2118
        %v2120 = vpop.f32.mrf.mxu0
        %2121 = vmatprep.mubr.bf16.mxu0 0
        %2122 = vmatmul.mubr.bf16.gmra.mxu0 %v1467
        %v2123 = vpop.f32.mrf.mxu0
        %v2124 = vadd.f32 %v682, %v2123
        %v2125 = vpop.f32.mrf.mxu0
        %v2126 = vpop.f32.mrf.mxu0
        %v2127 = vadd.f32 %v682, %v2126
        %v2128 = vpop.f32.mrf.mxu0
        %2129 = vmatprep.mubr.bf16.mxu0 0
        %2130 = vmatmul.mubr.bf16.gmra.mxu0 %v1470
        %v2131 = vpop.f32.mrf.mxu0
        %v2132 = vadd.f32 %v682, %v2131
        %v2133 = vpop.f32.mrf.mxu0
        %v2134 = vpop.f32.mrf.mxu0
        %v2135 = vadd.f32 %v682, %v2134
        %v2136 = vpop.f32.mrf.mxu0
        %2137 = vmatprep.mubr.bf16.mxu0 0
        %2138 = vmatmul.mubr.bf16.gmra.mxu0 %v1473
        %v2139 = vpop.f32.mrf.mxu0
        %v2140 = vadd.f32 %v682, %v2139
        %v2141 = vpop.f32.mrf.mxu0
        %v2142 = vpop.f32.mrf.mxu0
        %v2143 = vadd.f32 %v682, %v2142
        %v2144 = vpop.f32.mrf.mxu0
        %2145 = vmatprep.mubr.bf16.mxu0 0
        %2146 = vmatmul.mubr.bf16.gmra.mxu0 %v1476
        %v2147 = vpop.f32.mrf.mxu0
        %v2148 = vadd.f32 %v682, %v2147
        %v2149 = vpop.f32.mrf.mxu0
        %v2150 = vpop.f32.mrf.mxu0
        %v2151 = vadd.f32 %v682, %v2150
        %v2152 = vpop.f32.mrf.mxu0
        %2153 = vmatprep.mubr.bf16.mxu0 0
        %2154 = vmatmul.mubr.bf16.gmra.mxu0 %v1479
        %v2155 = vpop.f32.mrf.mxu0
        %v2156 = vadd.f32 %v682, %v2155
        %v2157 = vpop.f32.mrf.mxu0
        %v2158 = vpop.f32.mrf.mxu0
        %v2159 = vadd.f32 %v682, %v2158
        %v2160 = vpop.f32.mrf.mxu0
        %2161 = vmatprep.mubr.bf16.mxu0 0
        %2162 = vmatmul.mubr.bf16.gmra.mxu0 %v1482
        %v2163 = vpop.f32.mrf.mxu0
        %v2164 = vadd.f32 %v682, %v2163
        %v2165 = vpop.f32.mrf.mxu0
        %v2166 = vpop.f32.mrf.mxu0
        %v2167 = vadd.f32 %v682, %v2166
        %v2168 = vpop.f32.mrf.mxu0
        %2169 = vmatprep.mubr.bf16.mxu0 0
        %2170 = vmatmul.mubr.bf16.gmra.mxu0 %v1485
        %v2171 = vpop.f32.mrf.mxu0
        %v2172 = vadd.f32 %v682, %v2171
        %v2173 = vpop.f32.mrf.mxu0
        %v2174 = vpop.f32.mrf.mxu0
        %v2175 = vadd.f32 %v682, %v2174
        %v2176 = vpop.f32.mrf.mxu0
        %2177 = vmatprep.mubr.bf16.mxu0 0
        %2178 = vmatmul.mubr.bf16.gmra.mxu0 %v1488
        %v2179 = vpop.f32.mrf.mxu0
        %v2180 = vadd.f32 %v682, %v2179
        %v2181 = vpop.f32.mrf.mxu0
        %v2182 = vpop.f32.mrf.mxu0
        %v2183 = vadd.f32 %v682, %v2182
        %v2184 = vpop.f32.mrf.mxu0
        %2185 = vmatprep.mubr.bf16.mxu0 0
        %2186 = vmatmul.mubr.bf16.gmra.mxu0 %v1491
        %v2187 = vpop.f32.mrf.mxu0
        %v2188 = vadd.f32 %v682, %v2187
        %v2189 = vpop.f32.mrf.mxu0
        %v2190 = vpop.f32.mrf.mxu0
        %v2191 = vadd.f32 %v682, %v2190
        %v2192 = vpop.f32.mrf.mxu0
        %2193 = vmatprep.mubr.bf16.mxu0 0
        %2194 = vmatmul.mubr.bf16.gmra.mxu0 %v1494
        %v2195 = vpop.f32.mrf.mxu0
        %v2196 = vadd.f32 %v682, %v2195
        %v2197 = vpop.f32.mrf.mxu0
        %v2198 = vpop.f32.mrf.mxu0
        %v2199 = vadd.f32 %v682, %v2198
        %v2200 = vpop.f32.mrf.mxu0
        %2201 = vmatprep.mubr.bf16.mxu0 0
        %2202 = vmatmul.mubr.bf16.gmra.mxu0 %v1497
        %v2203 = vpop.f32.mrf.mxu0
        %v2204 = vadd.f32 %v682, %v2203
        %v2205 = vpop.f32.mrf.mxu0
        %v2206 = vpop.f32.mrf.mxu0
        %v2207 = vadd.f32 %v682, %v2206
        %v2208 = vpop.f32.mrf.mxu0
        %2209 = vmatprep.mubr.bf16.mxu0 0
        %2210 = vmatmul.mubr.bf16.gmra.mxu0 %v1500
        %v2211 = vpop.f32.mrf.mxu0
        %v2212 = vadd.f32 %v682, %v2211
        %v2213 = vpop.f32.mrf.mxu0
        %v2214 = vpop.f32.mrf.mxu0
        %v2215 = vadd.f32 %v682, %v2214
        %v2216 = vpop.f32.mrf.mxu0
        %2217 = vmatprep.mubr.bf16.mxu0 0
        %2218 = vmatmul.mubr.bf16.gmra.mxu0 %v1503
        %v2219 = vpop.f32.mrf.mxu0
        %v2220 = vadd.f32 %v682, %v2219
        %v2221 = vpop.f32.mrf.mxu0
        %v2222 = vpop.f32.mrf.mxu0
        %v2223 = vadd.f32 %v682, %v2222
        %v2224 = vpop.f32.mrf.mxu0
        %2225 = vmatprep.mubr.bf16.mxu0 0
        %2226 = vmatmul.mubr.bf16.gmra.mxu0 %v1506
        %v2227 = vpop.f32.mrf.mxu0
        %v2228 = vadd.f32 %v682, %v2227
        %v2229 = vpop.f32.mrf.mxu0
        %v2230 = vpop.f32.mrf.mxu0
        %v2231 = vadd.f32 %v682, %v2230
        %v2232 = vpop.f32.mrf.mxu0
        %2233 = vmatprep.mubr.bf16.mxu0 0
        %2234 = vmatmul.mubr.bf16.gmra.mxu0 %v1509
        %v2235 = vpop.f32.mrf.mxu0
        %v2236 = vadd.f32 %v682, %v2235
        %v2237 = vpop.f32.mrf.mxu0
        %v2238 = vpop.f32.mrf.mxu0
        %v2239 = vadd.f32 %v682, %v2238
        %v2240 = vpop.f32.mrf.mxu0
        %2241 = vmatprep.mubr.bf16.mxu0 0
        %2242 = vmatmul.mubr.bf16.gmra.mxu0 %v1512
        %v2243 = vpop.f32.mrf.mxu0
        %v2244 = vadd.f32 %v682, %v2243
        %v2245 = vpop.f32.mrf.mxu0
        %v2246 = vpop.f32.mrf.mxu0
        %v2247 = vadd.f32 %v682, %v2246
        %v2248 = vpop.f32.mrf.mxu0
        %2249 = vmatprep.mubr.bf16.mxu0 0
        %2250 = vmatmul.mubr.bf16.gmra.mxu0 %v1515
        %v2251 = vpop.f32.mrf.mxu0
        %v2252 = vadd.f32 %v682, %v2251
        %v2253 = vpop.f32.mrf.mxu0
        %v2254 = vpop.f32.mrf.mxu0
        %v2255 = vadd.f32 %v682, %v2254
        %v2256 = vpop.f32.mrf.mxu0
        %2257 = vmatprep.mubr.bf16.mxu0 0
        %2258 = vmatmul.mubr.bf16.gmra.mxu0 %v1518
        %v2259 = vpop.f32.mrf.mxu0
        %v2260 = vadd.f32 %v682, %v2259
        %v2261 = vpop.f32.mrf.mxu0
        %v2262 = vpop.f32.mrf.mxu0
        %v2263 = vadd.f32 %v682, %v2262
        %v2264 = vpop.f32.mrf.mxu0
        %2265 = vmatprep.mubr.bf16.mxu0 0
        %2266 = vmatmul.mubr.bf16.gmra.mxu0 %v1521
        %v2267 = vpop.f32.mrf.mxu0
        %v2268 = vadd.f32 %v682, %v2267
        %v2269 = vpop.f32.mrf.mxu0
        %v2270 = vpop.f32.mrf.mxu0
        %v2271 = vadd.f32 %v682, %v2270
        %v2272 = vpop.f32.mrf.mxu0
        %2273 = vmatprep.mubr.bf16.mxu0 0
        %2274 = vmatmul.mubr.bf16.gmra.mxu0 %v1524
        %v2275 = vpop.f32.mrf.mxu0
        %v2276 = vadd.f32 %v682, %v2275
        %v2277 = vpop.f32.mrf.mxu0
        %v2278 = vpop.f32.mrf.mxu0
        %v2279 = vadd.f32 %v682, %v2278
        %v2280 = vpop.f32.mrf.mxu0
        %2281 = vmatprep.mubr.bf16.mxu0 0
        %2282 = vmatmul.mubr.bf16.gmra.mxu0 %v1527
        %v2283 = vpop.f32.mrf.mxu0
        %v2284 = vadd.f32 %v682, %v2283
        %v2285 = vpop.f32.mrf.mxu0
        %v2286 = vpop.f32.mrf.mxu0
        %v2287 = vadd.f32 %v682, %v2286
        %v2288 = vpop.f32.mrf.mxu0
        %2289 = vmatprep.mubr.bf16.mxu0 0
        %2290 = vmatmul.mubr.bf16.gmra.mxu0 %v1530
        %v2291 = vpop.f32.mrf.mxu0
        %v2292 = vadd.f32 %v682, %v2291
        %v2293 = vpop.f32.mrf.mxu0
        %v2294 = vpop.f32.mrf.mxu0
        %v2295 = vadd.f32 %v682, %v2294
        %v2296 = vpop.f32.mrf.mxu0
        %2297 = vmatprep.mubr.bf16.mxu0 0
        %2298 = vmatmul.mubr.bf16.gmra.mxu0 %v1533
        %v2299 = vpop.f32.mrf.mxu0
        %v2300 = vadd.f32 %v682, %v2299
        %v2301 = vpop.f32.mrf.mxu0
        %v2302 = vpop.f32.mrf.mxu0
        %v2303 = vadd.f32 %v682, %v2302
        %v2304 = vpop.f32.mrf.mxu0
        %2305 = vmatprep.mubr.bf16.mxu0 0
        %2306 = vmatmul.mubr.bf16.gmra.mxu0 %v1536
        %v2307 = vpop.f32.mrf.mxu0
        %v2308 = vadd.f32 %v682, %v2307
        %v2309 = vpop.f32.mrf.mxu0
        %v2310 = vpop.f32.mrf.mxu0
        %v2311 = vadd.f32 %v682, %v2310
        %v2312 = vpop.f32.mrf.mxu0
        %2313 = vmatprep.mubr.bf16.mxu0 0
        %2314 = vmatmul.mubr.bf16.gmra.mxu0 %v1539
        %v2315 = vpop.f32.mrf.mxu0
        %v2316 = vadd.f32 %v682, %v2315
        %v2317 = vpop.f32.mrf.mxu0
        %v2318 = vpop.f32.mrf.mxu0
        %v2319 = vadd.f32 %v682, %v2318
        %v2320 = vpop.f32.mrf.mxu0
        %2321 = vmatprep.mubr.bf16.mxu0 0
        %2322 = vmatmul.mubr.bf16.gmra.mxu0 %v1542
        %v2323 = vpop.f32.mrf.mxu0
        %v2324 = vadd.f32 %v682, %v2323
        %v2325 = vpop.f32.mrf.mxu0
        %v2326 = vpop.f32.mrf.mxu0
        %v2327 = vadd.f32 %v682, %v2326
        %v2328 = vpop.f32.mrf.mxu0
        %2329 = vmatprep.mubr.bf16.mxu0 0
        %2330 = vmatmul.mubr.bf16.gmra.mxu0 %v1545
        %v2331 = vpop.f32.mrf.mxu0
        %v2332 = vadd.f32 %v682, %v2331
        %v2333 = vpop.f32.mrf.mxu0
        %v2334 = vpop.f32.mrf.mxu0
        %v2335 = vadd.f32 %v682, %v2334
        %v2336 = vpop.f32.mrf.mxu0
        %2337 = vmatprep.mubr.bf16.mxu0 0
        %2338 = vmatmul.mubr.bf16.gmra.mxu0 %v1548
        %v2339 = vpop.f32.mrf.mxu0
        %v2340 = vadd.f32 %v682, %v2339
        %v2341 = vpop.f32.mrf.mxu0
        %v2342 = vpop.f32.mrf.mxu0
        %v2343 = vadd.f32 %v682, %v2342
        %v2344 = vpop.f32.mrf.mxu0
        %2345 = vmatprep.mubr.bf16.mxu0 0
        %2346 = vmatmul.mubr.bf16.gmra.mxu0 %v1551
        %v2347 = vpop.f32.mrf.mxu0
        %v2348 = vadd.f32 %v682, %v2347
        %v2349 = vpop.f32.mrf.mxu0
        %v2350 = vpop.f32.mrf.mxu0
        %v2351 = vadd.f32 %v682, %v2350
        %v2352 = vpop.f32.mrf.mxu0
        %2353 = vmatprep.mubr.bf16.mxu0 0
        %2354 = vmatmul.mubr.bf16.gmra.mxu0 %v1554
        %v2355 = vpop.f32.mrf.mxu0
        %v2356 = vadd.f32 %v682, %v2355
        %v2357 = vpop.f32.mrf.mxu0
        %v2358 = vpop.f32.mrf.mxu0
        %v2359 = vadd.f32 %v682, %v2358
        %v2360 = vpop.f32.mrf.mxu0
        %2361 = vmatprep.mubr.bf16.mxu0 0
        %2362 = vmatmul.mubr.bf16.gmra.mxu0 %v1557
        %v2363 = vpop.f32.mrf.mxu0
        %v2364 = vadd.f32 %v682, %v2363
        %v2365 = vpop.f32.mrf.mxu0
        %v2366 = vpop.f32.mrf.mxu0
        %v2367 = vadd.f32 %v682, %v2366
        %v2368 = vpop.f32.mrf.mxu0
        %2369 = vmatprep.mubr.bf16.mxu0 0
        %2370 = vmatmul.mubr.bf16.gmra.mxu0 %v1560
        %v2371 = vpop.f32.mrf.mxu0
        %v2372 = vadd.f32 %v682, %v2371
        %v2373 = vpop.f32.mrf.mxu0
        %v2374 = vpop.f32.mrf.mxu0
        %v2375 = vadd.f32 %v682, %v2374
        %v2376 = vpop.f32.mrf.mxu0
        %2377 = vmatprep.mubr.bf16.mxu0 0
        %2378 = vmatmul.mubr.bf16.gmra.mxu0 %v1563
        %v2379 = vpop.f32.mrf.mxu0
        %v2380 = vadd.f32 %v682, %v2379
        %v2381 = vpop.f32.mrf.mxu0
        %v2382 = vpop.f32.mrf.mxu0
        %v2383 = vadd.f32 %v682, %v2382
        %v2384 = vpop.f32.mrf.mxu0
        %2385 = vmatprep.mubr.bf16.mxu0 0
        %2386 = vmatmul.mubr.bf16.gmra.mxu0 %v1566
        %v2387 = vpop.f32.mrf.mxu0
        %v2388 = vadd.f32 %v682, %v2387
        %v2389 = vpop.f32.mrf.mxu0
        %v2390 = vpop.f32.mrf.mxu0
        %v2391 = vadd.f32 %v682, %v2390
        %v2392 = vpop.f32.mrf.mxu0
        %2393 = vmatprep.mubr.bf16.mxu0 0
        %2394 = vmatmul.mubr.bf16.gmra.mxu0 %v1569
        %v2395 = vpop.f32.mrf.mxu0
        %v2396 = vadd.f32 %v682, %v2395
        %v2397 = vpop.f32.mrf.mxu0
        %v2398 = vpop.f32.mrf.mxu0
        %v2399 = vadd.f32 %v682, %v2398
        %v2400 = vpop.f32.mrf.mxu0
        %2401 = vmatprep.mubr.bf16.mxu0 0
        %2402 = vmatmul.mubr.bf16.gmra.mxu0 %v1572
        %v2403 = vpop.f32.mrf.mxu0
        %v2404 = vadd.f32 %v682, %v2403
        %v2405 = vpop.f32.mrf.mxu0
        %v2406 = vpop.f32.mrf.mxu0
        %v2407 = vadd.f32 %v682, %v2406
        %v2408 = vpop.f32.mrf.mxu0
        %2409 = vmatprep.mubr.bf16.mxu0 0
        %2410 = vmatmul.mubr.bf16.gmra.mxu0 %v1575
        %v2411 = vpop.f32.mrf.mxu0
        %v2412 = vadd.f32 %v682, %v2411
        %v2413 = vpop.f32.mrf.mxu0
        %v2414 = vpop.f32.mrf.mxu0
        %v2415 = vadd.f32 %v682, %v2414
        %v2416 = vpop.f32.mrf.mxu0
        %2417 = vmatprep.mubr.bf16.mxu0 0
        %2418 = vmatmul.mubr.bf16.gmra.mxu0 %v1578
        %v2419 = vpop.f32.mrf.mxu0
        %v2420 = vadd.f32 %v682, %v2419
        %v2421 = vpop.f32.mrf.mxu0
        %v2422 = vpop.f32.mrf.mxu0
        %v2423 = vadd.f32 %v682, %v2422
        %v2424 = vpop.f32.mrf.mxu0
        %2425 = vmatprep.mubr.bf16.mxu0 0
        %2426 = vmatmul.mubr.bf16.gmra.mxu0 %v1581
        %v2427 = vpop.f32.mrf.mxu0
        %v2428 = vadd.f32 %v682, %v2427
        %v2429 = vpop.f32.mrf.mxu0
        %v2430 = vpop.f32.mrf.mxu0
        %v2431 = vadd.f32 %v682, %v2430
        %v2432 = vpop.f32.mrf.mxu0
        %2433 = vmatprep.mubr.bf16.mxu0 0
        %2434 = vmatmul.mubr.bf16.gmra.mxu0 %v1584
        %v2435 = vpop.f32.mrf.mxu0
        %v2436 = vadd.f32 %v682, %v2435
        %v2437 = vpop.f32.mrf.mxu0
        %v2438 = vpop.f32.mrf.mxu0
        %v2439 = vadd.f32 %v682, %v2438
        %v2440 = vpop.f32.mrf.mxu0
        %2441 = vmatprep.mubr.bf16.mxu0 0
        %2442 = vmatmul.mubr.bf16.gmra.mxu0 %v1587
        %v2443 = vpop.f32.mrf.mxu0
        %v2444 = vadd.f32 %v682, %v2443
        %v2445 = vpop.f32.mrf.mxu0
        %v2446 = vpop.f32.mrf.mxu0
        %v2447 = vadd.f32 %v682, %v2446
        %v2448 = vpop.f32.mrf.mxu0
        %2449 = vmatprep.mubr.bf16.mxu0 0
        %2450 = vmatmul.mubr.bf16.gmra.mxu0 %v1590
        %v2451 = vpop.f32.mrf.mxu0
        %v2452 = vadd.f32 %v682, %v2451
        %v2453 = vpop.f32.mrf.mxu0
        %v2454 = vpop.f32.mrf.mxu0
        %v2455 = vadd.f32 %v682, %v2454
        %v2456 = vpop.f32.mrf.mxu0
        %2457 = vmatprep.mubr.bf16.mxu0 0
        %2458 = vmatmul.mubr.bf16.gmra.mxu0 %v1593
        %v2459 = vpop.f32.mrf.mxu0
        %v2460 = vadd.f32 %v682, %v2459
        %v2461 = vpop.f32.mrf.mxu0
        %v2462 = vpop.f32.mrf.mxu0
        %v2463 = vadd.f32 %v682, %v2462
        %v2464 = vpop.f32.mrf.mxu0
        %2465 = vmatprep.mubr.bf16.mxu0 0
        %2466 = vmatmul.mubr.bf16.gmra.mxu0 %v1596
        %v2467 = vpop.f32.mrf.mxu0
        %v2468 = vadd.f32 %v682, %v2467
        %v2469 = vpop.f32.mrf.mxu0
        %v2470 = vpop.f32.mrf.mxu0
        %v2471 = vadd.f32 %v682, %v2470
        %v2472 = vpop.f32.mrf.mxu0
        %2473 = vmatprep.mubr.bf16.mxu0 0
        %2474 = vmatmul.mubr.bf16.gmra.mxu0 %v1599
        %v2475 = vpop.f32.mrf.mxu0
        %v2476 = vadd.f32 %v682, %v2475
        %v2477 = vpop.f32.mrf.mxu0
        %v2478 = vpop.f32.mrf.mxu0
        %v2479 = vadd.f32 %v682, %v2478
        %v2480 = vpop.f32.mrf.mxu0
        %2481 = vmatprep.mubr.bf16.mxu0 0
        %2482 = vmatmul.mubr.bf16.gmra.mxu0 %v1602
        %v2483 = vpop.f32.mrf.mxu0
        %v2484 = vadd.f32 %v682, %v2483
        %v2485 = vpop.f32.mrf.mxu0
        %v2486 = vpop.f32.mrf.mxu0
        %v2487 = vadd.f32 %v682, %v2486
        %v2488 = vpop.f32.mrf.mxu0
        %2489 = vmatprep.mubr.bf16.mxu0 0
        %2490 = vmatmul.mubr.bf16.gmra.mxu0 %v1605
        %v2491 = vpop.f32.mrf.mxu0
        %v2492 = vadd.f32 %v682, %v2491
        %v2493 = vpop.f32.mrf.mxu0
        %v2494 = vpop.f32.mrf.mxu0
        %v2495 = vadd.f32 %v682, %v2494
        %v2496 = vpop.f32.mrf.mxu0
        %2497 = vmatprep.mubr.bf16.mxu0 0
        %2498 = vmatmul.mubr.bf16.gmra.mxu0 %v1608
        %v2499 = vpop.f32.mrf.mxu0
        %v2500 = vadd.f32 %v682, %v2499
        %v2501 = vpop.f32.mrf.mxu0
        %v2502 = vpop.f32.mrf.mxu0
        %v2503 = vadd.f32 %v682, %v2502
        %v2504 = vpop.f32.mrf.mxu0
        %2505 = vmatprep.mubr.bf16.mxu0 0
        %2506 = vmatmul.mubr.bf16.gmra.mxu0 %v1611
        %v2507 = vpop.f32.mrf.mxu0
        %v2508 = vadd.f32 %v682, %v2507
        %v2509 = vpop.f32.mrf.mxu0
        %v2510 = vpop.f32.mrf.mxu0
        %v2511 = vadd.f32 %v682, %v2510
        %v2512 = vpop.f32.mrf.mxu0
        %2513 = vmatprep.mubr.bf16.mxu0 0
        %2514 = vmatmul.mubr.bf16.gmra.mxu0 %v1614
        %v2515 = vpop.f32.mrf.mxu0
        %v2516 = vadd.f32 %v682, %v2515
        %v2517 = vpop.f32.mrf.mxu0
        %v2518 = vpop.f32.mrf.mxu0
        %v2519 = vadd.f32 %v682, %v2518
        %v2520 = vpop.f32.mrf.mxu0
        %2521 = vmatprep.mubr.bf16.mxu0 0
        %2522 = vmatmul.mubr.bf16.gmra.mxu0 %v1617
        %v2523 = vpop.f32.mrf.mxu0
        %v2524 = vadd.f32 %v682, %v2523
        %v2525 = vpop.f32.mrf.mxu0
        %v2526 = vpop.f32.mrf.mxu0
        %v2527 = vadd.f32 %v682, %v2526
        %v2528 = vpop.f32.mrf.mxu0
        %2529 = vmatprep.mubr.bf16.mxu0 0
        %2530 = vmatmul.mubr.bf16.gmra.mxu0 %v1620
        %v2531 = vpop.f32.mrf.mxu0
        %v2532 = vadd.f32 %v682, %v2531
        %v2533 = vpop.f32.mrf.mxu0
        %v2534 = vpop.f32.mrf.mxu0
        %v2535 = vadd.f32 %v682, %v2534
        %v2536 = vpop.f32.mrf.mxu0
        %2537 = vmatprep.mubr.bf16.mxu0 0
        %2538 = vmatmul.mubr.bf16.gmra.mxu0 %v1623
        %v2539 = vpop.f32.mrf.mxu0
        %v2540 = vadd.f32 %v682, %v2539
        %v2541 = vpop.f32.mrf.mxu0
        %v2542 = vpop.f32.mrf.mxu0
        %v2543 = vadd.f32 %v682, %v2542
        %v2544 = vpop.f32.mrf.mxu0
        %2545 = vmatprep.mubr.bf16.mxu0 0
        %2546 = vmatmul.mubr.bf16.gmra.mxu0 %v1626
        %v2547 = vpop.f32.mrf.mxu0
        %v2548 = vadd.f32 %v682, %v2547
        %v2549 = vpop.f32.mrf.mxu0
        %v2550 = vpop.f32.mrf.mxu0
        %v2551 = vadd.f32 %v682, %v2550
        %v2552 = vpop.f32.mrf.mxu0
        %2553 = vmatprep.mubr.bf16.mxu0 0
        %2554 = vmatmul.mubr.bf16.gmra.mxu0 %v1629
        %v2555 = vpop.f32.mrf.mxu0
        %v2556 = vadd.f32 %v682, %v2555
        %v2557 = vpop.f32.mrf.mxu0
        %v2558 = vpop.f32.mrf.mxu0
        %v2559 = vadd.f32 %v682, %v2558
        %v2560 = vpop.f32.mrf.mxu0
        %2561 = vmatprep.mubr.bf16.mxu0 0
        %2562 = vmatmul.mubr.bf16.gmra.mxu0 %v1632
        %v2563 = vpop.f32.mrf.mxu0
        %v2564 = vadd.f32 %v682, %v2563
        %v2565 = vpop.f32.mrf.mxu0
        %v2566 = vpop.f32.mrf.mxu0
        %v2567 = vadd.f32 %v682, %v2566
        %v2568 = vpop.f32.mrf.mxu0
        %2569 = vmatprep.mubr.bf16.mxu0 0
        %2570 = vmatmul.mubr.bf16.gmra.mxu0 %v1635
        %v2571 = vpop.f32.mrf.mxu0
        %v2572 = vadd.f32 %v682, %v2571
        %v2573 = vpop.f32.mrf.mxu0
        %v2574 = vpop.f32.mrf.mxu0
        %v2575 = vadd.f32 %v682, %v2574
        %v2576 = vpop.f32.mrf.mxu0
        %2577 = vmatprep.mubr.bf16.mxu0 0
        %2578 = vmatmul.mubr.bf16.gmra.mxu0 %v1638
        %v2579 = vpop.f32.mrf.mxu0
        %v2580 = vadd.f32 %v682, %v2579
        %v2581 = vpop.f32.mrf.mxu0
        %v2582 = vpop.f32.mrf.mxu0
        %v2583 = vadd.f32 %v682, %v2582
        %v2584 = vpop.f32.mrf.mxu0
        %2585 = vmatprep.mubr.bf16.mxu0 0
        %2586 = vmatmul.mubr.bf16.gmra.mxu0 %v1641
        %v2587 = vpop.f32.mrf.mxu0
        %v2588 = vadd.f32 %v682, %v2587
        %v2589 = vpop.f32.mrf.mxu0
        %v2590 = vpop.f32.mrf.mxu0
        %v2591 = vadd.f32 %v682, %v2590
        %v2592 = vpop.f32.mrf.mxu0
        %2593 = vmatprep.mubr.bf16.mxu0 0
        %2594 = vmatmul.mubr.bf16.gmra.mxu0 %v1644
        %v2595 = vpop.f32.mrf.mxu0
        %v2596 = vadd.f32 %v682, %v2595
        %v2597 = vpop.f32.mrf.mxu0
        %v2598 = vpop.f32.mrf.mxu0
        %v2599 = vadd.f32 %v682, %v2598
        %v2600 = vpop.f32.mrf.mxu0
        %2601 = vmatprep.mubr.bf16.mxu0 0
        %2602 = vmatmul.mubr.bf16.gmra.mxu0 %v1647
        %v2603 = vpop.f32.mrf.mxu0
        %v2604 = vadd.f32 %v682, %v2603
        %v2605 = vpop.f32.mrf.mxu0
        %v2606 = vpop.f32.mrf.mxu0
        %v2607 = vadd.f32 %v682, %v2606
        %v2608 = vpop.f32.mrf.mxu0
        %2609 = vmatprep.mubr.bf16.mxu0 0
        %2610 = vmatmul.mubr.bf16.gmra.mxu0 %v1650
        %v2611 = vpop.f32.mrf.mxu0
        %v2612 = vadd.f32 %v682, %v2611
        %v2613 = vpop.f32.mrf.mxu0
        %v2614 = vpop.f32.mrf.mxu0
        %v2615 = vadd.f32 %v682, %v2614
        %v2616 = vpop.f32.mrf.mxu0
        %2617 = vmatprep.mubr.bf16.mxu0 0
        %2618 = vmatmul.mubr.bf16.gmra.mxu0 %v1653
        %v2619 = vpop.f32.mrf.mxu0
        %v2620 = vadd.f32 %v682, %v2619
        %v2621 = vpop.f32.mrf.mxu0
        %v2622 = vpop.f32.mrf.mxu0
        %v2623 = vadd.f32 %v682, %v2622
        %v2624 = vpop.f32.mrf.mxu0
        %2625 = vmatprep.mubr.bf16.mxu0 0
        %2626 = vmatmul.mubr.bf16.gmra.mxu0 %v1656
        %v2627 = vpop.f32.mrf.mxu0
        %v2628 = vadd.f32 %v682, %v2627
        %v2629 = vpop.f32.mrf.mxu0
        %v2630 = vpop.f32.mrf.mxu0
        %v2631 = vadd.f32 %v682, %v2630
        %v2632 = vpop.f32.mrf.mxu0
        %2633 = vmatprep.mubr.bf16.mxu0 0
        %2634 = vmatmul.mubr.bf16.gmra.mxu0 %v1659
        %v2635 = vpop.f32.mrf.mxu0
        %v2636 = vadd.f32 %v682, %v2635
        %v2637 = vpop.f32.mrf.mxu0
        %v2638 = vpop.f32.mrf.mxu0
        %v2639 = vadd.f32 %v682, %v2638
        %v2640 = vpop.f32.mrf.mxu0
        %2641 = vmatprep.mubr.bf16.mxu0 0
        %2642 = vmatmul.mubr.bf16.gmra.mxu0 %v1662
        %v2643 = vpop.f32.mrf.mxu0
        %v2644 = vadd.f32 %v682, %v2643
        %v2645 = vpop.f32.mrf.mxu0
        %v2646 = vpop.f32.mrf.mxu0
        %v2647 = vadd.f32 %v682, %v2646
        %v2648 = vpop.f32.mrf.mxu0
        %2649 = vmatprep.mubr.bf16.mxu0 0
        %2650 = vmatmul.mubr.bf16.gmra.mxu0 %v1665
        %v2651 = vpop.f32.mrf.mxu0
        %v2652 = vadd.f32 %v682, %v2651
        %v2653 = vpop.f32.mrf.mxu0
        %v2654 = vpop.f32.mrf.mxu0
        %v2655 = vadd.f32 %v682, %v2654
        %v2656 = vpop.f32.mrf.mxu0
        %2657 = vmatprep.mubr.bf16.mxu0 0
        %2658 = vmatmul.mubr.bf16.gmra.mxu0 %v1668
        %v2659 = vpop.f32.mrf.mxu0
        %v2660 = vadd.f32 %v682, %v2659
        %v2661 = vpop.f32.mrf.mxu0
        %v2662 = vpop.f32.mrf.mxu0
        %v2663 = vadd.f32 %v682, %v2662
        %v2664 = vpop.f32.mrf.mxu0
        %2665 = vmatprep.mubr.bf16.mxu0 0
        %2666 = vmatmul.mubr.bf16.gmra.mxu0 %v1671
        %v2667 = vpop.f32.mrf.mxu0
        %v2668 = vadd.f32 %v682, %v2667
        %v2669 = vpop.f32.mrf.mxu0
        %v2670 = vpop.f32.mrf.mxu0
        %v2671 = vadd.f32 %v682, %v2670
        %v2672 = vpop.f32.mrf.mxu0
        %2673 = vmatprep.mubr.bf16.mxu0 0
        %2674 = vmatmul.mubr.bf16.gmra.mxu0 %v1674
        %v2675 = vpop.f32.mrf.mxu0
        %v2676 = vadd.f32 %v682, %v2675
        %v2677 = vpop.f32.mrf.mxu0
        %v2678 = vpop.f32.mrf.mxu0
        %v2679 = vadd.f32 %v682, %v2678
        %v2680 = vpop.f32.mrf.mxu0
        %2681 = vmatprep.mubr.bf16.mxu0 0
        %2682 = vmatmul.mubr.bf16.gmra.mxu0 %v1677
        %v2683 = vpop.f32.mrf.mxu0
        %v2684 = vadd.f32 %v682, %v2683
        %v2685 = vpop.f32.mrf.mxu0
        %v2686 = vpop.f32.mrf.mxu0
        %v2687 = vadd.f32 %v682, %v2686
        %v2688 = vpop.f32.mrf.mxu0
        %2689 = vmatprep.mubr.bf16.mxu0 0
        %2690 = vmatmul.mubr.bf16.gmra.mxu0 %v1680
        %v2691 = vpop.f32.mrf.mxu0
        %v2692 = vadd.f32 %v682, %v2691
        %v2693 = vpop.f32.mrf.mxu0
        %v2694 = vpop.f32.mrf.mxu0
        %v2695 = vadd.f32 %v682, %v2694
        %v2696 = vpop.f32.mrf.mxu0
        %2697 = vmatprep.mubr.bf16.mxu0 0
        %2698 = vmatmul.mubr.bf16.gmra.mxu0 %v1683
        %v2699 = vpop.f32.mrf.mxu0
        %v2700 = vadd.f32 %v682, %v2699
        %v2701 = vpop.f32.mrf.mxu0
        %v2702 = vpop.f32.mrf.mxu0
        %v2703 = vadd.f32 %v682, %v2702
        %v2704 = vpop.f32.mrf.mxu0
        %2705 = vmatprep.mubr.bf16.mxu0 0
        %2706 = vmatmul.mubr.bf16.gmra.mxu0 %v1686
        %v2707 = vpop.f32.mrf.mxu0
        %v2708 = vadd.f32 %v682, %v2707
        %v2709 = vpop.f32.mrf.mxu0
        %v2710 = vpop.f32.mrf.mxu0
        %v2711 = vadd.f32 %v682, %v2710
        %v2712 = vpop.f32.mrf.mxu0
        %2713 = vmatprep.mubr.bf16.mxu0 0
        %2714 = vmatmul.mubr.bf16.gmra.mxu0 %v1689
        %v2715 = vpop.f32.mrf.mxu0
        %v2716 = vadd.f32 %v682, %v2715
        %v2717 = vpop.f32.mrf.mxu0
        %v2718 = vpop.f32.mrf.mxu0
        %v2719 = vadd.f32 %v682, %v2718
        %v2720 = vpop.f32.mrf.mxu0
        %2721 = vmatprep.mubr.bf16.mxu0 0
        %2722 = vmatmul.mubr.bf16.gmra.mxu0 %v1692
        %v2723 = vpop.f32.mrf.mxu0
        %v2724 = vadd.f32 %v682, %v2723
        %v2725 = vpop.f32.mrf.mxu0
        %v2726 = vpop.f32.mrf.mxu0
        %v2727 = vadd.f32 %v682, %v2726
        %v2728 = vpop.f32.mrf.mxu0
        %2729 = vmatprep.mubr.bf16.mxu0 0
        %2730 = vmatmul.mubr.bf16.gmra.mxu0 %v1695
        %v2731 = vpop.f32.mrf.mxu0
        %v2732 = vadd.f32 %v682, %v2731
        %v2733 = vpop.f32.mrf.mxu0
        %v2734 = vpop.f32.mrf.mxu0
        %v2735 = vadd.f32 %v682, %v2734
        %v2736 = vpop.f32.mrf.mxu0
        %2737 = vmatprep.mubr.bf16.mxu0 0
        %2738 = vmatmul.mubr.bf16.gmra.mxu0 %v1698
        %v2739 = vpop.f32.mrf.mxu0
        %v2740 = vadd.f32 %v682, %v2739
        %v2741 = vpop.f32.mrf.mxu0
        %v2742 = vpop.f32.mrf.mxu0
        %v2743 = vadd.f32 %v682, %v2742
        %v2744 = vpop.f32.mrf.mxu0
        %2745 = vmatprep.mubr.bf16.mxu0 0
        %2746 = vmatmul.mubr.bf16.gmra.mxu0 %v1701
        %v2747 = vpop.f32.mrf.mxu0
        %v2748 = vadd.f32 %v682, %v2747
        %v2749 = vpop.f32.mrf.mxu0
        %v2750 = vpop.f32.mrf.mxu0
        %v2751 = vadd.f32 %v682, %v2750
        %v2752 = vpop.f32.mrf.mxu0
        %2753 = vmatprep.mubr.bf16.mxu0 0
        %2754 = vmatmul.mubr.bf16.gmra.mxu0 %v1704
        %v2755 = vpop.f32.mrf.mxu0
        %v2756 = vadd.f32 %v682, %v2755
        %v2757 = vpop.f32.mrf.mxu0
        %v2758 = vpop.f32.mrf.mxu0
        %v2759 = vadd.f32 %v682, %v2758
        %v2760 = vpop.f32.mrf.mxu0
        %2761 = vmatprep.mubr.bf16.mxu0 0
        %2762 = vmatmul.mubr.bf16.gmra.mxu0 %v1707
        %v2763 = vpop.f32.mrf.mxu0
        %v2764 = vadd.f32 %v682, %v2763
        %v2765 = vpop.f32.mrf.mxu0
        %v2766 = vpop.f32.mrf.mxu0
        %v2767 = vadd.f32 %v682, %v2766
        %v2768 = vpop.f32.mrf.mxu0
        %2769 = vdwg.mxu0
        %v2770 = vmax.f32 %v1748, 0.0
        %v2771 = vmax.f32 %v1751, 0.0
        %v2772 = vmax.f32 %v1756, 0.0
        %v2773 = vmax.f32 %v1759, 0.0
        %v2774 = vmax.f32 %v1764, 0.0
        %v2775 = vmax.f32 %v1767, 0.0
        %v2776 = vmax.f32 %v1772, 0.0
        %v2777 = vmax.f32 %v1775, 0.0
        %v2778 = vmax.f32 %v1780, 0.0
        %v2779 = vmax.f32 %v1783, 0.0
        %v2780 = vmax.f32 %v1788, 0.0
        %v2781 = vmax.f32 %v1791, 0.0
        %v2782 = vmax.f32 %v1796, 0.0
        %v2783 = vmax.f32 %v1799, 0.0
        %v2784 = vmax.f32 %v1804, 0.0
        %v2785 = vmax.f32 %v1807, 0.0
        %v2786 = vmax.f32 %v1812, 0.0
        %v2787 = vmax.f32 %v1815, 0.0
        %v2788 = vmax.f32 %v1820, 0.0
        %v2789 = vmax.f32 %v1823, 0.0
        %v2790 = vmax.f32 %v1828, 0.0
        %v2791 = vmax.f32 %v1831, 0.0
        %v2792 = vmax.f32 %v1836, 0.0
        %v2793 = vmax.f32 %v1839, 0.0
        %v2794 = vmax.f32 %v1844, 0.0
        %v2795 = vmax.f32 %v1847, 0.0
        %v2796 = vmax.f32 %v1852, 0.0
        %v2797 = vmax.f32 %v1855, 0.0
        %v2798 = vmax.f32 %v1860, 0.0
        %v2799 = vmax.f32 %v1863, 0.0
        %v2800 = vmax.f32 %v1868, 0.0
        %v2801 = vmax.f32 %v1871, 0.0
        %v2802 = vmax.f32 %v1876, 0.0
        %v2803 = vmax.f32 %v1879, 0.0
        %v2804 = vmax.f32 %v1884, 0.0
        %v2805 = vmax.f32 %v1887, 0.0
        %v2806 = vmax.f32 %v1892, 0.0
        %v2807 = vmax.f32 %v1895, 0.0
        %v2808 = vmax.f32 %v1900, 0.0
        %v2809 = vmax.f32 %v1903, 0.0
        %v2810 = vmax.f32 %v1908, 0.0
        %v2811 = vmax.f32 %v1911, 0.0
        %v2812 = vmax.f32 %v1916, 0.0
        %v2813 = vmax.f32 %v1919, 0.0
        %v2814 = vmax.f32 %v1924, 0.0
        %v2815 = vmax.f32 %v1927, 0.0
        %v2816 = vmax.f32 %v1932, 0.0
        %v2817 = vmax.f32 %v1935, 0.0
        %v2818 = vmax.f32 %v1940, 0.0
        %v2819 = vmax.f32 %v1943, 0.0
        %v2820 = vmax.f32 %v1948, 0.0
        %v2821 = vmax.f32 %v1951, 0.0
        %v2822 = vmax.f32 %v1956, 0.0
        %v2823 = vmax.f32 %v1959, 0.0
        %v2824 = vmax.f32 %v1964, 0.0
        %v2825 = vmax.f32 %v1967, 0.0
        %v2826 = vmax.f32 %v1972, 0.0
        %v2827 = vmax.f32 %v1975, 0.0
        %v2828 = vmax.f32 %v1980, 0.0
        %v2829 = vmax.f32 %v1983, 0.0
        %v2830 = vmax.f32 %v1988, 0.0
        %v2831 = vmax.f32 %v1991, 0.0
        %v2832 = vmax.f32 %v1996, 0.0
        %v2833 = vmax.f32 %v1999, 0.0
        %v2834 = vmax.f32 %v2004, 0.0
        %v2835 = vmax.f32 %v2007, 0.0
        %v2836 = vmax.f32 %v2012, 0.0
        %v2837 = vmax.f32 %v2015, 0.0
        %v2838 = vmax.f32 %v2020, 0.0
        %v2839 = vmax.f32 %v2023, 0.0
        %v2840 = vmax.f32 %v2028, 0.0
        %v2841 = vmax.f32 %v2031, 0.0
        %v2842 = vmax.f32 %v2036, 0.0
        %v2843 = vmax.f32 %v2039, 0.0
        %v2844 = vmax.f32 %v2044, 0.0
        %v2845 = vmax.f32 %v2047, 0.0
        %v2846 = vmax.f32 %v2052, 0.0
        %v2847 = vmax.f32 %v2055, 0.0
        %v2848 = vmax.f32 %v2060, 0.0
        %v2849 = vmax.f32 %v2063, 0.0
        %v2850 = vmax.f32 %v2068, 0.0
        %v2851 = vmax.f32 %v2071, 0.0
        %v2852 = vmax.f32 %v2076, 0.0
        %v2853 = vmax.f32 %v2079, 0.0
        %v2854 = vmax.f32 %v2084, 0.0
        %v2855 = vmax.f32 %v2087, 0.0
        %v2856 = vmax.f32 %v2092, 0.0
        %v2857 = vmax.f32 %v2095, 0.0
        %v2858 = vmax.f32 %v2100, 0.0
        %v2859 = vmax.f32 %v2103, 0.0
        %v2860 = vmax.f32 %v2108, 0.0
        %v2861 = vmax.f32 %v2111, 0.0
        %v2862 = vmax.f32 %v2116, 0.0
        %v2863 = vmax.f32 %v2119, 0.0
        %v2864 = vmax.f32 %v2124, 0.0
        %v2865 = vmax.f32 %v2127, 0.0
        %v2866 = vmax.f32 %v2132, 0.0
        %v2867 = vmax.f32 %v2135, 0.0
        %v2868 = vmax.f32 %v2140, 0.0
        %v2869 = vmax.f32 %v2143, 0.0
        %v2870 = vmax.f32 %v2148, 0.0
        %v2871 = vmax.f32 %v2151, 0.0
        %v2872 = vmax.f32 %v2156, 0.0
        %v2873 = vmax.f32 %v2159, 0.0
        %v2874 = vmax.f32 %v2164, 0.0
        %v2875 = vmax.f32 %v2167, 0.0
        %v2876 = vmax.f32 %v2172, 0.0
        %v2877 = vmax.f32 %v2175, 0.0
        %v2878 = vmax.f32 %v2180, 0.0
        %v2879 = vmax.f32 %v2183, 0.0
        %v2880 = vmax.f32 %v2188, 0.0
        %v2881 = vmax.f32 %v2191, 0.0
        %v2882 = vmax.f32 %v2196, 0.0
        %v2883 = vmax.f32 %v2199, 0.0
        %v2884 = vmax.f32 %v2204, 0.0
        %v2885 = vmax.f32 %v2207, 0.0
        %v2886 = vmax.f32 %v2212, 0.0
        %v2887 = vmax.f32 %v2215, 0.0
        %v2888 = vmax.f32 %v2220, 0.0
        %v2889 = vmax.f32 %v2223, 0.0
        %v2890 = vmax.f32 %v2228, 0.0
        %v2891 = vmax.f32 %v2231, 0.0
        %v2892 = vmax.f32 %v2236, 0.0
        %v2893 = vmax.f32 %v2239, 0.0
        %v2894 = vmax.f32 %v2244, 0.0
        %v2895 = vmax.f32 %v2247, 0.0
        %v2896 = vmax.f32 %v2252, 0.0
        %v2897 = vmax.f32 %v2255, 0.0
        %v2898 = vmax.f32 %v2260, 0.0
        %v2899 = vmax.f32 %v2263, 0.0
        %v2900 = vmax.f32 %v2268, 0.0
        %v2901 = vmax.f32 %v2271, 0.0
        %v2902 = vmax.f32 %v2276, 0.0
        %v2903 = vmax.f32 %v2279, 0.0
        %v2904 = vmax.f32 %v2284, 0.0
        %v2905 = vmax.f32 %v2287, 0.0
        %v2906 = vmax.f32 %v2292, 0.0
        %v2907 = vmax.f32 %v2295, 0.0
        %v2908 = vmax.f32 %v2300, 0.0
        %v2909 = vmax.f32 %v2303, 0.0
        %v2910 = vmax.f32 %v2308, 0.0
        %v2911 = vmax.f32 %v2311, 0.0
        %v2912 = vmax.f32 %v2316, 0.0
        %v2913 = vmax.f32 %v2319, 0.0
        %v2914 = vmax.f32 %v2324, 0.0
        %v2915 = vmax.f32 %v2327, 0.0
        %v2916 = vmax.f32 %v2332, 0.0
        %v2917 = vmax.f32 %v2335, 0.0
        %v2918 = vmax.f32 %v2340, 0.0
        %v2919 = vmax.f32 %v2343, 0.0
        %v2920 = vmax.f32 %v2348, 0.0
        %v2921 = vmax.f32 %v2351, 0.0
        %v2922 = vmax.f32 %v2356, 0.0
        %v2923 = vmax.f32 %v2359, 0.0
        %v2924 = vmax.f32 %v2364, 0.0
        %v2925 = vmax.f32 %v2367, 0.0
        %v2926 = vmax.f32 %v2372, 0.0
        %v2927 = vmax.f32 %v2375, 0.0
        %v2928 = vmax.f32 %v2380, 0.0
        %v2929 = vmax.f32 %v2383, 0.0
        %v2930 = vmax.f32 %v2388, 0.0
        %v2931 = vmax.f32 %v2391, 0.0
        %v2932 = vmax.f32 %v2396, 0.0
        %v2933 = vmax.f32 %v2399, 0.0
        %v2934 = vmax.f32 %v2404, 0.0
        %v2935 = vmax.f32 %v2407, 0.0
        %v2936 = vmax.f32 %v2412, 0.0
        %v2937 = vmax.f32 %v2415, 0.0
        %v2938 = vmax.f32 %v2420, 0.0
        %v2939 = vmax.f32 %v2423, 0.0
        %v2940 = vmax.f32 %v2428, 0.0
        %v2941 = vmax.f32 %v2431, 0.0
        %v2942 = vmax.f32 %v2436, 0.0
        %v2943 = vmax.f32 %v2439, 0.0
        %v2944 = vmax.f32 %v2444, 0.0
        %v2945 = vmax.f32 %v2447, 0.0
        %v2946 = vmax.f32 %v2452, 0.0
        %v2947 = vmax.f32 %v2455, 0.0
        %v2948 = vmax.f32 %v2460, 0.0
        %v2949 = vmax.f32 %v2463, 0.0
        %v2950 = vmax.f32 %v2468, 0.0
        %v2951 = vmax.f32 %v2471, 0.0
        %v2952 = vmax.f32 %v2476, 0.0
        %v2953 = vmax.f32 %v2479, 0.0
        %v2954 = vmax.f32 %v2484, 0.0
        %v2955 = vmax.f32 %v2487, 0.0
        %v2956 = vmax.f32 %v2492, 0.0
        %v2957 = vmax.f32 %v2495, 0.0
        %v2958 = vmax.f32 %v2500, 0.0
        %v2959 = vmax.f32 %v2503, 0.0
        %v2960 = vmax.f32 %v2508, 0.0
        %v2961 = vmax.f32 %v2511, 0.0
        %v2962 = vmax.f32 %v2516, 0.0
        %v2963 = vmax.f32 %v2519, 0.0
        %v2964 = vmax.f32 %v2524, 0.0
        %v2965 = vmax.f32 %v2527, 0.0
        %v2966 = vmax.f32 %v2532, 0.0
        %v2967 = vmax.f32 %v2535, 0.0
        %v2968 = vmax.f32 %v2540, 0.0
        %v2969 = vmax.f32 %v2543, 0.0
        %v2970 = vmax.f32 %v2548, 0.0
        %v2971 = vmax.f32 %v2551, 0.0
        %v2972 = vmax.f32 %v2556, 0.0
        %v2973 = vmax.f32 %v2559, 0.0
        %v2974 = vmax.f32 %v2564, 0.0
        %v2975 = vmax.f32 %v2567, 0.0
        %v2976 = vmax.f32 %v2572, 0.0
        %v2977 = vmax.f32 %v2575, 0.0
        %v2978 = vmax.f32 %v2580, 0.0
        %v2979 = vmax.f32 %v2583, 0.0
        %v2980 = vmax.f32 %v2588, 0.0
        %v2981 = vmax.f32 %v2591, 0.0
        %v2982 = vmax.f32 %v2596, 0.0
        %v2983 = vmax.f32 %v2599, 0.0
        %v2984 = vmax.f32 %v2604, 0.0
        %v2985 = vmax.f32 %v2607, 0.0
        %v2986 = vmax.f32 %v2612, 0.0
        %v2987 = vmax.f32 %v2615, 0.0
        %v2988 = vmax.f32 %v2620, 0.0
        %v2989 = vmax.f32 %v2623, 0.0
        %v2990 = vmax.f32 %v2628, 0.0
        %v2991 = vmax.f32 %v2631, 0.0
        %v2992 = vmax.f32 %v2636, 0.0
        %v2993 = vmax.f32 %v2639, 0.0
        %v2994 = vmax.f32 %v2644, 0.0
        %v2995 = vmax.f32 %v2647, 0.0
        %v2996 = vmax.f32 %v2652, 0.0
        %v2997 = vmax.f32 %v2655, 0.0
        %v2998 = vmax.f32 %v2660, 0.0
        %v2999 = vmax.f32 %v2663, 0.0
        %v3000 = vmax.f32 %v2668, 0.0
        %v3001 = vmax.f32 %v2671, 0.0
        %v3002 = vmax.f32 %v2676, 0.0
        %v3003 = vmax.f32 %v2679, 0.0
        %v3004 = vmax.f32 %v2684, 0.0
        %v3005 = vmax.f32 %v2687, 0.0
        %v3006 = vmax.f32 %v2692, 0.0
        %v3007 = vmax.f32 %v2695, 0.0
        %v3008 = vmax.f32 %v2700, 0.0
        %v3009 = vmax.f32 %v2703, 0.0
        %v3010 = vmax.f32 %v2708, 0.0
        %v3011 = vmax.f32 %v2711, 0.0
        %v3012 = vmax.f32 %v2716, 0.0
        %v3013 = vmax.f32 %v2719, 0.0
        %v3014 = vmax.f32 %v2724, 0.0
        %v3015 = vmax.f32 %v2727, 0.0
        %v3016 = vmax.f32 %v2732, 0.0
        %v3017 = vmax.f32 %v2735, 0.0
        %v3018 = vmax.f32 %v2740, 0.0
        %v3019 = vmax.f32 %v2743, 0.0
        %v3020 = vmax.f32 %v2748, 0.0
        %v3021 = vmax.f32 %v2751, 0.0
        %v3022 = vmax.f32 %v2756, 0.0
        %v3023 = vmax.f32 %v2759, 0.0
        %v3024 = vmax.f32 %v2764, 0.0
        %v3025 = vmax.f32 %v2767, 0.0
        %v3026 = vpack.c.bf16 %v2771, %v2770
        %v3027 = vpack.c.bf16 %v2773, %v2772
        %v3028 = vpack.c.bf16 %v2775, %v2774
        %v3029 = vpack.c.bf16 %v2777, %v2776
        %v3030 = vpack.c.bf16 %v2779, %v2778
        %v3031 = vpack.c.bf16 %v2781, %v2780
        %v3032 = vpack.c.bf16 %v2783, %v2782
        %v3033 = vpack.c.bf16 %v2785, %v2784
        %v3034 = vpack.c.bf16 %v2787, %v2786
        %v3035 = vpack.c.bf16 %v2789, %v2788
        %v3036 = vpack.c.bf16 %v2791, %v2790
        %v3037 = vpack.c.bf16 %v2793, %v2792
        %v3038 = vpack.c.bf16 %v2795, %v2794
        %v3039 = vpack.c.bf16 %v2797, %v2796
        %v3040 = vpack.c.bf16 %v2799, %v2798
        %v3041 = vpack.c.bf16 %v2801, %v2800
        %v3042 = vpack.c.bf16 %v2803, %v2802
        %v3043 = vpack.c.bf16 %v2805, %v2804
        %v3044 = vpack.c.bf16 %v2807, %v2806
        %v3045 = vpack.c.bf16 %v2809, %v2808
        %v3046 = vpack.c.bf16 %v2811, %v2810
        %v3047 = vpack.c.bf16 %v2813, %v2812
        %v3048 = vpack.c.bf16 %v2815, %v2814
        %v3049 = vpack.c.bf16 %v2817, %v2816
        %v3050 = vpack.c.bf16 %v2819, %v2818
        %v3051 = vpack.c.bf16 %v2821, %v2820
        %v3052 = vpack.c.bf16 %v2823, %v2822
        %v3053 = vpack.c.bf16 %v2825, %v2824
        %v3054 = vpack.c.bf16 %v2827, %v2826
        %v3055 = vpack.c.bf16 %v2829, %v2828
        %v3056 = vpack.c.bf16 %v2831, %v2830
        %v3057 = vpack.c.bf16 %v2833, %v2832
        %v3058 = vpack.c.bf16 %v2835, %v2834
        %v3059 = vpack.c.bf16 %v2837, %v2836
        %v3060 = vpack.c.bf16 %v2839, %v2838
        %v3061 = vpack.c.bf16 %v2841, %v2840
        %v3062 = vpack.c.bf16 %v2843, %v2842
        %v3063 = vpack.c.bf16 %v2845, %v2844
        %v3064 = vpack.c.bf16 %v2847, %v2846
        %v3065 = vpack.c.bf16 %v2849, %v2848
        %v3066 = vpack.c.bf16 %v2851, %v2850
        %v3067 = vpack.c.bf16 %v2853, %v2852
        %v3068 = vpack.c.bf16 %v2855, %v2854
        %v3069 = vpack.c.bf16 %v2857, %v2856
        %v3070 = vpack.c.bf16 %v2859, %v2858
        %v3071 = vpack.c.bf16 %v2861, %v2860
        %v3072 = vpack.c.bf16 %v2863, %v2862
        %v3073 = vpack.c.bf16 %v2865, %v2864
        %v3074 = vpack.c.bf16 %v2867, %v2866
        %v3075 = vpack.c.bf16 %v2869, %v2868
        %v3076 = vpack.c.bf16 %v2871, %v2870
        %v3077 = vpack.c.bf16 %v2873, %v2872
        %v3078 = vpack.c.bf16 %v2875, %v2874
        %v3079 = vpack.c.bf16 %v2877, %v2876
        %v3080 = vpack.c.bf16 %v2879, %v2878
        %v3081 = vpack.c.bf16 %v2881, %v2880
        %v3082 = vpack.c.bf16 %v2883, %v2882
        %v3083 = vpack.c.bf16 %v2885, %v2884
        %v3084 = vpack.c.bf16 %v2887, %v2886
        %v3085 = vpack.c.bf16 %v2889, %v2888
        %v3086 = vpack.c.bf16 %v2891, %v2890
        %v3087 = vpack.c.bf16 %v2893, %v2892
        %v3088 = vpack.c.bf16 %v2895, %v2894
        %v3089 = vpack.c.bf16 %v2897, %v2896
        %v3090 = vpack.c.bf16 %v2899, %v2898
        %v3091 = vpack.c.bf16 %v2901, %v2900
        %v3092 = vpack.c.bf16 %v2903, %v2902
        %v3093 = vpack.c.bf16 %v2905, %v2904
        %v3094 = vpack.c.bf16 %v2907, %v2906
        %v3095 = vpack.c.bf16 %v2909, %v2908
        %v3096 = vpack.c.bf16 %v2911, %v2910
        %v3097 = vpack.c.bf16 %v2913, %v2912
        %v3098 = vpack.c.bf16 %v2915, %v2914
        %v3099 = vpack.c.bf16 %v2917, %v2916
        %v3100 = vpack.c.bf16 %v2919, %v2918
        %v3101 = vpack.c.bf16 %v2921, %v2920
        %v3102 = vpack.c.bf16 %v2923, %v2922
        %v3103 = vpack.c.bf16 %v2925, %v2924
        %v3104 = vpack.c.bf16 %v2927, %v2926
        %v3105 = vpack.c.bf16 %v2929, %v2928
        %v3106 = vpack.c.bf16 %v2931, %v2930
        %v3107 = vpack.c.bf16 %v2933, %v2932
        %v3108 = vpack.c.bf16 %v2935, %v2934
        %v3109 = vpack.c.bf16 %v2937, %v2936
        %v3110 = vpack.c.bf16 %v2939, %v2938
        %v3111 = vpack.c.bf16 %v2941, %v2940
        %v3112 = vpack.c.bf16 %v2943, %v2942
        %v3113 = vpack.c.bf16 %v2945, %v2944
        %v3114 = vpack.c.bf16 %v2947, %v2946
        %v3115 = vpack.c.bf16 %v2949, %v2948
        %v3116 = vpack.c.bf16 %v2951, %v2950
        %v3117 = vpack.c.bf16 %v2953, %v2952
        %v3118 = vpack.c.bf16 %v2955, %v2954
        %v3119 = vpack.c.bf16 %v2957, %v2956
        %v3120 = vpack.c.bf16 %v2959, %v2958
        %v3121 = vpack.c.bf16 %v2961, %v2960
        %v3122 = vpack.c.bf16 %v2963, %v2962
        %v3123 = vpack.c.bf16 %v2965, %v2964
        %v3124 = vpack.c.bf16 %v2967, %v2966
        %v3125 = vpack.c.bf16 %v2969, %v2968
        %v3126 = vpack.c.bf16 %v2971, %v2970
        %v3127 = vpack.c.bf16 %v2973, %v2972
        %v3128 = vpack.c.bf16 %v2975, %v2974
        %v3129 = vpack.c.bf16 %v2977, %v2976
        %v3130 = vpack.c.bf16 %v2979, %v2978
        %v3131 = vpack.c.bf16 %v2981, %v2980
        %v3132 = vpack.c.bf16 %v2983, %v2982
        %v3133 = vpack.c.bf16 %v2985, %v2984
        %v3134 = vpack.c.bf16 %v2987, %v2986
        %v3135 = vpack.c.bf16 %v2989, %v2988
        %v3136 = vpack.c.bf16 %v2991, %v2990
        %v3137 = vpack.c.bf16 %v2993, %v2992
        %v3138 = vpack.c.bf16 %v2995, %v2994
        %v3139 = vpack.c.bf16 %v2997, %v2996
        %v3140 = vpack.c.bf16 %v2999, %v2998
        %v3141 = vpack.c.bf16 %v3001, %v3000
        %v3142 = vpack.c.bf16 %v3003, %v3002
        %v3143 = vpack.c.bf16 %v3005, %v3004
        %v3144 = vpack.c.bf16 %v3007, %v3006
        %v3145 = vpack.c.bf16 %v3009, %v3008
        %v3146 = vpack.c.bf16 %v3011, %v3010
        %v3147 = vpack.c.bf16 %v3013, %v3012
        %v3148 = vpack.c.bf16 %v3015, %v3014
        %v3149 = vpack.c.bf16 %v3017, %v3016
        %v3150 = vpack.c.bf16 %v3019, %v3018
        %v3151 = vpack.c.bf16 %v3021, %v3020
        %v3152 = vpack.c.bf16 %v3023, %v3022
        %v3153 = vpack.c.bf16 %v3025, %v3024
        %v3154 = vld [vmem:[%s3] sm:$0xf]
        %v3155 = vld [vmem:[%s3 + $0x4] sm:$0xf]
        %v3156 = vld [vmem:[%s3 + $0x8] sm:$0xf]
        %v3157 = vld [vmem:[%s3 + $0xc] sm:$0xf]
        %v3158 = vld [vmem:[%s3 + $0x10] sm:$0xf]
        %v3159 = vld [vmem:[%s3 + $0x14] sm:$0xf]
        %v3160 = vld [vmem:[%s3 + $0x18] sm:$0xf]
        %v3161 = vld [vmem:[%s3 + $0x1c] sm:$0xf]
        %v3162 = vld [vmem:[%s4] sm:$0x1]
        %v3164 = vlaneseq
        %v3165 = vshrl.u32 %v3164, 7
        %v3166 = vsub.s32 0, %v3165
        %v3167 = vrot.slane %v3162, %v3166
        %v3177 = vunpack.c.l.b16 %v3154
        %v3178 = vunpack.c.l.b16 %v3155
        %v3179 = vunpack.c.l.b16 %v3156
        %v3180 = vunpack.c.l.b16 %v3157
        %v3181 = vunpack.c.l.b16 %v3158
        %v3182 = vunpack.c.l.b16 %v3159
        %v3183 = vunpack.c.l.b16 %v3160
        %v3184 = vunpack.c.l.b16 %v3161
        %v3185 = vpack.c.b16 %v3178, %v3177
        %v3186 = vpack.c.b16 %v3180, %v3179
        %v3187 = vpack.c.b16 %v3182, %v3181
        %v3188 = vpack.c.b16 %v3184, %v3183
        %vm3193 = vcmask 523264
        %v3195 = vsel %vm3193, %v3026, 0
        %v3198 = vsel %vm3193, %v3027, 0
        %v3201 = vsel %vm3193, %v3028, 0
        %v3204 = vsel %vm3193, %v3029, 0
        %v3207 = vsel %vm3193, %v3030, 0
        %v3210 = vsel %vm3193, %v3031, 0
        %v3213 = vsel %vm3193, %v3032, 0
        %v3216 = vsel %vm3193, %v3033, 0
        %v3219 = vsel %vm3193, %v3034, 0
        %v3222 = vsel %vm3193, %v3035, 0
        %v3225 = vsel %vm3193, %v3036, 0
        %v3228 = vsel %vm3193, %v3037, 0
        %v3231 = vsel %vm3193, %v3038, 0
        %v3234 = vsel %vm3193, %v3039, 0
        %v3237 = vsel %vm3193, %v3040, 0
        %v3240 = vsel %vm3193, %v3041, 0
        %v3243 = vsel %vm3193, %v3042, 0
        %v3246 = vsel %vm3193, %v3043, 0
        %v3249 = vsel %vm3193, %v3044, 0
        %v3252 = vsel %vm3193, %v3045, 0
        %v3255 = vsel %vm3193, %v3046, 0
        %v3258 = vsel %vm3193, %v3047, 0
        %v3261 = vsel %vm3193, %v3048, 0
        %v3264 = vsel %vm3193, %v3049, 0
        %v3267 = vsel %vm3193, %v3050, 0
        %v3270 = vsel %vm3193, %v3051, 0
        %v3273 = vsel %vm3193, %v3052, 0
        %v3276 = vsel %vm3193, %v3053, 0
        %v3279 = vsel %vm3193, %v3054, 0
        %v3282 = vsel %vm3193, %v3055, 0
        %v3285 = vsel %vm3193, %v3056, 0
        %v3288 = vsel %vm3193, %v3057, 0
        %v3291 = vsel %vm3193, %v3058, 0
        %v3294 = vsel %vm3193, %v3059, 0
        %v3297 = vsel %vm3193, %v3060, 0
        %v3300 = vsel %vm3193, %v3061, 0
        %v3303 = vsel %vm3193, %v3062, 0
        %v3306 = vsel %vm3193, %v3063, 0
        %v3309 = vsel %vm3193, %v3064, 0
        %v3312 = vsel %vm3193, %v3065, 0
        %v3315 = vsel %vm3193, %v3066, 0
        %v3318 = vsel %vm3193, %v3067, 0
        %v3321 = vsel %vm3193, %v3068, 0
        %v3324 = vsel %vm3193, %v3069, 0
        %v3327 = vsel %vm3193, %v3070, 0
        %v3330 = vsel %vm3193, %v3071, 0
        %v3333 = vsel %vm3193, %v3072, 0
        %v3336 = vsel %vm3193, %v3073, 0
        %v3339 = vsel %vm3193, %v3074, 0
        %v3342 = vsel %vm3193, %v3075, 0
        %v3345 = vsel %vm3193, %v3076, 0
        %v3348 = vsel %vm3193, %v3077, 0
        %v3351 = vsel %vm3193, %v3078, 0
        %v3354 = vsel %vm3193, %v3079, 0
        %v3357 = vsel %vm3193, %v3080, 0
        %v3360 = vsel %vm3193, %v3081, 0
        %v3363 = vsel %vm3193, %v3082, 0
        %v3366 = vsel %vm3193, %v3083, 0
        %v3369 = vsel %vm3193, %v3084, 0
        %v3372 = vsel %vm3193, %v3085, 0
        %v3375 = vsel %vm3193, %v3086, 0
        %v3378 = vsel %vm3193, %v3087, 0
        %v3381 = vsel %vm3193, %v3088, 0
        %v3384 = vsel %vm3193, %v3089, 0
        %v3387 = vsel %vm3193, %v3090, 0
        %v3390 = vsel %vm3193, %v3091, 0
        %v3393 = vsel %vm3193, %v3092, 0
        %v3396 = vsel %vm3193, %v3093, 0
        %v3399 = vsel %vm3193, %v3094, 0
        %v3402 = vsel %vm3193, %v3095, 0
        %v3405 = vsel %vm3193, %v3096, 0
        %v3408 = vsel %vm3193, %v3097, 0
        %v3411 = vsel %vm3193, %v3098, 0
        %v3414 = vsel %vm3193, %v3099, 0
        %v3417 = vsel %vm3193, %v3100, 0
        %v3420 = vsel %vm3193, %v3101, 0
        %v3423 = vsel %vm3193, %v3102, 0
        %v3426 = vsel %vm3193, %v3103, 0
        %v3429 = vsel %vm3193, %v3104, 0
        %v3432 = vsel %vm3193, %v3105, 0
        %v3435 = vsel %vm3193, %v3106, 0
        %v3438 = vsel %vm3193, %v3107, 0
        %v3441 = vsel %vm3193, %v3108, 0
        %v3444 = vsel %vm3193, %v3109, 0
        %v3447 = vsel %vm3193, %v3110, 0
        %v3450 = vsel %vm3193, %v3111, 0
        %v3453 = vsel %vm3193, %v3112, 0
        %v3456 = vsel %vm3193, %v3113, 0
        %v3459 = vsel %vm3193, %v3114, 0
        %v3462 = vsel %vm3193, %v3115, 0
        %v3465 = vsel %vm3193, %v3116, 0
        %v3468 = vsel %vm3193, %v3117, 0
        %v3471 = vsel %vm3193, %v3118, 0
        %v3474 = vsel %vm3193, %v3119, 0
        %v3477 = vsel %vm3193, %v3120, 0
        %v3480 = vsel %vm3193, %v3121, 0
        %v3483 = vsel %vm3193, %v3122, 0
        %v3486 = vsel %vm3193, %v3123, 0
        %v3489 = vsel %vm3193, %v3124, 0
        %v3492 = vsel %vm3193, %v3125, 0
        %v3495 = vsel %vm3193, %v3126, 0
        %v3498 = vsel %vm3193, %v3127, 0
        %v3501 = vsel %vm3193, %v3128, 0
        %v3504 = vsel %vm3193, %v3129, 0
        %v3507 = vsel %vm3193, %v3130, 0
        %v3510 = vsel %vm3193, %v3131, 0
        %v3513 = vsel %vm3193, %v3132, 0
        %v3516 = vsel %vm3193, %v3133, 0
        %v3519 = vsel %vm3193, %v3134, 0
        %v3522 = vsel %vm3193, %v3135, 0
        %v3525 = vsel %vm3193, %v3136, 0
        %v3528 = vsel %vm3193, %v3137, 0
        %v3531 = vsel %vm3193, %v3138, 0
        %v3534 = vsel %vm3193, %v3139, 0
        %v3537 = vsel %vm3193, %v3140, 0
        %v3540 = vsel %vm3193, %v3141, 0
        %v3543 = vsel %vm3193, %v3142, 0
        %v3546 = vsel %vm3193, %v3143, 0
        %v3549 = vsel %vm3193, %v3144, 0
        %v3552 = vsel %vm3193, %v3145, 0
        %v3555 = vsel %vm3193, %v3146, 0
        %v3558 = vsel %vm3193, %v3147, 0
        %v3561 = vsel %vm3193, %v3148, 0
        %v3564 = vsel %vm3193, %v3149, 0
        %v3567 = vsel %vm3193, %v3150, 0
        %v3570 = vsel %vm3193, %v3151, 0
        %v3573 = vsel %vm3193, %v3152, 0
        %v3576 = vsel %vm3193, %v3153, 0
        %3578 = vmatprep.subr.bf16.mxu0 0
        %3579 = vmatpush1.bf16.msra.mxu0 0
        %3580 = vmatprep.subr.bf16.mxu0 0
        %3581 = vmatpush1.bf16.msra.mxu0 0
        %3582 = vmatprep.subr.bf16.mxu0 0
        %3583 = vmatpush1.bf16.msra.mxu0 0
        %3584 = vmatprep.subr.bf16.mxu0 0
        %3585 = vmatpush1.bf16.msra.mxu0 0
        %3586 = vmatprep.subr.bf16.mxu0 0
        %3587 = vmatpush1.bf16.msra.mxu0 %v3188
        %3588 = vmatprep.subr.bf16.mxu0 0
        %3589 = vmatpush1.bf16.msra.mxu0 %v3187
        %3590 = vmatprep.subr.bf16.mxu0 0
        %3591 = vmatpush1.bf16.msra.mxu0 %v3186
        %3592 = vmatprep.subr.bf16.mxu0 0
        %3593 = vmatpush1.bf16.msra.mxu0 %v3185
        %3594 = vmatprep.subr.bf16.mxu0 0
        %3595 = vmatpush2.bf16.msra.mxu0 0
        %3596 = vmatprep.subr.bf16.mxu0 0
        %3597 = vmatpush2.bf16.msra.mxu0 0
        %3598 = vmatprep.subr.bf16.mxu0 0
        %3599 = vmatpush2.bf16.msra.mxu0 0
        %3600 = vmatprep.subr.bf16.mxu0 0
        %3601 = vmatpush2.bf16.msra.mxu0 0
        %3602 = vmatprep.subr.bf16.mxu0 0
        %3603 = vmatpush2.bf16.msra.mxu0 0
        %3604 = vmatprep.subr.bf16.mxu0 0
        %3605 = vmatpush2.bf16.msra.mxu0 0
        %3606 = vmatprep.subr.bf16.mxu0 0
        %3607 = vmatpush2.bf16.msra.mxu0 0
        %3608 = vmatprep.subr.bf16.mxu0 0
        %3609 = vmatpush2.bf16.msra.mxu0 0
        %3610 = vmatprep.mubr.bf16.mxu0 0
        %3611 = vmatmul.mubr.bf16.gmra.mxu0 %v3195
        %v3612 = vpop.f32.mrf.mxu0
        %v3613 = vadd.f32 %v3167, %v3612
        %v3614 = vpop.f32.mrf.mxu0
        %v3615 = vpop.f32.mrf.mxu0
        %v3616 = vadd.f32 %v3167, %v3615
        %v3617 = vpop.f32.mrf.mxu0
        %3618 = vmatprep.mubr.bf16.mxu0 0
        %3619 = vmatmul.mubr.bf16.gmra.mxu0 %v3198
        %v3620 = vpop.f32.mrf.mxu0
        %v3621 = vadd.f32 %v3167, %v3620
        %v3622 = vpop.f32.mrf.mxu0
        %v3623 = vpop.f32.mrf.mxu0
        %v3624 = vadd.f32 %v3167, %v3623
        %v3625 = vpop.f32.mrf.mxu0
        %3626 = vmatprep.mubr.bf16.mxu0 0
        %3627 = vmatmul.mubr.bf16.gmra.mxu0 %v3201
        %v3628 = vpop.f32.mrf.mxu0
        %v3629 = vadd.f32 %v3167, %v3628
        %v3630 = vpop.f32.mrf.mxu0
        %v3631 = vpop.f32.mrf.mxu0
        %v3632 = vadd.f32 %v3167, %v3631
        %v3633 = vpop.f32.mrf.mxu0
        %3634 = vmatprep.mubr.bf16.mxu0 0
        %3635 = vmatmul.mubr.bf16.gmra.mxu0 %v3204
        %v3636 = vpop.f32.mrf.mxu0
        %v3637 = vadd.f32 %v3167, %v3636
        %v3638 = vpop.f32.mrf.mxu0
        %v3639 = vpop.f32.mrf.mxu0
        %v3640 = vadd.f32 %v3167, %v3639
        %v3641 = vpop.f32.mrf.mxu0
        %3642 = vmatprep.mubr.bf16.mxu0 0
        %3643 = vmatmul.mubr.bf16.gmra.mxu0 %v3207
        %v3644 = vpop.f32.mrf.mxu0
        %v3645 = vadd.f32 %v3167, %v3644
        %v3646 = vpop.f32.mrf.mxu0
        %v3647 = vpop.f32.mrf.mxu0
        %v3648 = vadd.f32 %v3167, %v3647
        %v3649 = vpop.f32.mrf.mxu0
        %3650 = vmatprep.mubr.bf16.mxu0 0
        %3651 = vmatmul.mubr.bf16.gmra.mxu0 %v3210
        %v3652 = vpop.f32.mrf.mxu0
        %v3653 = vadd.f32 %v3167, %v3652
        %v3654 = vpop.f32.mrf.mxu0
        %v3655 = vpop.f32.mrf.mxu0
        %v3656 = vadd.f32 %v3167, %v3655
        %v3657 = vpop.f32.mrf.mxu0
        %3658 = vmatprep.mubr.bf16.mxu0 0
        %3659 = vmatmul.mubr.bf16.gmra.mxu0 %v3213
        %v3660 = vpop.f32.mrf.mxu0
        %v3661 = vadd.f32 %v3167, %v3660
        %v3662 = vpop.f32.mrf.mxu0
        %v3663 = vpop.f32.mrf.mxu0
        %v3664 = vadd.f32 %v3167, %v3663
        %v3665 = vpop.f32.mrf.mxu0
        %3666 = vmatprep.mubr.bf16.mxu0 0
        %3667 = vmatmul.mubr.bf16.gmra.mxu0 %v3216
        %v3668 = vpop.f32.mrf.mxu0
        %v3669 = vadd.f32 %v3167, %v3668
        %v3670 = vpop.f32.mrf.mxu0
        %v3671 = vpop.f32.mrf.mxu0
        %v3672 = vadd.f32 %v3167, %v3671
        %v3673 = vpop.f32.mrf.mxu0
        %3674 = vmatprep.mubr.bf16.mxu0 0
        %3675 = vmatmul.mubr.bf16.gmra.mxu0 %v3219
        %v3676 = vpop.f32.mrf.mxu0
        %v3677 = vadd.f32 %v3167, %v3676
        %v3678 = vpop.f32.mrf.mxu0
        %v3679 = vpop.f32.mrf.mxu0
        %v3680 = vadd.f32 %v3167, %v3679
        %v3681 = vpop.f32.mrf.mxu0
        %3682 = vmatprep.mubr.bf16.mxu0 0
        %3683 = vmatmul.mubr.bf16.gmra.mxu0 %v3222
        %v3684 = vpop.f32.mrf.mxu0
        %v3685 = vadd.f32 %v3167, %v3684
        %v3686 = vpop.f32.mrf.mxu0
        %v3687 = vpop.f32.mrf.mxu0
        %v3688 = vadd.f32 %v3167, %v3687
        %v3689 = vpop.f32.mrf.mxu0
        %3690 = vmatprep.mubr.bf16.mxu0 0
        %3691 = vmatmul.mubr.bf16.gmra.mxu0 %v3225
        %v3692 = vpop.f32.mrf.mxu0
        %v3693 = vadd.f32 %v3167, %v3692
        %v3694 = vpop.f32.mrf.mxu0
        %v3695 = vpop.f32.mrf.mxu0
        %v3696 = vadd.f32 %v3167, %v3695
        %v3697 = vpop.f32.mrf.mxu0
        %3698 = vmatprep.mubr.bf16.mxu0 0
        %3699 = vmatmul.mubr.bf16.gmra.mxu0 %v3228
        %v3700 = vpop.f32.mrf.mxu0
        %v3701 = vadd.f32 %v3167, %v3700
        %v3702 = vpop.f32.mrf.mxu0
        %v3703 = vpop.f32.mrf.mxu0
        %v3704 = vadd.f32 %v3167, %v3703
        %v3705 = vpop.f32.mrf.mxu0
        %3706 = vmatprep.mubr.bf16.mxu0 0
        %3707 = vmatmul.mubr.bf16.gmra.mxu0 %v3231
        %v3708 = vpop.f32.mrf.mxu0
        %v3709 = vadd.f32 %v3167, %v3708
        %v3710 = vpop.f32.mrf.mxu0
        %v3711 = vpop.f32.mrf.mxu0
        %v3712 = vadd.f32 %v3167, %v3711
        %v3713 = vpop.f32.mrf.mxu0
        %3714 = vmatprep.mubr.bf16.mxu0 0
        %3715 = vmatmul.mubr.bf16.gmra.mxu0 %v3234
        %v3716 = vpop.f32.mrf.mxu0
        %v3717 = vadd.f32 %v3167, %v3716
        %v3718 = vpop.f32.mrf.mxu0
        %v3719 = vpop.f32.mrf.mxu0
        %v3720 = vadd.f32 %v3167, %v3719
        %v3721 = vpop.f32.mrf.mxu0
        %3722 = vmatprep.mubr.bf16.mxu0 0
        %3723 = vmatmul.mubr.bf16.gmra.mxu0 %v3237
        %v3724 = vpop.f32.mrf.mxu0
        %v3725 = vadd.f32 %v3167, %v3724
        %v3726 = vpop.f32.mrf.mxu0
        %v3727 = vpop.f32.mrf.mxu0
        %v3728 = vadd.f32 %v3167, %v3727
        %v3729 = vpop.f32.mrf.mxu0
        %3730 = vmatprep.mubr.bf16.mxu0 0
        %3731 = vmatmul.mubr.bf16.gmra.mxu0 %v3240
        %v3732 = vpop.f32.mrf.mxu0
        %v3733 = vadd.f32 %v3167, %v3732
        %v3734 = vpop.f32.mrf.mxu0
        %v3735 = vpop.f32.mrf.mxu0
        %v3736 = vadd.f32 %v3167, %v3735
        %v3737 = vpop.f32.mrf.mxu0
        %3738 = vmatprep.mubr.bf16.mxu0 0
        %3739 = vmatmul.mubr.bf16.gmra.mxu0 %v3243
        %v3740 = vpop.f32.mrf.mxu0
        %v3741 = vadd.f32 %v3167, %v3740
        %v3742 = vpop.f32.mrf.mxu0
        %v3743 = vpop.f32.mrf.mxu0
        %v3744 = vadd.f32 %v3167, %v3743
        %v3745 = vpop.f32.mrf.mxu0
        %3746 = vmatprep.mubr.bf16.mxu0 0
        %3747 = vmatmul.mubr.bf16.gmra.mxu0 %v3246
        %v3748 = vpop.f32.mrf.mxu0
        %v3749 = vadd.f32 %v3167, %v3748
        %v3750 = vpop.f32.mrf.mxu0
        %v3751 = vpop.f32.mrf.mxu0
        %v3752 = vadd.f32 %v3167, %v3751
        %v3753 = vpop.f32.mrf.mxu0
        %3754 = vmatprep.mubr.bf16.mxu0 0
        %3755 = vmatmul.mubr.bf16.gmra.mxu0 %v3249
        %v3756 = vpop.f32.mrf.mxu0
        %v3757 = vadd.f32 %v3167, %v3756
        %v3758 = vpop.f32.mrf.mxu0
        %v3759 = vpop.f32.mrf.mxu0
        %v3760 = vadd.f32 %v3167, %v3759
        %v3761 = vpop.f32.mrf.mxu0
        %3762 = vmatprep.mubr.bf16.mxu0 0
        %3763 = vmatmul.mubr.bf16.gmra.mxu0 %v3252
        %v3764 = vpop.f32.mrf.mxu0
        %v3765 = vadd.f32 %v3167, %v3764
        %v3766 = vpop.f32.mrf.mxu0
        %v3767 = vpop.f32.mrf.mxu0
        %v3768 = vadd.f32 %v3167, %v3767
        %v3769 = vpop.f32.mrf.mxu0
        %3770 = vmatprep.mubr.bf16.mxu0 0
        %3771 = vmatmul.mubr.bf16.gmra.mxu0 %v3255
        %v3772 = vpop.f32.mrf.mxu0
        %v3773 = vadd.f32 %v3167, %v3772
        %v3774 = vpop.f32.mrf.mxu0
        %v3775 = vpop.f32.mrf.mxu0
        %v3776 = vadd.f32 %v3167, %v3775
        %v3777 = vpop.f32.mrf.mxu0
        %3778 = vmatprep.mubr.bf16.mxu0 0
        %3779 = vmatmul.mubr.bf16.gmra.mxu0 %v3258
        %v3780 = vpop.f32.mrf.mxu0
        %v3781 = vadd.f32 %v3167, %v3780
        %v3782 = vpop.f32.mrf.mxu0
        %v3783 = vpop.f32.mrf.mxu0
        %v3784 = vadd.f32 %v3167, %v3783
        %v3785 = vpop.f32.mrf.mxu0
        %3786 = vmatprep.mubr.bf16.mxu0 0
        %3787 = vmatmul.mubr.bf16.gmra.mxu0 %v3261
        %v3788 = vpop.f32.mrf.mxu0
        %v3789 = vadd.f32 %v3167, %v3788
        %v3790 = vpop.f32.mrf.mxu0
        %v3791 = vpop.f32.mrf.mxu0
        %v3792 = vadd.f32 %v3167, %v3791
        %v3793 = vpop.f32.mrf.mxu0
        %3794 = vmatprep.mubr.bf16.mxu0 0
        %3795 = vmatmul.mubr.bf16.gmra.mxu0 %v3264
        %v3796 = vpop.f32.mrf.mxu0
        %v3797 = vadd.f32 %v3167, %v3796
        %v3798 = vpop.f32.mrf.mxu0
        %v3799 = vpop.f32.mrf.mxu0
        %v3800 = vadd.f32 %v3167, %v3799
        %v3801 = vpop.f32.mrf.mxu0
        %3802 = vmatprep.mubr.bf16.mxu0 0
        %3803 = vmatmul.mubr.bf16.gmra.mxu0 %v3267
        %v3804 = vpop.f32.mrf.mxu0
        %v3805 = vadd.f32 %v3167, %v3804
        %v3806 = vpop.f32.mrf.mxu0
        %v3807 = vpop.f32.mrf.mxu0
        %v3808 = vadd.f32 %v3167, %v3807
        %v3809 = vpop.f32.mrf.mxu0
        %3810 = vmatprep.mubr.bf16.mxu0 0
        %3811 = vmatmul.mubr.bf16.gmra.mxu0 %v3270
        %v3812 = vpop.f32.mrf.mxu0
        %v3813 = vadd.f32 %v3167, %v3812
        %v3814 = vpop.f32.mrf.mxu0
        %v3815 = vpop.f32.mrf.mxu0
        %v3816 = vadd.f32 %v3167, %v3815
        %v3817 = vpop.f32.mrf.mxu0
        %3818 = vmatprep.mubr.bf16.mxu0 0
        %3819 = vmatmul.mubr.bf16.gmra.mxu0 %v3273
        %v3820 = vpop.f32.mrf.mxu0
        %v3821 = vadd.f32 %v3167, %v3820
        %v3822 = vpop.f32.mrf.mxu0
        %v3823 = vpop.f32.mrf.mxu0
        %v3824 = vadd.f32 %v3167, %v3823
        %v3825 = vpop.f32.mrf.mxu0
        %3826 = vmatprep.mubr.bf16.mxu0 0
        %3827 = vmatmul.mubr.bf16.gmra.mxu0 %v3276
        %v3828 = vpop.f32.mrf.mxu0
        %v3829 = vadd.f32 %v3167, %v3828
        %v3830 = vpop.f32.mrf.mxu0
        %v3831 = vpop.f32.mrf.mxu0
        %v3832 = vadd.f32 %v3167, %v3831
        %v3833 = vpop.f32.mrf.mxu0
        %3834 = vmatprep.mubr.bf16.mxu0 0
        %3835 = vmatmul.mubr.bf16.gmra.mxu0 %v3279
        %v3836 = vpop.f32.mrf.mxu0
        %v3837 = vadd.f32 %v3167, %v3836
        %v3838 = vpop.f32.mrf.mxu0
        %v3839 = vpop.f32.mrf.mxu0
        %v3840 = vadd.f32 %v3167, %v3839
        %v3841 = vpop.f32.mrf.mxu0
        %3842 = vmatprep.mubr.bf16.mxu0 0
        %3843 = vmatmul.mubr.bf16.gmra.mxu0 %v3282
        %v3844 = vpop.f32.mrf.mxu0
        %v3845 = vadd.f32 %v3167, %v3844
        %v3846 = vpop.f32.mrf.mxu0
        %v3847 = vpop.f32.mrf.mxu0
        %v3848 = vadd.f32 %v3167, %v3847
        %v3849 = vpop.f32.mrf.mxu0
        %3850 = vmatprep.mubr.bf16.mxu0 0
        %3851 = vmatmul.mubr.bf16.gmra.mxu0 %v3285
        %v3852 = vpop.f32.mrf.mxu0
        %v3853 = vadd.f32 %v3167, %v3852
        %v3854 = vpop.f32.mrf.mxu0
        %v3855 = vpop.f32.mrf.mxu0
        %v3856 = vadd.f32 %v3167, %v3855
        %v3857 = vpop.f32.mrf.mxu0
        %3858 = vmatprep.mubr.bf16.mxu0 0
        %3859 = vmatmul.mubr.bf16.gmra.mxu0 %v3288
        %v3860 = vpop.f32.mrf.mxu0
        %v3861 = vadd.f32 %v3167, %v3860
        %v3862 = vpop.f32.mrf.mxu0
        %v3863 = vpop.f32.mrf.mxu0
        %v3864 = vadd.f32 %v3167, %v3863
        %v3865 = vpop.f32.mrf.mxu0
        %3866 = vmatprep.mubr.bf16.mxu0 0
        %3867 = vmatmul.mubr.bf16.gmra.mxu0 %v3291
        %v3868 = vpop.f32.mrf.mxu0
        %v3869 = vadd.f32 %v3167, %v3868
        %v3870 = vpop.f32.mrf.mxu0
        %v3871 = vpop.f32.mrf.mxu0
        %v3872 = vadd.f32 %v3167, %v3871
        %v3873 = vpop.f32.mrf.mxu0
        %3874 = vmatprep.mubr.bf16.mxu0 0
        %3875 = vmatmul.mubr.bf16.gmra.mxu0 %v3294
        %v3876 = vpop.f32.mrf.mxu0
        %v3877 = vadd.f32 %v3167, %v3876
        %v3878 = vpop.f32.mrf.mxu0
        %v3879 = vpop.f32.mrf.mxu0
        %v3880 = vadd.f32 %v3167, %v3879
        %v3881 = vpop.f32.mrf.mxu0
        %3882 = vmatprep.mubr.bf16.mxu0 0
        %3883 = vmatmul.mubr.bf16.gmra.mxu0 %v3297
        %v3884 = vpop.f32.mrf.mxu0
        %v3885 = vadd.f32 %v3167, %v3884
        %v3886 = vpop.f32.mrf.mxu0
        %v3887 = vpop.f32.mrf.mxu0
        %v3888 = vadd.f32 %v3167, %v3887
        %v3889 = vpop.f32.mrf.mxu0
        %3890 = vmatprep.mubr.bf16.mxu0 0
        %3891 = vmatmul.mubr.bf16.gmra.mxu0 %v3300
        %v3892 = vpop.f32.mrf.mxu0
        %v3893 = vadd.f32 %v3167, %v3892
        %v3894 = vpop.f32.mrf.mxu0
        %v3895 = vpop.f32.mrf.mxu0
        %v3896 = vadd.f32 %v3167, %v3895
        %v3897 = vpop.f32.mrf.mxu0
        %3898 = vmatprep.mubr.bf16.mxu0 0
        %3899 = vmatmul.mubr.bf16.gmra.mxu0 %v3303
        %v3900 = vpop.f32.mrf.mxu0
        %v3901 = vadd.f32 %v3167, %v3900
        %v3902 = vpop.f32.mrf.mxu0
        %v3903 = vpop.f32.mrf.mxu0
        %v3904 = vadd.f32 %v3167, %v3903
        %v3905 = vpop.f32.mrf.mxu0
        %3906 = vmatprep.mubr.bf16.mxu0 0
        %3907 = vmatmul.mubr.bf16.gmra.mxu0 %v3306
        %v3908 = vpop.f32.mrf.mxu0
        %v3909 = vadd.f32 %v3167, %v3908
        %v3910 = vpop.f32.mrf.mxu0
        %v3911 = vpop.f32.mrf.mxu0
        %v3912 = vadd.f32 %v3167, %v3911
        %v3913 = vpop.f32.mrf.mxu0
        %3914 = vmatprep.mubr.bf16.mxu0 0
        %3915 = vmatmul.mubr.bf16.gmra.mxu0 %v3309
        %v3916 = vpop.f32.mrf.mxu0
        %v3917 = vadd.f32 %v3167, %v3916
        %v3918 = vpop.f32.mrf.mxu0
        %v3919 = vpop.f32.mrf.mxu0
        %v3920 = vadd.f32 %v3167, %v3919
        %v3921 = vpop.f32.mrf.mxu0
        %3922 = vmatprep.mubr.bf16.mxu0 0
        %3923 = vmatmul.mubr.bf16.gmra.mxu0 %v3312
        %v3924 = vpop.f32.mrf.mxu0
        %v3925 = vadd.f32 %v3167, %v3924
        %v3926 = vpop.f32.mrf.mxu0
        %v3927 = vpop.f32.mrf.mxu0
        %v3928 = vadd.f32 %v3167, %v3927
        %v3929 = vpop.f32.mrf.mxu0
        %3930 = vmatprep.mubr.bf16.mxu0 0
        %3931 = vmatmul.mubr.bf16.gmra.mxu0 %v3315
        %v3932 = vpop.f32.mrf.mxu0
        %v3933 = vadd.f32 %v3167, %v3932
        %v3934 = vpop.f32.mrf.mxu0
        %v3935 = vpop.f32.mrf.mxu0
        %v3936 = vadd.f32 %v3167, %v3935
        %v3937 = vpop.f32.mrf.mxu0
        %3938 = vmatprep.mubr.bf16.mxu0 0
        %3939 = vmatmul.mubr.bf16.gmra.mxu0 %v3318
        %v3940 = vpop.f32.mrf.mxu0
        %v3941 = vadd.f32 %v3167, %v3940
        %v3942 = vpop.f32.mrf.mxu0
        %v3943 = vpop.f32.mrf.mxu0
        %v3944 = vadd.f32 %v3167, %v3943
        %v3945 = vpop.f32.mrf.mxu0
        %3946 = vmatprep.mubr.bf16.mxu0 0
        %3947 = vmatmul.mubr.bf16.gmra.mxu0 %v3321
        %v3948 = vpop.f32.mrf.mxu0
        %v3949 = vadd.f32 %v3167, %v3948
        %v3950 = vpop.f32.mrf.mxu0
        %v3951 = vpop.f32.mrf.mxu0
        %v3952 = vadd.f32 %v3167, %v3951
        %v3953 = vpop.f32.mrf.mxu0
        %3954 = vmatprep.mubr.bf16.mxu0 0
        %3955 = vmatmul.mubr.bf16.gmra.mxu0 %v3324
        %v3956 = vpop.f32.mrf.mxu0
        %v3957 = vadd.f32 %v3167, %v3956
        %v3958 = vpop.f32.mrf.mxu0
        %v3959 = vpop.f32.mrf.mxu0
        %v3960 = vadd.f32 %v3167, %v3959
        %v3961 = vpop.f32.mrf.mxu0
        %3962 = vmatprep.mubr.bf16.mxu0 0
        %3963 = vmatmul.mubr.bf16.gmra.mxu0 %v3327
        %v3964 = vpop.f32.mrf.mxu0
        %v3965 = vadd.f32 %v3167, %v3964
        %v3966 = vpop.f32.mrf.mxu0
        %v3967 = vpop.f32.mrf.mxu0
        %v3968 = vadd.f32 %v3167, %v3967
        %v3969 = vpop.f32.mrf.mxu0
        %3970 = vmatprep.mubr.bf16.mxu0 0
        %3971 = vmatmul.mubr.bf16.gmra.mxu0 %v3330
        %v3972 = vpop.f32.mrf.mxu0
        %v3973 = vadd.f32 %v3167, %v3972
        %v3974 = vpop.f32.mrf.mxu0
        %v3975 = vpop.f32.mrf.mxu0
        %v3976 = vadd.f32 %v3167, %v3975
        %v3977 = vpop.f32.mrf.mxu0
        %3978 = vmatprep.mubr.bf16.mxu0 0
        %3979 = vmatmul.mubr.bf16.gmra.mxu0 %v3333
        %v3980 = vpop.f32.mrf.mxu0
        %v3981 = vadd.f32 %v3167, %v3980
        %v3982 = vpop.f32.mrf.mxu0
        %v3983 = vpop.f32.mrf.mxu0
        %v3984 = vadd.f32 %v3167, %v3983
        %v3985 = vpop.f32.mrf.mxu0
        %3986 = vmatprep.mubr.bf16.mxu0 0
        %3987 = vmatmul.mubr.bf16.gmra.mxu0 %v3336
        %v3988 = vpop.f32.mrf.mxu0
        %v3989 = vadd.f32 %v3167, %v3988
        %v3990 = vpop.f32.mrf.mxu0
        %v3991 = vpop.f32.mrf.mxu0
        %v3992 = vadd.f32 %v3167, %v3991
        %v3993 = vpop.f32.mrf.mxu0
        %3994 = vmatprep.mubr.bf16.mxu0 0
        %3995 = vmatmul.mubr.bf16.gmra.mxu0 %v3339
        %v3996 = vpop.f32.mrf.mxu0
        %v3997 = vadd.f32 %v3167, %v3996
        %v3998 = vpop.f32.mrf.mxu0
        %v3999 = vpop.f32.mrf.mxu0
        %v4000 = vadd.f32 %v3167, %v3999
        %v4001 = vpop.f32.mrf.mxu0
        %4002 = vmatprep.mubr.bf16.mxu0 0
        %4003 = vmatmul.mubr.bf16.gmra.mxu0 %v3342
        %v4004 = vpop.f32.mrf.mxu0
        %v4005 = vadd.f32 %v3167, %v4004
        %v4006 = vpop.f32.mrf.mxu0
        %v4007 = vpop.f32.mrf.mxu0
        %v4008 = vadd.f32 %v3167, %v4007
        %v4009 = vpop.f32.mrf.mxu0
        %4010 = vmatprep.mubr.bf16.mxu0 0
        %4011 = vmatmul.mubr.bf16.gmra.mxu0 %v3345
        %v4012 = vpop.f32.mrf.mxu0
        %v4013 = vadd.f32 %v3167, %v4012
        %v4014 = vpop.f32.mrf.mxu0
        %v4015 = vpop.f32.mrf.mxu0
        %v4016 = vadd.f32 %v3167, %v4015
        %v4017 = vpop.f32.mrf.mxu0
        %4018 = vmatprep.mubr.bf16.mxu0 0
        %4019 = vmatmul.mubr.bf16.gmra.mxu0 %v3348
        %v4020 = vpop.f32.mrf.mxu0
        %v4021 = vadd.f32 %v3167, %v4020
        %v4022 = vpop.f32.mrf.mxu0
        %v4023 = vpop.f32.mrf.mxu0
        %v4024 = vadd.f32 %v3167, %v4023
        %v4025 = vpop.f32.mrf.mxu0
        %4026 = vmatprep.mubr.bf16.mxu0 0
        %4027 = vmatmul.mubr.bf16.gmra.mxu0 %v3351
        %v4028 = vpop.f32.mrf.mxu0
        %v4029 = vadd.f32 %v3167, %v4028
        %v4030 = vpop.f32.mrf.mxu0
        %v4031 = vpop.f32.mrf.mxu0
        %v4032 = vadd.f32 %v3167, %v4031
        %v4033 = vpop.f32.mrf.mxu0
        %4034 = vmatprep.mubr.bf16.mxu0 0
        %4035 = vmatmul.mubr.bf16.gmra.mxu0 %v3354
        %v4036 = vpop.f32.mrf.mxu0
        %v4037 = vadd.f32 %v3167, %v4036
        %v4038 = vpop.f32.mrf.mxu0
        %v4039 = vpop.f32.mrf.mxu0
        %v4040 = vadd.f32 %v3167, %v4039
        %v4041 = vpop.f32.mrf.mxu0
        %4042 = vmatprep.mubr.bf16.mxu0 0
        %4043 = vmatmul.mubr.bf16.gmra.mxu0 %v3357
        %v4044 = vpop.f32.mrf.mxu0
        %v4045 = vadd.f32 %v3167, %v4044
        %v4046 = vpop.f32.mrf.mxu0
        %v4047 = vpop.f32.mrf.mxu0
        %v4048 = vadd.f32 %v3167, %v4047
        %v4049 = vpop.f32.mrf.mxu0
        %4050 = vmatprep.mubr.bf16.mxu0 0
        %4051 = vmatmul.mubr.bf16.gmra.mxu0 %v3360
        %v4052 = vpop.f32.mrf.mxu0
        %v4053 = vadd.f32 %v3167, %v4052
        %v4054 = vpop.f32.mrf.mxu0
        %v4055 = vpop.f32.mrf.mxu0
        %v4056 = vadd.f32 %v3167, %v4055
        %v4057 = vpop.f32.mrf.mxu0
        %4058 = vmatprep.mubr.bf16.mxu0 0
        %4059 = vmatmul.mubr.bf16.gmra.mxu0 %v3363
        %v4060 = vpop.f32.mrf.mxu0
        %v4061 = vadd.f32 %v3167, %v4060
        %v4062 = vpop.f32.mrf.mxu0
        %v4063 = vpop.f32.mrf.mxu0
        %v4064 = vadd.f32 %v3167, %v4063
        %v4065 = vpop.f32.mrf.mxu0
        %4066 = vmatprep.mubr.bf16.mxu0 0
        %4067 = vmatmul.mubr.bf16.gmra.mxu0 %v3366
        %v4068 = vpop.f32.mrf.mxu0
        %v4069 = vadd.f32 %v3167, %v4068
        %v4070 = vpop.f32.mrf.mxu0
        %v4071 = vpop.f32.mrf.mxu0
        %v4072 = vadd.f32 %v3167, %v4071
        %v4073 = vpop.f32.mrf.mxu0
        %4074 = vmatprep.mubr.bf16.mxu0 0
        %4075 = vmatmul.mubr.bf16.gmra.mxu0 %v3369
        %v4076 = vpop.f32.mrf.mxu0
        %v4077 = vadd.f32 %v3167, %v4076
        %v4078 = vpop.f32.mrf.mxu0
        %v4079 = vpop.f32.mrf.mxu0
        %v4080 = vadd.f32 %v3167, %v4079
        %v4081 = vpop.f32.mrf.mxu0
        %4082 = vmatprep.mubr.bf16.mxu0 0
        %4083 = vmatmul.mubr.bf16.gmra.mxu0 %v3372
        %v4084 = vpop.f32.mrf.mxu0
        %v4085 = vadd.f32 %v3167, %v4084
        %v4086 = vpop.f32.mrf.mxu0
        %v4087 = vpop.f32.mrf.mxu0
        %v4088 = vadd.f32 %v3167, %v4087
        %v4089 = vpop.f32.mrf.mxu0
        %4090 = vmatprep.mubr.bf16.mxu0 0
        %4091 = vmatmul.mubr.bf16.gmra.mxu0 %v3375
        %v4092 = vpop.f32.mrf.mxu0
        %v4093 = vadd.f32 %v3167, %v4092
        %v4094 = vpop.f32.mrf.mxu0
        %v4095 = vpop.f32.mrf.mxu0
        %v4096 = vadd.f32 %v3167, %v4095
        %v4097 = vpop.f32.mrf.mxu0
        %4098 = vmatprep.mubr.bf16.mxu0 0
        %4099 = vmatmul.mubr.bf16.gmra.mxu0 %v3378
        %v4100 = vpop.f32.mrf.mxu0
        %v4101 = vadd.f32 %v3167, %v4100
        %v4102 = vpop.f32.mrf.mxu0
        %v4103 = vpop.f32.mrf.mxu0
        %v4104 = vadd.f32 %v3167, %v4103
        %v4105 = vpop.f32.mrf.mxu0
        %4106 = vmatprep.mubr.bf16.mxu0 0
        %4107 = vmatmul.mubr.bf16.gmra.mxu0 %v3381
        %v4108 = vpop.f32.mrf.mxu0
        %v4109 = vadd.f32 %v3167, %v4108
        %v4110 = vpop.f32.mrf.mxu0
        %v4111 = vpop.f32.mrf.mxu0
        %v4112 = vadd.f32 %v3167, %v4111
        %v4113 = vpop.f32.mrf.mxu0
        %4114 = vmatprep.mubr.bf16.mxu0 0
        %4115 = vmatmul.mubr.bf16.gmra.mxu0 %v3384
        %v4116 = vpop.f32.mrf.mxu0
        %v4117 = vadd.f32 %v3167, %v4116
        %v4118 = vpop.f32.mrf.mxu0
        %v4119 = vpop.f32.mrf.mxu0
        %v4120 = vadd.f32 %v3167, %v4119
        %v4121 = vpop.f32.mrf.mxu0
        %4122 = vmatprep.mubr.bf16.mxu0 0
        %4123 = vmatmul.mubr.bf16.gmra.mxu0 %v3387
        %v4124 = vpop.f32.mrf.mxu0
        %v4125 = vadd.f32 %v3167, %v4124
        %v4126 = vpop.f32.mrf.mxu0
        %v4127 = vpop.f32.mrf.mxu0
        %v4128 = vadd.f32 %v3167, %v4127
        %v4129 = vpop.f32.mrf.mxu0
        %4130 = vmatprep.mubr.bf16.mxu0 0
        %4131 = vmatmul.mubr.bf16.gmra.mxu0 %v3390
        %v4132 = vpop.f32.mrf.mxu0
        %v4133 = vadd.f32 %v3167, %v4132
        %v4134 = vpop.f32.mrf.mxu0
        %v4135 = vpop.f32.mrf.mxu0
        %v4136 = vadd.f32 %v3167, %v4135
        %v4137 = vpop.f32.mrf.mxu0
        %4138 = vmatprep.mubr.bf16.mxu0 0
        %4139 = vmatmul.mubr.bf16.gmra.mxu0 %v3393
        %v4140 = vpop.f32.mrf.mxu0
        %v4141 = vadd.f32 %v3167, %v4140
        %v4142 = vpop.f32.mrf.mxu0
        %v4143 = vpop.f32.mrf.mxu0
        %v4144 = vadd.f32 %v3167, %v4143
        %v4145 = vpop.f32.mrf.mxu0
        %4146 = vmatprep.mubr.bf16.mxu0 0
        %4147 = vmatmul.mubr.bf16.gmra.mxu0 %v3396
        %v4148 = vpop.f32.mrf.mxu0
        %v4149 = vadd.f32 %v3167, %v4148
        %v4150 = vpop.f32.mrf.mxu0
        %v4151 = vpop.f32.mrf.mxu0
        %v4152 = vadd.f32 %v3167, %v4151
        %v4153 = vpop.f32.mrf.mxu0
        %4154 = vmatprep.mubr.bf16.mxu0 0
        %4155 = vmatmul.mubr.bf16.gmra.mxu0 %v3399
        %v4156 = vpop.f32.mrf.mxu0
        %v4157 = vadd.f32 %v3167, %v4156
        %v4158 = vpop.f32.mrf.mxu0
        %v4159 = vpop.f32.mrf.mxu0
        %v4160 = vadd.f32 %v3167, %v4159
        %v4161 = vpop.f32.mrf.mxu0
        %4162 = vmatprep.mubr.bf16.mxu0 0
        %4163 = vmatmul.mubr.bf16.gmra.mxu0 %v3402
        %v4164 = vpop.f32.mrf.mxu0
        %v4165 = vadd.f32 %v3167, %v4164
        %v4166 = vpop.f32.mrf.mxu0
        %v4167 = vpop.f32.mrf.mxu0
        %v4168 = vadd.f32 %v3167, %v4167
        %v4169 = vpop.f32.mrf.mxu0
        %4170 = vmatprep.mubr.bf16.mxu0 0
        %4171 = vmatmul.mubr.bf16.gmra.mxu0 %v3405
        %v4172 = vpop.f32.mrf.mxu0
        %v4173 = vadd.f32 %v3167, %v4172
        %v4174 = vpop.f32.mrf.mxu0
        %v4175 = vpop.f32.mrf.mxu0
        %v4176 = vadd.f32 %v3167, %v4175
        %v4177 = vpop.f32.mrf.mxu0
        %4178 = vmatprep.mubr.bf16.mxu0 0
        %4179 = vmatmul.mubr.bf16.gmra.mxu0 %v3408
        %v4180 = vpop.f32.mrf.mxu0
        %v4181 = vadd.f32 %v3167, %v4180
        %v4182 = vpop.f32.mrf.mxu0
        %v4183 = vpop.f32.mrf.mxu0
        %v4184 = vadd.f32 %v3167, %v4183
        %v4185 = vpop.f32.mrf.mxu0
        %4186 = vmatprep.mubr.bf16.mxu0 0
        %4187 = vmatmul.mubr.bf16.gmra.mxu0 %v3411
        %v4188 = vpop.f32.mrf.mxu0
        %v4189 = vadd.f32 %v3167, %v4188
        %v4190 = vpop.f32.mrf.mxu0
        %v4191 = vpop.f32.mrf.mxu0
        %v4192 = vadd.f32 %v3167, %v4191
        %v4193 = vpop.f32.mrf.mxu0
        %4194 = vmatprep.mubr.bf16.mxu0 0
        %4195 = vmatmul.mubr.bf16.gmra.mxu0 %v3414
        %v4196 = vpop.f32.mrf.mxu0
        %v4197 = vadd.f32 %v3167, %v4196
        %v4198 = vpop.f32.mrf.mxu0
        %v4199 = vpop.f32.mrf.mxu0
        %v4200 = vadd.f32 %v3167, %v4199
        %v4201 = vpop.f32.mrf.mxu0
        %4202 = vmatprep.mubr.bf16.mxu0 0
        %4203 = vmatmul.mubr.bf16.gmra.mxu0 %v3417
        %v4204 = vpop.f32.mrf.mxu0
        %v4205 = vadd.f32 %v3167, %v4204
        %v4206 = vpop.f32.mrf.mxu0
        %v4207 = vpop.f32.mrf.mxu0
        %v4208 = vadd.f32 %v3167, %v4207
        %v4209 = vpop.f32.mrf.mxu0
        %4210 = vmatprep.mubr.bf16.mxu0 0
        %4211 = vmatmul.mubr.bf16.gmra.mxu0 %v3420
        %v4212 = vpop.f32.mrf.mxu0
        %v4213 = vadd.f32 %v3167, %v4212
        %v4214 = vpop.f32.mrf.mxu0
        %v4215 = vpop.f32.mrf.mxu0
        %v4216 = vadd.f32 %v3167, %v4215
        %v4217 = vpop.f32.mrf.mxu0
        %4218 = vmatprep.mubr.bf16.mxu0 0
        %4219 = vmatmul.mubr.bf16.gmra.mxu0 %v3423
        %v4220 = vpop.f32.mrf.mxu0
        %v4221 = vadd.f32 %v3167, %v4220
        %v4222 = vpop.f32.mrf.mxu0
        %v4223 = vpop.f32.mrf.mxu0
        %v4224 = vadd.f32 %v3167, %v4223
        %v4225 = vpop.f32.mrf.mxu0
        %4226 = vmatprep.mubr.bf16.mxu0 0
        %4227 = vmatmul.mubr.bf16.gmra.mxu0 %v3426
        %v4228 = vpop.f32.mrf.mxu0
        %v4229 = vadd.f32 %v3167, %v4228
        %v4230 = vpop.f32.mrf.mxu0
        %v4231 = vpop.f32.mrf.mxu0
        %v4232 = vadd.f32 %v3167, %v4231
        %v4233 = vpop.f32.mrf.mxu0
        %4234 = vmatprep.mubr.bf16.mxu0 0
        %4235 = vmatmul.mubr.bf16.gmra.mxu0 %v3429
        %v4236 = vpop.f32.mrf.mxu0
        %v4237 = vadd.f32 %v3167, %v4236
        %v4238 = vpop.f32.mrf.mxu0
        %v4239 = vpop.f32.mrf.mxu0
        %v4240 = vadd.f32 %v3167, %v4239
        %v4241 = vpop.f32.mrf.mxu0
        %4242 = vmatprep.mubr.bf16.mxu0 0
        %4243 = vmatmul.mubr.bf16.gmra.mxu0 %v3432
        %v4244 = vpop.f32.mrf.mxu0
        %v4245 = vadd.f32 %v3167, %v4244
        %v4246 = vpop.f32.mrf.mxu0
        %v4247 = vpop.f32.mrf.mxu0
        %v4248 = vadd.f32 %v3167, %v4247
        %v4249 = vpop.f32.mrf.mxu0
        %4250 = vmatprep.mubr.bf16.mxu0 0
        %4251 = vmatmul.mubr.bf16.gmra.mxu0 %v3435
        %v4252 = vpop.f32.mrf.mxu0
        %v4253 = vadd.f32 %v3167, %v4252
        %v4254 = vpop.f32.mrf.mxu0
        %v4255 = vpop.f32.mrf.mxu0
        %v4256 = vadd.f32 %v3167, %v4255
        %v4257 = vpop.f32.mrf.mxu0
        %4258 = vmatprep.mubr.bf16.mxu0 0
        %4259 = vmatmul.mubr.bf16.gmra.mxu0 %v3438
        %v4260 = vpop.f32.mrf.mxu0
        %v4261 = vadd.f32 %v3167, %v4260
        %v4262 = vpop.f32.mrf.mxu0
        %v4263 = vpop.f32.mrf.mxu0
        %v4264 = vadd.f32 %v3167, %v4263
        %v4265 = vpop.f32.mrf.mxu0
        %4266 = vmatprep.mubr.bf16.mxu0 0
        %4267 = vmatmul.mubr.bf16.gmra.mxu0 %v3441
        %v4268 = vpop.f32.mrf.mxu0
        %v4269 = vadd.f32 %v3167, %v4268
        %v4270 = vpop.f32.mrf.mxu0
        %v4271 = vpop.f32.mrf.mxu0
        %v4272 = vadd.f32 %v3167, %v4271
        %v4273 = vpop.f32.mrf.mxu0
        %4274 = vmatprep.mubr.bf16.mxu0 0
        %4275 = vmatmul.mubr.bf16.gmra.mxu0 %v3444
        %v4276 = vpop.f32.mrf.mxu0
        %v4277 = vadd.f32 %v3167, %v4276
        %v4278 = vpop.f32.mrf.mxu0
        %v4279 = vpop.f32.mrf.mxu0
        %v4280 = vadd.f32 %v3167, %v4279
        %v4281 = vpop.f32.mrf.mxu0
        %4282 = vmatprep.mubr.bf16.mxu0 0
        %4283 = vmatmul.mubr.bf16.gmra.mxu0 %v3447
        %v4284 = vpop.f32.mrf.mxu0
        %v4285 = vadd.f32 %v3167, %v4284
        %v4286 = vpop.f32.mrf.mxu0
        %v4287 = vpop.f32.mrf.mxu0
        %v4288 = vadd.f32 %v3167, %v4287
        %v4289 = vpop.f32.mrf.mxu0
        %4290 = vmatprep.mubr.bf16.mxu0 0
        %4291 = vmatmul.mubr.bf16.gmra.mxu0 %v3450
        %v4292 = vpop.f32.mrf.mxu0
        %v4293 = vadd.f32 %v3167, %v4292
        %v4294 = vpop.f32.mrf.mxu0
        %v4295 = vpop.f32.mrf.mxu0
        %v4296 = vadd.f32 %v3167, %v4295
        %v4297 = vpop.f32.mrf.mxu0
        %4298 = vmatprep.mubr.bf16.mxu0 0
        %4299 = vmatmul.mubr.bf16.gmra.mxu0 %v3453
        %v4300 = vpop.f32.mrf.mxu0
        %v4301 = vadd.f32 %v3167, %v4300
        %v4302 = vpop.f32.mrf.mxu0
        %v4303 = vpop.f32.mrf.mxu0
        %v4304 = vadd.f32 %v3167, %v4303
        %v4305 = vpop.f32.mrf.mxu0
        %4306 = vmatprep.mubr.bf16.mxu0 0
        %4307 = vmatmul.mubr.bf16.gmra.mxu0 %v3456
        %v4308 = vpop.f32.mrf.mxu0
        %v4309 = vadd.f32 %v3167, %v4308
        %v4310 = vpop.f32.mrf.mxu0
        %v4311 = vpop.f32.mrf.mxu0
        %v4312 = vadd.f32 %v3167, %v4311
        %v4313 = vpop.f32.mrf.mxu0
        %4314 = vmatprep.mubr.bf16.mxu0 0
        %4315 = vmatmul.mubr.bf16.gmra.mxu0 %v3459
        %v4316 = vpop.f32.mrf.mxu0
        %v4317 = vadd.f32 %v3167, %v4316
        %v4318 = vpop.f32.mrf.mxu0
        %v4319 = vpop.f32.mrf.mxu0
        %v4320 = vadd.f32 %v3167, %v4319
        %v4321 = vpop.f32.mrf.mxu0
        %4322 = vmatprep.mubr.bf16.mxu0 0
        %4323 = vmatmul.mubr.bf16.gmra.mxu0 %v3462
        %v4324 = vpop.f32.mrf.mxu0
        %v4325 = vadd.f32 %v3167, %v4324
        %v4326 = vpop.f32.mrf.mxu0
        %v4327 = vpop.f32.mrf.mxu0
        %v4328 = vadd.f32 %v3167, %v4327
        %v4329 = vpop.f32.mrf.mxu0
        %4330 = vmatprep.mubr.bf16.mxu0 0
        %4331 = vmatmul.mubr.bf16.gmra.mxu0 %v3465
        %v4332 = vpop.f32.mrf.mxu0
        %v4333 = vadd.f32 %v3167, %v4332
        %v4334 = vpop.f32.mrf.mxu0
        %v4335 = vpop.f32.mrf.mxu0
        %v4336 = vadd.f32 %v3167, %v4335
        %v4337 = vpop.f32.mrf.mxu0
        %4338 = vmatprep.mubr.bf16.mxu0 0
        %4339 = vmatmul.mubr.bf16.gmra.mxu0 %v3468
        %v4340 = vpop.f32.mrf.mxu0
        %v4341 = vadd.f32 %v3167, %v4340
        %v4342 = vpop.f32.mrf.mxu0
        %v4343 = vpop.f32.mrf.mxu0
        %v4344 = vadd.f32 %v3167, %v4343
        %v4345 = vpop.f32.mrf.mxu0
        %4346 = vmatprep.mubr.bf16.mxu0 0
        %4347 = vmatmul.mubr.bf16.gmra.mxu0 %v3471
        %v4348 = vpop.f32.mrf.mxu0
        %v4349 = vadd.f32 %v3167, %v4348
        %v4350 = vpop.f32.mrf.mxu0
        %v4351 = vpop.f32.mrf.mxu0
        %v4352 = vadd.f32 %v3167, %v4351
        %v4353 = vpop.f32.mrf.mxu0
        %4354 = vmatprep.mubr.bf16.mxu0 0
        %4355 = vmatmul.mubr.bf16.gmra.mxu0 %v3474
        %v4356 = vpop.f32.mrf.mxu0
        %v4357 = vadd.f32 %v3167, %v4356
        %v4358 = vpop.f32.mrf.mxu0
        %v4359 = vpop.f32.mrf.mxu0
        %v4360 = vadd.f32 %v3167, %v4359
        %v4361 = vpop.f32.mrf.mxu0
        %4362 = vmatprep.mubr.bf16.mxu0 0
        %4363 = vmatmul.mubr.bf16.gmra.mxu0 %v3477
        %v4364 = vpop.f32.mrf.mxu0
        %v4365 = vadd.f32 %v3167, %v4364
        %v4366 = vpop.f32.mrf.mxu0
        %v4367 = vpop.f32.mrf.mxu0
        %v4368 = vadd.f32 %v3167, %v4367
        %v4369 = vpop.f32.mrf.mxu0
        %4370 = vmatprep.mubr.bf16.mxu0 0
        %4371 = vmatmul.mubr.bf16.gmra.mxu0 %v3480
        %v4372 = vpop.f32.mrf.mxu0
        %v4373 = vadd.f32 %v3167, %v4372
        %v4374 = vpop.f32.mrf.mxu0
        %v4375 = vpop.f32.mrf.mxu0
        %v4376 = vadd.f32 %v3167, %v4375
        %v4377 = vpop.f32.mrf.mxu0
        %4378 = vmatprep.mubr.bf16.mxu0 0
        %4379 = vmatmul.mubr.bf16.gmra.mxu0 %v3483
        %v4380 = vpop.f32.mrf.mxu0
        %v4381 = vadd.f32 %v3167, %v4380
        %v4382 = vpop.f32.mrf.mxu0
        %v4383 = vpop.f32.mrf.mxu0
        %v4384 = vadd.f32 %v3167, %v4383
        %v4385 = vpop.f32.mrf.mxu0
        %4386 = vmatprep.mubr.bf16.mxu0 0
        %4387 = vmatmul.mubr.bf16.gmra.mxu0 %v3486
        %v4388 = vpop.f32.mrf.mxu0
        %v4389 = vadd.f32 %v3167, %v4388
        %v4390 = vpop.f32.mrf.mxu0
        %v4391 = vpop.f32.mrf.mxu0
        %v4392 = vadd.f32 %v3167, %v4391
        %v4393 = vpop.f32.mrf.mxu0
        %4394 = vmatprep.mubr.bf16.mxu0 0
        %4395 = vmatmul.mubr.bf16.gmra.mxu0 %v3489
        %v4396 = vpop.f32.mrf.mxu0
        %v4397 = vadd.f32 %v3167, %v4396
        %v4398 = vpop.f32.mrf.mxu0
        %v4399 = vpop.f32.mrf.mxu0
        %v4400 = vadd.f32 %v3167, %v4399
        %v4401 = vpop.f32.mrf.mxu0
        %4402 = vmatprep.mubr.bf16.mxu0 0
        %4403 = vmatmul.mubr.bf16.gmra.mxu0 %v3492
        %v4404 = vpop.f32.mrf.mxu0
        %v4405 = vadd.f32 %v3167, %v4404
        %v4406 = vpop.f32.mrf.mxu0
        %v4407 = vpop.f32.mrf.mxu0
        %v4408 = vadd.f32 %v3167, %v4407
        %v4409 = vpop.f32.mrf.mxu0
        %4410 = vmatprep.mubr.bf16.mxu0 0
        %4411 = vmatmul.mubr.bf16.gmra.mxu0 %v3495
        %v4412 = vpop.f32.mrf.mxu0
        %v4413 = vadd.f32 %v3167, %v4412
        %v4414 = vpop.f32.mrf.mxu0
        %v4415 = vpop.f32.mrf.mxu0
        %v4416 = vadd.f32 %v3167, %v4415
        %v4417 = vpop.f32.mrf.mxu0
        %4418 = vmatprep.mubr.bf16.mxu0 0
        %4419 = vmatmul.mubr.bf16.gmra.mxu0 %v3498
        %v4420 = vpop.f32.mrf.mxu0
        %v4421 = vadd.f32 %v3167, %v4420
        %v4422 = vpop.f32.mrf.mxu0
        %v4423 = vpop.f32.mrf.mxu0
        %v4424 = vadd.f32 %v3167, %v4423
        %v4425 = vpop.f32.mrf.mxu0
        %4426 = vmatprep.mubr.bf16.mxu0 0
        %4427 = vmatmul.mubr.bf16.gmra.mxu0 %v3501
        %v4428 = vpop.f32.mrf.mxu0
        %v4429 = vadd.f32 %v3167, %v4428
        %v4430 = vpop.f32.mrf.mxu0
        %v4431 = vpop.f32.mrf.mxu0
        %v4432 = vadd.f32 %v3167, %v4431
        %v4433 = vpop.f32.mrf.mxu0
        %4434 = vmatprep.mubr.bf16.mxu0 0
        %4435 = vmatmul.mubr.bf16.gmra.mxu0 %v3504
        %v4436 = vpop.f32.mrf.mxu0
        %v4437 = vadd.f32 %v3167, %v4436
        %v4438 = vpop.f32.mrf.mxu0
        %v4439 = vpop.f32.mrf.mxu0
        %v4440 = vadd.f32 %v3167, %v4439
        %v4441 = vpop.f32.mrf.mxu0
        %4442 = vmatprep.mubr.bf16.mxu0 0
        %4443 = vmatmul.mubr.bf16.gmra.mxu0 %v3507
        %v4444 = vpop.f32.mrf.mxu0
        %v4445 = vadd.f32 %v3167, %v4444
        %v4446 = vpop.f32.mrf.mxu0
        %v4447 = vpop.f32.mrf.mxu0
        %v4448 = vadd.f32 %v3167, %v4447
        %v4449 = vpop.f32.mrf.mxu0
        %4450 = vmatprep.mubr.bf16.mxu0 0
        %4451 = vmatmul.mubr.bf16.gmra.mxu0 %v3510
        %v4452 = vpop.f32.mrf.mxu0
        %v4453 = vadd.f32 %v3167, %v4452
        %v4454 = vpop.f32.mrf.mxu0
        %v4455 = vpop.f32.mrf.mxu0
        %v4456 = vadd.f32 %v3167, %v4455
        %v4457 = vpop.f32.mrf.mxu0
        %4458 = vmatprep.mubr.bf16.mxu0 0
        %4459 = vmatmul.mubr.bf16.gmra.mxu0 %v3513
        %v4460 = vpop.f32.mrf.mxu0
        %v4461 = vadd.f32 %v3167, %v4460
        %v4462 = vpop.f32.mrf.mxu0
        %v4463 = vpop.f32.mrf.mxu0
        %v4464 = vadd.f32 %v3167, %v4463
        %v4465 = vpop.f32.mrf.mxu0
        %4466 = vmatprep.mubr.bf16.mxu0 0
        %4467 = vmatmul.mubr.bf16.gmra.mxu0 %v3516
        %v4468 = vpop.f32.mrf.mxu0
        %v4469 = vadd.f32 %v3167, %v4468
        %v4470 = vpop.f32.mrf.mxu0
        %v4471 = vpop.f32.mrf.mxu0
        %v4472 = vadd.f32 %v3167, %v4471
        %v4473 = vpop.f32.mrf.mxu0
        %4474 = vmatprep.mubr.bf16.mxu0 0
        %4475 = vmatmul.mubr.bf16.gmra.mxu0 %v3519
        %v4476 = vpop.f32.mrf.mxu0
        %v4477 = vadd.f32 %v3167, %v4476
        %v4478 = vpop.f32.mrf.mxu0
        %v4479 = vpop.f32.mrf.mxu0
        %v4480 = vadd.f32 %v3167, %v4479
        %v4481 = vpop.f32.mrf.mxu0
        %4482 = vmatprep.mubr.bf16.mxu0 0
        %4483 = vmatmul.mubr.bf16.gmra.mxu0 %v3522
        %v4484 = vpop.f32.mrf.mxu0
        %v4485 = vadd.f32 %v3167, %v4484
        %v4486 = vpop.f32.mrf.mxu0
        %v4487 = vpop.f32.mrf.mxu0
        %v4488 = vadd.f32 %v3167, %v4487
        %v4489 = vpop.f32.mrf.mxu0
        %4490 = vmatprep.mubr.bf16.mxu0 0
        %4491 = vmatmul.mubr.bf16.gmra.mxu0 %v3525
        %v4492 = vpop.f32.mrf.mxu0
        %v4493 = vadd.f32 %v3167, %v4492
        %v4494 = vpop.f32.mrf.mxu0
        %v4495 = vpop.f32.mrf.mxu0
        %v4496 = vadd.f32 %v3167, %v4495
        %v4497 = vpop.f32.mrf.mxu0
        %4498 = vmatprep.mubr.bf16.mxu0 0
        %4499 = vmatmul.mubr.bf16.gmra.mxu0 %v3528
        %v4500 = vpop.f32.mrf.mxu0
        %v4501 = vadd.f32 %v3167, %v4500
        %v4502 = vpop.f32.mrf.mxu0
        %v4503 = vpop.f32.mrf.mxu0
        %v4504 = vadd.f32 %v3167, %v4503
        %v4505 = vpop.f32.mrf.mxu0
        %4506 = vmatprep.mubr.bf16.mxu0 0
        %4507 = vmatmul.mubr.bf16.gmra.mxu0 %v3531
        %v4508 = vpop.f32.mrf.mxu0
        %v4509 = vadd.f32 %v3167, %v4508
        %v4510 = vpop.f32.mrf.mxu0
        %v4511 = vpop.f32.mrf.mxu0
        %v4512 = vadd.f32 %v3167, %v4511
        %v4513 = vpop.f32.mrf.mxu0
        %4514 = vmatprep.mubr.bf16.mxu0 0
        %4515 = vmatmul.mubr.bf16.gmra.mxu0 %v3534
        %v4516 = vpop.f32.mrf.mxu0
        %v4517 = vadd.f32 %v3167, %v4516
        %v4518 = vpop.f32.mrf.mxu0
        %v4519 = vpop.f32.mrf.mxu0
        %v4520 = vadd.f32 %v3167, %v4519
        %v4521 = vpop.f32.mrf.mxu0
        %4522 = vmatprep.mubr.bf16.mxu0 0
        %4523 = vmatmul.mubr.bf16.gmra.mxu0 %v3537
        %v4524 = vpop.f32.mrf.mxu0
        %v4525 = vadd.f32 %v3167, %v4524
        %v4526 = vpop.f32.mrf.mxu0
        %v4527 = vpop.f32.mrf.mxu0
        %v4528 = vadd.f32 %v3167, %v4527
        %v4529 = vpop.f32.mrf.mxu0
        %4530 = vmatprep.mubr.bf16.mxu0 0
        %4531 = vmatmul.mubr.bf16.gmra.mxu0 %v3540
        %v4532 = vpop.f32.mrf.mxu0
        %v4533 = vadd.f32 %v3167, %v4532
        %v4534 = vpop.f32.mrf.mxu0
        %v4535 = vpop.f32.mrf.mxu0
        %v4536 = vadd.f32 %v3167, %v4535
        %v4537 = vpop.f32.mrf.mxu0
        %4538 = vmatprep.mubr.bf16.mxu0 0
        %4539 = vmatmul.mubr.bf16.gmra.mxu0 %v3543
        %v4540 = vpop.f32.mrf.mxu0
        %v4541 = vadd.f32 %v3167, %v4540
        %v4542 = vpop.f32.mrf.mxu0
        %v4543 = vpop.f32.mrf.mxu0
        %v4544 = vadd.f32 %v3167, %v4543
        %v4545 = vpop.f32.mrf.mxu0
        %4546 = vmatprep.mubr.bf16.mxu0 0
        %4547 = vmatmul.mubr.bf16.gmra.mxu0 %v3546
        %v4548 = vpop.f32.mrf.mxu0
        %v4549 = vadd.f32 %v3167, %v4548
        %v4550 = vpop.f32.mrf.mxu0
        %v4551 = vpop.f32.mrf.mxu0
        %v4552 = vadd.f32 %v3167, %v4551
        %v4553 = vpop.f32.mrf.mxu0
        %4554 = vmatprep.mubr.bf16.mxu0 0
        %4555 = vmatmul.mubr.bf16.gmra.mxu0 %v3549
        %v4556 = vpop.f32.mrf.mxu0
        %v4557 = vadd.f32 %v3167, %v4556
        %v4558 = vpop.f32.mrf.mxu0
        %v4559 = vpop.f32.mrf.mxu0
        %v4560 = vadd.f32 %v3167, %v4559
        %v4561 = vpop.f32.mrf.mxu0
        %4562 = vmatprep.mubr.bf16.mxu0 0
        %4563 = vmatmul.mubr.bf16.gmra.mxu0 %v3552
        %v4564 = vpop.f32.mrf.mxu0
        %v4565 = vadd.f32 %v3167, %v4564
        %v4566 = vpop.f32.mrf.mxu0
        %v4567 = vpop.f32.mrf.mxu0
        %v4568 = vadd.f32 %v3167, %v4567
        %v4569 = vpop.f32.mrf.mxu0
        %4570 = vmatprep.mubr.bf16.mxu0 0
        %4571 = vmatmul.mubr.bf16.gmra.mxu0 %v3555
        %v4572 = vpop.f32.mrf.mxu0
        %v4573 = vadd.f32 %v3167, %v4572
        %v4574 = vpop.f32.mrf.mxu0
        %v4575 = vpop.f32.mrf.mxu0
        %v4576 = vadd.f32 %v3167, %v4575
        %v4577 = vpop.f32.mrf.mxu0
        %4578 = vmatprep.mubr.bf16.mxu0 0
        %4579 = vmatmul.mubr.bf16.gmra.mxu0 %v3558
        %v4580 = vpop.f32.mrf.mxu0
        %v4581 = vadd.f32 %v3167, %v4580
        %v4582 = vpop.f32.mrf.mxu0
        %v4583 = vpop.f32.mrf.mxu0
        %v4584 = vadd.f32 %v3167, %v4583
        %v4585 = vpop.f32.mrf.mxu0
        %4586 = vmatprep.mubr.bf16.mxu0 0
        %4587 = vmatmul.mubr.bf16.gmra.mxu0 %v3561
        %v4588 = vpop.f32.mrf.mxu0
        %v4589 = vadd.f32 %v3167, %v4588
        %v4590 = vpop.f32.mrf.mxu0
        %v4591 = vpop.f32.mrf.mxu0
        %v4592 = vadd.f32 %v3167, %v4591
        %v4593 = vpop.f32.mrf.mxu0
        %4594 = vmatprep.mubr.bf16.mxu0 0
        %4595 = vmatmul.mubr.bf16.gmra.mxu0 %v3564
        %v4596 = vpop.f32.mrf.mxu0
        %v4597 = vadd.f32 %v3167, %v4596
        %v4598 = vpop.f32.mrf.mxu0
        %v4599 = vpop.f32.mrf.mxu0
        %v4600 = vadd.f32 %v3167, %v4599
        %v4601 = vpop.f32.mrf.mxu0
        %4602 = vmatprep.mubr.bf16.mxu0 0
        %4603 = vmatmul.mubr.bf16.gmra.mxu0 %v3567
        %v4604 = vpop.f32.mrf.mxu0
        %v4605 = vadd.f32 %v3167, %v4604
        %v4606 = vpop.f32.mrf.mxu0
        %v4607 = vpop.f32.mrf.mxu0
        %v4608 = vadd.f32 %v3167, %v4607
        %v4609 = vpop.f32.mrf.mxu0
        %4610 = vmatprep.mubr.bf16.mxu0 0
        %4611 = vmatmul.mubr.bf16.gmra.mxu0 %v3570
        %v4612 = vpop.f32.mrf.mxu0
        %v4613 = vadd.f32 %v3167, %v4612
        %v4614 = vpop.f32.mrf.mxu0
        %v4615 = vpop.f32.mrf.mxu0
        %v4616 = vadd.f32 %v3167, %v4615
        %v4617 = vpop.f32.mrf.mxu0
        %4618 = vmatprep.mubr.bf16.mxu0 0
        %4619 = vmatmul.mubr.bf16.gmra.mxu0 %v3573
        %v4620 = vpop.f32.mrf.mxu0
        %v4621 = vadd.f32 %v3167, %v4620
        %v4622 = vpop.f32.mrf.mxu0
        %v4623 = vpop.f32.mrf.mxu0
        %v4624 = vadd.f32 %v3167, %v4623
        %v4625 = vpop.f32.mrf.mxu0
        %4626 = vmatprep.mubr.bf16.mxu0 0
        %4627 = vmatmul.mubr.bf16.gmra.mxu0 %v3576
        %v4628 = vpop.f32.mrf.mxu0
        %v4629 = vadd.f32 %v3167, %v4628
        %v4630 = vpop.f32.mrf.mxu0
        %v4631 = vpop.f32.mrf.mxu0
        %v4632 = vadd.f32 %v3167, %v4631
        %v4633 = vpop.f32.mrf.mxu0
        %4634 = vdwg.mxu0
        %v4635 = vmax.f32 %v3613, 0.0
        %v4636 = vmax.f32 %v3616, 0.0
        %v4637 = vmax.f32 %v3621, 0.0
        %v4638 = vmax.f32 %v3624, 0.0
        %v4639 = vmax.f32 %v3629, 0.0
        %v4640 = vmax.f32 %v3632, 0.0
        %v4641 = vmax.f32 %v3637, 0.0
        %v4642 = vmax.f32 %v3640, 0.0
        %v4643 = vmax.f32 %v3645, 0.0
        %v4644 = vmax.f32 %v3648, 0.0
        %v4645 = vmax.f32 %v3653, 0.0
        %v4646 = vmax.f32 %v3656, 0.0
        %v4647 = vmax.f32 %v3661, 0.0
        %v4648 = vmax.f32 %v3664, 0.0
        %v4649 = vmax.f32 %v3669, 0.0
        %v4650 = vmax.f32 %v3672, 0.0
        %v4651 = vmax.f32 %v3677, 0.0
        %v4652 = vmax.f32 %v3680, 0.0
        %v4653 = vmax.f32 %v3685, 0.0
        %v4654 = vmax.f32 %v3688, 0.0
        %v4655 = vmax.f32 %v3693, 0.0
        %v4656 = vmax.f32 %v3696, 0.0
        %v4657 = vmax.f32 %v3701, 0.0
        %v4658 = vmax.f32 %v3704, 0.0
        %v4659 = vmax.f32 %v3709, 0.0
        %v4660 = vmax.f32 %v3712, 0.0
        %v4661 = vmax.f32 %v3717, 0.0
        %v4662 = vmax.f32 %v3720, 0.0
        %v4663 = vmax.f32 %v3725, 0.0
        %v4664 = vmax.f32 %v3728, 0.0
        %v4665 = vmax.f32 %v3733, 0.0
        %v4666 = vmax.f32 %v3736, 0.0
        %v4667 = vmax.f32 %v3741, 0.0
        %v4668 = vmax.f32 %v3744, 0.0
        %v4669 = vmax.f32 %v3749, 0.0
        %v4670 = vmax.f32 %v3752, 0.0
        %v4671 = vmax.f32 %v3757, 0.0
        %v4672 = vmax.f32 %v3760, 0.0
        %v4673 = vmax.f32 %v3765, 0.0
        %v4674 = vmax.f32 %v3768, 0.0
        %v4675 = vmax.f32 %v3773, 0.0
        %v4676 = vmax.f32 %v3776, 0.0
        %v4677 = vmax.f32 %v3781, 0.0
        %v4678 = vmax.f32 %v3784, 0.0
        %v4679 = vmax.f32 %v3789, 0.0
        %v4680 = vmax.f32 %v3792, 0.0
        %v4681 = vmax.f32 %v3797, 0.0
        %v4682 = vmax.f32 %v3800, 0.0
        %v4683 = vmax.f32 %v3805, 0.0
        %v4684 = vmax.f32 %v3808, 0.0
        %v4685 = vmax.f32 %v3813, 0.0
        %v4686 = vmax.f32 %v3816, 0.0
        %v4687 = vmax.f32 %v3821, 0.0
        %v4688 = vmax.f32 %v3824, 0.0
        %v4689 = vmax.f32 %v3829, 0.0
        %v4690 = vmax.f32 %v3832, 0.0
        %v4691 = vmax.f32 %v3837, 0.0
        %v4692 = vmax.f32 %v3840, 0.0
        %v4693 = vmax.f32 %v3845, 0.0
        %v4694 = vmax.f32 %v3848, 0.0
        %v4695 = vmax.f32 %v3853, 0.0
        %v4696 = vmax.f32 %v3856, 0.0
        %v4697 = vmax.f32 %v3861, 0.0
        %v4698 = vmax.f32 %v3864, 0.0
        %v4699 = vmax.f32 %v3869, 0.0
        %v4700 = vmax.f32 %v3872, 0.0
        %v4701 = vmax.f32 %v3877, 0.0
        %v4702 = vmax.f32 %v3880, 0.0
        %v4703 = vmax.f32 %v3885, 0.0
        %v4704 = vmax.f32 %v3888, 0.0
        %v4705 = vmax.f32 %v3893, 0.0
        %v4706 = vmax.f32 %v3896, 0.0
        %v4707 = vmax.f32 %v3901, 0.0
        %v4708 = vmax.f32 %v3904, 0.0
        %v4709 = vmax.f32 %v3909, 0.0
        %v4710 = vmax.f32 %v3912, 0.0
        %v4711 = vmax.f32 %v3917, 0.0
        %v4712 = vmax.f32 %v3920, 0.0
        %v4713 = vmax.f32 %v3925, 0.0
        %v4714 = vmax.f32 %v3928, 0.0
        %v4715 = vmax.f32 %v3933, 0.0
        %v4716 = vmax.f32 %v3936, 0.0
        %v4717 = vmax.f32 %v3941, 0.0
        %v4718 = vmax.f32 %v3944, 0.0
        %v4719 = vmax.f32 %v3949, 0.0
        %v4720 = vmax.f32 %v3952, 0.0
        %v4721 = vmax.f32 %v3957, 0.0
        %v4722 = vmax.f32 %v3960, 0.0
        %v4723 = vmax.f32 %v3965, 0.0
        %v4724 = vmax.f32 %v3968, 0.0
        %v4725 = vmax.f32 %v3973, 0.0
        %v4726 = vmax.f32 %v3976, 0.0
        %v4727 = vmax.f32 %v3981, 0.0
        %v4728 = vmax.f32 %v3984, 0.0
        %v4729 = vmax.f32 %v3989, 0.0
        %v4730 = vmax.f32 %v3992, 0.0
        %v4731 = vmax.f32 %v3997, 0.0
        %v4732 = vmax.f32 %v4000, 0.0
        %v4733 = vmax.f32 %v4005, 0.0
        %v4734 = vmax.f32 %v4008, 0.0
        %v4735 = vmax.f32 %v4013, 0.0
        %v4736 = vmax.f32 %v4016, 0.0
        %v4737 = vmax.f32 %v4021, 0.0
        %v4738 = vmax.f32 %v4024, 0.0
        %v4739 = vmax.f32 %v4029, 0.0
        %v4740 = vmax.f32 %v4032, 0.0
        %v4741 = vmax.f32 %v4037, 0.0
        %v4742 = vmax.f32 %v4040, 0.0
        %v4743 = vmax.f32 %v4045, 0.0
        %v4744 = vmax.f32 %v4048, 0.0
        %v4745 = vmax.f32 %v4053, 0.0
        %v4746 = vmax.f32 %v4056, 0.0
        %v4747 = vmax.f32 %v4061, 0.0
        %v4748 = vmax.f32 %v4064, 0.0
        %v4749 = vmax.f32 %v4069, 0.0
        %v4750 = vmax.f32 %v4072, 0.0
        %v4751 = vmax.f32 %v4077, 0.0
        %v4752 = vmax.f32 %v4080, 0.0
        %v4753 = vmax.f32 %v4085, 0.0
        %v4754 = vmax.f32 %v4088, 0.0
        %v4755 = vmax.f32 %v4093, 0.0
        %v4756 = vmax.f32 %v4096, 0.0
        %v4757 = vmax.f32 %v4101, 0.0
        %v4758 = vmax.f32 %v4104, 0.0
        %v4759 = vmax.f32 %v4109, 0.0
        %v4760 = vmax.f32 %v4112, 0.0
        %v4761 = vmax.f32 %v4117, 0.0
        %v4762 = vmax.f32 %v4120, 0.0
        %v4763 = vmax.f32 %v4125, 0.0
        %v4764 = vmax.f32 %v4128, 0.0
        %v4765 = vmax.f32 %v4133, 0.0
        %v4766 = vmax.f32 %v4136, 0.0
        %v4767 = vmax.f32 %v4141, 0.0
        %v4768 = vmax.f32 %v4144, 0.0
        %v4769 = vmax.f32 %v4149, 0.0
        %v4770 = vmax.f32 %v4152, 0.0
        %v4771 = vmax.f32 %v4157, 0.0
        %v4772 = vmax.f32 %v4160, 0.0
        %v4773 = vmax.f32 %v4165, 0.0
        %v4774 = vmax.f32 %v4168, 0.0
        %v4775 = vmax.f32 %v4173, 0.0
        %v4776 = vmax.f32 %v4176, 0.0
        %v4777 = vmax.f32 %v4181, 0.0
        %v4778 = vmax.f32 %v4184, 0.0
        %v4779 = vmax.f32 %v4189, 0.0
        %v4780 = vmax.f32 %v4192, 0.0
        %v4781 = vmax.f32 %v4197, 0.0
        %v4782 = vmax.f32 %v4200, 0.0
        %v4783 = vmax.f32 %v4205, 0.0
        %v4784 = vmax.f32 %v4208, 0.0
        %v4785 = vmax.f32 %v4213, 0.0
        %v4786 = vmax.f32 %v4216, 0.0
        %v4787 = vmax.f32 %v4221, 0.0
        %v4788 = vmax.f32 %v4224, 0.0
        %v4789 = vmax.f32 %v4229, 0.0
        %v4790 = vmax.f32 %v4232, 0.0
        %v4791 = vmax.f32 %v4237, 0.0
        %v4792 = vmax.f32 %v4240, 0.0
        %v4793 = vmax.f32 %v4245, 0.0
        %v4794 = vmax.f32 %v4248, 0.0
        %v4795 = vmax.f32 %v4253, 0.0
        %v4796 = vmax.f32 %v4256, 0.0
        %v4797 = vmax.f32 %v4261, 0.0
        %v4798 = vmax.f32 %v4264, 0.0
        %v4799 = vmax.f32 %v4269, 0.0
        %v4800 = vmax.f32 %v4272, 0.0
        %v4801 = vmax.f32 %v4277, 0.0
        %v4802 = vmax.f32 %v4280, 0.0
        %v4803 = vmax.f32 %v4285, 0.0
        %v4804 = vmax.f32 %v4288, 0.0
        %v4805 = vmax.f32 %v4293, 0.0
        %v4806 = vmax.f32 %v4296, 0.0
        %v4807 = vmax.f32 %v4301, 0.0
        %v4808 = vmax.f32 %v4304, 0.0
        %v4809 = vmax.f32 %v4309, 0.0
        %v4810 = vmax.f32 %v4312, 0.0
        %v4811 = vmax.f32 %v4317, 0.0
        %v4812 = vmax.f32 %v4320, 0.0
        %v4813 = vmax.f32 %v4325, 0.0
        %v4814 = vmax.f32 %v4328, 0.0
        %v4815 = vmax.f32 %v4333, 0.0
        %v4816 = vmax.f32 %v4336, 0.0
        %v4817 = vmax.f32 %v4341, 0.0
        %v4818 = vmax.f32 %v4344, 0.0
        %v4819 = vmax.f32 %v4349, 0.0
        %v4820 = vmax.f32 %v4352, 0.0
        %v4821 = vmax.f32 %v4357, 0.0
        %v4822 = vmax.f32 %v4360, 0.0
        %v4823 = vmax.f32 %v4365, 0.0
        %v4824 = vmax.f32 %v4368, 0.0
        %v4825 = vmax.f32 %v4373, 0.0
        %v4826 = vmax.f32 %v4376, 0.0
        %v4827 = vmax.f32 %v4381, 0.0
        %v4828 = vmax.f32 %v4384, 0.0
        %v4829 = vmax.f32 %v4389, 0.0
        %v4830 = vmax.f32 %v4392, 0.0
        %v4831 = vmax.f32 %v4397, 0.0
        %v4832 = vmax.f32 %v4400, 0.0
        %v4833 = vmax.f32 %v4405, 0.0
        %v4834 = vmax.f32 %v4408, 0.0
        %v4835 = vmax.f32 %v4413, 0.0
        %v4836 = vmax.f32 %v4416, 0.0
        %v4837 = vmax.f32 %v4421, 0.0
        %v4838 = vmax.f32 %v4424, 0.0
        %v4839 = vmax.f32 %v4429, 0.0
        %v4840 = vmax.f32 %v4432, 0.0
        %v4841 = vmax.f32 %v4437, 0.0
        %v4842 = vmax.f32 %v4440, 0.0
        %v4843 = vmax.f32 %v4445, 0.0
        %v4844 = vmax.f32 %v4448, 0.0
        %v4845 = vmax.f32 %v4453, 0.0
        %v4846 = vmax.f32 %v4456, 0.0
        %v4847 = vmax.f32 %v4461, 0.0
        %v4848 = vmax.f32 %v4464, 0.0
        %v4849 = vmax.f32 %v4469, 0.0
        %v4850 = vmax.f32 %v4472, 0.0
        %v4851 = vmax.f32 %v4477, 0.0
        %v4852 = vmax.f32 %v4480, 0.0
        %v4853 = vmax.f32 %v4485, 0.0
        %v4854 = vmax.f32 %v4488, 0.0
        %v4855 = vmax.f32 %v4493, 0.0
        %v4856 = vmax.f32 %v4496, 0.0
        %v4857 = vmax.f32 %v4501, 0.0
        %v4858 = vmax.f32 %v4504, 0.0
        %v4859 = vmax.f32 %v4509, 0.0
        %v4860 = vmax.f32 %v4512, 0.0
        %v4861 = vmax.f32 %v4517, 0.0
        %v4862 = vmax.f32 %v4520, 0.0
        %v4863 = vmax.f32 %v4525, 0.0
        %v4864 = vmax.f32 %v4528, 0.0
        %v4865 = vmax.f32 %v4533, 0.0
        %v4866 = vmax.f32 %v4536, 0.0
        %v4867 = vmax.f32 %v4541, 0.0
        %v4868 = vmax.f32 %v4544, 0.0
        %v4869 = vmax.f32 %v4549, 0.0
        %v4870 = vmax.f32 %v4552, 0.0
        %v4871 = vmax.f32 %v4557, 0.0
        %v4872 = vmax.f32 %v4560, 0.0
        %v4873 = vmax.f32 %v4565, 0.0
        %v4874 = vmax.f32 %v4568, 0.0
        %v4875 = vmax.f32 %v4573, 0.0
        %v4876 = vmax.f32 %v4576, 0.0
        %v4877 = vmax.f32 %v4581, 0.0
        %v4878 = vmax.f32 %v4584, 0.0
        %v4879 = vmax.f32 %v4589, 0.0
        %v4880 = vmax.f32 %v4592, 0.0
        %v4881 = vmax.f32 %v4597, 0.0
        %v4882 = vmax.f32 %v4600, 0.0
        %v4883 = vmax.f32 %v4605, 0.0
        %v4884 = vmax.f32 %v4608, 0.0
        %v4885 = vmax.f32 %v4613, 0.0
        %v4886 = vmax.f32 %v4616, 0.0
        %v4887 = vmax.f32 %v4621, 0.0
        %v4888 = vmax.f32 %v4624, 0.0
        %v4889 = vmax.f32 %v4629, 0.0
        %v4890 = vmax.f32 %v4632, 0.0
        %v4891 = vpack.c.bf16 %v4636, %v4635
        %v4892 = vpack.c.bf16 %v4638, %v4637
        %v4893 = vpack.c.bf16 %v4640, %v4639
        %v4894 = vpack.c.bf16 %v4642, %v4641
        %v4895 = vpack.c.bf16 %v4644, %v4643
        %v4896 = vpack.c.bf16 %v4646, %v4645
        %v4897 = vpack.c.bf16 %v4648, %v4647
        %v4898 = vpack.c.bf16 %v4650, %v4649
        %v4899 = vpack.c.bf16 %v4652, %v4651
        %v4900 = vpack.c.bf16 %v4654, %v4653
        %v4901 = vpack.c.bf16 %v4656, %v4655
        %v4902 = vpack.c.bf16 %v4658, %v4657
        %v4903 = vpack.c.bf16 %v4660, %v4659
        %v4904 = vpack.c.bf16 %v4662, %v4661
        %v4905 = vpack.c.bf16 %v4664, %v4663
        %v4906 = vpack.c.bf16 %v4666, %v4665
        %v4907 = vpack.c.bf16 %v4668, %v4667
        %v4908 = vpack.c.bf16 %v4670, %v4669
        %v4909 = vpack.c.bf16 %v4672, %v4671
        %v4910 = vpack.c.bf16 %v4674, %v4673
        %v4911 = vpack.c.bf16 %v4676, %v4675
        %v4912 = vpack.c.bf16 %v4678, %v4677
        %v4913 = vpack.c.bf16 %v4680, %v4679
        %v4914 = vpack.c.bf16 %v4682, %v4681
        %v4915 = vpack.c.bf16 %v4684, %v4683
        %v4916 = vpack.c.bf16 %v4686, %v4685
        %v4917 = vpack.c.bf16 %v4688, %v4687
        %v4918 = vpack.c.bf16 %v4690, %v4689
        %v4919 = vpack.c.bf16 %v4692, %v4691
        %v4920 = vpack.c.bf16 %v4694, %v4693
        %v4921 = vpack.c.bf16 %v4696, %v4695
        %v4922 = vpack.c.bf16 %v4698, %v4697
        %v4923 = vpack.c.bf16 %v4700, %v4699
        %v4924 = vpack.c.bf16 %v4702, %v4701
        %v4925 = vpack.c.bf16 %v4704, %v4703
        %v4926 = vpack.c.bf16 %v4706, %v4705
        %v4927 = vpack.c.bf16 %v4708, %v4707
        %v4928 = vpack.c.bf16 %v4710, %v4709
        %v4929 = vpack.c.bf16 %v4712, %v4711
        %v4930 = vpack.c.bf16 %v4714, %v4713
        %v4931 = vpack.c.bf16 %v4716, %v4715
        %v4932 = vpack.c.bf16 %v4718, %v4717
        %v4933 = vpack.c.bf16 %v4720, %v4719
        %v4934 = vpack.c.bf16 %v4722, %v4721
        %v4935 = vpack.c.bf16 %v4724, %v4723
        %v4936 = vpack.c.bf16 %v4726, %v4725
        %v4937 = vpack.c.bf16 %v4728, %v4727
        %v4938 = vpack.c.bf16 %v4730, %v4729
        %v4939 = vpack.c.bf16 %v4732, %v4731
        %v4940 = vpack.c.bf16 %v4734, %v4733
        %v4941 = vpack.c.bf16 %v4736, %v4735
        %v4942 = vpack.c.bf16 %v4738, %v4737
        %v4943 = vpack.c.bf16 %v4740, %v4739
        %v4944 = vpack.c.bf16 %v4742, %v4741
        %v4945 = vpack.c.bf16 %v4744, %v4743
        %v4946 = vpack.c.bf16 %v4746, %v4745
        %v4947 = vpack.c.bf16 %v4748, %v4747
        %v4948 = vpack.c.bf16 %v4750, %v4749
        %v4949 = vpack.c.bf16 %v4752, %v4751
        %v4950 = vpack.c.bf16 %v4754, %v4753
        %v4951 = vpack.c.bf16 %v4756, %v4755
        %v4952 = vpack.c.bf16 %v4758, %v4757
        %v4953 = vpack.c.bf16 %v4760, %v4759
        %v4954 = vpack.c.bf16 %v4762, %v4761
        %v4955 = vpack.c.bf16 %v4764, %v4763
        %v4956 = vpack.c.bf16 %v4766, %v4765
        %v4957 = vpack.c.bf16 %v4768, %v4767
        %v4958 = vpack.c.bf16 %v4770, %v4769
        %v4959 = vpack.c.bf16 %v4772, %v4771
        %v4960 = vpack.c.bf16 %v4774, %v4773
        %v4961 = vpack.c.bf16 %v4776, %v4775
        %v4962 = vpack.c.bf16 %v4778, %v4777
        %v4963 = vpack.c.bf16 %v4780, %v4779
        %v4964 = vpack.c.bf16 %v4782, %v4781
        %v4965 = vpack.c.bf16 %v4784, %v4783
        %v4966 = vpack.c.bf16 %v4786, %v4785
        %v4967 = vpack.c.bf16 %v4788, %v4787
        %v4968 = vpack.c.bf16 %v4790, %v4789
        %v4969 = vpack.c.bf16 %v4792, %v4791
        %v4970 = vpack.c.bf16 %v4794, %v4793
        %v4971 = vpack.c.bf16 %v4796, %v4795
        %v4972 = vpack.c.bf16 %v4798, %v4797
        %v4973 = vpack.c.bf16 %v4800, %v4799
        %v4974 = vpack.c.bf16 %v4802, %v4801
        %v4975 = vpack.c.bf16 %v4804, %v4803
        %v4976 = vpack.c.bf16 %v4806, %v4805
        %v4977 = vpack.c.bf16 %v4808, %v4807
        %v4978 = vpack.c.bf16 %v4810, %v4809
        %v4979 = vpack.c.bf16 %v4812, %v4811
        %v4980 = vpack.c.bf16 %v4814, %v4813
        %v4981 = vpack.c.bf16 %v4816, %v4815
        %v4982 = vpack.c.bf16 %v4818, %v4817
        %v4983 = vpack.c.bf16 %v4820, %v4819
        %v4984 = vpack.c.bf16 %v4822, %v4821
        %v4985 = vpack.c.bf16 %v4824, %v4823
        %v4986 = vpack.c.bf16 %v4826, %v4825
        %v4987 = vpack.c.bf16 %v4828, %v4827
        %v4988 = vpack.c.bf16 %v4830, %v4829
        %v4989 = vpack.c.bf16 %v4832, %v4831
        %v4990 = vpack.c.bf16 %v4834, %v4833
        %v4991 = vpack.c.bf16 %v4836, %v4835
        %v4992 = vpack.c.bf16 %v4838, %v4837
        %v4993 = vpack.c.bf16 %v4840, %v4839
        %v4994 = vpack.c.bf16 %v4842, %v4841
        %v4995 = vpack.c.bf16 %v4844, %v4843
        %v4996 = vpack.c.bf16 %v4846, %v4845
        %v4997 = vpack.c.bf16 %v4848, %v4847
        %v4998 = vpack.c.bf16 %v4850, %v4849
        %v4999 = vpack.c.bf16 %v4852, %v4851
        %v5000 = vpack.c.bf16 %v4854, %v4853
        %v5001 = vpack.c.bf16 %v4856, %v4855
        %v5002 = vpack.c.bf16 %v4858, %v4857
        %v5003 = vpack.c.bf16 %v4860, %v4859
        %v5004 = vpack.c.bf16 %v4862, %v4861
        %v5005 = vpack.c.bf16 %v4864, %v4863
        %v5006 = vpack.c.bf16 %v4866, %v4865
        %v5007 = vpack.c.bf16 %v4868, %v4867
        %v5008 = vpack.c.bf16 %v4870, %v4869
        %v5009 = vpack.c.bf16 %v4872, %v4871
        %v5010 = vpack.c.bf16 %v4874, %v4873
        %v5011 = vpack.c.bf16 %v4876, %v4875
        %v5012 = vpack.c.bf16 %v4878, %v4877
        %v5013 = vpack.c.bf16 %v4880, %v4879
        %v5014 = vpack.c.bf16 %v4882, %v4881
        %v5015 = vpack.c.bf16 %v4884, %v4883
        %v5016 = vpack.c.bf16 %v4886, %v4885
        %v5017 = vpack.c.bf16 %v4888, %v4887
        %v5018 = vpack.c.bf16 %v4890, %v4889
        %v5019 = vld [vmem:[%s5] sm:$0xf]
        %v5020 = vld [vmem:[%s5 + $0x4] sm:$0xf]
        %v5021 = vld [vmem:[%s5 + $0x8] sm:$0xf]
        %v5022 = vld [vmem:[%s5 + $0xc] sm:$0xf]
        %v5023 = vld [vmem:[%s5 + $0x10] sm:$0xf]
        %v5024 = vld [vmem:[%s5 + $0x14] sm:$0xf]
        %v5025 = vld [vmem:[%s5 + $0x18] sm:$0xf]
        %v5026 = vld [vmem:[%s5 + $0x1c] sm:$0xf]
        %v5027 = vld [vmem:[%s6] sm:$0x1]
        %v5029 = vlaneseq
        %v5030 = vshrl.u32 %v5029, 7
        %v5031 = vsub.s32 0, %v5030
        %v5032 = vrot.slane %v5027, %v5031
        %v5042 = vunpack.c.l.b16 %v5019
        %v5043 = vunpack.c.l.b16 %v5020
        %v5044 = vunpack.c.l.b16 %v5021
        %v5045 = vunpack.c.l.b16 %v5022
        %v5046 = vunpack.c.l.b16 %v5023
        %v5047 = vunpack.c.l.b16 %v5024
        %v5048 = vunpack.c.l.b16 %v5025
        %v5049 = vunpack.c.l.b16 %v5026
        %v5050 = vpack.c.b16 %v5043, %v5042
        %v5051 = vpack.c.b16 %v5045, %v5044
        %v5052 = vpack.c.b16 %v5047, %v5046
        %v5053 = vpack.c.b16 %v5049, %v5048
        %v5059 = vsel %vm3193, %v4891, 0
        %v5062 = vsel %vm3193, %v4892, 0
        %v5065 = vsel %vm3193, %v4893, 0
        %v5068 = vsel %vm3193, %v4894, 0
        %v5071 = vsel %vm3193, %v4895, 0
        %v5074 = vsel %vm3193, %v4896, 0
        %v5077 = vsel %vm3193, %v4897, 0
        %v5080 = vsel %vm3193, %v4898, 0
        %v5083 = vsel %vm3193, %v4899, 0
        %v5086 = vsel %vm3193, %v4900, 0
        %v5089 = vsel %vm3193, %v4901, 0
        %v5092 = vsel %vm3193, %v4902, 0
        %v5095 = vsel %vm3193, %v4903, 0
        %v5098 = vsel %vm3193, %v4904, 0
        %v5101 = vsel %vm3193, %v4905, 0
        %v5104 = vsel %vm3193, %v4906, 0
        %v5107 = vsel %vm3193, %v4907, 0
        %v5110 = vsel %vm3193, %v4908, 0
        %v5113 = vsel %vm3193, %v4909, 0
        %v5116 = vsel %vm3193, %v4910, 0
        %v5119 = vsel %vm3193, %v4911, 0
        %v5122 = vsel %vm3193, %v4912, 0
        %v5125 = vsel %vm3193, %v4913, 0
        %v5128 = vsel %vm3193, %v4914, 0
        %v5131 = vsel %vm3193, %v4915, 0
        %v5134 = vsel %vm3193, %v4916, 0
        %v5137 = vsel %vm3193, %v4917, 0
        %v5140 = vsel %vm3193, %v4918, 0
        %v5143 = vsel %vm3193, %v4919, 0
        %v5146 = vsel %vm3193, %v4920, 0
        %v5149 = vsel %vm3193, %v4921, 0
        %v5152 = vsel %vm3193, %v4922, 0
        %v5155 = vsel %vm3193, %v4923, 0
        %v5158 = vsel %vm3193, %v4924, 0
        %v5161 = vsel %vm3193, %v4925, 0
        %v5164 = vsel %vm3193, %v4926, 0
        %v5167 = vsel %vm3193, %v4927, 0
        %v5170 = vsel %vm3193, %v4928, 0
        %v5173 = vsel %vm3193, %v4929, 0
        %v5176 = vsel %vm3193, %v4930, 0
        %v5179 = vsel %vm3193, %v4931, 0
        %v5182 = vsel %vm3193, %v4932, 0
        %v5185 = vsel %vm3193, %v4933, 0
        %v5188 = vsel %vm3193, %v4934, 0
        %v5191 = vsel %vm3193, %v4935, 0
        %v5194 = vsel %vm3193, %v4936, 0
        %v5197 = vsel %vm3193, %v4937, 0
        %v5200 = vsel %vm3193, %v4938, 0
        %v5203 = vsel %vm3193, %v4939, 0
        %v5206 = vsel %vm3193, %v4940, 0
        %v5209 = vsel %vm3193, %v4941, 0
        %v5212 = vsel %vm3193, %v4942, 0
        %v5215 = vsel %vm3193, %v4943, 0
        %v5218 = vsel %vm3193, %v4944, 0
        %v5221 = vsel %vm3193, %v4945, 0
        %v5224 = vsel %vm3193, %v4946, 0
        %v5227 = vsel %vm3193, %v4947, 0
        %v5230 = vsel %vm3193, %v4948, 0
        %v5233 = vsel %vm3193, %v4949, 0
        %v5236 = vsel %vm3193, %v4950, 0
        %v5239 = vsel %vm3193, %v4951, 0
        %v5242 = vsel %vm3193, %v4952, 0
        %v5245 = vsel %vm3193, %v4953, 0
        %v5248 = vsel %vm3193, %v4954, 0
        %v5251 = vsel %vm3193, %v4955, 0
        %v5254 = vsel %vm3193, %v4956, 0
        %v5257 = vsel %vm3193, %v4957, 0
        %v5260 = vsel %vm3193, %v4958, 0
        %v5263 = vsel %vm3193, %v4959, 0
        %v5266 = vsel %vm3193, %v4960, 0
        %v5269 = vsel %vm3193, %v4961, 0
        %v5272 = vsel %vm3193, %v4962, 0
        %v5275 = vsel %vm3193, %v4963, 0
        %v5278 = vsel %vm3193, %v4964, 0
        %v5281 = vsel %vm3193, %v4965, 0
        %v5284 = vsel %vm3193, %v4966, 0
        %v5287 = vsel %vm3193, %v4967, 0
        %v5290 = vsel %vm3193, %v4968, 0
        %v5293 = vsel %vm3193, %v4969, 0
        %v5296 = vsel %vm3193, %v4970, 0
        %v5299 = vsel %vm3193, %v4971, 0
        %v5302 = vsel %vm3193, %v4972, 0
        %v5305 = vsel %vm3193, %v4973, 0
        %v5308 = vsel %vm3193, %v4974, 0
        %v5311 = vsel %vm3193, %v4975, 0
        %v5314 = vsel %vm3193, %v4976, 0
        %v5317 = vsel %vm3193, %v4977, 0
        %v5320 = vsel %vm3193, %v4978, 0
        %v5323 = vsel %vm3193, %v4979, 0
        %v5326 = vsel %vm3193, %v4980, 0
        %v5329 = vsel %vm3193, %v4981, 0
        %v5332 = vsel %vm3193, %v4982, 0
        %v5335 = vsel %vm3193, %v4983, 0
        %v5338 = vsel %vm3193, %v4984, 0
        %v5341 = vsel %vm3193, %v4985, 0
        %v5344 = vsel %vm3193, %v4986, 0
        %v5347 = vsel %vm3193, %v4987, 0
        %v5350 = vsel %vm3193, %v4988, 0
        %v5353 = vsel %vm3193, %v4989, 0
        %v5356 = vsel %vm3193, %v4990, 0
        %v5359 = vsel %vm3193, %v4991, 0
        %v5362 = vsel %vm3193, %v4992, 0
        %v5365 = vsel %vm3193, %v4993, 0
        %v5368 = vsel %vm3193, %v4994, 0
        %v5371 = vsel %vm3193, %v4995, 0
        %v5374 = vsel %vm3193, %v4996, 0
        %v5377 = vsel %vm3193, %v4997, 0
        %v5380 = vsel %vm3193, %v4998, 0
        %v5383 = vsel %vm3193, %v4999, 0
        %v5386 = vsel %vm3193, %v5000, 0
        %v5389 = vsel %vm3193, %v5001, 0
        %v5392 = vsel %vm3193, %v5002, 0
        %v5395 = vsel %vm3193, %v5003, 0
        %v5398 = vsel %vm3193, %v5004, 0
        %v5401 = vsel %vm3193, %v5005, 0
        %v5404 = vsel %vm3193, %v5006, 0
        %v5407 = vsel %vm3193, %v5007, 0
        %v5410 = vsel %vm3193, %v5008, 0
        %v5413 = vsel %vm3193, %v5009, 0
        %v5416 = vsel %vm3193, %v5010, 0
        %v5419 = vsel %vm3193, %v5011, 0
        %v5422 = vsel %vm3193, %v5012, 0
        %v5425 = vsel %vm3193, %v5013, 0
        %v5428 = vsel %vm3193, %v5014, 0
        %v5431 = vsel %vm3193, %v5015, 0
        %v5434 = vsel %vm3193, %v5016, 0
        %v5437 = vsel %vm3193, %v5017, 0
        %v5440 = vsel %vm3193, %v5018, 0
        %5442 = vmatprep.subr.bf16.mxu0 0
        %5443 = vmatpush1.bf16.msra.mxu0 0
        %5444 = vmatprep.subr.bf16.mxu0 0
        %5445 = vmatpush1.bf16.msra.mxu0 0
        %5446 = vmatprep.subr.bf16.mxu0 0
        %5447 = vmatpush1.bf16.msra.mxu0 0
        %5448 = vmatprep.subr.bf16.mxu0 0
        %5449 = vmatpush1.bf16.msra.mxu0 0
        %5450 = vmatprep.subr.bf16.mxu0 0
        %5451 = vmatpush1.bf16.msra.mxu0 %v5053
        %5452 = vmatprep.subr.bf16.mxu0 0
        %5453 = vmatpush1.bf16.msra.mxu0 %v5052
        %5454 = vmatprep.subr.bf16.mxu0 0
        %5455 = vmatpush1.bf16.msra.mxu0 %v5051
        %5456 = vmatprep.subr.bf16.mxu0 0
        %5457 = vmatpush1.bf16.msra.mxu0 %v5050
        %5458 = vmatprep.subr.bf16.mxu0 0
        %5459 = vmatpush2.bf16.msra.mxu0 0
        %5460 = vmatprep.subr.bf16.mxu0 0
        %5461 = vmatpush2.bf16.msra.mxu0 0
        %5462 = vmatprep.subr.bf16.mxu0 0
        %5463 = vmatpush2.bf16.msra.mxu0 0
        %5464 = vmatprep.subr.bf16.mxu0 0
        %5465 = vmatpush2.bf16.msra.mxu0 0
        %5466 = vmatprep.subr.bf16.mxu0 0
        %5467 = vmatpush2.bf16.msra.mxu0 0
        %5468 = vmatprep.subr.bf16.mxu0 0
        %5469 = vmatpush2.bf16.msra.mxu0 0
        %5470 = vmatprep.subr.bf16.mxu0 0
        %5471 = vmatpush2.bf16.msra.mxu0 0
        %5472 = vmatprep.subr.bf16.mxu0 0
        %5473 = vmatpush2.bf16.msra.mxu0 0
        %5474 = vmatprep.mubr.bf16.mxu0 0
        %5475 = vmatmul.mubr.bf16.gmra.mxu0 %v5059
        %v5476 = vpop.f32.mrf.mxu0
        %v5477 = vadd.f32 %v5032, %v5476
        %v5478 = vpop.f32.mrf.mxu0
        %v5479 = vpop.f32.mrf.mxu0
        %v5480 = vadd.f32 %v5032, %v5479
        %v5481 = vpop.f32.mrf.mxu0
        %5482 = vmatprep.mubr.bf16.mxu0 0
        %5483 = vmatmul.mubr.bf16.gmra.mxu0 %v5062
        %v5484 = vpop.f32.mrf.mxu0
        %v5485 = vadd.f32 %v5032, %v5484
        %v5486 = vpop.f32.mrf.mxu0
        %v5487 = vpop.f32.mrf.mxu0
        %v5488 = vadd.f32 %v5032, %v5487
        %v5489 = vpop.f32.mrf.mxu0
        %5490 = vmatprep.mubr.bf16.mxu0 0
        %5491 = vmatmul.mubr.bf16.gmra.mxu0 %v5065
        %v5492 = vpop.f32.mrf.mxu0
        %v5493 = vadd.f32 %v5032, %v5492
        %v5494 = vpop.f32.mrf.mxu0
        %v5495 = vpop.f32.mrf.mxu0
        %v5496 = vadd.f32 %v5032, %v5495
        %v5497 = vpop.f32.mrf.mxu0
        %5498 = vmatprep.mubr.bf16.mxu0 0
        %5499 = vmatmul.mubr.bf16.gmra.mxu0 %v5068
        %v5500 = vpop.f32.mrf.mxu0
        %v5501 = vadd.f32 %v5032, %v5500
        %v5502 = vpop.f32.mrf.mxu0
        %v5503 = vpop.f32.mrf.mxu0
        %v5504 = vadd.f32 %v5032, %v5503
        %v5505 = vpop.f32.mrf.mxu0
        %5506 = vmatprep.mubr.bf16.mxu0 0
        %5507 = vmatmul.mubr.bf16.gmra.mxu0 %v5071
        %v5508 = vpop.f32.mrf.mxu0
        %v5509 = vadd.f32 %v5032, %v5508
        %v5510 = vpop.f32.mrf.mxu0
        %v5511 = vpop.f32.mrf.mxu0
        %v5512 = vadd.f32 %v5032, %v5511
        %v5513 = vpop.f32.mrf.mxu0
        %5514 = vmatprep.mubr.bf16.mxu0 0
        %5515 = vmatmul.mubr.bf16.gmra.mxu0 %v5074
        %v5516 = vpop.f32.mrf.mxu0
        %v5517 = vadd.f32 %v5032, %v5516
        %v5518 = vpop.f32.mrf.mxu0
        %v5519 = vpop.f32.mrf.mxu0
        %v5520 = vadd.f32 %v5032, %v5519
        %v5521 = vpop.f32.mrf.mxu0
        %5522 = vmatprep.mubr.bf16.mxu0 0
        %5523 = vmatmul.mubr.bf16.gmra.mxu0 %v5077
        %v5524 = vpop.f32.mrf.mxu0
        %v5525 = vadd.f32 %v5032, %v5524
        %v5526 = vpop.f32.mrf.mxu0
        %v5527 = vpop.f32.mrf.mxu0
        %v5528 = vadd.f32 %v5032, %v5527
        %v5529 = vpop.f32.mrf.mxu0
        %5530 = vmatprep.mubr.bf16.mxu0 0
        %5531 = vmatmul.mubr.bf16.gmra.mxu0 %v5080
        %v5532 = vpop.f32.mrf.mxu0
        %v5533 = vadd.f32 %v5032, %v5532
        %v5534 = vpop.f32.mrf.mxu0
        %v5535 = vpop.f32.mrf.mxu0
        %v5536 = vadd.f32 %v5032, %v5535
        %v5537 = vpop.f32.mrf.mxu0
        %5538 = vmatprep.mubr.bf16.mxu0 0
        %5539 = vmatmul.mubr.bf16.gmra.mxu0 %v5083
        %v5540 = vpop.f32.mrf.mxu0
        %v5541 = vadd.f32 %v5032, %v5540
        %v5542 = vpop.f32.mrf.mxu0
        %v5543 = vpop.f32.mrf.mxu0
        %v5544 = vadd.f32 %v5032, %v5543
        %v5545 = vpop.f32.mrf.mxu0
        %5546 = vmatprep.mubr.bf16.mxu0 0
        %5547 = vmatmul.mubr.bf16.gmra.mxu0 %v5086
        %v5548 = vpop.f32.mrf.mxu0
        %v5549 = vadd.f32 %v5032, %v5548
        %v5550 = vpop.f32.mrf.mxu0
        %v5551 = vpop.f32.mrf.mxu0
        %v5552 = vadd.f32 %v5032, %v5551
        %v5553 = vpop.f32.mrf.mxu0
        %5554 = vmatprep.mubr.bf16.mxu0 0
        %5555 = vmatmul.mubr.bf16.gmra.mxu0 %v5089
        %v5556 = vpop.f32.mrf.mxu0
        %v5557 = vadd.f32 %v5032, %v5556
        %v5558 = vpop.f32.mrf.mxu0
        %v5559 = vpop.f32.mrf.mxu0
        %v5560 = vadd.f32 %v5032, %v5559
        %v5561 = vpop.f32.mrf.mxu0
        %5562 = vmatprep.mubr.bf16.mxu0 0
        %5563 = vmatmul.mubr.bf16.gmra.mxu0 %v5092
        %v5564 = vpop.f32.mrf.mxu0
        %v5565 = vadd.f32 %v5032, %v5564
        %v5566 = vpop.f32.mrf.mxu0
        %v5567 = vpop.f32.mrf.mxu0
        %v5568 = vadd.f32 %v5032, %v5567
        %v5569 = vpop.f32.mrf.mxu0
        %5570 = vmatprep.mubr.bf16.mxu0 0
        %5571 = vmatmul.mubr.bf16.gmra.mxu0 %v5095
        %v5572 = vpop.f32.mrf.mxu0
        %v5573 = vadd.f32 %v5032, %v5572
        %v5574 = vpop.f32.mrf.mxu0
        %v5575 = vpop.f32.mrf.mxu0
        %v5576 = vadd.f32 %v5032, %v5575
        %v5577 = vpop.f32.mrf.mxu0
        %5578 = vmatprep.mubr.bf16.mxu0 0
        %5579 = vmatmul.mubr.bf16.gmra.mxu0 %v5098
        %v5580 = vpop.f32.mrf.mxu0
        %v5581 = vadd.f32 %v5032, %v5580
        %v5582 = vpop.f32.mrf.mxu0
        %v5583 = vpop.f32.mrf.mxu0
        %v5584 = vadd.f32 %v5032, %v5583
        %v5585 = vpop.f32.mrf.mxu0
        %5586 = vmatprep.mubr.bf16.mxu0 0
        %5587 = vmatmul.mubr.bf16.gmra.mxu0 %v5101
        %v5588 = vpop.f32.mrf.mxu0
        %v5589 = vadd.f32 %v5032, %v5588
        %v5590 = vpop.f32.mrf.mxu0
        %v5591 = vpop.f32.mrf.mxu0
        %v5592 = vadd.f32 %v5032, %v5591
        %v5593 = vpop.f32.mrf.mxu0
        %5594 = vmatprep.mubr.bf16.mxu0 0
        %5595 = vmatmul.mubr.bf16.gmra.mxu0 %v5104
        %v5596 = vpop.f32.mrf.mxu0
        %v5597 = vadd.f32 %v5032, %v5596
        %v5598 = vpop.f32.mrf.mxu0
        %v5599 = vpop.f32.mrf.mxu0
        %v5600 = vadd.f32 %v5032, %v5599
        %v5601 = vpop.f32.mrf.mxu0
        %5602 = vmatprep.mubr.bf16.mxu0 0
        %5603 = vmatmul.mubr.bf16.gmra.mxu0 %v5107
        %v5604 = vpop.f32.mrf.mxu0
        %v5605 = vadd.f32 %v5032, %v5604
        %v5606 = vpop.f32.mrf.mxu0
        %v5607 = vpop.f32.mrf.mxu0
        %v5608 = vadd.f32 %v5032, %v5607
        %v5609 = vpop.f32.mrf.mxu0
        %5610 = vmatprep.mubr.bf16.mxu0 0
        %5611 = vmatmul.mubr.bf16.gmra.mxu0 %v5110
        %v5612 = vpop.f32.mrf.mxu0
        %v5613 = vadd.f32 %v5032, %v5612
        %v5614 = vpop.f32.mrf.mxu0
        %v5615 = vpop.f32.mrf.mxu0
        %v5616 = vadd.f32 %v5032, %v5615
        %v5617 = vpop.f32.mrf.mxu0
        %5618 = vmatprep.mubr.bf16.mxu0 0
        %5619 = vmatmul.mubr.bf16.gmra.mxu0 %v5113
        %v5620 = vpop.f32.mrf.mxu0
        %v5621 = vadd.f32 %v5032, %v5620
        %v5622 = vpop.f32.mrf.mxu0
        %v5623 = vpop.f32.mrf.mxu0
        %v5624 = vadd.f32 %v5032, %v5623
        %v5625 = vpop.f32.mrf.mxu0
        %5626 = vmatprep.mubr.bf16.mxu0 0
        %5627 = vmatmul.mubr.bf16.gmra.mxu0 %v5116
        %v5628 = vpop.f32.mrf.mxu0
        %v5629 = vadd.f32 %v5032, %v5628
        %v5630 = vpop.f32.mrf.mxu0
        %v5631 = vpop.f32.mrf.mxu0
        %v5632 = vadd.f32 %v5032, %v5631
        %v5633 = vpop.f32.mrf.mxu0
        %5634 = vmatprep.mubr.bf16.mxu0 0
        %5635 = vmatmul.mubr.bf16.gmra.mxu0 %v5119
        %v5636 = vpop.f32.mrf.mxu0
        %v5637 = vadd.f32 %v5032, %v5636
        %v5638 = vpop.f32.mrf.mxu0
        %v5639 = vpop.f32.mrf.mxu0
        %v5640 = vadd.f32 %v5032, %v5639
        %v5641 = vpop.f32.mrf.mxu0
        %5642 = vmatprep.mubr.bf16.mxu0 0
        %5643 = vmatmul.mubr.bf16.gmra.mxu0 %v5122
        %v5644 = vpop.f32.mrf.mxu0
        %v5645 = vadd.f32 %v5032, %v5644
        %v5646 = vpop.f32.mrf.mxu0
        %v5647 = vpop.f32.mrf.mxu0
        %v5648 = vadd.f32 %v5032, %v5647
        %v5649 = vpop.f32.mrf.mxu0
        %5650 = vmatprep.mubr.bf16.mxu0 0
        %5651 = vmatmul.mubr.bf16.gmra.mxu0 %v5125
        %v5652 = vpop.f32.mrf.mxu0
        %v5653 = vadd.f32 %v5032, %v5652
        %v5654 = vpop.f32.mrf.mxu0
        %v5655 = vpop.f32.mrf.mxu0
        %v5656 = vadd.f32 %v5032, %v5655
        %v5657 = vpop.f32.mrf.mxu0
        %5658 = vmatprep.mubr.bf16.mxu0 0
        %5659 = vmatmul.mubr.bf16.gmra.mxu0 %v5128
        %v5660 = vpop.f32.mrf.mxu0
        %v5661 = vadd.f32 %v5032, %v5660
        %v5662 = vpop.f32.mrf.mxu0
        %v5663 = vpop.f32.mrf.mxu0
        %v5664 = vadd.f32 %v5032, %v5663
        %v5665 = vpop.f32.mrf.mxu0
        %5666 = vmatprep.mubr.bf16.mxu0 0
        %5667 = vmatmul.mubr.bf16.gmra.mxu0 %v5131
        %v5668 = vpop.f32.mrf.mxu0
        %v5669 = vadd.f32 %v5032, %v5668
        %v5670 = vpop.f32.mrf.mxu0
        %v5671 = vpop.f32.mrf.mxu0
        %v5672 = vadd.f32 %v5032, %v5671
        %v5673 = vpop.f32.mrf.mxu0
        %5674 = vmatprep.mubr.bf16.mxu0 0
        %5675 = vmatmul.mubr.bf16.gmra.mxu0 %v5134
        %v5676 = vpop.f32.mrf.mxu0
        %v5677 = vadd.f32 %v5032, %v5676
        %v5678 = vpop.f32.mrf.mxu0
        %v5679 = vpop.f32.mrf.mxu0
        %v5680 = vadd.f32 %v5032, %v5679
        %v5681 = vpop.f32.mrf.mxu0
        %5682 = vmatprep.mubr.bf16.mxu0 0
        %5683 = vmatmul.mubr.bf16.gmra.mxu0 %v5137
        %v5684 = vpop.f32.mrf.mxu0
        %v5685 = vadd.f32 %v5032, %v5684
        %v5686 = vpop.f32.mrf.mxu0
        %v5687 = vpop.f32.mrf.mxu0
        %v5688 = vadd.f32 %v5032, %v5687
        %v5689 = vpop.f32.mrf.mxu0
        %5690 = vmatprep.mubr.bf16.mxu0 0
        %5691 = vmatmul.mubr.bf16.gmra.mxu0 %v5140
        %v5692 = vpop.f32.mrf.mxu0
        %v5693 = vadd.f32 %v5032, %v5692
        %v5694 = vpop.f32.mrf.mxu0
        %v5695 = vpop.f32.mrf.mxu0
        %v5696 = vadd.f32 %v5032, %v5695
        %v5697 = vpop.f32.mrf.mxu0
        %5698 = vmatprep.mubr.bf16.mxu0 0
        %5699 = vmatmul.mubr.bf16.gmra.mxu0 %v5143
        %v5700 = vpop.f32.mrf.mxu0
        %v5701 = vadd.f32 %v5032, %v5700
        %v5702 = vpop.f32.mrf.mxu0
        %v5703 = vpop.f32.mrf.mxu0
        %v5704 = vadd.f32 %v5032, %v5703
        %v5705 = vpop.f32.mrf.mxu0
        %5706 = vmatprep.mubr.bf16.mxu0 0
        %5707 = vmatmul.mubr.bf16.gmra.mxu0 %v5146
        %v5708 = vpop.f32.mrf.mxu0
        %v5709 = vadd.f32 %v5032, %v5708
        %v5710 = vpop.f32.mrf.mxu0
        %v5711 = vpop.f32.mrf.mxu0
        %v5712 = vadd.f32 %v5032, %v5711
        %v5713 = vpop.f32.mrf.mxu0
        %5714 = vmatprep.mubr.bf16.mxu0 0
        %5715 = vmatmul.mubr.bf16.gmra.mxu0 %v5149
        %v5716 = vpop.f32.mrf.mxu0
        %v5717 = vadd.f32 %v5032, %v5716
        %v5718 = vpop.f32.mrf.mxu0
        %v5719 = vpop.f32.mrf.mxu0
        %v5720 = vadd.f32 %v5032, %v5719
        %v5721 = vpop.f32.mrf.mxu0
        %5722 = vmatprep.mubr.bf16.mxu0 0
        %5723 = vmatmul.mubr.bf16.gmra.mxu0 %v5152
        %v5724 = vpop.f32.mrf.mxu0
        %v5725 = vadd.f32 %v5032, %v5724
        %v5726 = vpop.f32.mrf.mxu0
        %v5727 = vpop.f32.mrf.mxu0
        %v5728 = vadd.f32 %v5032, %v5727
        %v5729 = vpop.f32.mrf.mxu0
        %5730 = vmatprep.mubr.bf16.mxu0 0
        %5731 = vmatmul.mubr.bf16.gmra.mxu0 %v5155
        %v5732 = vpop.f32.mrf.mxu0
        %v5733 = vadd.f32 %v5032, %v5732
        %v5734 = vpop.f32.mrf.mxu0
        %v5735 = vpop.f32.mrf.mxu0
        %v5736 = vadd.f32 %v5032, %v5735
        %v5737 = vpop.f32.mrf.mxu0
        %5738 = vmatprep.mubr.bf16.mxu0 0
        %5739 = vmatmul.mubr.bf16.gmra.mxu0 %v5158
        %v5740 = vpop.f32.mrf.mxu0
        %v5741 = vadd.f32 %v5032, %v5740
        %v5742 = vpop.f32.mrf.mxu0
        %v5743 = vpop.f32.mrf.mxu0
        %v5744 = vadd.f32 %v5032, %v5743
        %v5745 = vpop.f32.mrf.mxu0
        %5746 = vmatprep.mubr.bf16.mxu0 0
        %5747 = vmatmul.mubr.bf16.gmra.mxu0 %v5161
        %v5748 = vpop.f32.mrf.mxu0
        %v5749 = vadd.f32 %v5032, %v5748
        %v5750 = vpop.f32.mrf.mxu0
        %v5751 = vpop.f32.mrf.mxu0
        %v5752 = vadd.f32 %v5032, %v5751
        %v5753 = vpop.f32.mrf.mxu0
        %5754 = vmatprep.mubr.bf16.mxu0 0
        %5755 = vmatmul.mubr.bf16.gmra.mxu0 %v5164
        %v5756 = vpop.f32.mrf.mxu0
        %v5757 = vadd.f32 %v5032, %v5756
        %v5758 = vpop.f32.mrf.mxu0
        %v5759 = vpop.f32.mrf.mxu0
        %v5760 = vadd.f32 %v5032, %v5759
        %v5761 = vpop.f32.mrf.mxu0
        %5762 = vmatprep.mubr.bf16.mxu0 0
        %5763 = vmatmul.mubr.bf16.gmra.mxu0 %v5167
        %v5764 = vpop.f32.mrf.mxu0
        %v5765 = vadd.f32 %v5032, %v5764
        %v5766 = vpop.f32.mrf.mxu0
        %v5767 = vpop.f32.mrf.mxu0
        %v5768 = vadd.f32 %v5032, %v5767
        %v5769 = vpop.f32.mrf.mxu0
        %5770 = vmatprep.mubr.bf16.mxu0 0
        %5771 = vmatmul.mubr.bf16.gmra.mxu0 %v5170
        %v5772 = vpop.f32.mrf.mxu0
        %v5773 = vadd.f32 %v5032, %v5772
        %v5774 = vpop.f32.mrf.mxu0
        %v5775 = vpop.f32.mrf.mxu0
        %v5776 = vadd.f32 %v5032, %v5775
        %v5777 = vpop.f32.mrf.mxu0
        %5778 = vmatprep.mubr.bf16.mxu0 0
        %5779 = vmatmul.mubr.bf16.gmra.mxu0 %v5173
        %v5780 = vpop.f32.mrf.mxu0
        %v5781 = vadd.f32 %v5032, %v5780
        %v5782 = vpop.f32.mrf.mxu0
        %v5783 = vpop.f32.mrf.mxu0
        %v5784 = vadd.f32 %v5032, %v5783
        %v5785 = vpop.f32.mrf.mxu0
        %5786 = vmatprep.mubr.bf16.mxu0 0
        %5787 = vmatmul.mubr.bf16.gmra.mxu0 %v5176
        %v5788 = vpop.f32.mrf.mxu0
        %v5789 = vadd.f32 %v5032, %v5788
        %v5790 = vpop.f32.mrf.mxu0
        %v5791 = vpop.f32.mrf.mxu0
        %v5792 = vadd.f32 %v5032, %v5791
        %v5793 = vpop.f32.mrf.mxu0
        %5794 = vmatprep.mubr.bf16.mxu0 0
        %5795 = vmatmul.mubr.bf16.gmra.mxu0 %v5179
        %v5796 = vpop.f32.mrf.mxu0
        %v5797 = vadd.f32 %v5032, %v5796
        %v5798 = vpop.f32.mrf.mxu0
        %v5799 = vpop.f32.mrf.mxu0
        %v5800 = vadd.f32 %v5032, %v5799
        %v5801 = vpop.f32.mrf.mxu0
        %5802 = vmatprep.mubr.bf16.mxu0 0
        %5803 = vmatmul.mubr.bf16.gmra.mxu0 %v5182
        %v5804 = vpop.f32.mrf.mxu0
        %v5805 = vadd.f32 %v5032, %v5804
        %v5806 = vpop.f32.mrf.mxu0
        %v5807 = vpop.f32.mrf.mxu0
        %v5808 = vadd.f32 %v5032, %v5807
        %v5809 = vpop.f32.mrf.mxu0
        %5810 = vmatprep.mubr.bf16.mxu0 0
        %5811 = vmatmul.mubr.bf16.gmra.mxu0 %v5185
        %v5812 = vpop.f32.mrf.mxu0
        %v5813 = vadd.f32 %v5032, %v5812
        %v5814 = vpop.f32.mrf.mxu0
        %v5815 = vpop.f32.mrf.mxu0
        %v5816 = vadd.f32 %v5032, %v5815
        %v5817 = vpop.f32.mrf.mxu0
        %5818 = vmatprep.mubr.bf16.mxu0 0
        %5819 = vmatmul.mubr.bf16.gmra.mxu0 %v5188
        %v5820 = vpop.f32.mrf.mxu0
        %v5821 = vadd.f32 %v5032, %v5820
        %v5822 = vpop.f32.mrf.mxu0
        %v5823 = vpop.f32.mrf.mxu0
        %v5824 = vadd.f32 %v5032, %v5823
        %v5825 = vpop.f32.mrf.mxu0
        %5826 = vmatprep.mubr.bf16.mxu0 0
        %5827 = vmatmul.mubr.bf16.gmra.mxu0 %v5191
        %v5828 = vpop.f32.mrf.mxu0
        %v5829 = vadd.f32 %v5032, %v5828
        %v5830 = vpop.f32.mrf.mxu0
        %v5831 = vpop.f32.mrf.mxu0
        %v5832 = vadd.f32 %v5032, %v5831
        %v5833 = vpop.f32.mrf.mxu0
        %5834 = vmatprep.mubr.bf16.mxu0 0
        %5835 = vmatmul.mubr.bf16.gmra.mxu0 %v5194
        %v5836 = vpop.f32.mrf.mxu0
        %v5837 = vadd.f32 %v5032, %v5836
        %v5838 = vpop.f32.mrf.mxu0
        %v5839 = vpop.f32.mrf.mxu0
        %v5840 = vadd.f32 %v5032, %v5839
        %v5841 = vpop.f32.mrf.mxu0
        %5842 = vmatprep.mubr.bf16.mxu0 0
        %5843 = vmatmul.mubr.bf16.gmra.mxu0 %v5197
        %v5844 = vpop.f32.mrf.mxu0
        %v5845 = vadd.f32 %v5032, %v5844
        %v5846 = vpop.f32.mrf.mxu0
        %v5847 = vpop.f32.mrf.mxu0
        %v5848 = vadd.f32 %v5032, %v5847
        %v5849 = vpop.f32.mrf.mxu0
        %5850 = vmatprep.mubr.bf16.mxu0 0
        %5851 = vmatmul.mubr.bf16.gmra.mxu0 %v5200
        %v5852 = vpop.f32.mrf.mxu0
        %v5853 = vadd.f32 %v5032, %v5852
        %v5854 = vpop.f32.mrf.mxu0
        %v5855 = vpop.f32.mrf.mxu0
        %v5856 = vadd.f32 %v5032, %v5855
        %v5857 = vpop.f32.mrf.mxu0
        %5858 = vmatprep.mubr.bf16.mxu0 0
        %5859 = vmatmul.mubr.bf16.gmra.mxu0 %v5203
        %v5860 = vpop.f32.mrf.mxu0
        %v5861 = vadd.f32 %v5032, %v5860
        %v5862 = vpop.f32.mrf.mxu0
        %v5863 = vpop.f32.mrf.mxu0
        %v5864 = vadd.f32 %v5032, %v5863
        %v5865 = vpop.f32.mrf.mxu0
        %5866 = vmatprep.mubr.bf16.mxu0 0
        %5867 = vmatmul.mubr.bf16.gmra.mxu0 %v5206
        %v5868 = vpop.f32.mrf.mxu0
        %v5869 = vadd.f32 %v5032, %v5868
        %v5870 = vpop.f32.mrf.mxu0
        %v5871 = vpop.f32.mrf.mxu0
        %v5872 = vadd.f32 %v5032, %v5871
        %v5873 = vpop.f32.mrf.mxu0
        %5874 = vmatprep.mubr.bf16.mxu0 0
        %5875 = vmatmul.mubr.bf16.gmra.mxu0 %v5209
        %v5876 = vpop.f32.mrf.mxu0
        %v5877 = vadd.f32 %v5032, %v5876
        %v5878 = vpop.f32.mrf.mxu0
        %v5879 = vpop.f32.mrf.mxu0
        %v5880 = vadd.f32 %v5032, %v5879
        %v5881 = vpop.f32.mrf.mxu0
        %5882 = vmatprep.mubr.bf16.mxu0 0
        %5883 = vmatmul.mubr.bf16.gmra.mxu0 %v5212
        %v5884 = vpop.f32.mrf.mxu0
        %v5885 = vadd.f32 %v5032, %v5884
        %v5886 = vpop.f32.mrf.mxu0
        %v5887 = vpop.f32.mrf.mxu0
        %v5888 = vadd.f32 %v5032, %v5887
        %v5889 = vpop.f32.mrf.mxu0
        %5890 = vmatprep.mubr.bf16.mxu0 0
        %5891 = vmatmul.mubr.bf16.gmra.mxu0 %v5215
        %v5892 = vpop.f32.mrf.mxu0
        %v5893 = vadd.f32 %v5032, %v5892
        %v5894 = vpop.f32.mrf.mxu0
        %v5895 = vpop.f32.mrf.mxu0
        %v5896 = vadd.f32 %v5032, %v5895
        %v5897 = vpop.f32.mrf.mxu0
        %5898 = vmatprep.mubr.bf16.mxu0 0
        %5899 = vmatmul.mubr.bf16.gmra.mxu0 %v5218
        %v5900 = vpop.f32.mrf.mxu0
        %v5901 = vadd.f32 %v5032, %v5900
        %v5902 = vpop.f32.mrf.mxu0
        %v5903 = vpop.f32.mrf.mxu0
        %v5904 = vadd.f32 %v5032, %v5903
        %v5905 = vpop.f32.mrf.mxu0
        %5906 = vmatprep.mubr.bf16.mxu0 0
        %5907 = vmatmul.mubr.bf16.gmra.mxu0 %v5221
        %v5908 = vpop.f32.mrf.mxu0
        %v5909 = vadd.f32 %v5032, %v5908
        %v5910 = vpop.f32.mrf.mxu0
        %v5911 = vpop.f32.mrf.mxu0
        %v5912 = vadd.f32 %v5032, %v5911
        %v5913 = vpop.f32.mrf.mxu0
        %5914 = vmatprep.mubr.bf16.mxu0 0
        %5915 = vmatmul.mubr.bf16.gmra.mxu0 %v5224
        %v5916 = vpop.f32.mrf.mxu0
        %v5917 = vadd.f32 %v5032, %v5916
        %v5918 = vpop.f32.mrf.mxu0
        %v5919 = vpop.f32.mrf.mxu0
        %v5920 = vadd.f32 %v5032, %v5919
        %v5921 = vpop.f32.mrf.mxu0
        %5922 = vmatprep.mubr.bf16.mxu0 0
        %5923 = vmatmul.mubr.bf16.gmra.mxu0 %v5227
        %v5924 = vpop.f32.mrf.mxu0
        %v5925 = vadd.f32 %v5032, %v5924
        %v5926 = vpop.f32.mrf.mxu0
        %v5927 = vpop.f32.mrf.mxu0
        %v5928 = vadd.f32 %v5032, %v5927
        %v5929 = vpop.f32.mrf.mxu0
        %5930 = vmatprep.mubr.bf16.mxu0 0
        %5931 = vmatmul.mubr.bf16.gmra.mxu0 %v5230
        %v5932 = vpop.f32.mrf.mxu0
        %v5933 = vadd.f32 %v5032, %v5932
        %v5934 = vpop.f32.mrf.mxu0
        %v5935 = vpop.f32.mrf.mxu0
        %v5936 = vadd.f32 %v5032, %v5935
        %v5937 = vpop.f32.mrf.mxu0
        %5938 = vmatprep.mubr.bf16.mxu0 0
        %5939 = vmatmul.mubr.bf16.gmra.mxu0 %v5233
        %v5940 = vpop.f32.mrf.mxu0
        %v5941 = vadd.f32 %v5032, %v5940
        %v5942 = vpop.f32.mrf.mxu0
        %v5943 = vpop.f32.mrf.mxu0
        %v5944 = vadd.f32 %v5032, %v5943
        %v5945 = vpop.f32.mrf.mxu0
        %5946 = vmatprep.mubr.bf16.mxu0 0
        %5947 = vmatmul.mubr.bf16.gmra.mxu0 %v5236
        %v5948 = vpop.f32.mrf.mxu0
        %v5949 = vadd.f32 %v5032, %v5948
        %v5950 = vpop.f32.mrf.mxu0
        %v5951 = vpop.f32.mrf.mxu0
        %v5952 = vadd.f32 %v5032, %v5951
        %v5953 = vpop.f32.mrf.mxu0
        %5954 = vmatprep.mubr.bf16.mxu0 0
        %5955 = vmatmul.mubr.bf16.gmra.mxu0 %v5239
        %v5956 = vpop.f32.mrf.mxu0
        %v5957 = vadd.f32 %v5032, %v5956
        %v5958 = vpop.f32.mrf.mxu0
        %v5959 = vpop.f32.mrf.mxu0
        %v5960 = vadd.f32 %v5032, %v5959
        %v5961 = vpop.f32.mrf.mxu0
        %5962 = vmatprep.mubr.bf16.mxu0 0
        %5963 = vmatmul.mubr.bf16.gmra.mxu0 %v5242
        %v5964 = vpop.f32.mrf.mxu0
        %v5965 = vadd.f32 %v5032, %v5964
        %v5966 = vpop.f32.mrf.mxu0
        %v5967 = vpop.f32.mrf.mxu0
        %v5968 = vadd.f32 %v5032, %v5967
        %v5969 = vpop.f32.mrf.mxu0
        %5970 = vmatprep.mubr.bf16.mxu0 0
        %5971 = vmatmul.mubr.bf16.gmra.mxu0 %v5245
        %v5972 = vpop.f32.mrf.mxu0
        %v5973 = vadd.f32 %v5032, %v5972
        %v5974 = vpop.f32.mrf.mxu0
        %v5975 = vpop.f32.mrf.mxu0
        %v5976 = vadd.f32 %v5032, %v5975
        %v5977 = vpop.f32.mrf.mxu0
        %5978 = vmatprep.mubr.bf16.mxu0 0
        %5979 = vmatmul.mubr.bf16.gmra.mxu0 %v5248
        %v5980 = vpop.f32.mrf.mxu0
        %v5981 = vadd.f32 %v5032, %v5980
        %v5982 = vpop.f32.mrf.mxu0
        %v5983 = vpop.f32.mrf.mxu0
        %v5984 = vadd.f32 %v5032, %v5983
        %v5985 = vpop.f32.mrf.mxu0
        %5986 = vmatprep.mubr.bf16.mxu0 0
        %5987 = vmatmul.mubr.bf16.gmra.mxu0 %v5251
        %v5988 = vpop.f32.mrf.mxu0
        %v5989 = vadd.f32 %v5032, %v5988
        %v5990 = vpop.f32.mrf.mxu0
        %v5991 = vpop.f32.mrf.mxu0
        %v5992 = vadd.f32 %v5032, %v5991
        %v5993 = vpop.f32.mrf.mxu0
        %5994 = vmatprep.mubr.bf16.mxu0 0
        %5995 = vmatmul.mubr.bf16.gmra.mxu0 %v5254
        %v5996 = vpop.f32.mrf.mxu0
        %v5997 = vadd.f32 %v5032, %v5996
        %v5998 = vpop.f32.mrf.mxu0
        %v5999 = vpop.f32.mrf.mxu0
        %v6000 = vadd.f32 %v5032, %v5999
        %v6001 = vpop.f32.mrf.mxu0
        %6002 = vmatprep.mubr.bf16.mxu0 0
        %6003 = vmatmul.mubr.bf16.gmra.mxu0 %v5257
        %v6004 = vpop.f32.mrf.mxu0
        %v6005 = vadd.f32 %v5032, %v6004
        %v6006 = vpop.f32.mrf.mxu0
        %v6007 = vpop.f32.mrf.mxu0
        %v6008 = vadd.f32 %v5032, %v6007
        %v6009 = vpop.f32.mrf.mxu0
        %6010 = vmatprep.mubr.bf16.mxu0 0
        %6011 = vmatmul.mubr.bf16.gmra.mxu0 %v5260
        %v6012 = vpop.f32.mrf.mxu0
        %v6013 = vadd.f32 %v5032, %v6012
        %v6014 = vpop.f32.mrf.mxu0
        %v6015 = vpop.f32.mrf.mxu0
        %v6016 = vadd.f32 %v5032, %v6015
        %v6017 = vpop.f32.mrf.mxu0
        %6018 = vmatprep.mubr.bf16.mxu0 0
        %6019 = vmatmul.mubr.bf16.gmra.mxu0 %v5263
        %v6020 = vpop.f32.mrf.mxu0
        %v6021 = vadd.f32 %v5032, %v6020
        %v6022 = vpop.f32.mrf.mxu0
        %v6023 = vpop.f32.mrf.mxu0
        %v6024 = vadd.f32 %v5032, %v6023
        %v6025 = vpop.f32.mrf.mxu0
        %6026 = vmatprep.mubr.bf16.mxu0 0
        %6027 = vmatmul.mubr.bf16.gmra.mxu0 %v5266
        %v6028 = vpop.f32.mrf.mxu0
        %v6029 = vadd.f32 %v5032, %v6028
        %v6030 = vpop.f32.mrf.mxu0
        %v6031 = vpop.f32.mrf.mxu0
        %v6032 = vadd.f32 %v5032, %v6031
        %v6033 = vpop.f32.mrf.mxu0
        %6034 = vmatprep.mubr.bf16.mxu0 0
        %6035 = vmatmul.mubr.bf16.gmra.mxu0 %v5269
        %v6036 = vpop.f32.mrf.mxu0
        %v6037 = vadd.f32 %v5032, %v6036
        %v6038 = vpop.f32.mrf.mxu0
        %v6039 = vpop.f32.mrf.mxu0
        %v6040 = vadd.f32 %v5032, %v6039
        %v6041 = vpop.f32.mrf.mxu0
        %6042 = vmatprep.mubr.bf16.mxu0 0
        %6043 = vmatmul.mubr.bf16.gmra.mxu0 %v5272
        %v6044 = vpop.f32.mrf.mxu0
        %v6045 = vadd.f32 %v5032, %v6044
        %v6046 = vpop.f32.mrf.mxu0
        %v6047 = vpop.f32.mrf.mxu0
        %v6048 = vadd.f32 %v5032, %v6047
        %v6049 = vpop.f32.mrf.mxu0
        %6050 = vmatprep.mubr.bf16.mxu0 0
        %6051 = vmatmul.mubr.bf16.gmra.mxu0 %v5275
        %v6052 = vpop.f32.mrf.mxu0
        %v6053 = vadd.f32 %v5032, %v6052
        %v6054 = vpop.f32.mrf.mxu0
        %v6055 = vpop.f32.mrf.mxu0
        %v6056 = vadd.f32 %v5032, %v6055
        %v6057 = vpop.f32.mrf.mxu0
        %6058 = vmatprep.mubr.bf16.mxu0 0
        %6059 = vmatmul.mubr.bf16.gmra.mxu0 %v5278
        %v6060 = vpop.f32.mrf.mxu0
        %v6061 = vadd.f32 %v5032, %v6060
        %v6062 = vpop.f32.mrf.mxu0
        %v6063 = vpop.f32.mrf.mxu0
        %v6064 = vadd.f32 %v5032, %v6063
        %v6065 = vpop.f32.mrf.mxu0
        %6066 = vmatprep.mubr.bf16.mxu0 0
        %6067 = vmatmul.mubr.bf16.gmra.mxu0 %v5281
        %v6068 = vpop.f32.mrf.mxu0
        %v6069 = vadd.f32 %v5032, %v6068
        %v6070 = vpop.f32.mrf.mxu0
        %v6071 = vpop.f32.mrf.mxu0
        %v6072 = vadd.f32 %v5032, %v6071
        %v6073 = vpop.f32.mrf.mxu0
        %6074 = vmatprep.mubr.bf16.mxu0 0
        %6075 = vmatmul.mubr.bf16.gmra.mxu0 %v5284
        %v6076 = vpop.f32.mrf.mxu0
        %v6077 = vadd.f32 %v5032, %v6076
        %v6078 = vpop.f32.mrf.mxu0
        %v6079 = vpop.f32.mrf.mxu0
        %v6080 = vadd.f32 %v5032, %v6079
        %v6081 = vpop.f32.mrf.mxu0
        %6082 = vmatprep.mubr.bf16.mxu0 0
        %6083 = vmatmul.mubr.bf16.gmra.mxu0 %v5287
        %v6084 = vpop.f32.mrf.mxu0
        %v6085 = vadd.f32 %v5032, %v6084
        %v6086 = vpop.f32.mrf.mxu0
        %v6087 = vpop.f32.mrf.mxu0
        %v6088 = vadd.f32 %v5032, %v6087
        %v6089 = vpop.f32.mrf.mxu0
        %6090 = vmatprep.mubr.bf16.mxu0 0
        %6091 = vmatmul.mubr.bf16.gmra.mxu0 %v5290
        %v6092 = vpop.f32.mrf.mxu0
        %v6093 = vadd.f32 %v5032, %v6092
        %v6094 = vpop.f32.mrf.mxu0
        %v6095 = vpop.f32.mrf.mxu0
        %v6096 = vadd.f32 %v5032, %v6095
        %v6097 = vpop.f32.mrf.mxu0
        %6098 = vmatprep.mubr.bf16.mxu0 0
        %6099 = vmatmul.mubr.bf16.gmra.mxu0 %v5293
        %v6100 = vpop.f32.mrf.mxu0
        %v6101 = vadd.f32 %v5032, %v6100
        %v6102 = vpop.f32.mrf.mxu0
        %v6103 = vpop.f32.mrf.mxu0
        %v6104 = vadd.f32 %v5032, %v6103
        %v6105 = vpop.f32.mrf.mxu0
        %6106 = vmatprep.mubr.bf16.mxu0 0
        %6107 = vmatmul.mubr.bf16.gmra.mxu0 %v5296
        %v6108 = vpop.f32.mrf.mxu0
        %v6109 = vadd.f32 %v5032, %v6108
        %v6110 = vpop.f32.mrf.mxu0
        %v6111 = vpop.f32.mrf.mxu0
        %v6112 = vadd.f32 %v5032, %v6111
        %v6113 = vpop.f32.mrf.mxu0
        %6114 = vmatprep.mubr.bf16.mxu0 0
        %6115 = vmatmul.mubr.bf16.gmra.mxu0 %v5299
        %v6116 = vpop.f32.mrf.mxu0
        %v6117 = vadd.f32 %v5032, %v6116
        %v6118 = vpop.f32.mrf.mxu0
        %v6119 = vpop.f32.mrf.mxu0
        %v6120 = vadd.f32 %v5032, %v6119
        %v6121 = vpop.f32.mrf.mxu0
        %6122 = vmatprep.mubr.bf16.mxu0 0
        %6123 = vmatmul.mubr.bf16.gmra.mxu0 %v5302
        %v6124 = vpop.f32.mrf.mxu0
        %v6125 = vadd.f32 %v5032, %v6124
        %v6126 = vpop.f32.mrf.mxu0
        %v6127 = vpop.f32.mrf.mxu0
        %v6128 = vadd.f32 %v5032, %v6127
        %v6129 = vpop.f32.mrf.mxu0
        %6130 = vmatprep.mubr.bf16.mxu0 0
        %6131 = vmatmul.mubr.bf16.gmra.mxu0 %v5305
        %v6132 = vpop.f32.mrf.mxu0
        %v6133 = vadd.f32 %v5032, %v6132
        %v6134 = vpop.f32.mrf.mxu0
        %v6135 = vpop.f32.mrf.mxu0
        %v6136 = vadd.f32 %v5032, %v6135
        %v6137 = vpop.f32.mrf.mxu0
        %6138 = vmatprep.mubr.bf16.mxu0 0
        %6139 = vmatmul.mubr.bf16.gmra.mxu0 %v5308
        %v6140 = vpop.f32.mrf.mxu0
        %v6141 = vadd.f32 %v5032, %v6140
        %v6142 = vpop.f32.mrf.mxu0
        %v6143 = vpop.f32.mrf.mxu0
        %v6144 = vadd.f32 %v5032, %v6143
        %v6145 = vpop.f32.mrf.mxu0
        %6146 = vmatprep.mubr.bf16.mxu0 0
        %6147 = vmatmul.mubr.bf16.gmra.mxu0 %v5311
        %v6148 = vpop.f32.mrf.mxu0
        %v6149 = vadd.f32 %v5032, %v6148
        %v6150 = vpop.f32.mrf.mxu0
        %v6151 = vpop.f32.mrf.mxu0
        %v6152 = vadd.f32 %v5032, %v6151
        %v6153 = vpop.f32.mrf.mxu0
        %6154 = vmatprep.mubr.bf16.mxu0 0
        %6155 = vmatmul.mubr.bf16.gmra.mxu0 %v5314
        %v6156 = vpop.f32.mrf.mxu0
        %v6157 = vadd.f32 %v5032, %v6156
        %v6158 = vpop.f32.mrf.mxu0
        %v6159 = vpop.f32.mrf.mxu0
        %v6160 = vadd.f32 %v5032, %v6159
        %v6161 = vpop.f32.mrf.mxu0
        %6162 = vmatprep.mubr.bf16.mxu0 0
        %6163 = vmatmul.mubr.bf16.gmra.mxu0 %v5317
        %v6164 = vpop.f32.mrf.mxu0
        %v6165 = vadd.f32 %v5032, %v6164
        %v6166 = vpop.f32.mrf.mxu0
        %v6167 = vpop.f32.mrf.mxu0
        %v6168 = vadd.f32 %v5032, %v6167
        %v6169 = vpop.f32.mrf.mxu0
        %6170 = vmatprep.mubr.bf16.mxu0 0
        %6171 = vmatmul.mubr.bf16.gmra.mxu0 %v5320
        %v6172 = vpop.f32.mrf.mxu0
        %v6173 = vadd.f32 %v5032, %v6172
        %v6174 = vpop.f32.mrf.mxu0
        %v6175 = vpop.f32.mrf.mxu0
        %v6176 = vadd.f32 %v5032, %v6175
        %v6177 = vpop.f32.mrf.mxu0
        %6178 = vmatprep.mubr.bf16.mxu0 0
        %6179 = vmatmul.mubr.bf16.gmra.mxu0 %v5323
        %v6180 = vpop.f32.mrf.mxu0
        %v6181 = vadd.f32 %v5032, %v6180
        %v6182 = vpop.f32.mrf.mxu0
        %v6183 = vpop.f32.mrf.mxu0
        %v6184 = vadd.f32 %v5032, %v6183
        %v6185 = vpop.f32.mrf.mxu0
        %6186 = vmatprep.mubr.bf16.mxu0 0
        %6187 = vmatmul.mubr.bf16.gmra.mxu0 %v5326
        %v6188 = vpop.f32.mrf.mxu0
        %v6189 = vadd.f32 %v5032, %v6188
        %v6190 = vpop.f32.mrf.mxu0
        %v6191 = vpop.f32.mrf.mxu0
        %v6192 = vadd.f32 %v5032, %v6191
        %v6193 = vpop.f32.mrf.mxu0
        %6194 = vmatprep.mubr.bf16.mxu0 0
        %6195 = vmatmul.mubr.bf16.gmra.mxu0 %v5329
        %v6196 = vpop.f32.mrf.mxu0
        %v6197 = vadd.f32 %v5032, %v6196
        %v6198 = vpop.f32.mrf.mxu0
        %v6199 = vpop.f32.mrf.mxu0
        %v6200 = vadd.f32 %v5032, %v6199
        %v6201 = vpop.f32.mrf.mxu0
        %6202 = vmatprep.mubr.bf16.mxu0 0
        %6203 = vmatmul.mubr.bf16.gmra.mxu0 %v5332
        %v6204 = vpop.f32.mrf.mxu0
        %v6205 = vadd.f32 %v5032, %v6204
        %v6206 = vpop.f32.mrf.mxu0
        %v6207 = vpop.f32.mrf.mxu0
        %v6208 = vadd.f32 %v5032, %v6207
        %v6209 = vpop.f32.mrf.mxu0
        %6210 = vmatprep.mubr.bf16.mxu0 0
        %6211 = vmatmul.mubr.bf16.gmra.mxu0 %v5335
        %v6212 = vpop.f32.mrf.mxu0
        %v6213 = vadd.f32 %v5032, %v6212
        %v6214 = vpop.f32.mrf.mxu0
        %v6215 = vpop.f32.mrf.mxu0
        %v6216 = vadd.f32 %v5032, %v6215
        %v6217 = vpop.f32.mrf.mxu0
        %6218 = vmatprep.mubr.bf16.mxu0 0
        %6219 = vmatmul.mubr.bf16.gmra.mxu0 %v5338
        %v6220 = vpop.f32.mrf.mxu0
        %v6221 = vadd.f32 %v5032, %v6220
        %v6222 = vpop.f32.mrf.mxu0
        %v6223 = vpop.f32.mrf.mxu0
        %v6224 = vadd.f32 %v5032, %v6223
        %v6225 = vpop.f32.mrf.mxu0
        %6226 = vmatprep.mubr.bf16.mxu0 0
        %6227 = vmatmul.mubr.bf16.gmra.mxu0 %v5341
        %v6228 = vpop.f32.mrf.mxu0
        %v6229 = vadd.f32 %v5032, %v6228
        %v6230 = vpop.f32.mrf.mxu0
        %v6231 = vpop.f32.mrf.mxu0
        %v6232 = vadd.f32 %v5032, %v6231
        %v6233 = vpop.f32.mrf.mxu0
        %6234 = vmatprep.mubr.bf16.mxu0 0
        %6235 = vmatmul.mubr.bf16.gmra.mxu0 %v5344
        %v6236 = vpop.f32.mrf.mxu0
        %v6237 = vadd.f32 %v5032, %v6236
        %v6238 = vpop.f32.mrf.mxu0
        %v6239 = vpop.f32.mrf.mxu0
        %v6240 = vadd.f32 %v5032, %v6239
        %v6241 = vpop.f32.mrf.mxu0
        %6242 = vmatprep.mubr.bf16.mxu0 0
        %6243 = vmatmul.mubr.bf16.gmra.mxu0 %v5347
        %v6244 = vpop.f32.mrf.mxu0
        %v6245 = vadd.f32 %v5032, %v6244
        %v6246 = vpop.f32.mrf.mxu0
        %v6247 = vpop.f32.mrf.mxu0
        %v6248 = vadd.f32 %v5032, %v6247
        %v6249 = vpop.f32.mrf.mxu0
        %6250 = vmatprep.mubr.bf16.mxu0 0
        %6251 = vmatmul.mubr.bf16.gmra.mxu0 %v5350
        %v6252 = vpop.f32.mrf.mxu0
        %v6253 = vadd.f32 %v5032, %v6252
        %v6254 = vpop.f32.mrf.mxu0
        %v6255 = vpop.f32.mrf.mxu0
        %v6256 = vadd.f32 %v5032, %v6255
        %v6257 = vpop.f32.mrf.mxu0
        %6258 = vmatprep.mubr.bf16.mxu0 0
        %6259 = vmatmul.mubr.bf16.gmra.mxu0 %v5353
        %v6260 = vpop.f32.mrf.mxu0
        %v6261 = vadd.f32 %v5032, %v6260
        %v6262 = vpop.f32.mrf.mxu0
        %v6263 = vpop.f32.mrf.mxu0
        %v6264 = vadd.f32 %v5032, %v6263
        %v6265 = vpop.f32.mrf.mxu0
        %6266 = vmatprep.mubr.bf16.mxu0 0
        %6267 = vmatmul.mubr.bf16.gmra.mxu0 %v5356
        %v6268 = vpop.f32.mrf.mxu0
        %v6269 = vadd.f32 %v5032, %v6268
        %v6270 = vpop.f32.mrf.mxu0
        %v6271 = vpop.f32.mrf.mxu0
        %v6272 = vadd.f32 %v5032, %v6271
        %v6273 = vpop.f32.mrf.mxu0
        %6274 = vmatprep.mubr.bf16.mxu0 0
        %6275 = vmatmul.mubr.bf16.gmra.mxu0 %v5359
        %v6276 = vpop.f32.mrf.mxu0
        %v6277 = vadd.f32 %v5032, %v6276
        %v6278 = vpop.f32.mrf.mxu0
        %v6279 = vpop.f32.mrf.mxu0
        %v6280 = vadd.f32 %v5032, %v6279
        %v6281 = vpop.f32.mrf.mxu0
        %6282 = vmatprep.mubr.bf16.mxu0 0
        %6283 = vmatmul.mubr.bf16.gmra.mxu0 %v5362
        %v6284 = vpop.f32.mrf.mxu0
        %v6285 = vadd.f32 %v5032, %v6284
        %v6286 = vpop.f32.mrf.mxu0
        %v6287 = vpop.f32.mrf.mxu0
        %v6288 = vadd.f32 %v5032, %v6287
        %v6289 = vpop.f32.mrf.mxu0
        %6290 = vmatprep.mubr.bf16.mxu0 0
        %6291 = vmatmul.mubr.bf16.gmra.mxu0 %v5365
        %v6292 = vpop.f32.mrf.mxu0
        %v6293 = vadd.f32 %v5032, %v6292
        %v6294 = vpop.f32.mrf.mxu0
        %v6295 = vpop.f32.mrf.mxu0
        %v6296 = vadd.f32 %v5032, %v6295
        %v6297 = vpop.f32.mrf.mxu0
        %6298 = vmatprep.mubr.bf16.mxu0 0
        %6299 = vmatmul.mubr.bf16.gmra.mxu0 %v5368
        %v6300 = vpop.f32.mrf.mxu0
        %v6301 = vadd.f32 %v5032, %v6300
        %v6302 = vpop.f32.mrf.mxu0
        %v6303 = vpop.f32.mrf.mxu0
        %v6304 = vadd.f32 %v5032, %v6303
        %v6305 = vpop.f32.mrf.mxu0
        %6306 = vmatprep.mubr.bf16.mxu0 0
        %6307 = vmatmul.mubr.bf16.gmra.mxu0 %v5371
        %v6308 = vpop.f32.mrf.mxu0
        %v6309 = vadd.f32 %v5032, %v6308
        %v6310 = vpop.f32.mrf.mxu0
        %v6311 = vpop.f32.mrf.mxu0
        %v6312 = vadd.f32 %v5032, %v6311
        %v6313 = vpop.f32.mrf.mxu0
        %6314 = vmatprep.mubr.bf16.mxu0 0
        %6315 = vmatmul.mubr.bf16.gmra.mxu0 %v5374
        %v6316 = vpop.f32.mrf.mxu0
        %v6317 = vadd.f32 %v5032, %v6316
        %v6318 = vpop.f32.mrf.mxu0
        %v6319 = vpop.f32.mrf.mxu0
        %v6320 = vadd.f32 %v5032, %v6319
        %v6321 = vpop.f32.mrf.mxu0
        %6322 = vmatprep.mubr.bf16.mxu0 0
        %6323 = vmatmul.mubr.bf16.gmra.mxu0 %v5377
        %v6324 = vpop.f32.mrf.mxu0
        %v6325 = vadd.f32 %v5032, %v6324
        %v6326 = vpop.f32.mrf.mxu0
        %v6327 = vpop.f32.mrf.mxu0
        %v6328 = vadd.f32 %v5032, %v6327
        %v6329 = vpop.f32.mrf.mxu0
        %6330 = vmatprep.mubr.bf16.mxu0 0
        %6331 = vmatmul.mubr.bf16.gmra.mxu0 %v5380
        %v6332 = vpop.f32.mrf.mxu0
        %v6333 = vadd.f32 %v5032, %v6332
        %v6334 = vpop.f32.mrf.mxu0
        %v6335 = vpop.f32.mrf.mxu0
        %v6336 = vadd.f32 %v5032, %v6335
        %v6337 = vpop.f32.mrf.mxu0
        %6338 = vmatprep.mubr.bf16.mxu0 0
        %6339 = vmatmul.mubr.bf16.gmra.mxu0 %v5383
        %v6340 = vpop.f32.mrf.mxu0
        %v6341 = vadd.f32 %v5032, %v6340
        %v6342 = vpop.f32.mrf.mxu0
        %v6343 = vpop.f32.mrf.mxu0
        %v6344 = vadd.f32 %v5032, %v6343
        %v6345 = vpop.f32.mrf.mxu0
        %6346 = vmatprep.mubr.bf16.mxu0 0
        %6347 = vmatmul.mubr.bf16.gmra.mxu0 %v5386
        %v6348 = vpop.f32.mrf.mxu0
        %v6349 = vadd.f32 %v5032, %v6348
        %v6350 = vpop.f32.mrf.mxu0
        %v6351 = vpop.f32.mrf.mxu0
        %v6352 = vadd.f32 %v5032, %v6351
        %v6353 = vpop.f32.mrf.mxu0
        %6354 = vmatprep.mubr.bf16.mxu0 0
        %6355 = vmatmul.mubr.bf16.gmra.mxu0 %v5389
        %v6356 = vpop.f32.mrf.mxu0
        %v6357 = vadd.f32 %v5032, %v6356
        %v6358 = vpop.f32.mrf.mxu0
        %v6359 = vpop.f32.mrf.mxu0
        %v6360 = vadd.f32 %v5032, %v6359
        %v6361 = vpop.f32.mrf.mxu0
        %6362 = vmatprep.mubr.bf16.mxu0 0
        %6363 = vmatmul.mubr.bf16.gmra.mxu0 %v5392
        %v6364 = vpop.f32.mrf.mxu0
        %v6365 = vadd.f32 %v5032, %v6364
        %v6366 = vpop.f32.mrf.mxu0
        %v6367 = vpop.f32.mrf.mxu0
        %v6368 = vadd.f32 %v5032, %v6367
        %v6369 = vpop.f32.mrf.mxu0
        %6370 = vmatprep.mubr.bf16.mxu0 0
        %6371 = vmatmul.mubr.bf16.gmra.mxu0 %v5395
        %v6372 = vpop.f32.mrf.mxu0
        %v6373 = vadd.f32 %v5032, %v6372
        %v6374 = vpop.f32.mrf.mxu0
        %v6375 = vpop.f32.mrf.mxu0
        %v6376 = vadd.f32 %v5032, %v6375
        %v6377 = vpop.f32.mrf.mxu0
        %6378 = vmatprep.mubr.bf16.mxu0 0
        %6379 = vmatmul.mubr.bf16.gmra.mxu0 %v5398
        %v6380 = vpop.f32.mrf.mxu0
        %v6381 = vadd.f32 %v5032, %v6380
        %v6382 = vpop.f32.mrf.mxu0
        %v6383 = vpop.f32.mrf.mxu0
        %v6384 = vadd.f32 %v5032, %v6383
        %v6385 = vpop.f32.mrf.mxu0
        %6386 = vmatprep.mubr.bf16.mxu0 0
        %6387 = vmatmul.mubr.bf16.gmra.mxu0 %v5401
        %v6388 = vpop.f32.mrf.mxu0
        %v6389 = vadd.f32 %v5032, %v6388
        %v6390 = vpop.f32.mrf.mxu0
        %v6391 = vpop.f32.mrf.mxu0
        %v6392 = vadd.f32 %v5032, %v6391
        %v6393 = vpop.f32.mrf.mxu0
        %6394 = vmatprep.mubr.bf16.mxu0 0
        %6395 = vmatmul.mubr.bf16.gmra.mxu0 %v5404
        %v6396 = vpop.f32.mrf.mxu0
        %v6397 = vadd.f32 %v5032, %v6396
        %v6398 = vpop.f32.mrf.mxu0
        %v6399 = vpop.f32.mrf.mxu0
        %v6400 = vadd.f32 %v5032, %v6399
        %v6401 = vpop.f32.mrf.mxu0
        %6402 = vmatprep.mubr.bf16.mxu0 0
        %6403 = vmatmul.mubr.bf16.gmra.mxu0 %v5407
        %v6404 = vpop.f32.mrf.mxu0
        %v6405 = vadd.f32 %v5032, %v6404
        %v6406 = vpop.f32.mrf.mxu0
        %v6407 = vpop.f32.mrf.mxu0
        %v6408 = vadd.f32 %v5032, %v6407
        %v6409 = vpop.f32.mrf.mxu0
        %6410 = vmatprep.mubr.bf16.mxu0 0
        %6411 = vmatmul.mubr.bf16.gmra.mxu0 %v5410
        %v6412 = vpop.f32.mrf.mxu0
        %v6413 = vadd.f32 %v5032, %v6412
        %v6414 = vpop.f32.mrf.mxu0
        %v6415 = vpop.f32.mrf.mxu0
        %v6416 = vadd.f32 %v5032, %v6415
        %v6417 = vpop.f32.mrf.mxu0
        %6418 = vmatprep.mubr.bf16.mxu0 0
        %6419 = vmatmul.mubr.bf16.gmra.mxu0 %v5413
        %v6420 = vpop.f32.mrf.mxu0
        %v6421 = vadd.f32 %v5032, %v6420
        %v6422 = vpop.f32.mrf.mxu0
        %v6423 = vpop.f32.mrf.mxu0
        %v6424 = vadd.f32 %v5032, %v6423
        %v6425 = vpop.f32.mrf.mxu0
        %6426 = vmatprep.mubr.bf16.mxu0 0
        %6427 = vmatmul.mubr.bf16.gmra.mxu0 %v5416
        %v6428 = vpop.f32.mrf.mxu0
        %v6429 = vadd.f32 %v5032, %v6428
        %v6430 = vpop.f32.mrf.mxu0
        %v6431 = vpop.f32.mrf.mxu0
        %v6432 = vadd.f32 %v5032, %v6431
        %v6433 = vpop.f32.mrf.mxu0
        %6434 = vmatprep.mubr.bf16.mxu0 0
        %6435 = vmatmul.mubr.bf16.gmra.mxu0 %v5419
        %v6436 = vpop.f32.mrf.mxu0
        %v6437 = vadd.f32 %v5032, %v6436
        %v6438 = vpop.f32.mrf.mxu0
        %v6439 = vpop.f32.mrf.mxu0
        %v6440 = vadd.f32 %v5032, %v6439
        %v6441 = vpop.f32.mrf.mxu0
        %6442 = vmatprep.mubr.bf16.mxu0 0
        %6443 = vmatmul.mubr.bf16.gmra.mxu0 %v5422
        %v6444 = vpop.f32.mrf.mxu0
        %v6445 = vadd.f32 %v5032, %v6444
        %v6446 = vpop.f32.mrf.mxu0
        %v6447 = vpop.f32.mrf.mxu0
        %v6448 = vadd.f32 %v5032, %v6447
        %v6449 = vpop.f32.mrf.mxu0
        %6450 = vmatprep.mubr.bf16.mxu0 0
        %6451 = vmatmul.mubr.bf16.gmra.mxu0 %v5425
        %v6452 = vpop.f32.mrf.mxu0
        %v6453 = vadd.f32 %v5032, %v6452
        %v6454 = vpop.f32.mrf.mxu0
        %v6455 = vpop.f32.mrf.mxu0
        %v6456 = vadd.f32 %v5032, %v6455
        %v6457 = vpop.f32.mrf.mxu0
        %6458 = vmatprep.mubr.bf16.mxu0 0
        %6459 = vmatmul.mubr.bf16.gmra.mxu0 %v5428
        %v6460 = vpop.f32.mrf.mxu0
        %v6461 = vadd.f32 %v5032, %v6460
        %v6462 = vpop.f32.mrf.mxu0
        %v6463 = vpop.f32.mrf.mxu0
        %v6464 = vadd.f32 %v5032, %v6463
        %v6465 = vpop.f32.mrf.mxu0
        %6466 = vmatprep.mubr.bf16.mxu0 0
        %6467 = vmatmul.mubr.bf16.gmra.mxu0 %v5431
        %v6468 = vpop.f32.mrf.mxu0
        %v6469 = vadd.f32 %v5032, %v6468
        %v6470 = vpop.f32.mrf.mxu0
        %v6471 = vpop.f32.mrf.mxu0
        %v6472 = vadd.f32 %v5032, %v6471
        %v6473 = vpop.f32.mrf.mxu0
        %6474 = vmatprep.mubr.bf16.mxu0 0
        %6475 = vmatmul.mubr.bf16.gmra.mxu0 %v5434
        %v6476 = vpop.f32.mrf.mxu0
        %v6477 = vadd.f32 %v5032, %v6476
        %v6478 = vpop.f32.mrf.mxu0
        %v6479 = vpop.f32.mrf.mxu0
        %v6480 = vadd.f32 %v5032, %v6479
        %v6481 = vpop.f32.mrf.mxu0
        %6482 = vmatprep.mubr.bf16.mxu0 0
        %6483 = vmatmul.mubr.bf16.gmra.mxu0 %v5437
        %v6484 = vpop.f32.mrf.mxu0
        %v6485 = vadd.f32 %v5032, %v6484
        %v6486 = vpop.f32.mrf.mxu0
        %v6487 = vpop.f32.mrf.mxu0
        %v6488 = vadd.f32 %v5032, %v6487
        %v6489 = vpop.f32.mrf.mxu0
        %6490 = vmatprep.mubr.bf16.mxu0 0
        %6491 = vmatmul.mubr.bf16.gmra.mxu0 %v5440
        %v6492 = vpop.f32.mrf.mxu0
        %v6493 = vadd.f32 %v5032, %v6492
        %v6494 = vpop.f32.mrf.mxu0
        %v6495 = vpop.f32.mrf.mxu0
        %v6496 = vadd.f32 %v5032, %v6495
        %v6497 = vpop.f32.mrf.mxu0
        %6498 = vdwg.mxu0
        %v6499 = vmax.f32 %v5477, 0.0
        %v6500 = vmax.f32 %v5480, 0.0
        %v6501 = vmax.f32 %v5485, 0.0
        %v6502 = vmax.f32 %v5488, 0.0
        %v6503 = vmax.f32 %v5493, 0.0
        %v6504 = vmax.f32 %v5496, 0.0
        %v6505 = vmax.f32 %v5501, 0.0
        %v6506 = vmax.f32 %v5504, 0.0
        %v6507 = vmax.f32 %v5509, 0.0
        %v6508 = vmax.f32 %v5512, 0.0
        %v6509 = vmax.f32 %v5517, 0.0
        %v6510 = vmax.f32 %v5520, 0.0
        %v6511 = vmax.f32 %v5525, 0.0
        %v6512 = vmax.f32 %v5528, 0.0
        %v6513 = vmax.f32 %v5533, 0.0
        %v6514 = vmax.f32 %v5536, 0.0
        %v6515 = vmax.f32 %v5541, 0.0
        %v6516 = vmax.f32 %v5544, 0.0
        %v6517 = vmax.f32 %v5549, 0.0
        %v6518 = vmax.f32 %v5552, 0.0
        %v6519 = vmax.f32 %v5557, 0.0
        %v6520 = vmax.f32 %v5560, 0.0
        %v6521 = vmax.f32 %v5565, 0.0
        %v6522 = vmax.f32 %v5568, 0.0
        %v6523 = vmax.f32 %v5573, 0.0
        %v6524 = vmax.f32 %v5576, 0.0
        %v6525 = vmax.f32 %v5581, 0.0
        %v6526 = vmax.f32 %v5584, 0.0
        %v6527 = vmax.f32 %v5589, 0.0
        %v6528 = vmax.f32 %v5592, 0.0
        %v6529 = vmax.f32 %v5597, 0.0
        %v6530 = vmax.f32 %v5600, 0.0
        %v6531 = vmax.f32 %v5605, 0.0
        %v6532 = vmax.f32 %v5608, 0.0
        %v6533 = vmax.f32 %v5613, 0.0
        %v6534 = vmax.f32 %v5616, 0.0
        %v6535 = vmax.f32 %v5621, 0.0
        %v6536 = vmax.f32 %v5624, 0.0
        %v6537 = vmax.f32 %v5629, 0.0
        %v6538 = vmax.f32 %v5632, 0.0
        %v6539 = vmax.f32 %v5637, 0.0
        %v6540 = vmax.f32 %v5640, 0.0
        %v6541 = vmax.f32 %v5645, 0.0
        %v6542 = vmax.f32 %v5648, 0.0
        %v6543 = vmax.f32 %v5653, 0.0
        %v6544 = vmax.f32 %v5656, 0.0
        %v6545 = vmax.f32 %v5661, 0.0
        %v6546 = vmax.f32 %v5664, 0.0
        %v6547 = vmax.f32 %v5669, 0.0
        %v6548 = vmax.f32 %v5672, 0.0
        %v6549 = vmax.f32 %v5677, 0.0
        %v6550 = vmax.f32 %v5680, 0.0
        %v6551 = vmax.f32 %v5685, 0.0
        %v6552 = vmax.f32 %v5688, 0.0
        %v6553 = vmax.f32 %v5693, 0.0
        %v6554 = vmax.f32 %v5696, 0.0
        %v6555 = vmax.f32 %v5701, 0.0
        %v6556 = vmax.f32 %v5704, 0.0
        %v6557 = vmax.f32 %v5709, 0.0
        %v6558 = vmax.f32 %v5712, 0.0
        %v6559 = vmax.f32 %v5717, 0.0
        %v6560 = vmax.f32 %v5720, 0.0
        %v6561 = vmax.f32 %v5725, 0.0
        %v6562 = vmax.f32 %v5728, 0.0
        %v6563 = vmax.f32 %v5733, 0.0
        %v6564 = vmax.f32 %v5736, 0.0
        %v6565 = vmax.f32 %v5741, 0.0
        %v6566 = vmax.f32 %v5744, 0.0
        %v6567 = vmax.f32 %v5749, 0.0
        %v6568 = vmax.f32 %v5752, 0.0
        %v6569 = vmax.f32 %v5757, 0.0
        %v6570 = vmax.f32 %v5760, 0.0
        %v6571 = vmax.f32 %v5765, 0.0
        %v6572 = vmax.f32 %v5768, 0.0
        %v6573 = vmax.f32 %v5773, 0.0
        %v6574 = vmax.f32 %v5776, 0.0
        %v6575 = vmax.f32 %v5781, 0.0
        %v6576 = vmax.f32 %v5784, 0.0
        %v6577 = vmax.f32 %v5789, 0.0
        %v6578 = vmax.f32 %v5792, 0.0
        %v6579 = vmax.f32 %v5797, 0.0
        %v6580 = vmax.f32 %v5800, 0.0
        %v6581 = vmax.f32 %v5805, 0.0
        %v6582 = vmax.f32 %v5808, 0.0
        %v6583 = vmax.f32 %v5813, 0.0
        %v6584 = vmax.f32 %v5816, 0.0
        %v6585 = vmax.f32 %v5821, 0.0
        %v6586 = vmax.f32 %v5824, 0.0
        %v6587 = vmax.f32 %v5829, 0.0
        %v6588 = vmax.f32 %v5832, 0.0
        %v6589 = vmax.f32 %v5837, 0.0
        %v6590 = vmax.f32 %v5840, 0.0
        %v6591 = vmax.f32 %v5845, 0.0
        %v6592 = vmax.f32 %v5848, 0.0
        %v6593 = vmax.f32 %v5853, 0.0
        %v6594 = vmax.f32 %v5856, 0.0
        %v6595 = vmax.f32 %v5861, 0.0
        %v6596 = vmax.f32 %v5864, 0.0
        %v6597 = vmax.f32 %v5869, 0.0
        %v6598 = vmax.f32 %v5872, 0.0
        %v6599 = vmax.f32 %v5877, 0.0
        %v6600 = vmax.f32 %v5880, 0.0
        %v6601 = vmax.f32 %v5885, 0.0
        %v6602 = vmax.f32 %v5888, 0.0
        %v6603 = vmax.f32 %v5893, 0.0
        %v6604 = vmax.f32 %v5896, 0.0
        %v6605 = vmax.f32 %v5901, 0.0
        %v6606 = vmax.f32 %v5904, 0.0
        %v6607 = vmax.f32 %v5909, 0.0
        %v6608 = vmax.f32 %v5912, 0.0
        %v6609 = vmax.f32 %v5917, 0.0
        %v6610 = vmax.f32 %v5920, 0.0
        %v6611 = vmax.f32 %v5925, 0.0
        %v6612 = vmax.f32 %v5928, 0.0
        %v6613 = vmax.f32 %v5933, 0.0
        %v6614 = vmax.f32 %v5936, 0.0
        %v6615 = vmax.f32 %v5941, 0.0
        %v6616 = vmax.f32 %v5944, 0.0
        %v6617 = vmax.f32 %v5949, 0.0
        %v6618 = vmax.f32 %v5952, 0.0
        %v6619 = vmax.f32 %v5957, 0.0
        %v6620 = vmax.f32 %v5960, 0.0
        %v6621 = vmax.f32 %v5965, 0.0
        %v6622 = vmax.f32 %v5968, 0.0
        %v6623 = vmax.f32 %v5973, 0.0
        %v6624 = vmax.f32 %v5976, 0.0
        %v6625 = vmax.f32 %v5981, 0.0
        %v6626 = vmax.f32 %v5984, 0.0
        %v6627 = vmax.f32 %v5989, 0.0
        %v6628 = vmax.f32 %v5992, 0.0
        %v6629 = vmax.f32 %v5997, 0.0
        %v6630 = vmax.f32 %v6000, 0.0
        %v6631 = vmax.f32 %v6005, 0.0
        %v6632 = vmax.f32 %v6008, 0.0
        %v6633 = vmax.f32 %v6013, 0.0
        %v6634 = vmax.f32 %v6016, 0.0
        %v6635 = vmax.f32 %v6021, 0.0
        %v6636 = vmax.f32 %v6024, 0.0
        %v6637 = vmax.f32 %v6029, 0.0
        %v6638 = vmax.f32 %v6032, 0.0
        %v6639 = vmax.f32 %v6037, 0.0
        %v6640 = vmax.f32 %v6040, 0.0
        %v6641 = vmax.f32 %v6045, 0.0
        %v6642 = vmax.f32 %v6048, 0.0
        %v6643 = vmax.f32 %v6053, 0.0
        %v6644 = vmax.f32 %v6056, 0.0
        %v6645 = vmax.f32 %v6061, 0.0
        %v6646 = vmax.f32 %v6064, 0.0
        %v6647 = vmax.f32 %v6069, 0.0
        %v6648 = vmax.f32 %v6072, 0.0
        %v6649 = vmax.f32 %v6077, 0.0
        %v6650 = vmax.f32 %v6080, 0.0
        %v6651 = vmax.f32 %v6085, 0.0
        %v6652 = vmax.f32 %v6088, 0.0
        %v6653 = vmax.f32 %v6093, 0.0
        %v6654 = vmax.f32 %v6096, 0.0
        %v6655 = vmax.f32 %v6101, 0.0
        %v6656 = vmax.f32 %v6104, 0.0
        %v6657 = vmax.f32 %v6109, 0.0
        %v6658 = vmax.f32 %v6112, 0.0
        %v6659 = vmax.f32 %v6117, 0.0
        %v6660 = vmax.f32 %v6120, 0.0
        %v6661 = vmax.f32 %v6125, 0.0
        %v6662 = vmax.f32 %v6128, 0.0
        %v6663 = vmax.f32 %v6133, 0.0
        %v6664 = vmax.f32 %v6136, 0.0
        %v6665 = vmax.f32 %v6141, 0.0
        %v6666 = vmax.f32 %v6144, 0.0
        %v6667 = vmax.f32 %v6149, 0.0
        %v6668 = vmax.f32 %v6152, 0.0
        %v6669 = vmax.f32 %v6157, 0.0
        %v6670 = vmax.f32 %v6160, 0.0
        %v6671 = vmax.f32 %v6165, 0.0
        %v6672 = vmax.f32 %v6168, 0.0
        %v6673 = vmax.f32 %v6173, 0.0
        %v6674 = vmax.f32 %v6176, 0.0
        %v6675 = vmax.f32 %v6181, 0.0
        %v6676 = vmax.f32 %v6184, 0.0
        %v6677 = vmax.f32 %v6189, 0.0
        %v6678 = vmax.f32 %v6192, 0.0
        %v6679 = vmax.f32 %v6197, 0.0
        %v6680 = vmax.f32 %v6200, 0.0
        %v6681 = vmax.f32 %v6205, 0.0
        %v6682 = vmax.f32 %v6208, 0.0
        %v6683 = vmax.f32 %v6213, 0.0
        %v6684 = vmax.f32 %v6216, 0.0
        %v6685 = vmax.f32 %v6221, 0.0
        %v6686 = vmax.f32 %v6224, 0.0
        %v6687 = vmax.f32 %v6229, 0.0
        %v6688 = vmax.f32 %v6232, 0.0
        %v6689 = vmax.f32 %v6237, 0.0
        %v6690 = vmax.f32 %v6240, 0.0
        %v6691 = vmax.f32 %v6245, 0.0
        %v6692 = vmax.f32 %v6248, 0.0
        %v6693 = vmax.f32 %v6253, 0.0
        %v6694 = vmax.f32 %v6256, 0.0
        %v6695 = vmax.f32 %v6261, 0.0
        %v6696 = vmax.f32 %v6264, 0.0
        %v6697 = vmax.f32 %v6269, 0.0
        %v6698 = vmax.f32 %v6272, 0.0
        %v6699 = vmax.f32 %v6277, 0.0
        %v6700 = vmax.f32 %v6280, 0.0
        %v6701 = vmax.f32 %v6285, 0.0
        %v6702 = vmax.f32 %v6288, 0.0
        %v6703 = vmax.f32 %v6293, 0.0
        %v6704 = vmax.f32 %v6296, 0.0
        %v6705 = vmax.f32 %v6301, 0.0
        %v6706 = vmax.f32 %v6304, 0.0
        %v6707 = vmax.f32 %v6309, 0.0
        %v6708 = vmax.f32 %v6312, 0.0
        %v6709 = vmax.f32 %v6317, 0.0
        %v6710 = vmax.f32 %v6320, 0.0
        %v6711 = vmax.f32 %v6325, 0.0
        %v6712 = vmax.f32 %v6328, 0.0
        %v6713 = vmax.f32 %v6333, 0.0
        %v6714 = vmax.f32 %v6336, 0.0
        %v6715 = vmax.f32 %v6341, 0.0
        %v6716 = vmax.f32 %v6344, 0.0
        %v6717 = vmax.f32 %v6349, 0.0
        %v6718 = vmax.f32 %v6352, 0.0
        %v6719 = vmax.f32 %v6357, 0.0
        %v6720 = vmax.f32 %v6360, 0.0
        %v6721 = vmax.f32 %v6365, 0.0
        %v6722 = vmax.f32 %v6368, 0.0
        %v6723 = vmax.f32 %v6373, 0.0
        %v6724 = vmax.f32 %v6376, 0.0
        %v6725 = vmax.f32 %v6381, 0.0
        %v6726 = vmax.f32 %v6384, 0.0
        %v6727 = vmax.f32 %v6389, 0.0
        %v6728 = vmax.f32 %v6392, 0.0
        %v6729 = vmax.f32 %v6397, 0.0
        %v6730 = vmax.f32 %v6400, 0.0
        %v6731 = vmax.f32 %v6405, 0.0
        %v6732 = vmax.f32 %v6408, 0.0
        %v6733 = vmax.f32 %v6413, 0.0
        %v6734 = vmax.f32 %v6416, 0.0
        %v6735 = vmax.f32 %v6421, 0.0
        %v6736 = vmax.f32 %v6424, 0.0
        %v6737 = vmax.f32 %v6429, 0.0
        %v6738 = vmax.f32 %v6432, 0.0
        %v6739 = vmax.f32 %v6437, 0.0
        %v6740 = vmax.f32 %v6440, 0.0
        %v6741 = vmax.f32 %v6445, 0.0
        %v6742 = vmax.f32 %v6448, 0.0
        %v6743 = vmax.f32 %v6453, 0.0
        %v6744 = vmax.f32 %v6456, 0.0
        %v6745 = vmax.f32 %v6461, 0.0
        %v6746 = vmax.f32 %v6464, 0.0
        %v6747 = vmax.f32 %v6469, 0.0
        %v6748 = vmax.f32 %v6472, 0.0
        %v6749 = vmax.f32 %v6477, 0.0
        %v6750 = vmax.f32 %v6480, 0.0
        %v6751 = vmax.f32 %v6485, 0.0
        %v6752 = vmax.f32 %v6488, 0.0
        %v6753 = vmax.f32 %v6493, 0.0
        %v6754 = vmax.f32 %v6496, 0.0
        %v6755 = vpack.c.bf16 %v6500, %v6499
        %v6756 = vpack.c.bf16 %v6502, %v6501
        %v6757 = vpack.c.bf16 %v6504, %v6503
        %v6758 = vpack.c.bf16 %v6506, %v6505
        %v6759 = vpack.c.bf16 %v6508, %v6507
        %v6760 = vpack.c.bf16 %v6510, %v6509
        %v6761 = vpack.c.bf16 %v6512, %v6511
        %v6762 = vpack.c.bf16 %v6514, %v6513
        %v6763 = vpack.c.bf16 %v6516, %v6515
        %v6764 = vpack.c.bf16 %v6518, %v6517
        %v6765 = vpack.c.bf16 %v6520, %v6519
        %v6766 = vpack.c.bf16 %v6522, %v6521
        %v6767 = vpack.c.bf16 %v6524, %v6523
        %v6768 = vpack.c.bf16 %v6526, %v6525
        %v6769 = vpack.c.bf16 %v6528, %v6527
        %v6770 = vpack.c.bf16 %v6530, %v6529
        %v6771 = vpack.c.bf16 %v6532, %v6531
        %v6772 = vpack.c.bf16 %v6534, %v6533
        %v6773 = vpack.c.bf16 %v6536, %v6535
        %v6774 = vpack.c.bf16 %v6538, %v6537
        %v6775 = vpack.c.bf16 %v6540, %v6539
        %v6776 = vpack.c.bf16 %v6542, %v6541
        %v6777 = vpack.c.bf16 %v6544, %v6543
        %v6778 = vpack.c.bf16 %v6546, %v6545
        %v6779 = vpack.c.bf16 %v6548, %v6547
        %v6780 = vpack.c.bf16 %v6550, %v6549
        %v6781 = vpack.c.bf16 %v6552, %v6551
        %v6782 = vpack.c.bf16 %v6554, %v6553
        %v6783 = vpack.c.bf16 %v6556, %v6555
        %v6784 = vpack.c.bf16 %v6558, %v6557
        %v6785 = vpack.c.bf16 %v6560, %v6559
        %v6786 = vpack.c.bf16 %v6562, %v6561
        %v6787 = vpack.c.bf16 %v6564, %v6563
        %v6788 = vpack.c.bf16 %v6566, %v6565
        %v6789 = vpack.c.bf16 %v6568, %v6567
        %v6790 = vpack.c.bf16 %v6570, %v6569
        %v6791 = vpack.c.bf16 %v6572, %v6571
        %v6792 = vpack.c.bf16 %v6574, %v6573
        %v6793 = vpack.c.bf16 %v6576, %v6575
        %v6794 = vpack.c.bf16 %v6578, %v6577
        %v6795 = vpack.c.bf16 %v6580, %v6579
        %v6796 = vpack.c.bf16 %v6582, %v6581
        %v6797 = vpack.c.bf16 %v6584, %v6583
        %v6798 = vpack.c.bf16 %v6586, %v6585
        %v6799 = vpack.c.bf16 %v6588, %v6587
        %v6800 = vpack.c.bf16 %v6590, %v6589
        %v6801 = vpack.c.bf16 %v6592, %v6591
        %v6802 = vpack.c.bf16 %v6594, %v6593
        %v6803 = vpack.c.bf16 %v6596, %v6595
        %v6804 = vpack.c.bf16 %v6598, %v6597
        %v6805 = vpack.c.bf16 %v6600, %v6599
        %v6806 = vpack.c.bf16 %v6602, %v6601
        %v6807 = vpack.c.bf16 %v6604, %v6603
        %v6808 = vpack.c.bf16 %v6606, %v6605
        %v6809 = vpack.c.bf16 %v6608, %v6607
        %v6810 = vpack.c.bf16 %v6610, %v6609
        %v6811 = vpack.c.bf16 %v6612, %v6611
        %v6812 = vpack.c.bf16 %v6614, %v6613
        %v6813 = vpack.c.bf16 %v6616, %v6615
        %v6814 = vpack.c.bf16 %v6618, %v6617
        %v6815 = vpack.c.bf16 %v6620, %v6619
        %v6816 = vpack.c.bf16 %v6622, %v6621
        %v6817 = vpack.c.bf16 %v6624, %v6623
        %v6818 = vpack.c.bf16 %v6626, %v6625
        %v6819 = vpack.c.bf16 %v6628, %v6627
        %v6820 = vpack.c.bf16 %v6630, %v6629
        %v6821 = vpack.c.bf16 %v6632, %v6631
        %v6822 = vpack.c.bf16 %v6634, %v6633
        %v6823 = vpack.c.bf16 %v6636, %v6635
        %v6824 = vpack.c.bf16 %v6638, %v6637
        %v6825 = vpack.c.bf16 %v6640, %v6639
        %v6826 = vpack.c.bf16 %v6642, %v6641
        %v6827 = vpack.c.bf16 %v6644, %v6643
        %v6828 = vpack.c.bf16 %v6646, %v6645
        %v6829 = vpack.c.bf16 %v6648, %v6647
        %v6830 = vpack.c.bf16 %v6650, %v6649
        %v6831 = vpack.c.bf16 %v6652, %v6651
        %v6832 = vpack.c.bf16 %v6654, %v6653
        %v6833 = vpack.c.bf16 %v6656, %v6655
        %v6834 = vpack.c.bf16 %v6658, %v6657
        %v6835 = vpack.c.bf16 %v6660, %v6659
        %v6836 = vpack.c.bf16 %v6662, %v6661
        %v6837 = vpack.c.bf16 %v6664, %v6663
        %v6838 = vpack.c.bf16 %v6666, %v6665
        %v6839 = vpack.c.bf16 %v6668, %v6667
        %v6840 = vpack.c.bf16 %v6670, %v6669
        %v6841 = vpack.c.bf16 %v6672, %v6671
        %v6842 = vpack.c.bf16 %v6674, %v6673
        %v6843 = vpack.c.bf16 %v6676, %v6675
        %v6844 = vpack.c.bf16 %v6678, %v6677
        %v6845 = vpack.c.bf16 %v6680, %v6679
        %v6846 = vpack.c.bf16 %v6682, %v6681
        %v6847 = vpack.c.bf16 %v6684, %v6683
        %v6848 = vpack.c.bf16 %v6686, %v6685
        %v6849 = vpack.c.bf16 %v6688, %v6687
        %v6850 = vpack.c.bf16 %v6690, %v6689
        %v6851 = vpack.c.bf16 %v6692, %v6691
        %v6852 = vpack.c.bf16 %v6694, %v6693
        %v6853 = vpack.c.bf16 %v6696, %v6695
        %v6854 = vpack.c.bf16 %v6698, %v6697
        %v6855 = vpack.c.bf16 %v6700, %v6699
        %v6856 = vpack.c.bf16 %v6702, %v6701
        %v6857 = vpack.c.bf16 %v6704, %v6703
        %v6858 = vpack.c.bf16 %v6706, %v6705
        %v6859 = vpack.c.bf16 %v6708, %v6707
        %v6860 = vpack.c.bf16 %v6710, %v6709
        %v6861 = vpack.c.bf16 %v6712, %v6711
        %v6862 = vpack.c.bf16 %v6714, %v6713
        %v6863 = vpack.c.bf16 %v6716, %v6715
        %v6864 = vpack.c.bf16 %v6718, %v6717
        %v6865 = vpack.c.bf16 %v6720, %v6719
        %v6866 = vpack.c.bf16 %v6722, %v6721
        %v6867 = vpack.c.bf16 %v6724, %v6723
        %v6868 = vpack.c.bf16 %v6726, %v6725
        %v6869 = vpack.c.bf16 %v6728, %v6727
        %v6870 = vpack.c.bf16 %v6730, %v6729
        %v6871 = vpack.c.bf16 %v6732, %v6731
        %v6872 = vpack.c.bf16 %v6734, %v6733
        %v6873 = vpack.c.bf16 %v6736, %v6735
        %v6874 = vpack.c.bf16 %v6738, %v6737
        %v6875 = vpack.c.bf16 %v6740, %v6739
        %v6876 = vpack.c.bf16 %v6742, %v6741
        %v6877 = vpack.c.bf16 %v6744, %v6743
        %v6878 = vpack.c.bf16 %v6746, %v6745
        %v6879 = vpack.c.bf16 %v6748, %v6747
        %v6880 = vpack.c.bf16 %v6750, %v6749
        %v6881 = vpack.c.bf16 %v6752, %v6751
        %v6882 = vpack.c.bf16 %v6754, %v6753
        %v6883 = vld [vmem:[%s7] sm:$0xf]
        %v6884 = vld [vmem:[%s7 + $0x4] sm:$0xf]
        %v6885 = vld [vmem:[%s7 + $0x8] sm:$0xf]
        %v6886 = vld [vmem:[%s7 + $0xc] sm:$0xf]
        %v6887 = vld [vmem:[%s7 + $0x10] sm:$0xf]
        %v6888 = vld [vmem:[%s7 + $0x14] sm:$0xf]
        %v6889 = vld [vmem:[%s7 + $0x18] sm:$0xf]
        %v6890 = vld [vmem:[%s7 + $0x1c] sm:$0xf]
        %v6891 = vld [vmem:[%s8] sm:$0x1]
        %v6893 = vlaneseq
        %v6894 = vshrl.u32 %v6893, 7
        %v6895 = vsub.s32 0, %v6894
        %v6896 = vrot.slane %v6891, %v6895
        %v6906 = vunpack.c.l.b16 %v6883
        %v6907 = vunpack.c.l.b16 %v6884
        %v6908 = vunpack.c.l.b16 %v6885
        %v6909 = vunpack.c.l.b16 %v6886
        %v6910 = vunpack.c.l.b16 %v6887
        %v6911 = vunpack.c.l.b16 %v6888
        %v6912 = vunpack.c.l.b16 %v6889
        %v6913 = vunpack.c.l.b16 %v6890
        %v6914 = vpack.c.b16 %v6907, %v6906
        %v6915 = vpack.c.b16 %v6909, %v6908
        %v6916 = vpack.c.b16 %v6911, %v6910
        %v6917 = vpack.c.b16 %v6913, %v6912
        %v6923 = vsel %vm3193, %v6755, 0
        %v6926 = vsel %vm3193, %v6756, 0
        %v6929 = vsel %vm3193, %v6757, 0
        %v6932 = vsel %vm3193, %v6758, 0
        %v6935 = vsel %vm3193, %v6759, 0
        %v6938 = vsel %vm3193, %v6760, 0
        %v6941 = vsel %vm3193, %v6761, 0
        %v6944 = vsel %vm3193, %v6762, 0
        %v6947 = vsel %vm3193, %v6763, 0
        %v6950 = vsel %vm3193, %v6764, 0
        %v6953 = vsel %vm3193, %v6765, 0
        %v6956 = vsel %vm3193, %v6766, 0
        %v6959 = vsel %vm3193, %v6767, 0
        %v6962 = vsel %vm3193, %v6768, 0
        %v6965 = vsel %vm3193, %v6769, 0
        %v6968 = vsel %vm3193, %v6770, 0
        %v6971 = vsel %vm3193, %v6771, 0
        %v6974 = vsel %vm3193, %v6772, 0
        %v6977 = vsel %vm3193, %v6773, 0
        %v6980 = vsel %vm3193, %v6774, 0
        %v6983 = vsel %vm3193, %v6775, 0
        %v6986 = vsel %vm3193, %v6776, 0
        %v6989 = vsel %vm3193, %v6777, 0
        %v6992 = vsel %vm3193, %v6778, 0
        %v6995 = vsel %vm3193, %v6779, 0
        %v6998 = vsel %vm3193, %v6780, 0
        %v7001 = vsel %vm3193, %v6781, 0
        %v7004 = vsel %vm3193, %v6782, 0
        %v7007 = vsel %vm3193, %v6783, 0
        %v7010 = vsel %vm3193, %v6784, 0
        %v7013 = vsel %vm3193, %v6785, 0
        %v7016 = vsel %vm3193, %v6786, 0
        %v7019 = vsel %vm3193, %v6787, 0
        %v7022 = vsel %vm3193, %v6788, 0
        %v7025 = vsel %vm3193, %v6789, 0
        %v7028 = vsel %vm3193, %v6790, 0
        %v7031 = vsel %vm3193, %v6791, 0
        %v7034 = vsel %vm3193, %v6792, 0
        %v7037 = vsel %vm3193, %v6793, 0
        %v7040 = vsel %vm3193, %v6794, 0
        %v7043 = vsel %vm3193, %v6795, 0
        %v7046 = vsel %vm3193, %v6796, 0
        %v7049 = vsel %vm3193, %v6797, 0
        %v7052 = vsel %vm3193, %v6798, 0
        %v7055 = vsel %vm3193, %v6799, 0
        %v7058 = vsel %vm3193, %v6800, 0
        %v7061 = vsel %vm3193, %v6801, 0
        %v7064 = vsel %vm3193, %v6802, 0
        %v7067 = vsel %vm3193, %v6803, 0
        %v7070 = vsel %vm3193, %v6804, 0
        %v7073 = vsel %vm3193, %v6805, 0
        %v7076 = vsel %vm3193, %v6806, 0
        %v7079 = vsel %vm3193, %v6807, 0
        %v7082 = vsel %vm3193, %v6808, 0
        %v7085 = vsel %vm3193, %v6809, 0
        %v7088 = vsel %vm3193, %v6810, 0
        %v7091 = vsel %vm3193, %v6811, 0
        %v7094 = vsel %vm3193, %v6812, 0
        %v7097 = vsel %vm3193, %v6813, 0
        %v7100 = vsel %vm3193, %v6814, 0
        %v7103 = vsel %vm3193, %v6815, 0
        %v7106 = vsel %vm3193, %v6816, 0
        %v7109 = vsel %vm3193, %v6817, 0
        %v7112 = vsel %vm3193, %v6818, 0
        %v7115 = vsel %vm3193, %v6819, 0
        %v7118 = vsel %vm3193, %v6820, 0
        %v7121 = vsel %vm3193, %v6821, 0
        %v7124 = vsel %vm3193, %v6822, 0
        %v7127 = vsel %vm3193, %v6823, 0
        %v7130 = vsel %vm3193, %v6824, 0
        %v7133 = vsel %vm3193, %v6825, 0
        %v7136 = vsel %vm3193, %v6826, 0
        %v7139 = vsel %vm3193, %v6827, 0
        %v7142 = vsel %vm3193, %v6828, 0
        %v7145 = vsel %vm3193, %v6829, 0
        %v7148 = vsel %vm3193, %v6830, 0
        %v7151 = vsel %vm3193, %v6831, 0
        %v7154 = vsel %vm3193, %v6832, 0
        %v7157 = vsel %vm3193, %v6833, 0
        %v7160 = vsel %vm3193, %v6834, 0
        %v7163 = vsel %vm3193, %v6835, 0
        %v7166 = vsel %vm3193, %v6836, 0
        %v7169 = vsel %vm3193, %v6837, 0
        %v7172 = vsel %vm3193, %v6838, 0
        %v7175 = vsel %vm3193, %v6839, 0
        %v7178 = vsel %vm3193, %v6840, 0
        %v7181 = vsel %vm3193, %v6841, 0
        %v7184 = vsel %vm3193, %v6842, 0
        %v7187 = vsel %vm3193, %v6843, 0
        %v7190 = vsel %vm3193, %v6844, 0
        %v7193 = vsel %vm3193, %v6845, 0
        %v7196 = vsel %vm3193, %v6846, 0
        %v7199 = vsel %vm3193, %v6847, 0
        %v7202 = vsel %vm3193, %v6848, 0
        %v7205 = vsel %vm3193, %v6849, 0
        %v7208 = vsel %vm3193, %v6850, 0
        %v7211 = vsel %vm3193, %v6851, 0
        %v7214 = vsel %vm3193, %v6852, 0
        %v7217 = vsel %vm3193, %v6853, 0
        %v7220 = vsel %vm3193, %v6854, 0
        %v7223 = vsel %vm3193, %v6855, 0
        %v7226 = vsel %vm3193, %v6856, 0
        %v7229 = vsel %vm3193, %v6857, 0
        %v7232 = vsel %vm3193, %v6858, 0
        %v7235 = vsel %vm3193, %v6859, 0
        %v7238 = vsel %vm3193, %v6860, 0
        %v7241 = vsel %vm3193, %v6861, 0
        %v7244 = vsel %vm3193, %v6862, 0
        %v7247 = vsel %vm3193, %v6863, 0
        %v7250 = vsel %vm3193, %v6864, 0
        %v7253 = vsel %vm3193, %v6865, 0
        %v7256 = vsel %vm3193, %v6866, 0
        %v7259 = vsel %vm3193, %v6867, 0
        %v7262 = vsel %vm3193, %v6868, 0
        %v7265 = vsel %vm3193, %v6869, 0
        %v7268 = vsel %vm3193, %v6870, 0
        %v7271 = vsel %vm3193, %v6871, 0
        %v7274 = vsel %vm3193, %v6872, 0
        %v7277 = vsel %vm3193, %v6873, 0
        %v7280 = vsel %vm3193, %v6874, 0
        %v7283 = vsel %vm3193, %v6875, 0
        %v7286 = vsel %vm3193, %v6876, 0
        %v7289 = vsel %vm3193, %v6877, 0
        %v7292 = vsel %vm3193, %v6878, 0
        %v7295 = vsel %vm3193, %v6879, 0
        %v7298 = vsel %vm3193, %v6880, 0
        %v7301 = vsel %vm3193, %v6881, 0
        %v7304 = vsel %vm3193, %v6882, 0
        %7306 = vmatprep.subr.bf16.mxu0 0
        %7307 = vmatpush1.bf16.msra.mxu0 0
        %7308 = vmatprep.subr.bf16.mxu0 0
        %7309 = vmatpush1.bf16.msra.mxu0 0
        %7310 = vmatprep.subr.bf16.mxu0 0
        %7311 = vmatpush1.bf16.msra.mxu0 0
        %7312 = vmatprep.subr.bf16.mxu0 0
        %7313 = vmatpush1.bf16.msra.mxu0 0
        %7314 = vmatprep.subr.bf16.mxu0 0
        %7315 = vmatpush1.bf16.msra.mxu0 %v6917
        %7316 = vmatprep.subr.bf16.mxu0 0
        %7317 = vmatpush1.bf16.msra.mxu0 %v6916
        %7318 = vmatprep.subr.bf16.mxu0 0
        %7319 = vmatpush1.bf16.msra.mxu0 %v6915
        %7320 = vmatprep.subr.bf16.mxu0 0
        %7321 = vmatpush1.bf16.msra.mxu0 %v6914
        %7322 = vmatprep.subr.bf16.mxu0 0
        %7323 = vmatpush2.bf16.msra.mxu0 0
        %7324 = vmatprep.subr.bf16.mxu0 0
        %7325 = vmatpush2.bf16.msra.mxu0 0
        %7326 = vmatprep.subr.bf16.mxu0 0
        %7327 = vmatpush2.bf16.msra.mxu0 0
        %7328 = vmatprep.subr.bf16.mxu0 0
        %7329 = vmatpush2.bf16.msra.mxu0 0
        %7330 = vmatprep.subr.bf16.mxu0 0
        %7331 = vmatpush2.bf16.msra.mxu0 0
        %7332 = vmatprep.subr.bf16.mxu0 0
        %7333 = vmatpush2.bf16.msra.mxu0 0
        %7334 = vmatprep.subr.bf16.mxu0 0
        %7335 = vmatpush2.bf16.msra.mxu0 0
        %7336 = vmatprep.subr.bf16.mxu0 0
        %7337 = vmatpush2.bf16.msra.mxu0 0
        %7338 = vmatprep.mubr.bf16.mxu0 0
        %7339 = vmatmul.mubr.bf16.gmra.mxu0 %v6923
        %v7340 = vpop.f32.mrf.mxu0
        %v7341 = vadd.f32 %v6896, %v7340
        %v7342 = vpop.f32.mrf.mxu0
        %v7343 = vpop.f32.mrf.mxu0
        %v7344 = vadd.f32 %v6896, %v7343
        %v7345 = vpop.f32.mrf.mxu0
        %7346 = vmatprep.mubr.bf16.mxu0 0
        %7347 = vmatmul.mubr.bf16.gmra.mxu0 %v6926
        %v7348 = vpop.f32.mrf.mxu0
        %v7349 = vadd.f32 %v6896, %v7348
        %v7350 = vpop.f32.mrf.mxu0
        %v7351 = vpop.f32.mrf.mxu0
        %v7352 = vadd.f32 %v6896, %v7351
        %v7353 = vpop.f32.mrf.mxu0
        %7354 = vmatprep.mubr.bf16.mxu0 0
        %7355 = vmatmul.mubr.bf16.gmra.mxu0 %v6929
        %v7356 = vpop.f32.mrf.mxu0
        %v7357 = vadd.f32 %v6896, %v7356
        %v7358 = vpop.f32.mrf.mxu0
        %v7359 = vpop.f32.mrf.mxu0
        %v7360 = vadd.f32 %v6896, %v7359
        %v7361 = vpop.f32.mrf.mxu0
        %7362 = vmatprep.mubr.bf16.mxu0 0
        %7363 = vmatmul.mubr.bf16.gmra.mxu0 %v6932
        %v7364 = vpop.f32.mrf.mxu0
        %v7365 = vadd.f32 %v6896, %v7364
        %v7366 = vpop.f32.mrf.mxu0
        %v7367 = vpop.f32.mrf.mxu0
        %v7368 = vadd.f32 %v6896, %v7367
        %v7369 = vpop.f32.mrf.mxu0
        %7370 = vmatprep.mubr.bf16.mxu0 0
        %7371 = vmatmul.mubr.bf16.gmra.mxu0 %v6935
        %v7372 = vpop.f32.mrf.mxu0
        %v7373 = vadd.f32 %v6896, %v7372
        %v7374 = vpop.f32.mrf.mxu0
        %v7375 = vpop.f32.mrf.mxu0
        %v7376 = vadd.f32 %v6896, %v7375
        %v7377 = vpop.f32.mrf.mxu0
        %7378 = vmatprep.mubr.bf16.mxu0 0
        %7379 = vmatmul.mubr.bf16.gmra.mxu0 %v6938
        %v7380 = vpop.f32.mrf.mxu0
        %v7381 = vadd.f32 %v6896, %v7380
        %v7382 = vpop.f32.mrf.mxu0
        %v7383 = vpop.f32.mrf.mxu0
        %v7384 = vadd.f32 %v6896, %v7383
        %v7385 = vpop.f32.mrf.mxu0
        %7386 = vmatprep.mubr.bf16.mxu0 0
        %7387 = vmatmul.mubr.bf16.gmra.mxu0 %v6941
        %v7388 = vpop.f32.mrf.mxu0
        %v7389 = vadd.f32 %v6896, %v7388
        %v7390 = vpop.f32.mrf.mxu0
        %v7391 = vpop.f32.mrf.mxu0
        %v7392 = vadd.f32 %v6896, %v7391
        %v7393 = vpop.f32.mrf.mxu0
        %7394 = vmatprep.mubr.bf16.mxu0 0
        %7395 = vmatmul.mubr.bf16.gmra.mxu0 %v6944
        %v7396 = vpop.f32.mrf.mxu0
        %v7397 = vadd.f32 %v6896, %v7396
        %v7398 = vpop.f32.mrf.mxu0
        %v7399 = vpop.f32.mrf.mxu0
        %v7400 = vadd.f32 %v6896, %v7399
        %v7401 = vpop.f32.mrf.mxu0
        %7402 = vmatprep.mubr.bf16.mxu0 0
        %7403 = vmatmul.mubr.bf16.gmra.mxu0 %v6947
        %v7404 = vpop.f32.mrf.mxu0
        %v7405 = vadd.f32 %v6896, %v7404
        %v7406 = vpop.f32.mrf.mxu0
        %v7407 = vpop.f32.mrf.mxu0
        %v7408 = vadd.f32 %v6896, %v7407
        %v7409 = vpop.f32.mrf.mxu0
        %7410 = vmatprep.mubr.bf16.mxu0 0
        %7411 = vmatmul.mubr.bf16.gmra.mxu0 %v6950
        %v7412 = vpop.f32.mrf.mxu0
        %v7413 = vadd.f32 %v6896, %v7412
        %v7414 = vpop.f32.mrf.mxu0
        %v7415 = vpop.f32.mrf.mxu0
        %v7416 = vadd.f32 %v6896, %v7415
        %v7417 = vpop.f32.mrf.mxu0
        %7418 = vmatprep.mubr.bf16.mxu0 0
        %7419 = vmatmul.mubr.bf16.gmra.mxu0 %v6953
        %v7420 = vpop.f32.mrf.mxu0
        %v7421 = vadd.f32 %v6896, %v7420
        %v7422 = vpop.f32.mrf.mxu0
        %v7423 = vpop.f32.mrf.mxu0
        %v7424 = vadd.f32 %v6896, %v7423
        %v7425 = vpop.f32.mrf.mxu0
        %7426 = vmatprep.mubr.bf16.mxu0 0
        %7427 = vmatmul.mubr.bf16.gmra.mxu0 %v6956
        %v7428 = vpop.f32.mrf.mxu0
        %v7429 = vadd.f32 %v6896, %v7428
        %v7430 = vpop.f32.mrf.mxu0
        %v7431 = vpop.f32.mrf.mxu0
        %v7432 = vadd.f32 %v6896, %v7431
        %v7433 = vpop.f32.mrf.mxu0
        %7434 = vmatprep.mubr.bf16.mxu0 0
        %7435 = vmatmul.mubr.bf16.gmra.mxu0 %v6959
        %v7436 = vpop.f32.mrf.mxu0
        %v7437 = vadd.f32 %v6896, %v7436
        %v7438 = vpop.f32.mrf.mxu0
        %v7439 = vpop.f32.mrf.mxu0
        %v7440 = vadd.f32 %v6896, %v7439
        %v7441 = vpop.f32.mrf.mxu0
        %7442 = vmatprep.mubr.bf16.mxu0 0
        %7443 = vmatmul.mubr.bf16.gmra.mxu0 %v6962
        %v7444 = vpop.f32.mrf.mxu0
        %v7445 = vadd.f32 %v6896, %v7444
        %v7446 = vpop.f32.mrf.mxu0
        %v7447 = vpop.f32.mrf.mxu0
        %v7448 = vadd.f32 %v6896, %v7447
        %v7449 = vpop.f32.mrf.mxu0
        %7450 = vmatprep.mubr.bf16.mxu0 0
        %7451 = vmatmul.mubr.bf16.gmra.mxu0 %v6965
        %v7452 = vpop.f32.mrf.mxu0
        %v7453 = vadd.f32 %v6896, %v7452
        %v7454 = vpop.f32.mrf.mxu0
        %v7455 = vpop.f32.mrf.mxu0
        %v7456 = vadd.f32 %v6896, %v7455
        %v7457 = vpop.f32.mrf.mxu0
        %7458 = vmatprep.mubr.bf16.mxu0 0
        %7459 = vmatmul.mubr.bf16.gmra.mxu0 %v6968
        %v7460 = vpop.f32.mrf.mxu0
        %v7461 = vadd.f32 %v6896, %v7460
        %v7462 = vpop.f32.mrf.mxu0
        %v7463 = vpop.f32.mrf.mxu0
        %v7464 = vadd.f32 %v6896, %v7463
        %v7465 = vpop.f32.mrf.mxu0
        %7466 = vmatprep.mubr.bf16.mxu0 0
        %7467 = vmatmul.mubr.bf16.gmra.mxu0 %v6971
        %v7468 = vpop.f32.mrf.mxu0
        %v7469 = vadd.f32 %v6896, %v7468
        %v7470 = vpop.f32.mrf.mxu0
        %v7471 = vpop.f32.mrf.mxu0
        %v7472 = vadd.f32 %v6896, %v7471
        %v7473 = vpop.f32.mrf.mxu0
        %7474 = vmatprep.mubr.bf16.mxu0 0
        %7475 = vmatmul.mubr.bf16.gmra.mxu0 %v6974
        %v7476 = vpop.f32.mrf.mxu0
        %v7477 = vadd.f32 %v6896, %v7476
        %v7478 = vpop.f32.mrf.mxu0
        %v7479 = vpop.f32.mrf.mxu0
        %v7480 = vadd.f32 %v6896, %v7479
        %v7481 = vpop.f32.mrf.mxu0
        %7482 = vmatprep.mubr.bf16.mxu0 0
        %7483 = vmatmul.mubr.bf16.gmra.mxu0 %v6977
        %v7484 = vpop.f32.mrf.mxu0
        %v7485 = vadd.f32 %v6896, %v7484
        %v7486 = vpop.f32.mrf.mxu0
        %v7487 = vpop.f32.mrf.mxu0
        %v7488 = vadd.f32 %v6896, %v7487
        %v7489 = vpop.f32.mrf.mxu0
        %7490 = vmatprep.mubr.bf16.mxu0 0
        %7491 = vmatmul.mubr.bf16.gmra.mxu0 %v6980
        %v7492 = vpop.f32.mrf.mxu0
        %v7493 = vadd.f32 %v6896, %v7492
        %v7494 = vpop.f32.mrf.mxu0
        %v7495 = vpop.f32.mrf.mxu0
        %v7496 = vadd.f32 %v6896, %v7495
        %v7497 = vpop.f32.mrf.mxu0
        %7498 = vmatprep.mubr.bf16.mxu0 0
        %7499 = vmatmul.mubr.bf16.gmra.mxu0 %v6983
        %v7500 = vpop.f32.mrf.mxu0
        %v7501 = vadd.f32 %v6896, %v7500
        %v7502 = vpop.f32.mrf.mxu0
        %v7503 = vpop.f32.mrf.mxu0
        %v7504 = vadd.f32 %v6896, %v7503
        %v7505 = vpop.f32.mrf.mxu0
        %7506 = vmatprep.mubr.bf16.mxu0 0
        %7507 = vmatmul.mubr.bf16.gmra.mxu0 %v6986
        %v7508 = vpop.f32.mrf.mxu0
        %v7509 = vadd.f32 %v6896, %v7508
        %v7510 = vpop.f32.mrf.mxu0
        %v7511 = vpop.f32.mrf.mxu0
        %v7512 = vadd.f32 %v6896, %v7511
        %v7513 = vpop.f32.mrf.mxu0
        %7514 = vmatprep.mubr.bf16.mxu0 0
        %7515 = vmatmul.mubr.bf16.gmra.mxu0 %v6989
        %v7516 = vpop.f32.mrf.mxu0
        %v7517 = vadd.f32 %v6896, %v7516
        %v7518 = vpop.f32.mrf.mxu0
        %v7519 = vpop.f32.mrf.mxu0
        %v7520 = vadd.f32 %v6896, %v7519
        %v7521 = vpop.f32.mrf.mxu0
        %7522 = vmatprep.mubr.bf16.mxu0 0
        %7523 = vmatmul.mubr.bf16.gmra.mxu0 %v6992
        %v7524 = vpop.f32.mrf.mxu0
        %v7525 = vadd.f32 %v6896, %v7524
        %v7526 = vpop.f32.mrf.mxu0
        %v7527 = vpop.f32.mrf.mxu0
        %v7528 = vadd.f32 %v6896, %v7527
        %v7529 = vpop.f32.mrf.mxu0
        %7530 = vmatprep.mubr.bf16.mxu0 0
        %7531 = vmatmul.mubr.bf16.gmra.mxu0 %v6995
        %v7532 = vpop.f32.mrf.mxu0
        %v7533 = vadd.f32 %v6896, %v7532
        %v7534 = vpop.f32.mrf.mxu0
        %v7535 = vpop.f32.mrf.mxu0
        %v7536 = vadd.f32 %v6896, %v7535
        %v7537 = vpop.f32.mrf.mxu0
        %7538 = vmatprep.mubr.bf16.mxu0 0
        %7539 = vmatmul.mubr.bf16.gmra.mxu0 %v6998
        %v7540 = vpop.f32.mrf.mxu0
        %v7541 = vadd.f32 %v6896, %v7540
        %v7542 = vpop.f32.mrf.mxu0
        %v7543 = vpop.f32.mrf.mxu0
        %v7544 = vadd.f32 %v6896, %v7543
        %v7545 = vpop.f32.mrf.mxu0
        %7546 = vmatprep.mubr.bf16.mxu0 0
        %7547 = vmatmul.mubr.bf16.gmra.mxu0 %v7001
        %v7548 = vpop.f32.mrf.mxu0
        %v7549 = vadd.f32 %v6896, %v7548
        %v7550 = vpop.f32.mrf.mxu0
        %v7551 = vpop.f32.mrf.mxu0
        %v7552 = vadd.f32 %v6896, %v7551
        %v7553 = vpop.f32.mrf.mxu0
        %7554 = vmatprep.mubr.bf16.mxu0 0
        %7555 = vmatmul.mubr.bf16.gmra.mxu0 %v7004
        %v7556 = vpop.f32.mrf.mxu0
        %v7557 = vadd.f32 %v6896, %v7556
        %v7558 = vpop.f32.mrf.mxu0
        %v7559 = vpop.f32.mrf.mxu0
        %v7560 = vadd.f32 %v6896, %v7559
        %v7561 = vpop.f32.mrf.mxu0
        %7562 = vmatprep.mubr.bf16.mxu0 0
        %7563 = vmatmul.mubr.bf16.gmra.mxu0 %v7007
        %v7564 = vpop.f32.mrf.mxu0
        %v7565 = vadd.f32 %v6896, %v7564
        %v7566 = vpop.f32.mrf.mxu0
        %v7567 = vpop.f32.mrf.mxu0
        %v7568 = vadd.f32 %v6896, %v7567
        %v7569 = vpop.f32.mrf.mxu0
        %7570 = vmatprep.mubr.bf16.mxu0 0
        %7571 = vmatmul.mubr.bf16.gmra.mxu0 %v7010
        %v7572 = vpop.f32.mrf.mxu0
        %v7573 = vadd.f32 %v6896, %v7572
        %v7574 = vpop.f32.mrf.mxu0
        %v7575 = vpop.f32.mrf.mxu0
        %v7576 = vadd.f32 %v6896, %v7575
        %v7577 = vpop.f32.mrf.mxu0
        %7578 = vmatprep.mubr.bf16.mxu0 0
        %7579 = vmatmul.mubr.bf16.gmra.mxu0 %v7013
        %v7580 = vpop.f32.mrf.mxu0
        %v7581 = vadd.f32 %v6896, %v7580
        %v7582 = vpop.f32.mrf.mxu0
        %v7583 = vpop.f32.mrf.mxu0
        %v7584 = vadd.f32 %v6896, %v7583
        %v7585 = vpop.f32.mrf.mxu0
        %7586 = vmatprep.mubr.bf16.mxu0 0
        %7587 = vmatmul.mubr.bf16.gmra.mxu0 %v7016
        %v7588 = vpop.f32.mrf.mxu0
        %v7589 = vadd.f32 %v6896, %v7588
        %v7590 = vpop.f32.mrf.mxu0
        %v7591 = vpop.f32.mrf.mxu0
        %v7592 = vadd.f32 %v6896, %v7591
        %v7593 = vpop.f32.mrf.mxu0
        %7594 = vmatprep.mubr.bf16.mxu0 0
        %7595 = vmatmul.mubr.bf16.gmra.mxu0 %v7019
        %v7596 = vpop.f32.mrf.mxu0
        %v7597 = vadd.f32 %v6896, %v7596
        %v7598 = vpop.f32.mrf.mxu0
        %v7599 = vpop.f32.mrf.mxu0
        %v7600 = vadd.f32 %v6896, %v7599
        %v7601 = vpop.f32.mrf.mxu0
        %7602 = vmatprep.mubr.bf16.mxu0 0
        %7603 = vmatmul.mubr.bf16.gmra.mxu0 %v7022
        %v7604 = vpop.f32.mrf.mxu0
        %v7605 = vadd.f32 %v6896, %v7604
        %v7606 = vpop.f32.mrf.mxu0
        %v7607 = vpop.f32.mrf.mxu0
        %v7608 = vadd.f32 %v6896, %v7607
        %v7609 = vpop.f32.mrf.mxu0
        %7610 = vmatprep.mubr.bf16.mxu0 0
        %7611 = vmatmul.mubr.bf16.gmra.mxu0 %v7025
        %v7612 = vpop.f32.mrf.mxu0
        %v7613 = vadd.f32 %v6896, %v7612
        %v7614 = vpop.f32.mrf.mxu0
        %v7615 = vpop.f32.mrf.mxu0
        %v7616 = vadd.f32 %v6896, %v7615
        %v7617 = vpop.f32.mrf.mxu0
        %7618 = vmatprep.mubr.bf16.mxu0 0
        %7619 = vmatmul.mubr.bf16.gmra.mxu0 %v7028
        %v7620 = vpop.f32.mrf.mxu0
        %v7621 = vadd.f32 %v6896, %v7620
        %v7622 = vpop.f32.mrf.mxu0
        %v7623 = vpop.f32.mrf.mxu0
        %v7624 = vadd.f32 %v6896, %v7623
        %v7625 = vpop.f32.mrf.mxu0
        %7626 = vmatprep.mubr.bf16.mxu0 0
        %7627 = vmatmul.mubr.bf16.gmra.mxu0 %v7031
        %v7628 = vpop.f32.mrf.mxu0
        %v7629 = vadd.f32 %v6896, %v7628
        %v7630 = vpop.f32.mrf.mxu0
        %v7631 = vpop.f32.mrf.mxu0
        %v7632 = vadd.f32 %v6896, %v7631
        %v7633 = vpop.f32.mrf.mxu0
        %7634 = vmatprep.mubr.bf16.mxu0 0
        %7635 = vmatmul.mubr.bf16.gmra.mxu0 %v7034
        %v7636 = vpop.f32.mrf.mxu0
        %v7637 = vadd.f32 %v6896, %v7636
        %v7638 = vpop.f32.mrf.mxu0
        %v7639 = vpop.f32.mrf.mxu0
        %v7640 = vadd.f32 %v6896, %v7639
        %v7641 = vpop.f32.mrf.mxu0
        %7642 = vmatprep.mubr.bf16.mxu0 0
        %7643 = vmatmul.mubr.bf16.gmra.mxu0 %v7037
        %v7644 = vpop.f32.mrf.mxu0
        %v7645 = vadd.f32 %v6896, %v7644
        %v7646 = vpop.f32.mrf.mxu0
        %v7647 = vpop.f32.mrf.mxu0
        %v7648 = vadd.f32 %v6896, %v7647
        %v7649 = vpop.f32.mrf.mxu0
        %7650 = vmatprep.mubr.bf16.mxu0 0
        %7651 = vmatmul.mubr.bf16.gmra.mxu0 %v7040
        %v7652 = vpop.f32.mrf.mxu0
        %v7653 = vadd.f32 %v6896, %v7652
        %v7654 = vpop.f32.mrf.mxu0
        %v7655 = vpop.f32.mrf.mxu0
        %v7656 = vadd.f32 %v6896, %v7655
        %v7657 = vpop.f32.mrf.mxu0
        %7658 = vmatprep.mubr.bf16.mxu0 0
        %7659 = vmatmul.mubr.bf16.gmra.mxu0 %v7043
        %v7660 = vpop.f32.mrf.mxu0
        %v7661 = vadd.f32 %v6896, %v7660
        %v7662 = vpop.f32.mrf.mxu0
        %v7663 = vpop.f32.mrf.mxu0
        %v7664 = vadd.f32 %v6896, %v7663
        %v7665 = vpop.f32.mrf.mxu0
        %7666 = vmatprep.mubr.bf16.mxu0 0
        %7667 = vmatmul.mubr.bf16.gmra.mxu0 %v7046
        %v7668 = vpop.f32.mrf.mxu0
        %v7669 = vadd.f32 %v6896, %v7668
        %v7670 = vpop.f32.mrf.mxu0
        %v7671 = vpop.f32.mrf.mxu0
        %v7672 = vadd.f32 %v6896, %v7671
        %v7673 = vpop.f32.mrf.mxu0
        %7674 = vmatprep.mubr.bf16.mxu0 0
        %7675 = vmatmul.mubr.bf16.gmra.mxu0 %v7049
        %v7676 = vpop.f32.mrf.mxu0
        %v7677 = vadd.f32 %v6896, %v7676
        %v7678 = vpop.f32.mrf.mxu0
        %v7679 = vpop.f32.mrf.mxu0
        %v7680 = vadd.f32 %v6896, %v7679
        %v7681 = vpop.f32.mrf.mxu0
        %7682 = vmatprep.mubr.bf16.mxu0 0
        %7683 = vmatmul.mubr.bf16.gmra.mxu0 %v7052
        %v7684 = vpop.f32.mrf.mxu0
        %v7685 = vadd.f32 %v6896, %v7684
        %v7686 = vpop.f32.mrf.mxu0
        %v7687 = vpop.f32.mrf.mxu0
        %v7688 = vadd.f32 %v6896, %v7687
        %v7689 = vpop.f32.mrf.mxu0
        %7690 = vmatprep.mubr.bf16.mxu0 0
        %7691 = vmatmul.mubr.bf16.gmra.mxu0 %v7055
        %v7692 = vpop.f32.mrf.mxu0
        %v7693 = vadd.f32 %v6896, %v7692
        %v7694 = vpop.f32.mrf.mxu0
        %v7695 = vpop.f32.mrf.mxu0
        %v7696 = vadd.f32 %v6896, %v7695
        %v7697 = vpop.f32.mrf.mxu0
        %7698 = vmatprep.mubr.bf16.mxu0 0
        %7699 = vmatmul.mubr.bf16.gmra.mxu0 %v7058
        %v7700 = vpop.f32.mrf.mxu0
        %v7701 = vadd.f32 %v6896, %v7700
        %v7702 = vpop.f32.mrf.mxu0
        %v7703 = vpop.f32.mrf.mxu0
        %v7704 = vadd.f32 %v6896, %v7703
        %v7705 = vpop.f32.mrf.mxu0
        %7706 = vmatprep.mubr.bf16.mxu0 0
        %7707 = vmatmul.mubr.bf16.gmra.mxu0 %v7061
        %v7708 = vpop.f32.mrf.mxu0
        %v7709 = vadd.f32 %v6896, %v7708
        %v7710 = vpop.f32.mrf.mxu0
        %v7711 = vpop.f32.mrf.mxu0
        %v7712 = vadd.f32 %v6896, %v7711
        %v7713 = vpop.f32.mrf.mxu0
        %7714 = vmatprep.mubr.bf16.mxu0 0
        %7715 = vmatmul.mubr.bf16.gmra.mxu0 %v7064
        %v7716 = vpop.f32.mrf.mxu0
        %v7717 = vadd.f32 %v6896, %v7716
        %v7718 = vpop.f32.mrf.mxu0
        %v7719 = vpop.f32.mrf.mxu0
        %v7720 = vadd.f32 %v6896, %v7719
        %v7721 = vpop.f32.mrf.mxu0
        %7722 = vmatprep.mubr.bf16.mxu0 0
        %7723 = vmatmul.mubr.bf16.gmra.mxu0 %v7067
        %v7724 = vpop.f32.mrf.mxu0
        %v7725 = vadd.f32 %v6896, %v7724
        %v7726 = vpop.f32.mrf.mxu0
        %v7727 = vpop.f32.mrf.mxu0
        %v7728 = vadd.f32 %v6896, %v7727
        %v7729 = vpop.f32.mrf.mxu0
        %7730 = vmatprep.mubr.bf16.mxu0 0
        %7731 = vmatmul.mubr.bf16.gmra.mxu0 %v7070
        %v7732 = vpop.f32.mrf.mxu0
        %v7733 = vadd.f32 %v6896, %v7732
        %v7734 = vpop.f32.mrf.mxu0
        %v7735 = vpop.f32.mrf.mxu0
        %v7736 = vadd.f32 %v6896, %v7735
        %v7737 = vpop.f32.mrf.mxu0
        %7738 = vmatprep.mubr.bf16.mxu0 0
        %7739 = vmatmul.mubr.bf16.gmra.mxu0 %v7073
        %v7740 = vpop.f32.mrf.mxu0
        %v7741 = vadd.f32 %v6896, %v7740
        %v7742 = vpop.f32.mrf.mxu0
        %v7743 = vpop.f32.mrf.mxu0
        %v7744 = vadd.f32 %v6896, %v7743
        %v7745 = vpop.f32.mrf.mxu0
        %7746 = vmatprep.mubr.bf16.mxu0 0
        %7747 = vmatmul.mubr.bf16.gmra.mxu0 %v7076
        %v7748 = vpop.f32.mrf.mxu0
        %v7749 = vadd.f32 %v6896, %v7748
        %v7750 = vpop.f32.mrf.mxu0
        %v7751 = vpop.f32.mrf.mxu0
        %v7752 = vadd.f32 %v6896, %v7751
        %v7753 = vpop.f32.mrf.mxu0
        %7754 = vmatprep.mubr.bf16.mxu0 0
        %7755 = vmatmul.mubr.bf16.gmra.mxu0 %v7079
        %v7756 = vpop.f32.mrf.mxu0
        %v7757 = vadd.f32 %v6896, %v7756
        %v7758 = vpop.f32.mrf.mxu0
        %v7759 = vpop.f32.mrf.mxu0
        %v7760 = vadd.f32 %v6896, %v7759
        %v7761 = vpop.f32.mrf.mxu0
        %7762 = vmatprep.mubr.bf16.mxu0 0
        %7763 = vmatmul.mubr.bf16.gmra.mxu0 %v7082
        %v7764 = vpop.f32.mrf.mxu0
        %v7765 = vadd.f32 %v6896, %v7764
        %v7766 = vpop.f32.mrf.mxu0
        %v7767 = vpop.f32.mrf.mxu0
        %v7768 = vadd.f32 %v6896, %v7767
        %v7769 = vpop.f32.mrf.mxu0
        %7770 = vmatprep.mubr.bf16.mxu0 0
        %7771 = vmatmul.mubr.bf16.gmra.mxu0 %v7085
        %v7772 = vpop.f32.mrf.mxu0
        %v7773 = vadd.f32 %v6896, %v7772
        %v7774 = vpop.f32.mrf.mxu0
        %v7775 = vpop.f32.mrf.mxu0
        %v7776 = vadd.f32 %v6896, %v7775
        %v7777 = vpop.f32.mrf.mxu0
        %7778 = vmatprep.mubr.bf16.mxu0 0
        %7779 = vmatmul.mubr.bf16.gmra.mxu0 %v7088
        %v7780 = vpop.f32.mrf.mxu0
        %v7781 = vadd.f32 %v6896, %v7780
        %v7782 = vpop.f32.mrf.mxu0
        %v7783 = vpop.f32.mrf.mxu0
        %v7784 = vadd.f32 %v6896, %v7783
        %v7785 = vpop.f32.mrf.mxu0
        %7786 = vmatprep.mubr.bf16.mxu0 0
        %7787 = vmatmul.mubr.bf16.gmra.mxu0 %v7091
        %v7788 = vpop.f32.mrf.mxu0
        %v7789 = vadd.f32 %v6896, %v7788
        %v7790 = vpop.f32.mrf.mxu0
        %v7791 = vpop.f32.mrf.mxu0
        %v7792 = vadd.f32 %v6896, %v7791
        %v7793 = vpop.f32.mrf.mxu0
        %7794 = vmatprep.mubr.bf16.mxu0 0
        %7795 = vmatmul.mubr.bf16.gmra.mxu0 %v7094
        %v7796 = vpop.f32.mrf.mxu0
        %v7797 = vadd.f32 %v6896, %v7796
        %v7798 = vpop.f32.mrf.mxu0
        %v7799 = vpop.f32.mrf.mxu0
        %v7800 = vadd.f32 %v6896, %v7799
        %v7801 = vpop.f32.mrf.mxu0
        %7802 = vmatprep.mubr.bf16.mxu0 0
        %7803 = vmatmul.mubr.bf16.gmra.mxu0 %v7097
        %v7804 = vpop.f32.mrf.mxu0
        %v7805 = vadd.f32 %v6896, %v7804
        %v7806 = vpop.f32.mrf.mxu0
        %v7807 = vpop.f32.mrf.mxu0
        %v7808 = vadd.f32 %v6896, %v7807
        %v7809 = vpop.f32.mrf.mxu0
        %7810 = vmatprep.mubr.bf16.mxu0 0
        %7811 = vmatmul.mubr.bf16.gmra.mxu0 %v7100
        %v7812 = vpop.f32.mrf.mxu0
        %v7813 = vadd.f32 %v6896, %v7812
        %v7814 = vpop.f32.mrf.mxu0
        %v7815 = vpop.f32.mrf.mxu0
        %v7816 = vadd.f32 %v6896, %v7815
        %v7817 = vpop.f32.mrf.mxu0
        %7818 = vmatprep.mubr.bf16.mxu0 0
        %7819 = vmatmul.mubr.bf16.gmra.mxu0 %v7103
        %v7820 = vpop.f32.mrf.mxu0
        %v7821 = vadd.f32 %v6896, %v7820
        %v7822 = vpop.f32.mrf.mxu0
        %v7823 = vpop.f32.mrf.mxu0
        %v7824 = vadd.f32 %v6896, %v7823
        %v7825 = vpop.f32.mrf.mxu0
        %7826 = vmatprep.mubr.bf16.mxu0 0
        %7827 = vmatmul.mubr.bf16.gmra.mxu0 %v7106
        %v7828 = vpop.f32.mrf.mxu0
        %v7829 = vadd.f32 %v6896, %v7828
        %v7830 = vpop.f32.mrf.mxu0
        %v7831 = vpop.f32.mrf.mxu0
        %v7832 = vadd.f32 %v6896, %v7831
        %v7833 = vpop.f32.mrf.mxu0
        %7834 = vmatprep.mubr.bf16.mxu0 0
        %7835 = vmatmul.mubr.bf16.gmra.mxu0 %v7109
        %v7836 = vpop.f32.mrf.mxu0
        %v7837 = vadd.f32 %v6896, %v7836
        %v7838 = vpop.f32.mrf.mxu0
        %v7839 = vpop.f32.mrf.mxu0
        %v7840 = vadd.f32 %v6896, %v7839
        %v7841 = vpop.f32.mrf.mxu0
        %7842 = vmatprep.mubr.bf16.mxu0 0
        %7843 = vmatmul.mubr.bf16.gmra.mxu0 %v7112
        %v7844 = vpop.f32.mrf.mxu0
        %v7845 = vadd.f32 %v6896, %v7844
        %v7846 = vpop.f32.mrf.mxu0
        %v7847 = vpop.f32.mrf.mxu0
        %v7848 = vadd.f32 %v6896, %v7847
        %v7849 = vpop.f32.mrf.mxu0
        %7850 = vmatprep.mubr.bf16.mxu0 0
        %7851 = vmatmul.mubr.bf16.gmra.mxu0 %v7115
        %v7852 = vpop.f32.mrf.mxu0
        %v7853 = vadd.f32 %v6896, %v7852
        %v7854 = vpop.f32.mrf.mxu0
        %v7855 = vpop.f32.mrf.mxu0
        %v7856 = vadd.f32 %v6896, %v7855
        %v7857 = vpop.f32.mrf.mxu0
        %7858 = vmatprep.mubr.bf16.mxu0 0
        %7859 = vmatmul.mubr.bf16.gmra.mxu0 %v7118
        %v7860 = vpop.f32.mrf.mxu0
        %v7861 = vadd.f32 %v6896, %v7860
        %v7862 = vpop.f32.mrf.mxu0
        %v7863 = vpop.f32.mrf.mxu0
        %v7864 = vadd.f32 %v6896, %v7863
        %v7865 = vpop.f32.mrf.mxu0
        %7866 = vmatprep.mubr.bf16.mxu0 0
        %7867 = vmatmul.mubr.bf16.gmra.mxu0 %v7121
        %v7868 = vpop.f32.mrf.mxu0
        %v7869 = vadd.f32 %v6896, %v7868
        %v7870 = vpop.f32.mrf.mxu0
        %v7871 = vpop.f32.mrf.mxu0
        %v7872 = vadd.f32 %v6896, %v7871
        %v7873 = vpop.f32.mrf.mxu0
        %7874 = vmatprep.mubr.bf16.mxu0 0
        %7875 = vmatmul.mubr.bf16.gmra.mxu0 %v7124
        %v7876 = vpop.f32.mrf.mxu0
        %v7877 = vadd.f32 %v6896, %v7876
        %v7878 = vpop.f32.mrf.mxu0
        %v7879 = vpop.f32.mrf.mxu0
        %v7880 = vadd.f32 %v6896, %v7879
        %v7881 = vpop.f32.mrf.mxu0
        %7882 = vmatprep.mubr.bf16.mxu0 0
        %7883 = vmatmul.mubr.bf16.gmra.mxu0 %v7127
        %v7884 = vpop.f32.mrf.mxu0
        %v7885 = vadd.f32 %v6896, %v7884
        %v7886 = vpop.f32.mrf.mxu0
        %v7887 = vpop.f32.mrf.mxu0
        %v7888 = vadd.f32 %v6896, %v7887
        %v7889 = vpop.f32.mrf.mxu0
        %7890 = vmatprep.mubr.bf16.mxu0 0
        %7891 = vmatmul.mubr.bf16.gmra.mxu0 %v7130
        %v7892 = vpop.f32.mrf.mxu0
        %v7893 = vadd.f32 %v6896, %v7892
        %v7894 = vpop.f32.mrf.mxu0
        %v7895 = vpop.f32.mrf.mxu0
        %v7896 = vadd.f32 %v6896, %v7895
        %v7897 = vpop.f32.mrf.mxu0
        %7898 = vmatprep.mubr.bf16.mxu0 0
        %7899 = vmatmul.mubr.bf16.gmra.mxu0 %v7133
        %v7900 = vpop.f32.mrf.mxu0
        %v7901 = vadd.f32 %v6896, %v7900
        %v7902 = vpop.f32.mrf.mxu0
        %v7903 = vpop.f32.mrf.mxu0
        %v7904 = vadd.f32 %v6896, %v7903
        %v7905 = vpop.f32.mrf.mxu0
        %7906 = vmatprep.mubr.bf16.mxu0 0
        %7907 = vmatmul.mubr.bf16.gmra.mxu0 %v7136
        %v7908 = vpop.f32.mrf.mxu0
        %v7909 = vadd.f32 %v6896, %v7908
        %v7910 = vpop.f32.mrf.mxu0
        %v7911 = vpop.f32.mrf.mxu0
        %v7912 = vadd.f32 %v6896, %v7911
        %v7913 = vpop.f32.mrf.mxu0
        %7914 = vmatprep.mubr.bf16.mxu0 0
        %7915 = vmatmul.mubr.bf16.gmra.mxu0 %v7139
        %v7916 = vpop.f32.mrf.mxu0
        %v7917 = vadd.f32 %v6896, %v7916
        %v7918 = vpop.f32.mrf.mxu0
        %v7919 = vpop.f32.mrf.mxu0
        %v7920 = vadd.f32 %v6896, %v7919
        %v7921 = vpop.f32.mrf.mxu0
        %7922 = vmatprep.mubr.bf16.mxu0 0
        %7923 = vmatmul.mubr.bf16.gmra.mxu0 %v7142
        %v7924 = vpop.f32.mrf.mxu0
        %v7925 = vadd.f32 %v6896, %v7924
        %v7926 = vpop.f32.mrf.mxu0
        %v7927 = vpop.f32.mrf.mxu0
        %v7928 = vadd.f32 %v6896, %v7927
        %v7929 = vpop.f32.mrf.mxu0
        %7930 = vmatprep.mubr.bf16.mxu0 0
        %7931 = vmatmul.mubr.bf16.gmra.mxu0 %v7145
        %v7932 = vpop.f32.mrf.mxu0
        %v7933 = vadd.f32 %v6896, %v7932
        %v7934 = vpop.f32.mrf.mxu0
        %v7935 = vpop.f32.mrf.mxu0
        %v7936 = vadd.f32 %v6896, %v7935
        %v7937 = vpop.f32.mrf.mxu0
        %7938 = vmatprep.mubr.bf16.mxu0 0
        %7939 = vmatmul.mubr.bf16.gmra.mxu0 %v7148
        %v7940 = vpop.f32.mrf.mxu0
        %v7941 = vadd.f32 %v6896, %v7940
        %v7942 = vpop.f32.mrf.mxu0
        %v7943 = vpop.f32.mrf.mxu0
        %v7944 = vadd.f32 %v6896, %v7943
        %v7945 = vpop.f32.mrf.mxu0
        %7946 = vmatprep.mubr.bf16.mxu0 0
        %7947 = vmatmul.mubr.bf16.gmra.mxu0 %v7151
        %v7948 = vpop.f32.mrf.mxu0
        %v7949 = vadd.f32 %v6896, %v7948
        %v7950 = vpop.f32.mrf.mxu0
        %v7951 = vpop.f32.mrf.mxu0
        %v7952 = vadd.f32 %v6896, %v7951
        %v7953 = vpop.f32.mrf.mxu0
        %7954 = vmatprep.mubr.bf16.mxu0 0
        %7955 = vmatmul.mubr.bf16.gmra.mxu0 %v7154
        %v7956 = vpop.f32.mrf.mxu0
        %v7957 = vadd.f32 %v6896, %v7956
        %v7958 = vpop.f32.mrf.mxu0
        %v7959 = vpop.f32.mrf.mxu0
        %v7960 = vadd.f32 %v6896, %v7959
        %v7961 = vpop.f32.mrf.mxu0
        %7962 = vmatprep.mubr.bf16.mxu0 0
        %7963 = vmatmul.mubr.bf16.gmra.mxu0 %v7157
        %v7964 = vpop.f32.mrf.mxu0
        %v7965 = vadd.f32 %v6896, %v7964
        %v7966 = vpop.f32.mrf.mxu0
        %v7967 = vpop.f32.mrf.mxu0
        %v7968 = vadd.f32 %v6896, %v7967
        %v7969 = vpop.f32.mrf.mxu0
        %7970 = vmatprep.mubr.bf16.mxu0 0
        %7971 = vmatmul.mubr.bf16.gmra.mxu0 %v7160
        %v7972 = vpop.f32.mrf.mxu0
        %v7973 = vadd.f32 %v6896, %v7972
        %v7974 = vpop.f32.mrf.mxu0
        %v7975 = vpop.f32.mrf.mxu0
        %v7976 = vadd.f32 %v6896, %v7975
        %v7977 = vpop.f32.mrf.mxu0
        %7978 = vmatprep.mubr.bf16.mxu0 0
        %7979 = vmatmul.mubr.bf16.gmra.mxu0 %v7163
        %v7980 = vpop.f32.mrf.mxu0
        %v7981 = vadd.f32 %v6896, %v7980
        %v7982 = vpop.f32.mrf.mxu0
        %v7983 = vpop.f32.mrf.mxu0
        %v7984 = vadd.f32 %v6896, %v7983
        %v7985 = vpop.f32.mrf.mxu0
        %7986 = vmatprep.mubr.bf16.mxu0 0
        %7987 = vmatmul.mubr.bf16.gmra.mxu0 %v7166
        %v7988 = vpop.f32.mrf.mxu0
        %v7989 = vadd.f32 %v6896, %v7988
        %v7990 = vpop.f32.mrf.mxu0
        %v7991 = vpop.f32.mrf.mxu0
        %v7992 = vadd.f32 %v6896, %v7991
        %v7993 = vpop.f32.mrf.mxu0
        %7994 = vmatprep.mubr.bf16.mxu0 0
        %7995 = vmatmul.mubr.bf16.gmra.mxu0 %v7169
        %v7996 = vpop.f32.mrf.mxu0
        %v7997 = vadd.f32 %v6896, %v7996
        %v7998 = vpop.f32.mrf.mxu0
        %v7999 = vpop.f32.mrf.mxu0
        %v8000 = vadd.f32 %v6896, %v7999
        %v8001 = vpop.f32.mrf.mxu0
        %8002 = vmatprep.mubr.bf16.mxu0 0
        %8003 = vmatmul.mubr.bf16.gmra.mxu0 %v7172
        %v8004 = vpop.f32.mrf.mxu0
        %v8005 = vadd.f32 %v6896, %v8004
        %v8006 = vpop.f32.mrf.mxu0
        %v8007 = vpop.f32.mrf.mxu0
        %v8008 = vadd.f32 %v6896, %v8007
        %v8009 = vpop.f32.mrf.mxu0
        %8010 = vmatprep.mubr.bf16.mxu0 0
        %8011 = vmatmul.mubr.bf16.gmra.mxu0 %v7175
        %v8012 = vpop.f32.mrf.mxu0
        %v8013 = vadd.f32 %v6896, %v8012
        %v8014 = vpop.f32.mrf.mxu0
        %v8015 = vpop.f32.mrf.mxu0
        %v8016 = vadd.f32 %v6896, %v8015
        %v8017 = vpop.f32.mrf.mxu0
        %8018 = vmatprep.mubr.bf16.mxu0 0
        %8019 = vmatmul.mubr.bf16.gmra.mxu0 %v7178
        %v8020 = vpop.f32.mrf.mxu0
        %v8021 = vadd.f32 %v6896, %v8020
        %v8022 = vpop.f32.mrf.mxu0
        %v8023 = vpop.f32.mrf.mxu0
        %v8024 = vadd.f32 %v6896, %v8023
        %v8025 = vpop.f32.mrf.mxu0
        %8026 = vmatprep.mubr.bf16.mxu0 0
        %8027 = vmatmul.mubr.bf16.gmra.mxu0 %v7181
        %v8028 = vpop.f32.mrf.mxu0
        %v8029 = vadd.f32 %v6896, %v8028
        %v8030 = vpop.f32.mrf.mxu0
        %v8031 = vpop.f32.mrf.mxu0
        %v8032 = vadd.f32 %v6896, %v8031
        %v8033 = vpop.f32.mrf.mxu0
        %8034 = vmatprep.mubr.bf16.mxu0 0
        %8035 = vmatmul.mubr.bf16.gmra.mxu0 %v7184
        %v8036 = vpop.f32.mrf.mxu0
        %v8037 = vadd.f32 %v6896, %v8036
        %v8038 = vpop.f32.mrf.mxu0
        %v8039 = vpop.f32.mrf.mxu0
        %v8040 = vadd.f32 %v6896, %v8039
        %v8041 = vpop.f32.mrf.mxu0
        %8042 = vmatprep.mubr.bf16.mxu0 0
        %8043 = vmatmul.mubr.bf16.gmra.mxu0 %v7187
        %v8044 = vpop.f32.mrf.mxu0
        %v8045 = vadd.f32 %v6896, %v8044
        %v8046 = vpop.f32.mrf.mxu0
        %v8047 = vpop.f32.mrf.mxu0
        %v8048 = vadd.f32 %v6896, %v8047
        %v8049 = vpop.f32.mrf.mxu0
        %8050 = vmatprep.mubr.bf16.mxu0 0
        %8051 = vmatmul.mubr.bf16.gmra.mxu0 %v7190
        %v8052 = vpop.f32.mrf.mxu0
        %v8053 = vadd.f32 %v6896, %v8052
        %v8054 = vpop.f32.mrf.mxu0
        %v8055 = vpop.f32.mrf.mxu0
        %v8056 = vadd.f32 %v6896, %v8055
        %v8057 = vpop.f32.mrf.mxu0
        %8058 = vmatprep.mubr.bf16.mxu0 0
        %8059 = vmatmul.mubr.bf16.gmra.mxu0 %v7193
        %v8060 = vpop.f32.mrf.mxu0
        %v8061 = vadd.f32 %v6896, %v8060
        %v8062 = vpop.f32.mrf.mxu0
        %v8063 = vpop.f32.mrf.mxu0
        %v8064 = vadd.f32 %v6896, %v8063
        %v8065 = vpop.f32.mrf.mxu0
        %8066 = vmatprep.mubr.bf16.mxu0 0
        %8067 = vmatmul.mubr.bf16.gmra.mxu0 %v7196
        %v8068 = vpop.f32.mrf.mxu0
        %v8069 = vadd.f32 %v6896, %v8068
        %v8070 = vpop.f32.mrf.mxu0
        %v8071 = vpop.f32.mrf.mxu0
        %v8072 = vadd.f32 %v6896, %v8071
        %v8073 = vpop.f32.mrf.mxu0
        %8074 = vmatprep.mubr.bf16.mxu0 0
        %8075 = vmatmul.mubr.bf16.gmra.mxu0 %v7199
        %v8076 = vpop.f32.mrf.mxu0
        %v8077 = vadd.f32 %v6896, %v8076
        %v8078 = vpop.f32.mrf.mxu0
        %v8079 = vpop.f32.mrf.mxu0
        %v8080 = vadd.f32 %v6896, %v8079
        %v8081 = vpop.f32.mrf.mxu0
        %8082 = vmatprep.mubr.bf16.mxu0 0
        %8083 = vmatmul.mubr.bf16.gmra.mxu0 %v7202
        %v8084 = vpop.f32.mrf.mxu0
        %v8085 = vadd.f32 %v6896, %v8084
        %v8086 = vpop.f32.mrf.mxu0
        %v8087 = vpop.f32.mrf.mxu0
        %v8088 = vadd.f32 %v6896, %v8087
        %v8089 = vpop.f32.mrf.mxu0
        %8090 = vmatprep.mubr.bf16.mxu0 0
        %8091 = vmatmul.mubr.bf16.gmra.mxu0 %v7205
        %v8092 = vpop.f32.mrf.mxu0
        %v8093 = vadd.f32 %v6896, %v8092
        %v8094 = vpop.f32.mrf.mxu0
        %v8095 = vpop.f32.mrf.mxu0
        %v8096 = vadd.f32 %v6896, %v8095
        %v8097 = vpop.f32.mrf.mxu0
        %8098 = vmatprep.mubr.bf16.mxu0 0
        %8099 = vmatmul.mubr.bf16.gmra.mxu0 %v7208
        %v8100 = vpop.f32.mrf.mxu0
        %v8101 = vadd.f32 %v6896, %v8100
        %v8102 = vpop.f32.mrf.mxu0
        %v8103 = vpop.f32.mrf.mxu0
        %v8104 = vadd.f32 %v6896, %v8103
        %v8105 = vpop.f32.mrf.mxu0
        %8106 = vmatprep.mubr.bf16.mxu0 0
        %8107 = vmatmul.mubr.bf16.gmra.mxu0 %v7211
        %v8108 = vpop.f32.mrf.mxu0
        %v8109 = vadd.f32 %v6896, %v8108
        %v8110 = vpop.f32.mrf.mxu0
        %v8111 = vpop.f32.mrf.mxu0
        %v8112 = vadd.f32 %v6896, %v8111
        %v8113 = vpop.f32.mrf.mxu0
        %8114 = vmatprep.mubr.bf16.mxu0 0
        %8115 = vmatmul.mubr.bf16.gmra.mxu0 %v7214
        %v8116 = vpop.f32.mrf.mxu0
        %v8117 = vadd.f32 %v6896, %v8116
        %v8118 = vpop.f32.mrf.mxu0
        %v8119 = vpop.f32.mrf.mxu0
        %v8120 = vadd.f32 %v6896, %v8119
        %v8121 = vpop.f32.mrf.mxu0
        %8122 = vmatprep.mubr.bf16.mxu0 0
        %8123 = vmatmul.mubr.bf16.gmra.mxu0 %v7217
        %v8124 = vpop.f32.mrf.mxu0
        %v8125 = vadd.f32 %v6896, %v8124
        %v8126 = vpop.f32.mrf.mxu0
        %v8127 = vpop.f32.mrf.mxu0
        %v8128 = vadd.f32 %v6896, %v8127
        %v8129 = vpop.f32.mrf.mxu0
        %8130 = vmatprep.mubr.bf16.mxu0 0
        %8131 = vmatmul.mubr.bf16.gmra.mxu0 %v7220
        %v8132 = vpop.f32.mrf.mxu0
        %v8133 = vadd.f32 %v6896, %v8132
        %v8134 = vpop.f32.mrf.mxu0
        %v8135 = vpop.f32.mrf.mxu0
        %v8136 = vadd.f32 %v6896, %v8135
        %v8137 = vpop.f32.mrf.mxu0
        %8138 = vmatprep.mubr.bf16.mxu0 0
        %8139 = vmatmul.mubr.bf16.gmra.mxu0 %v7223
        %v8140 = vpop.f32.mrf.mxu0
        %v8141 = vadd.f32 %v6896, %v8140
        %v8142 = vpop.f32.mrf.mxu0
        %v8143 = vpop.f32.mrf.mxu0
        %v8144 = vadd.f32 %v6896, %v8143
        %v8145 = vpop.f32.mrf.mxu0
        %8146 = vmatprep.mubr.bf16.mxu0 0
        %8147 = vmatmul.mubr.bf16.gmra.mxu0 %v7226
        %v8148 = vpop.f32.mrf.mxu0
        %v8149 = vadd.f32 %v6896, %v8148
        %v8150 = vpop.f32.mrf.mxu0
        %v8151 = vpop.f32.mrf.mxu0
        %v8152 = vadd.f32 %v6896, %v8151
        %v8153 = vpop.f32.mrf.mxu0
        %8154 = vmatprep.mubr.bf16.mxu0 0
        %8155 = vmatmul.mubr.bf16.gmra.mxu0 %v7229
        %v8156 = vpop.f32.mrf.mxu0
        %v8157 = vadd.f32 %v6896, %v8156
        %v8158 = vpop.f32.mrf.mxu0
        %v8159 = vpop.f32.mrf.mxu0
        %v8160 = vadd.f32 %v6896, %v8159
        %v8161 = vpop.f32.mrf.mxu0
        %8162 = vmatprep.mubr.bf16.mxu0 0
        %8163 = vmatmul.mubr.bf16.gmra.mxu0 %v7232
        %v8164 = vpop.f32.mrf.mxu0
        %v8165 = vadd.f32 %v6896, %v8164
        %v8166 = vpop.f32.mrf.mxu0
        %v8167 = vpop.f32.mrf.mxu0
        %v8168 = vadd.f32 %v6896, %v8167
        %v8169 = vpop.f32.mrf.mxu0
        %8170 = vmatprep.mubr.bf16.mxu0 0
        %8171 = vmatmul.mubr.bf16.gmra.mxu0 %v7235
        %v8172 = vpop.f32.mrf.mxu0
        %v8173 = vadd.f32 %v6896, %v8172
        %v8174 = vpop.f32.mrf.mxu0
        %v8175 = vpop.f32.mrf.mxu0
        %v8176 = vadd.f32 %v6896, %v8175
        %v8177 = vpop.f32.mrf.mxu0
        %8178 = vmatprep.mubr.bf16.mxu0 0
        %8179 = vmatmul.mubr.bf16.gmra.mxu0 %v7238
        %v8180 = vpop.f32.mrf.mxu0
        %v8181 = vadd.f32 %v6896, %v8180
        %v8182 = vpop.f32.mrf.mxu0
        %v8183 = vpop.f32.mrf.mxu0
        %v8184 = vadd.f32 %v6896, %v8183
        %v8185 = vpop.f32.mrf.mxu0
        %8186 = vmatprep.mubr.bf16.mxu0 0
        %8187 = vmatmul.mubr.bf16.gmra.mxu0 %v7241
        %v8188 = vpop.f32.mrf.mxu0
        %v8189 = vadd.f32 %v6896, %v8188
        %v8190 = vpop.f32.mrf.mxu0
        %v8191 = vpop.f32.mrf.mxu0
        %v8192 = vadd.f32 %v6896, %v8191
        %v8193 = vpop.f32.mrf.mxu0
        %8194 = vmatprep.mubr.bf16.mxu0 0
        %8195 = vmatmul.mubr.bf16.gmra.mxu0 %v7244
        %v8196 = vpop.f32.mrf.mxu0
        %v8197 = vadd.f32 %v6896, %v8196
        %v8198 = vpop.f32.mrf.mxu0
        %v8199 = vpop.f32.mrf.mxu0
        %v8200 = vadd.f32 %v6896, %v8199
        %v8201 = vpop.f32.mrf.mxu0
        %8202 = vmatprep.mubr.bf16.mxu0 0
        %8203 = vmatmul.mubr.bf16.gmra.mxu0 %v7247
        %v8204 = vpop.f32.mrf.mxu0
        %v8205 = vadd.f32 %v6896, %v8204
        %v8206 = vpop.f32.mrf.mxu0
        %v8207 = vpop.f32.mrf.mxu0
        %v8208 = vadd.f32 %v6896, %v8207
        %v8209 = vpop.f32.mrf.mxu0
        %8210 = vmatprep.mubr.bf16.mxu0 0
        %8211 = vmatmul.mubr.bf16.gmra.mxu0 %v7250
        %v8212 = vpop.f32.mrf.mxu0
        %v8213 = vadd.f32 %v6896, %v8212
        %v8214 = vpop.f32.mrf.mxu0
        %v8215 = vpop.f32.mrf.mxu0
        %v8216 = vadd.f32 %v6896, %v8215
        %v8217 = vpop.f32.mrf.mxu0
        %8218 = vmatprep.mubr.bf16.mxu0 0
        %8219 = vmatmul.mubr.bf16.gmra.mxu0 %v7253
        %v8220 = vpop.f32.mrf.mxu0
        %v8221 = vadd.f32 %v6896, %v8220
        %v8222 = vpop.f32.mrf.mxu0
        %v8223 = vpop.f32.mrf.mxu0
        %v8224 = vadd.f32 %v6896, %v8223
        %v8225 = vpop.f32.mrf.mxu0
        %8226 = vmatprep.mubr.bf16.mxu0 0
        %8227 = vmatmul.mubr.bf16.gmra.mxu0 %v7256
        %v8228 = vpop.f32.mrf.mxu0
        %v8229 = vadd.f32 %v6896, %v8228
        %v8230 = vpop.f32.mrf.mxu0
        %v8231 = vpop.f32.mrf.mxu0
        %v8232 = vadd.f32 %v6896, %v8231
        %v8233 = vpop.f32.mrf.mxu0
        %8234 = vmatprep.mubr.bf16.mxu0 0
        %8235 = vmatmul.mubr.bf16.gmra.mxu0 %v7259
        %v8236 = vpop.f32.mrf.mxu0
        %v8237 = vadd.f32 %v6896, %v8236
        %v8238 = vpop.f32.mrf.mxu0
        %v8239 = vpop.f32.mrf.mxu0
        %v8240 = vadd.f32 %v6896, %v8239
        %v8241 = vpop.f32.mrf.mxu0
        %8242 = vmatprep.mubr.bf16.mxu0 0
        %8243 = vmatmul.mubr.bf16.gmra.mxu0 %v7262
        %v8244 = vpop.f32.mrf.mxu0
        %v8245 = vadd.f32 %v6896, %v8244
        %v8246 = vpop.f32.mrf.mxu0
        %v8247 = vpop.f32.mrf.mxu0
        %v8248 = vadd.f32 %v6896, %v8247
        %v8249 = vpop.f32.mrf.mxu0
        %8250 = vmatprep.mubr.bf16.mxu0 0
        %8251 = vmatmul.mubr.bf16.gmra.mxu0 %v7265
        %v8252 = vpop.f32.mrf.mxu0
        %v8253 = vadd.f32 %v6896, %v8252
        %v8254 = vpop.f32.mrf.mxu0
        %v8255 = vpop.f32.mrf.mxu0
        %v8256 = vadd.f32 %v6896, %v8255
        %v8257 = vpop.f32.mrf.mxu0
        %8258 = vmatprep.mubr.bf16.mxu0 0
        %8259 = vmatmul.mubr.bf16.gmra.mxu0 %v7268
        %v8260 = vpop.f32.mrf.mxu0
        %v8261 = vadd.f32 %v6896, %v8260
        %v8262 = vpop.f32.mrf.mxu0
        %v8263 = vpop.f32.mrf.mxu0
        %v8264 = vadd.f32 %v6896, %v8263
        %v8265 = vpop.f32.mrf.mxu0
        %8266 = vmatprep.mubr.bf16.mxu0 0
        %8267 = vmatmul.mubr.bf16.gmra.mxu0 %v7271
        %v8268 = vpop.f32.mrf.mxu0
        %v8269 = vadd.f32 %v6896, %v8268
        %v8270 = vpop.f32.mrf.mxu0
        %v8271 = vpop.f32.mrf.mxu0
        %v8272 = vadd.f32 %v6896, %v8271
        %v8273 = vpop.f32.mrf.mxu0
        %8274 = vmatprep.mubr.bf16.mxu0 0
        %8275 = vmatmul.mubr.bf16.gmra.mxu0 %v7274
        %v8276 = vpop.f32.mrf.mxu0
        %v8277 = vadd.f32 %v6896, %v8276
        %v8278 = vpop.f32.mrf.mxu0
        %v8279 = vpop.f32.mrf.mxu0
        %v8280 = vadd.f32 %v6896, %v8279
        %v8281 = vpop.f32.mrf.mxu0
        %8282 = vmatprep.mubr.bf16.mxu0 0
        %8283 = vmatmul.mubr.bf16.gmra.mxu0 %v7277
        %v8284 = vpop.f32.mrf.mxu0
        %v8285 = vadd.f32 %v6896, %v8284
        %v8286 = vpop.f32.mrf.mxu0
        %v8287 = vpop.f32.mrf.mxu0
        %v8288 = vadd.f32 %v6896, %v8287
        %v8289 = vpop.f32.mrf.mxu0
        %8290 = vmatprep.mubr.bf16.mxu0 0
        %8291 = vmatmul.mubr.bf16.gmra.mxu0 %v7280
        %v8292 = vpop.f32.mrf.mxu0
        %v8293 = vadd.f32 %v6896, %v8292
        %v8294 = vpop.f32.mrf.mxu0
        %v8295 = vpop.f32.mrf.mxu0
        %v8296 = vadd.f32 %v6896, %v8295
        %v8297 = vpop.f32.mrf.mxu0
        %8298 = vmatprep.mubr.bf16.mxu0 0
        %8299 = vmatmul.mubr.bf16.gmra.mxu0 %v7283
        %v8300 = vpop.f32.mrf.mxu0
        %v8301 = vadd.f32 %v6896, %v8300
        %v8302 = vpop.f32.mrf.mxu0
        %v8303 = vpop.f32.mrf.mxu0
        %v8304 = vadd.f32 %v6896, %v8303
        %v8305 = vpop.f32.mrf.mxu0
        %8306 = vmatprep.mubr.bf16.mxu0 0
        %8307 = vmatmul.mubr.bf16.gmra.mxu0 %v7286
        %v8308 = vpop.f32.mrf.mxu0
        %v8309 = vadd.f32 %v6896, %v8308
        %v8310 = vpop.f32.mrf.mxu0
        %v8311 = vpop.f32.mrf.mxu0
        %v8312 = vadd.f32 %v6896, %v8311
        %v8313 = vpop.f32.mrf.mxu0
        %8314 = vmatprep.mubr.bf16.mxu0 0
        %8315 = vmatmul.mubr.bf16.gmra.mxu0 %v7289
        %v8316 = vpop.f32.mrf.mxu0
        %v8317 = vadd.f32 %v6896, %v8316
        %v8318 = vpop.f32.mrf.mxu0
        %v8319 = vpop.f32.mrf.mxu0
        %v8320 = vadd.f32 %v6896, %v8319
        %v8321 = vpop.f32.mrf.mxu0
        %8322 = vmatprep.mubr.bf16.mxu0 0
        %8323 = vmatmul.mubr.bf16.gmra.mxu0 %v7292
        %v8324 = vpop.f32.mrf.mxu0
        %v8325 = vadd.f32 %v6896, %v8324
        %v8326 = vpop.f32.mrf.mxu0
        %v8327 = vpop.f32.mrf.mxu0
        %v8328 = vadd.f32 %v6896, %v8327
        %v8329 = vpop.f32.mrf.mxu0
        %8330 = vmatprep.mubr.bf16.mxu0 0
        %8331 = vmatmul.mubr.bf16.gmra.mxu0 %v7295
        %v8332 = vpop.f32.mrf.mxu0
        %v8333 = vadd.f32 %v6896, %v8332
        %v8334 = vpop.f32.mrf.mxu0
        %v8335 = vpop.f32.mrf.mxu0
        %v8336 = vadd.f32 %v6896, %v8335
        %v8337 = vpop.f32.mrf.mxu0
        %8338 = vmatprep.mubr.bf16.mxu0 0
        %8339 = vmatmul.mubr.bf16.gmra.mxu0 %v7298
        %v8340 = vpop.f32.mrf.mxu0
        %v8341 = vadd.f32 %v6896, %v8340
        %v8342 = vpop.f32.mrf.mxu0
        %v8343 = vpop.f32.mrf.mxu0
        %v8344 = vadd.f32 %v6896, %v8343
        %v8345 = vpop.f32.mrf.mxu0
        %8346 = vmatprep.mubr.bf16.mxu0 0
        %8347 = vmatmul.mubr.bf16.gmra.mxu0 %v7301
        %v8348 = vpop.f32.mrf.mxu0
        %v8349 = vadd.f32 %v6896, %v8348
        %v8350 = vpop.f32.mrf.mxu0
        %v8351 = vpop.f32.mrf.mxu0
        %v8352 = vadd.f32 %v6896, %v8351
        %v8353 = vpop.f32.mrf.mxu0
        %8354 = vmatprep.mubr.bf16.mxu0 0
        %8355 = vmatmul.mubr.bf16.gmra.mxu0 %v7304
        %v8356 = vpop.f32.mrf.mxu0
        %v8357 = vadd.f32 %v6896, %v8356
        %v8358 = vpop.f32.mrf.mxu0
        %v8359 = vpop.f32.mrf.mxu0
        %v8360 = vadd.f32 %v6896, %v8359
        %v8361 = vpop.f32.mrf.mxu0
        %8362 = vdwg.mxu0
        %v8363 = vmax.f32 %v7341, 0.0
        %v8364 = vmax.f32 %v7344, 0.0
        %v8365 = vmax.f32 %v7349, 0.0
        %v8366 = vmax.f32 %v7352, 0.0
        %v8367 = vmax.f32 %v7357, 0.0
        %v8368 = vmax.f32 %v7360, 0.0
        %v8369 = vmax.f32 %v7365, 0.0
        %v8370 = vmax.f32 %v7368, 0.0
        %v8371 = vmax.f32 %v7373, 0.0
        %v8372 = vmax.f32 %v7376, 0.0
        %v8373 = vmax.f32 %v7381, 0.0
        %v8374 = vmax.f32 %v7384, 0.0
        %v8375 = vmax.f32 %v7389, 0.0
        %v8376 = vmax.f32 %v7392, 0.0
        %v8377 = vmax.f32 %v7397, 0.0
        %v8378 = vmax.f32 %v7400, 0.0
        %v8379 = vmax.f32 %v7405, 0.0
        %v8380 = vmax.f32 %v7408, 0.0
        %v8381 = vmax.f32 %v7413, 0.0
        %v8382 = vmax.f32 %v7416, 0.0
        %v8383 = vmax.f32 %v7421, 0.0
        %v8384 = vmax.f32 %v7424, 0.0
        %v8385 = vmax.f32 %v7429, 0.0
        %v8386 = vmax.f32 %v7432, 0.0
        %v8387 = vmax.f32 %v7437, 0.0
        %v8388 = vmax.f32 %v7440, 0.0
        %v8389 = vmax.f32 %v7445, 0.0
        %v8390 = vmax.f32 %v7448, 0.0
        %v8391 = vmax.f32 %v7453, 0.0
        %v8392 = vmax.f32 %v7456, 0.0
        %v8393 = vmax.f32 %v7461, 0.0
        %v8394 = vmax.f32 %v7464, 0.0
        %v8395 = vmax.f32 %v7469, 0.0
        %v8396 = vmax.f32 %v7472, 0.0
        %v8397 = vmax.f32 %v7477, 0.0
        %v8398 = vmax.f32 %v7480, 0.0
        %v8399 = vmax.f32 %v7485, 0.0
        %v8400 = vmax.f32 %v7488, 0.0
        %v8401 = vmax.f32 %v7493, 0.0
        %v8402 = vmax.f32 %v7496, 0.0
        %v8403 = vmax.f32 %v7501, 0.0
        %v8404 = vmax.f32 %v7504, 0.0
        %v8405 = vmax.f32 %v7509, 0.0
        %v8406 = vmax.f32 %v7512, 0.0
        %v8407 = vmax.f32 %v7517, 0.0
        %v8408 = vmax.f32 %v7520, 0.0
        %v8409 = vmax.f32 %v7525, 0.0
        %v8410 = vmax.f32 %v7528, 0.0
        %v8411 = vmax.f32 %v7533, 0.0
        %v8412 = vmax.f32 %v7536, 0.0
        %v8413 = vmax.f32 %v7541, 0.0
        %v8414 = vmax.f32 %v7544, 0.0
        %v8415 = vmax.f32 %v7549, 0.0
        %v8416 = vmax.f32 %v7552, 0.0
        %v8417 = vmax.f32 %v7557, 0.0
        %v8418 = vmax.f32 %v7560, 0.0
        %v8419 = vmax.f32 %v7565, 0.0
        %v8420 = vmax.f32 %v7568, 0.0
        %v8421 = vmax.f32 %v7573, 0.0
        %v8422 = vmax.f32 %v7576, 0.0
        %v8423 = vmax.f32 %v7581, 0.0
        %v8424 = vmax.f32 %v7584, 0.0
        %v8425 = vmax.f32 %v7589, 0.0
        %v8426 = vmax.f32 %v7592, 0.0
        %v8427 = vmax.f32 %v7597, 0.0
        %v8428 = vmax.f32 %v7600, 0.0
        %v8429 = vmax.f32 %v7605, 0.0
        %v8430 = vmax.f32 %v7608, 0.0
        %v8431 = vmax.f32 %v7613, 0.0
        %v8432 = vmax.f32 %v7616, 0.0
        %v8433 = vmax.f32 %v7621, 0.0
        %v8434 = vmax.f32 %v7624, 0.0
        %v8435 = vmax.f32 %v7629, 0.0
        %v8436 = vmax.f32 %v7632, 0.0
        %v8437 = vmax.f32 %v7637, 0.0
        %v8438 = vmax.f32 %v7640, 0.0
        %v8439 = vmax.f32 %v7645, 0.0
        %v8440 = vmax.f32 %v7648, 0.0
        %v8441 = vmax.f32 %v7653, 0.0
        %v8442 = vmax.f32 %v7656, 0.0
        %v8443 = vmax.f32 %v7661, 0.0
        %v8444 = vmax.f32 %v7664, 0.0
        %v8445 = vmax.f32 %v7669, 0.0
        %v8446 = vmax.f32 %v7672, 0.0
        %v8447 = vmax.f32 %v7677, 0.0
        %v8448 = vmax.f32 %v7680, 0.0
        %v8449 = vmax.f32 %v7685, 0.0
        %v8450 = vmax.f32 %v7688, 0.0
        %v8451 = vmax.f32 %v7693, 0.0
        %v8452 = vmax.f32 %v7696, 0.0
        %v8453 = vmax.f32 %v7701, 0.0
        %v8454 = vmax.f32 %v7704, 0.0
        %v8455 = vmax.f32 %v7709, 0.0
        %v8456 = vmax.f32 %v7712, 0.0
        %v8457 = vmax.f32 %v7717, 0.0
        %v8458 = vmax.f32 %v7720, 0.0
        %v8459 = vmax.f32 %v7725, 0.0
        %v8460 = vmax.f32 %v7728, 0.0
        %v8461 = vmax.f32 %v7733, 0.0
        %v8462 = vmax.f32 %v7736, 0.0
        %v8463 = vmax.f32 %v7741, 0.0
        %v8464 = vmax.f32 %v7744, 0.0
        %v8465 = vmax.f32 %v7749, 0.0
        %v8466 = vmax.f32 %v7752, 0.0
        %v8467 = vmax.f32 %v7757, 0.0
        %v8468 = vmax.f32 %v7760, 0.0
        %v8469 = vmax.f32 %v7765, 0.0
        %v8470 = vmax.f32 %v7768, 0.0
        %v8471 = vmax.f32 %v7773, 0.0
        %v8472 = vmax.f32 %v7776, 0.0
        %v8473 = vmax.f32 %v7781, 0.0
        %v8474 = vmax.f32 %v7784, 0.0
        %v8475 = vmax.f32 %v7789, 0.0
        %v8476 = vmax.f32 %v7792, 0.0
        %v8477 = vmax.f32 %v7797, 0.0
        %v8478 = vmax.f32 %v7800, 0.0
        %v8479 = vmax.f32 %v7805, 0.0
        %v8480 = vmax.f32 %v7808, 0.0
        %v8481 = vmax.f32 %v7813, 0.0
        %v8482 = vmax.f32 %v7816, 0.0
        %v8483 = vmax.f32 %v7821, 0.0
        %v8484 = vmax.f32 %v7824, 0.0
        %v8485 = vmax.f32 %v7829, 0.0
        %v8486 = vmax.f32 %v7832, 0.0
        %v8487 = vmax.f32 %v7837, 0.0
        %v8488 = vmax.f32 %v7840, 0.0
        %v8489 = vmax.f32 %v7845, 0.0
        %v8490 = vmax.f32 %v7848, 0.0
        %v8491 = vmax.f32 %v7853, 0.0
        %v8492 = vmax.f32 %v7856, 0.0
        %v8493 = vmax.f32 %v7861, 0.0
        %v8494 = vmax.f32 %v7864, 0.0
        %v8495 = vmax.f32 %v7869, 0.0
        %v8496 = vmax.f32 %v7872, 0.0
        %v8497 = vmax.f32 %v7877, 0.0
        %v8498 = vmax.f32 %v7880, 0.0
        %v8499 = vmax.f32 %v7885, 0.0
        %v8500 = vmax.f32 %v7888, 0.0
        %v8501 = vmax.f32 %v7893, 0.0
        %v8502 = vmax.f32 %v7896, 0.0
        %v8503 = vmax.f32 %v7901, 0.0
        %v8504 = vmax.f32 %v7904, 0.0
        %v8505 = vmax.f32 %v7909, 0.0
        %v8506 = vmax.f32 %v7912, 0.0
        %v8507 = vmax.f32 %v7917, 0.0
        %v8508 = vmax.f32 %v7920, 0.0
        %v8509 = vmax.f32 %v7925, 0.0
        %v8510 = vmax.f32 %v7928, 0.0
        %v8511 = vmax.f32 %v7933, 0.0
        %v8512 = vmax.f32 %v7936, 0.0
        %v8513 = vmax.f32 %v7941, 0.0
        %v8514 = vmax.f32 %v7944, 0.0
        %v8515 = vmax.f32 %v7949, 0.0
        %v8516 = vmax.f32 %v7952, 0.0
        %v8517 = vmax.f32 %v7957, 0.0
        %v8518 = vmax.f32 %v7960, 0.0
        %v8519 = vmax.f32 %v7965, 0.0
        %v8520 = vmax.f32 %v7968, 0.0
        %v8521 = vmax.f32 %v7973, 0.0
        %v8522 = vmax.f32 %v7976, 0.0
        %v8523 = vmax.f32 %v7981, 0.0
        %v8524 = vmax.f32 %v7984, 0.0
        %v8525 = vmax.f32 %v7989, 0.0
        %v8526 = vmax.f32 %v7992, 0.0
        %v8527 = vmax.f32 %v7997, 0.0
        %v8528 = vmax.f32 %v8000, 0.0
        %v8529 = vmax.f32 %v8005, 0.0
        %v8530 = vmax.f32 %v8008, 0.0
        %v8531 = vmax.f32 %v8013, 0.0
        %v8532 = vmax.f32 %v8016, 0.0
        %v8533 = vmax.f32 %v8021, 0.0
        %v8534 = vmax.f32 %v8024, 0.0
        %v8535 = vmax.f32 %v8029, 0.0
        %v8536 = vmax.f32 %v8032, 0.0
        %v8537 = vmax.f32 %v8037, 0.0
        %v8538 = vmax.f32 %v8040, 0.0
        %v8539 = vmax.f32 %v8045, 0.0
        %v8540 = vmax.f32 %v8048, 0.0
        %v8541 = vmax.f32 %v8053, 0.0
        %v8542 = vmax.f32 %v8056, 0.0
        %v8543 = vmax.f32 %v8061, 0.0
        %v8544 = vmax.f32 %v8064, 0.0
        %v8545 = vmax.f32 %v8069, 0.0
        %v8546 = vmax.f32 %v8072, 0.0
        %v8547 = vmax.f32 %v8077, 0.0
        %v8548 = vmax.f32 %v8080, 0.0
        %v8549 = vmax.f32 %v8085, 0.0
        %v8550 = vmax.f32 %v8088, 0.0
        %v8551 = vmax.f32 %v8093, 0.0
        %v8552 = vmax.f32 %v8096, 0.0
        %v8553 = vmax.f32 %v8101, 0.0
        %v8554 = vmax.f32 %v8104, 0.0
        %v8555 = vmax.f32 %v8109, 0.0
        %v8556 = vmax.f32 %v8112, 0.0
        %v8557 = vmax.f32 %v8117, 0.0
        %v8558 = vmax.f32 %v8120, 0.0
        %v8559 = vmax.f32 %v8125, 0.0
        %v8560 = vmax.f32 %v8128, 0.0
        %v8561 = vmax.f32 %v8133, 0.0
        %v8562 = vmax.f32 %v8136, 0.0
        %v8563 = vmax.f32 %v8141, 0.0
        %v8564 = vmax.f32 %v8144, 0.0
        %v8565 = vmax.f32 %v8149, 0.0
        %v8566 = vmax.f32 %v8152, 0.0
        %v8567 = vmax.f32 %v8157, 0.0
        %v8568 = vmax.f32 %v8160, 0.0
        %v8569 = vmax.f32 %v8165, 0.0
        %v8570 = vmax.f32 %v8168, 0.0
        %v8571 = vmax.f32 %v8173, 0.0
        %v8572 = vmax.f32 %v8176, 0.0
        %v8573 = vmax.f32 %v8181, 0.0
        %v8574 = vmax.f32 %v8184, 0.0
        %v8575 = vmax.f32 %v8189, 0.0
        %v8576 = vmax.f32 %v8192, 0.0
        %v8577 = vmax.f32 %v8197, 0.0
        %v8578 = vmax.f32 %v8200, 0.0
        %v8579 = vmax.f32 %v8205, 0.0
        %v8580 = vmax.f32 %v8208, 0.0
        %v8581 = vmax.f32 %v8213, 0.0
        %v8582 = vmax.f32 %v8216, 0.0
        %v8583 = vmax.f32 %v8221, 0.0
        %v8584 = vmax.f32 %v8224, 0.0
        %v8585 = vmax.f32 %v8229, 0.0
        %v8586 = vmax.f32 %v8232, 0.0
        %v8587 = vmax.f32 %v8237, 0.0
        %v8588 = vmax.f32 %v8240, 0.0
        %v8589 = vmax.f32 %v8245, 0.0
        %v8590 = vmax.f32 %v8248, 0.0
        %v8591 = vmax.f32 %v8253, 0.0
        %v8592 = vmax.f32 %v8256, 0.0
        %v8593 = vmax.f32 %v8261, 0.0
        %v8594 = vmax.f32 %v8264, 0.0
        %v8595 = vmax.f32 %v8269, 0.0
        %v8596 = vmax.f32 %v8272, 0.0
        %v8597 = vmax.f32 %v8277, 0.0
        %v8598 = vmax.f32 %v8280, 0.0
        %v8599 = vmax.f32 %v8285, 0.0
        %v8600 = vmax.f32 %v8288, 0.0
        %v8601 = vmax.f32 %v8293, 0.0
        %v8602 = vmax.f32 %v8296, 0.0
        %v8603 = vmax.f32 %v8301, 0.0
        %v8604 = vmax.f32 %v8304, 0.0
        %v8605 = vmax.f32 %v8309, 0.0
        %v8606 = vmax.f32 %v8312, 0.0
        %v8607 = vmax.f32 %v8317, 0.0
        %v8608 = vmax.f32 %v8320, 0.0
        %v8609 = vmax.f32 %v8325, 0.0
        %v8610 = vmax.f32 %v8328, 0.0
        %v8611 = vmax.f32 %v8333, 0.0
        %v8612 = vmax.f32 %v8336, 0.0
        %v8613 = vmax.f32 %v8341, 0.0
        %v8614 = vmax.f32 %v8344, 0.0
        %v8615 = vmax.f32 %v8349, 0.0
        %v8616 = vmax.f32 %v8352, 0.0
        %v8617 = vmax.f32 %v8357, 0.0
        %v8618 = vmax.f32 %v8360, 0.0
        %v8619 = vpack.c.bf16 %v8364, %v8363
        %v8620 = vpack.c.bf16 %v8366, %v8365
        %v8621 = vpack.c.bf16 %v8368, %v8367
        %v8622 = vpack.c.bf16 %v8370, %v8369
        %v8623 = vpack.c.bf16 %v8372, %v8371
        %v8624 = vpack.c.bf16 %v8374, %v8373
        %v8625 = vpack.c.bf16 %v8376, %v8375
        %v8626 = vpack.c.bf16 %v8378, %v8377
        %v8627 = vpack.c.bf16 %v8380, %v8379
        %v8628 = vpack.c.bf16 %v8382, %v8381
        %v8629 = vpack.c.bf16 %v8384, %v8383
        %v8630 = vpack.c.bf16 %v8386, %v8385
        %v8631 = vpack.c.bf16 %v8388, %v8387
        %v8632 = vpack.c.bf16 %v8390, %v8389
        %v8633 = vpack.c.bf16 %v8392, %v8391
        %v8634 = vpack.c.bf16 %v8394, %v8393
        %v8635 = vpack.c.bf16 %v8396, %v8395
        %v8636 = vpack.c.bf16 %v8398, %v8397
        %v8637 = vpack.c.bf16 %v8400, %v8399
        %v8638 = vpack.c.bf16 %v8402, %v8401
        %v8639 = vpack.c.bf16 %v8404, %v8403
        %v8640 = vpack.c.bf16 %v8406, %v8405
        %v8641 = vpack.c.bf16 %v8408, %v8407
        %v8642 = vpack.c.bf16 %v8410, %v8409
        %v8643 = vpack.c.bf16 %v8412, %v8411
        %v8644 = vpack.c.bf16 %v8414, %v8413
        %v8645 = vpack.c.bf16 %v8416, %v8415
        %v8646 = vpack.c.bf16 %v8418, %v8417
        %v8647 = vpack.c.bf16 %v8420, %v8419
        %v8648 = vpack.c.bf16 %v8422, %v8421
        %v8649 = vpack.c.bf16 %v8424, %v8423
        %v8650 = vpack.c.bf16 %v8426, %v8425
        %v8651 = vpack.c.bf16 %v8428, %v8427
        %v8652 = vpack.c.bf16 %v8430, %v8429
        %v8653 = vpack.c.bf16 %v8432, %v8431
        %v8654 = vpack.c.bf16 %v8434, %v8433
        %v8655 = vpack.c.bf16 %v8436, %v8435
        %v8656 = vpack.c.bf16 %v8438, %v8437
        %v8657 = vpack.c.bf16 %v8440, %v8439
        %v8658 = vpack.c.bf16 %v8442, %v8441
        %v8659 = vpack.c.bf16 %v8444, %v8443
        %v8660 = vpack.c.bf16 %v8446, %v8445
        %v8661 = vpack.c.bf16 %v8448, %v8447
        %v8662 = vpack.c.bf16 %v8450, %v8449
        %v8663 = vpack.c.bf16 %v8452, %v8451
        %v8664 = vpack.c.bf16 %v8454, %v8453
        %v8665 = vpack.c.bf16 %v8456, %v8455
        %v8666 = vpack.c.bf16 %v8458, %v8457
        %v8667 = vpack.c.bf16 %v8460, %v8459
        %v8668 = vpack.c.bf16 %v8462, %v8461
        %v8669 = vpack.c.bf16 %v8464, %v8463
        %v8670 = vpack.c.bf16 %v8466, %v8465
        %v8671 = vpack.c.bf16 %v8468, %v8467
        %v8672 = vpack.c.bf16 %v8470, %v8469
        %v8673 = vpack.c.bf16 %v8472, %v8471
        %v8674 = vpack.c.bf16 %v8474, %v8473
        %v8675 = vpack.c.bf16 %v8476, %v8475
        %v8676 = vpack.c.bf16 %v8478, %v8477
        %v8677 = vpack.c.bf16 %v8480, %v8479
        %v8678 = vpack.c.bf16 %v8482, %v8481
        %v8679 = vpack.c.bf16 %v8484, %v8483
        %v8680 = vpack.c.bf16 %v8486, %v8485
        %v8681 = vpack.c.bf16 %v8488, %v8487
        %v8682 = vpack.c.bf16 %v8490, %v8489
        %v8683 = vpack.c.bf16 %v8492, %v8491
        %v8684 = vpack.c.bf16 %v8494, %v8493
        %v8685 = vpack.c.bf16 %v8496, %v8495
        %v8686 = vpack.c.bf16 %v8498, %v8497
        %v8687 = vpack.c.bf16 %v8500, %v8499
        %v8688 = vpack.c.bf16 %v8502, %v8501
        %v8689 = vpack.c.bf16 %v8504, %v8503
        %v8690 = vpack.c.bf16 %v8506, %v8505
        %v8691 = vpack.c.bf16 %v8508, %v8507
        %v8692 = vpack.c.bf16 %v8510, %v8509
        %v8693 = vpack.c.bf16 %v8512, %v8511
        %v8694 = vpack.c.bf16 %v8514, %v8513
        %v8695 = vpack.c.bf16 %v8516, %v8515
        %v8696 = vpack.c.bf16 %v8518, %v8517
        %v8697 = vpack.c.bf16 %v8520, %v8519
        %v8698 = vpack.c.bf16 %v8522, %v8521
        %v8699 = vpack.c.bf16 %v8524, %v8523
        %v8700 = vpack.c.bf16 %v8526, %v8525
        %v8701 = vpack.c.bf16 %v8528, %v8527
        %v8702 = vpack.c.bf16 %v8530, %v8529
        %v8703 = vpack.c.bf16 %v8532, %v8531
        %v8704 = vpack.c.bf16 %v8534, %v8533
        %v8705 = vpack.c.bf16 %v8536, %v8535
        %v8706 = vpack.c.bf16 %v8538, %v8537
        %v8707 = vpack.c.bf16 %v8540, %v8539
        %v8708 = vpack.c.bf16 %v8542, %v8541
        %v8709 = vpack.c.bf16 %v8544, %v8543
        %v8710 = vpack.c.bf16 %v8546, %v8545
        %v8711 = vpack.c.bf16 %v8548, %v8547
        %v8712 = vpack.c.bf16 %v8550, %v8549
        %v8713 = vpack.c.bf16 %v8552, %v8551
        %v8714 = vpack.c.bf16 %v8554, %v8553
        %v8715 = vpack.c.bf16 %v8556, %v8555
        %v8716 = vpack.c.bf16 %v8558, %v8557
        %v8717 = vpack.c.bf16 %v8560, %v8559
        %v8718 = vpack.c.bf16 %v8562, %v8561
        %v8719 = vpack.c.bf16 %v8564, %v8563
        %v8720 = vpack.c.bf16 %v8566, %v8565
        %v8721 = vpack.c.bf16 %v8568, %v8567
        %v8722 = vpack.c.bf16 %v8570, %v8569
        %v8723 = vpack.c.bf16 %v8572, %v8571
        %v8724 = vpack.c.bf16 %v8574, %v8573
        %v8725 = vpack.c.bf16 %v8576, %v8575
        %v8726 = vpack.c.bf16 %v8578, %v8577
        %v8727 = vpack.c.bf16 %v8580, %v8579
        %v8728 = vpack.c.bf16 %v8582, %v8581
        %v8729 = vpack.c.bf16 %v8584, %v8583
        %v8730 = vpack.c.bf16 %v8586, %v8585
        %v8731 = vpack.c.bf16 %v8588, %v8587
        %v8732 = vpack.c.bf16 %v8590, %v8589
        %v8733 = vpack.c.bf16 %v8592, %v8591
        %v8734 = vpack.c.bf16 %v8594, %v8593
        %v8735 = vpack.c.bf16 %v8596, %v8595
        %v8736 = vpack.c.bf16 %v8598, %v8597
        %v8737 = vpack.c.bf16 %v8600, %v8599
        %v8738 = vpack.c.bf16 %v8602, %v8601
        %v8739 = vpack.c.bf16 %v8604, %v8603
        %v8740 = vpack.c.bf16 %v8606, %v8605
        %v8741 = vpack.c.bf16 %v8608, %v8607
        %v8742 = vpack.c.bf16 %v8610, %v8609
        %v8743 = vpack.c.bf16 %v8612, %v8611
        %v8744 = vpack.c.bf16 %v8614, %v8613
        %v8745 = vpack.c.bf16 %v8616, %v8615
        %v8746 = vpack.c.bf16 %v8618, %v8617
        %v8747 = vld [vmem:[%s9] sm:$0xf]
        %v8748 = vld [vmem:[%s9 + $0x4] sm:$0xf]
        %v8749 = vld [vmem:[%s9 + $0x8] sm:$0xf]
        %v8750 = vld [vmem:[%s9 + $0xc] sm:$0xf]
        %v8751 = vld [vmem:[%s9 + $0x10] sm:$0xf]
        %v8752 = vld [vmem:[%s9 + $0x14] sm:$0xf]
        %v8753 = vld [vmem:[%s9 + $0x18] sm:$0xf]
        %v8754 = vld [vmem:[%s9 + $0x1c] sm:$0xf]
        %v8755 = vld [vmem:[%s9 + $0x20] sm:$0xf]
        %v8756 = vld [vmem:[%s9 + $0x24] sm:$0xf]
        %v8757 = vld [vmem:[%s9 + $0x28] sm:$0xf]
        %v8758 = vld [vmem:[%s9 + $0x2c] sm:$0xf]
        %v8759 = vld [vmem:[%s9 + $0x30] sm:$0xf]
        %v8760 = vld [vmem:[%s9 + $0x34] sm:$0xf]
        %v8761 = vld [vmem:[%s9 + $0x38] sm:$0xf]
        %v8762 = vld [vmem:[%s9 + $0x3c] sm:$0xf]
        %v8763 = vld [vmem:[%s10] sm:$0x1]
        %v8765 = vlaneseq
        %v8766 = vshrl.u32 %v8765, 7
        %v8767 = vsub.s32 0, %v8766
        %v8768 = vrot.slane %v8763, %v8767
        %v8786 = vunpack.c.l.b16 %v8747
        %v8787 = vunpack.c.l.b16 %v8748
        %v8788 = vunpack.c.l.b16 %v8749
        %v8789 = vunpack.c.l.b16 %v8750
        %v8790 = vunpack.c.l.b16 %v8751
        %v8791 = vunpack.c.l.b16 %v8752
        %v8792 = vunpack.c.l.b16 %v8753
        %v8793 = vunpack.c.l.b16 %v8754
        %v8794 = vunpack.c.l.b16 %v8755
        %v8795 = vunpack.c.l.b16 %v8756
        %v8796 = vunpack.c.l.b16 %v8757
        %v8797 = vunpack.c.l.b16 %v8758
        %v8798 = vunpack.c.l.b16 %v8759
        %v8799 = vunpack.c.l.b16 %v8760
        %v8800 = vunpack.c.l.b16 %v8761
        %v8801 = vunpack.c.l.b16 %v8762
        %v8802 = vpack.c.b16 %v8787, %v8786
        %v8803 = vpack.c.b16 %v8789, %v8788
        %v8804 = vpack.c.b16 %v8791, %v8790
        %v8805 = vpack.c.b16 %v8793, %v8792
        %v8806 = vpack.c.b16 %v8795, %v8794
        %v8807 = vpack.c.b16 %v8797, %v8796
        %v8808 = vpack.c.b16 %v8799, %v8798
        %v8809 = vpack.c.b16 %v8801, %v8800
        %8818 = vmatprep.subr.bf16.mxu0 0
        %8819 = vmatpush1.bf16.msra.mxu0 %v8809
        %8820 = vmatprep.subr.bf16.mxu0 0
        %8821 = vmatpush1.bf16.msra.mxu0 %v8808
        %8822 = vmatprep.subr.bf16.mxu0 0
        %8823 = vmatpush1.bf16.msra.mxu0 %v8807
        %8824 = vmatprep.subr.bf16.mxu0 0
        %8825 = vmatpush1.bf16.msra.mxu0 %v8806
        %8826 = vmatprep.subr.bf16.mxu0 0
        %8827 = vmatpush1.bf16.msra.mxu0 %v8805
        %8828 = vmatprep.subr.bf16.mxu0 0
        %8829 = vmatpush1.bf16.msra.mxu0 %v8804
        %8830 = vmatprep.subr.bf16.mxu0 0
        %8831 = vmatpush1.bf16.msra.mxu0 %v8803
        %8832 = vmatprep.subr.bf16.mxu0 0
        %8833 = vmatpush1.bf16.msra.mxu0 %v8802
        %8834 = vmatprep.subr.bf16.mxu0 0
        %8835 = vmatpush2.bf16.msra.mxu0 0
        %8836 = vmatprep.subr.bf16.mxu0 0
        %8837 = vmatpush2.bf16.msra.mxu0 0
        %8838 = vmatprep.subr.bf16.mxu0 0
        %8839 = vmatpush2.bf16.msra.mxu0 0
        %8840 = vmatprep.subr.bf16.mxu0 0
        %8841 = vmatpush2.bf16.msra.mxu0 0
        %8842 = vmatprep.subr.bf16.mxu0 0
        %8843 = vmatpush2.bf16.msra.mxu0 0
        %8844 = vmatprep.subr.bf16.mxu0 0
        %8845 = vmatpush2.bf16.msra.mxu0 0
        %8846 = vmatprep.subr.bf16.mxu0 0
        %8847 = vmatpush2.bf16.msra.mxu0 0
        %8848 = vmatprep.subr.bf16.mxu0 0
        %8849 = vmatpush2.bf16.msra.mxu0 0
        %8850 = vmatprep.mubr.bf16.mxu0 0
        %8851 = vmatmul.mubr.bf16.gmra.mxu0 %v8619
        %v8852 = vpop.f32.mrf.mxu0
        %v8853 = vadd.f32 %v8768, %v8852
        %v8854 = vpop.f32.mrf.mxu0
        %v8855 = vpop.f32.mrf.mxu0
        %v8856 = vadd.f32 %v8768, %v8855
        %v8857 = vpop.f32.mrf.mxu0
        %8858 = vmatprep.mubr.bf16.mxu0 0
        %8859 = vmatmul.mubr.bf16.gmra.mxu0 %v8620
        %v8860 = vpop.f32.mrf.mxu0
        %v8861 = vadd.f32 %v8768, %v8860
        %v8862 = vpop.f32.mrf.mxu0
        %v8863 = vpop.f32.mrf.mxu0
        %v8864 = vadd.f32 %v8768, %v8863
        %v8865 = vpop.f32.mrf.mxu0
        %8866 = vmatprep.mubr.bf16.mxu0 0
        %8867 = vmatmul.mubr.bf16.gmra.mxu0 %v8621
        %v8868 = vpop.f32.mrf.mxu0
        %v8869 = vadd.f32 %v8768, %v8868
        %v8870 = vpop.f32.mrf.mxu0
        %v8871 = vpop.f32.mrf.mxu0
        %v8872 = vadd.f32 %v8768, %v8871
        %v8873 = vpop.f32.mrf.mxu0
        %8874 = vmatprep.mubr.bf16.mxu0 0
        %8875 = vmatmul.mubr.bf16.gmra.mxu0 %v8622
        %v8876 = vpop.f32.mrf.mxu0
        %v8877 = vadd.f32 %v8768, %v8876
        %v8878 = vpop.f32.mrf.mxu0
        %v8879 = vpop.f32.mrf.mxu0
        %v8880 = vadd.f32 %v8768, %v8879
        %v8881 = vpop.f32.mrf.mxu0
        %8882 = vmatprep.mubr.bf16.mxu0 0
        %8883 = vmatmul.mubr.bf16.gmra.mxu0 %v8623
        %v8884 = vpop.f32.mrf.mxu0
        %v8885 = vadd.f32 %v8768, %v8884
        %v8886 = vpop.f32.mrf.mxu0
        %v8887 = vpop.f32.mrf.mxu0
        %v8888 = vadd.f32 %v8768, %v8887
        %v8889 = vpop.f32.mrf.mxu0
        %8890 = vmatprep.mubr.bf16.mxu0 0
        %8891 = vmatmul.mubr.bf16.gmra.mxu0 %v8624
        %v8892 = vpop.f32.mrf.mxu0
        %v8893 = vadd.f32 %v8768, %v8892
        %v8894 = vpop.f32.mrf.mxu0
        %v8895 = vpop.f32.mrf.mxu0
        %v8896 = vadd.f32 %v8768, %v8895
        %v8897 = vpop.f32.mrf.mxu0
        %8898 = vmatprep.mubr.bf16.mxu0 0
        %8899 = vmatmul.mubr.bf16.gmra.mxu0 %v8625
        %v8900 = vpop.f32.mrf.mxu0
        %v8901 = vadd.f32 %v8768, %v8900
        %v8902 = vpop.f32.mrf.mxu0
        %v8903 = vpop.f32.mrf.mxu0
        %v8904 = vadd.f32 %v8768, %v8903
        %v8905 = vpop.f32.mrf.mxu0
        %8906 = vmatprep.mubr.bf16.mxu0 0
        %8907 = vmatmul.mubr.bf16.gmra.mxu0 %v8626
        %v8908 = vpop.f32.mrf.mxu0
        %v8909 = vadd.f32 %v8768, %v8908
        %v8910 = vpop.f32.mrf.mxu0
        %v8911 = vpop.f32.mrf.mxu0
        %v8912 = vadd.f32 %v8768, %v8911
        %v8913 = vpop.f32.mrf.mxu0
        %8914 = vmatprep.mubr.bf16.mxu0 0
        %8915 = vmatmul.mubr.bf16.gmra.mxu0 %v8627
        %v8916 = vpop.f32.mrf.mxu0
        %v8917 = vadd.f32 %v8768, %v8916
        %v8918 = vpop.f32.mrf.mxu0
        %v8919 = vpop.f32.mrf.mxu0
        %v8920 = vadd.f32 %v8768, %v8919
        %v8921 = vpop.f32.mrf.mxu0
        %8922 = vmatprep.mubr.bf16.mxu0 0
        %8923 = vmatmul.mubr.bf16.gmra.mxu0 %v8628
        %v8924 = vpop.f32.mrf.mxu0
        %v8925 = vadd.f32 %v8768, %v8924
        %v8926 = vpop.f32.mrf.mxu0
        %v8927 = vpop.f32.mrf.mxu0
        %v8928 = vadd.f32 %v8768, %v8927
        %v8929 = vpop.f32.mrf.mxu0
        %8930 = vmatprep.mubr.bf16.mxu0 0
        %8931 = vmatmul.mubr.bf16.gmra.mxu0 %v8629
        %v8932 = vpop.f32.mrf.mxu0
        %v8933 = vadd.f32 %v8768, %v8932
        %v8934 = vpop.f32.mrf.mxu0
        %v8935 = vpop.f32.mrf.mxu0
        %v8936 = vadd.f32 %v8768, %v8935
        %v8937 = vpop.f32.mrf.mxu0
        %8938 = vmatprep.mubr.bf16.mxu0 0
        %8939 = vmatmul.mubr.bf16.gmra.mxu0 %v8630
        %v8940 = vpop.f32.mrf.mxu0
        %v8941 = vadd.f32 %v8768, %v8940
        %v8942 = vpop.f32.mrf.mxu0
        %v8943 = vpop.f32.mrf.mxu0
        %v8944 = vadd.f32 %v8768, %v8943
        %v8945 = vpop.f32.mrf.mxu0
        %8946 = vmatprep.mubr.bf16.mxu0 0
        %8947 = vmatmul.mubr.bf16.gmra.mxu0 %v8631
        %v8948 = vpop.f32.mrf.mxu0
        %v8949 = vadd.f32 %v8768, %v8948
        %v8950 = vpop.f32.mrf.mxu0
        %v8951 = vpop.f32.mrf.mxu0
        %v8952 = vadd.f32 %v8768, %v8951
        %v8953 = vpop.f32.mrf.mxu0
        %8954 = vmatprep.mubr.bf16.mxu0 0
        %8955 = vmatmul.mubr.bf16.gmra.mxu0 %v8632
        %v8956 = vpop.f32.mrf.mxu0
        %v8957 = vadd.f32 %v8768, %v8956
        %v8958 = vpop.f32.mrf.mxu0
        %v8959 = vpop.f32.mrf.mxu0
        %v8960 = vadd.f32 %v8768, %v8959
        %v8961 = vpop.f32.mrf.mxu0
        %8962 = vmatprep.mubr.bf16.mxu0 0
        %8963 = vmatmul.mubr.bf16.gmra.mxu0 %v8633
        %v8964 = vpop.f32.mrf.mxu0
        %v8965 = vadd.f32 %v8768, %v8964
        %v8966 = vpop.f32.mrf.mxu0
        %v8967 = vpop.f32.mrf.mxu0
        %v8968 = vadd.f32 %v8768, %v8967
        %v8969 = vpop.f32.mrf.mxu0
        %8970 = vmatprep.mubr.bf16.mxu0 0
        %8971 = vmatmul.mubr.bf16.gmra.mxu0 %v8634
        %v8972 = vpop.f32.mrf.mxu0
        %v8973 = vadd.f32 %v8768, %v8972
        %v8974 = vpop.f32.mrf.mxu0
        %v8975 = vpop.f32.mrf.mxu0
        %v8976 = vadd.f32 %v8768, %v8975
        %v8977 = vpop.f32.mrf.mxu0
        %8978 = vmatprep.mubr.bf16.mxu0 0
        %8979 = vmatmul.mubr.bf16.gmra.mxu0 %v8635
        %v8980 = vpop.f32.mrf.mxu0
        %v8981 = vadd.f32 %v8768, %v8980
        %v8982 = vpop.f32.mrf.mxu0
        %v8983 = vpop.f32.mrf.mxu0
        %v8984 = vadd.f32 %v8768, %v8983
        %v8985 = vpop.f32.mrf.mxu0
        %8986 = vmatprep.mubr.bf16.mxu0 0
        %8987 = vmatmul.mubr.bf16.gmra.mxu0 %v8636
        %v8988 = vpop.f32.mrf.mxu0
        %v8989 = vadd.f32 %v8768, %v8988
        %v8990 = vpop.f32.mrf.mxu0
        %v8991 = vpop.f32.mrf.mxu0
        %v8992 = vadd.f32 %v8768, %v8991
        %v8993 = vpop.f32.mrf.mxu0
        %8994 = vmatprep.mubr.bf16.mxu0 0
        %8995 = vmatmul.mubr.bf16.gmra.mxu0 %v8637
        %v8996 = vpop.f32.mrf.mxu0
        %v8997 = vadd.f32 %v8768, %v8996
        %v8998 = vpop.f32.mrf.mxu0
        %v8999 = vpop.f32.mrf.mxu0
        %v9000 = vadd.f32 %v8768, %v8999
        %v9001 = vpop.f32.mrf.mxu0
        %9002 = vmatprep.mubr.bf16.mxu0 0
        %9003 = vmatmul.mubr.bf16.gmra.mxu0 %v8638
        %v9004 = vpop.f32.mrf.mxu0
        %v9005 = vadd.f32 %v8768, %v9004
        %v9006 = vpop.f32.mrf.mxu0
        %v9007 = vpop.f32.mrf.mxu0
        %v9008 = vadd.f32 %v8768, %v9007
        %v9009 = vpop.f32.mrf.mxu0
        %9010 = vmatprep.mubr.bf16.mxu0 0
        %9011 = vmatmul.mubr.bf16.gmra.mxu0 %v8639
        %v9012 = vpop.f32.mrf.mxu0
        %v9013 = vadd.f32 %v8768, %v9012
        %v9014 = vpop.f32.mrf.mxu0
        %v9015 = vpop.f32.mrf.mxu0
        %v9016 = vadd.f32 %v8768, %v9015
        %v9017 = vpop.f32.mrf.mxu0
        %9018 = vmatprep.mubr.bf16.mxu0 0
        %9019 = vmatmul.mubr.bf16.gmra.mxu0 %v8640
        %v9020 = vpop.f32.mrf.mxu0
        %v9021 = vadd.f32 %v8768, %v9020
        %v9022 = vpop.f32.mrf.mxu0
        %v9023 = vpop.f32.mrf.mxu0
        %v9024 = vadd.f32 %v8768, %v9023
        %v9025 = vpop.f32.mrf.mxu0
        %9026 = vmatprep.mubr.bf16.mxu0 0
        %9027 = vmatmul.mubr.bf16.gmra.mxu0 %v8641
        %v9028 = vpop.f32.mrf.mxu0
        %v9029 = vadd.f32 %v8768, %v9028
        %v9030 = vpop.f32.mrf.mxu0
        %v9031 = vpop.f32.mrf.mxu0
        %v9032 = vadd.f32 %v8768, %v9031
        %v9033 = vpop.f32.mrf.mxu0
        %9034 = vmatprep.mubr.bf16.mxu0 0
        %9035 = vmatmul.mubr.bf16.gmra.mxu0 %v8642
        %v9036 = vpop.f32.mrf.mxu0
        %v9037 = vadd.f32 %v8768, %v9036
        %v9038 = vpop.f32.mrf.mxu0
        %v9039 = vpop.f32.mrf.mxu0
        %v9040 = vadd.f32 %v8768, %v9039
        %v9041 = vpop.f32.mrf.mxu0
        %9042 = vmatprep.mubr.bf16.mxu0 0
        %9043 = vmatmul.mubr.bf16.gmra.mxu0 %v8643
        %v9044 = vpop.f32.mrf.mxu0
        %v9045 = vadd.f32 %v8768, %v9044
        %v9046 = vpop.f32.mrf.mxu0
        %v9047 = vpop.f32.mrf.mxu0
        %v9048 = vadd.f32 %v8768, %v9047
        %v9049 = vpop.f32.mrf.mxu0
        %9050 = vmatprep.mubr.bf16.mxu0 0
        %9051 = vmatmul.mubr.bf16.gmra.mxu0 %v8644
        %v9052 = vpop.f32.mrf.mxu0
        %v9053 = vadd.f32 %v8768, %v9052
        %v9054 = vpop.f32.mrf.mxu0
        %v9055 = vpop.f32.mrf.mxu0
        %v9056 = vadd.f32 %v8768, %v9055
        %v9057 = vpop.f32.mrf.mxu0
        %9058 = vmatprep.mubr.bf16.mxu0 0
        %9059 = vmatmul.mubr.bf16.gmra.mxu0 %v8645
        %v9060 = vpop.f32.mrf.mxu0
        %v9061 = vadd.f32 %v8768, %v9060
        %v9062 = vpop.f32.mrf.mxu0
        %v9063 = vpop.f32.mrf.mxu0
        %v9064 = vadd.f32 %v8768, %v9063
        %v9065 = vpop.f32.mrf.mxu0
        %9066 = vmatprep.mubr.bf16.mxu0 0
        %9067 = vmatmul.mubr.bf16.gmra.mxu0 %v8646
        %v9068 = vpop.f32.mrf.mxu0
        %v9069 = vadd.f32 %v8768, %v9068
        %v9070 = vpop.f32.mrf.mxu0
        %v9071 = vpop.f32.mrf.mxu0
        %v9072 = vadd.f32 %v8768, %v9071
        %v9073 = vpop.f32.mrf.mxu0
        %9074 = vmatprep.mubr.bf16.mxu0 0
        %9075 = vmatmul.mubr.bf16.gmra.mxu0 %v8647
        %v9076 = vpop.f32.mrf.mxu0
        %v9077 = vadd.f32 %v8768, %v9076
        %v9078 = vpop.f32.mrf.mxu0
        %v9079 = vpop.f32.mrf.mxu0
        %v9080 = vadd.f32 %v8768, %v9079
        %v9081 = vpop.f32.mrf.mxu0
        %9082 = vmatprep.mubr.bf16.mxu0 0
        %9083 = vmatmul.mubr.bf16.gmra.mxu0 %v8648
        %v9084 = vpop.f32.mrf.mxu0
        %v9085 = vadd.f32 %v8768, %v9084
        %v9086 = vpop.f32.mrf.mxu0
        %v9087 = vpop.f32.mrf.mxu0
        %v9088 = vadd.f32 %v8768, %v9087
        %v9089 = vpop.f32.mrf.mxu0
        %9090 = vmatprep.mubr.bf16.mxu0 0
        %9091 = vmatmul.mubr.bf16.gmra.mxu0 %v8649
        %v9092 = vpop.f32.mrf.mxu0
        %v9093 = vadd.f32 %v8768, %v9092
        %v9094 = vpop.f32.mrf.mxu0
        %v9095 = vpop.f32.mrf.mxu0
        %v9096 = vadd.f32 %v8768, %v9095
        %v9097 = vpop.f32.mrf.mxu0
        %9098 = vmatprep.mubr.bf16.mxu0 0
        %9099 = vmatmul.mubr.bf16.gmra.mxu0 %v8650
        %v9100 = vpop.f32.mrf.mxu0
        %v9101 = vadd.f32 %v8768, %v9100
        %v9102 = vpop.f32.mrf.mxu0
        %v9103 = vpop.f32.mrf.mxu0
        %v9104 = vadd.f32 %v8768, %v9103
        %v9105 = vpop.f32.mrf.mxu0
        %9106 = vmatprep.mubr.bf16.mxu0 0
        %9107 = vmatmul.mubr.bf16.gmra.mxu0 %v8651
        %v9108 = vpop.f32.mrf.mxu0
        %v9109 = vadd.f32 %v8768, %v9108
        %v9110 = vpop.f32.mrf.mxu0
        %v9111 = vpop.f32.mrf.mxu0
        %v9112 = vadd.f32 %v8768, %v9111
        %v9113 = vpop.f32.mrf.mxu0
        %9114 = vmatprep.mubr.bf16.mxu0 0
        %9115 = vmatmul.mubr.bf16.gmra.mxu0 %v8652
        %v9116 = vpop.f32.mrf.mxu0
        %v9117 = vadd.f32 %v8768, %v9116
        %v9118 = vpop.f32.mrf.mxu0
        %v9119 = vpop.f32.mrf.mxu0
        %v9120 = vadd.f32 %v8768, %v9119
        %v9121 = vpop.f32.mrf.mxu0
        %9122 = vmatprep.mubr.bf16.mxu0 0
        %9123 = vmatmul.mubr.bf16.gmra.mxu0 %v8653
        %v9124 = vpop.f32.mrf.mxu0
        %v9125 = vadd.f32 %v8768, %v9124
        %v9126 = vpop.f32.mrf.mxu0
        %v9127 = vpop.f32.mrf.mxu0
        %v9128 = vadd.f32 %v8768, %v9127
        %v9129 = vpop.f32.mrf.mxu0
        %9130 = vmatprep.mubr.bf16.mxu0 0
        %9131 = vmatmul.mubr.bf16.gmra.mxu0 %v8654
        %v9132 = vpop.f32.mrf.mxu0
        %v9133 = vadd.f32 %v8768, %v9132
        %v9134 = vpop.f32.mrf.mxu0
        %v9135 = vpop.f32.mrf.mxu0
        %v9136 = vadd.f32 %v8768, %v9135
        %v9137 = vpop.f32.mrf.mxu0
        %9138 = vmatprep.mubr.bf16.mxu0 0
        %9139 = vmatmul.mubr.bf16.gmra.mxu0 %v8655
        %v9140 = vpop.f32.mrf.mxu0
        %v9141 = vadd.f32 %v8768, %v9140
        %v9142 = vpop.f32.mrf.mxu0
        %v9143 = vpop.f32.mrf.mxu0
        %v9144 = vadd.f32 %v8768, %v9143
        %v9145 = vpop.f32.mrf.mxu0
        %9146 = vmatprep.mubr.bf16.mxu0 0
        %9147 = vmatmul.mubr.bf16.gmra.mxu0 %v8656
        %v9148 = vpop.f32.mrf.mxu0
        %v9149 = vadd.f32 %v8768, %v9148
        %v9150 = vpop.f32.mrf.mxu0
        %v9151 = vpop.f32.mrf.mxu0
        %v9152 = vadd.f32 %v8768, %v9151
        %v9153 = vpop.f32.mrf.mxu0
        %9154 = vmatprep.mubr.bf16.mxu0 0
        %9155 = vmatmul.mubr.bf16.gmra.mxu0 %v8657
        %v9156 = vpop.f32.mrf.mxu0
        %v9157 = vadd.f32 %v8768, %v9156
        %v9158 = vpop.f32.mrf.mxu0
        %v9159 = vpop.f32.mrf.mxu0
        %v9160 = vadd.f32 %v8768, %v9159
        %v9161 = vpop.f32.mrf.mxu0
        %9162 = vmatprep.mubr.bf16.mxu0 0
        %9163 = vmatmul.mubr.bf16.gmra.mxu0 %v8658
        %v9164 = vpop.f32.mrf.mxu0
        %v9165 = vadd.f32 %v8768, %v9164
        %v9166 = vpop.f32.mrf.mxu0
        %v9167 = vpop.f32.mrf.mxu0
        %v9168 = vadd.f32 %v8768, %v9167
        %v9169 = vpop.f32.mrf.mxu0
        %9170 = vmatprep.mubr.bf16.mxu0 0
        %9171 = vmatmul.mubr.bf16.gmra.mxu0 %v8659
        %v9172 = vpop.f32.mrf.mxu0
        %v9173 = vadd.f32 %v8768, %v9172
        %v9174 = vpop.f32.mrf.mxu0
        %v9175 = vpop.f32.mrf.mxu0
        %v9176 = vadd.f32 %v8768, %v9175
        %v9177 = vpop.f32.mrf.mxu0
        %9178 = vmatprep.mubr.bf16.mxu0 0
        %9179 = vmatmul.mubr.bf16.gmra.mxu0 %v8660
        %v9180 = vpop.f32.mrf.mxu0
        %v9181 = vadd.f32 %v8768, %v9180
        %v9182 = vpop.f32.mrf.mxu0
        %v9183 = vpop.f32.mrf.mxu0
        %v9184 = vadd.f32 %v8768, %v9183
        %v9185 = vpop.f32.mrf.mxu0
        %9186 = vmatprep.mubr.bf16.mxu0 0
        %9187 = vmatmul.mubr.bf16.gmra.mxu0 %v8661
        %v9188 = vpop.f32.mrf.mxu0
        %v9189 = vadd.f32 %v8768, %v9188
        %v9190 = vpop.f32.mrf.mxu0
        %v9191 = vpop.f32.mrf.mxu0
        %v9192 = vadd.f32 %v8768, %v9191
        %v9193 = vpop.f32.mrf.mxu0
        %9194 = vmatprep.mubr.bf16.mxu0 0
        %9195 = vmatmul.mubr.bf16.gmra.mxu0 %v8662
        %v9196 = vpop.f32.mrf.mxu0
        %v9197 = vadd.f32 %v8768, %v9196
        %v9198 = vpop.f32.mrf.mxu0
        %v9199 = vpop.f32.mrf.mxu0
        %v9200 = vadd.f32 %v8768, %v9199
        %v9201 = vpop.f32.mrf.mxu0
        %9202 = vmatprep.mubr.bf16.mxu0 0
        %9203 = vmatmul.mubr.bf16.gmra.mxu0 %v8663
        %v9204 = vpop.f32.mrf.mxu0
        %v9205 = vadd.f32 %v8768, %v9204
        %v9206 = vpop.f32.mrf.mxu0
        %v9207 = vpop.f32.mrf.mxu0
        %v9208 = vadd.f32 %v8768, %v9207
        %v9209 = vpop.f32.mrf.mxu0
        %9210 = vmatprep.mubr.bf16.mxu0 0
        %9211 = vmatmul.mubr.bf16.gmra.mxu0 %v8664
        %v9212 = vpop.f32.mrf.mxu0
        %v9213 = vadd.f32 %v8768, %v9212
        %v9214 = vpop.f32.mrf.mxu0
        %v9215 = vpop.f32.mrf.mxu0
        %v9216 = vadd.f32 %v8768, %v9215
        %v9217 = vpop.f32.mrf.mxu0
        %9218 = vmatprep.mubr.bf16.mxu0 0
        %9219 = vmatmul.mubr.bf16.gmra.mxu0 %v8665
        %v9220 = vpop.f32.mrf.mxu0
        %v9221 = vadd.f32 %v8768, %v9220
        %v9222 = vpop.f32.mrf.mxu0
        %v9223 = vpop.f32.mrf.mxu0
        %v9224 = vadd.f32 %v8768, %v9223
        %v9225 = vpop.f32.mrf.mxu0
        %9226 = vmatprep.mubr.bf16.mxu0 0
        %9227 = vmatmul.mubr.bf16.gmra.mxu0 %v8666
        %v9228 = vpop.f32.mrf.mxu0
        %v9229 = vadd.f32 %v8768, %v9228
        %v9230 = vpop.f32.mrf.mxu0
        %v9231 = vpop.f32.mrf.mxu0
        %v9232 = vadd.f32 %v8768, %v9231
        %v9233 = vpop.f32.mrf.mxu0
        %9234 = vmatprep.mubr.bf16.mxu0 0
        %9235 = vmatmul.mubr.bf16.gmra.mxu0 %v8667
        %v9236 = vpop.f32.mrf.mxu0
        %v9237 = vadd.f32 %v8768, %v9236
        %v9238 = vpop.f32.mrf.mxu0
        %v9239 = vpop.f32.mrf.mxu0
        %v9240 = vadd.f32 %v8768, %v9239
        %v9241 = vpop.f32.mrf.mxu0
        %9242 = vmatprep.mubr.bf16.mxu0 0
        %9243 = vmatmul.mubr.bf16.gmra.mxu0 %v8668
        %v9244 = vpop.f32.mrf.mxu0
        %v9245 = vadd.f32 %v8768, %v9244
        %v9246 = vpop.f32.mrf.mxu0
        %v9247 = vpop.f32.mrf.mxu0
        %v9248 = vadd.f32 %v8768, %v9247
        %v9249 = vpop.f32.mrf.mxu0
        %9250 = vmatprep.mubr.bf16.mxu0 0
        %9251 = vmatmul.mubr.bf16.gmra.mxu0 %v8669
        %v9252 = vpop.f32.mrf.mxu0
        %v9253 = vadd.f32 %v8768, %v9252
        %v9254 = vpop.f32.mrf.mxu0
        %v9255 = vpop.f32.mrf.mxu0
        %v9256 = vadd.f32 %v8768, %v9255
        %v9257 = vpop.f32.mrf.mxu0
        %9258 = vmatprep.mubr.bf16.mxu0 0
        %9259 = vmatmul.mubr.bf16.gmra.mxu0 %v8670
        %v9260 = vpop.f32.mrf.mxu0
        %v9261 = vadd.f32 %v8768, %v9260
        %v9262 = vpop.f32.mrf.mxu0
        %v9263 = vpop.f32.mrf.mxu0
        %v9264 = vadd.f32 %v8768, %v9263
        %v9265 = vpop.f32.mrf.mxu0
        %9266 = vmatprep.mubr.bf16.mxu0 0
        %9267 = vmatmul.mubr.bf16.gmra.mxu0 %v8671
        %v9268 = vpop.f32.mrf.mxu0
        %v9269 = vadd.f32 %v8768, %v9268
        %v9270 = vpop.f32.mrf.mxu0
        %v9271 = vpop.f32.mrf.mxu0
        %v9272 = vadd.f32 %v8768, %v9271
        %v9273 = vpop.f32.mrf.mxu0
        %9274 = vmatprep.mubr.bf16.mxu0 0
        %9275 = vmatmul.mubr.bf16.gmra.mxu0 %v8672
        %v9276 = vpop.f32.mrf.mxu0
        %v9277 = vadd.f32 %v8768, %v9276
        %v9278 = vpop.f32.mrf.mxu0
        %v9279 = vpop.f32.mrf.mxu0
        %v9280 = vadd.f32 %v8768, %v9279
        %v9281 = vpop.f32.mrf.mxu0
        %9282 = vmatprep.mubr.bf16.mxu0 0
        %9283 = vmatmul.mubr.bf16.gmra.mxu0 %v8673
        %v9284 = vpop.f32.mrf.mxu0
        %v9285 = vadd.f32 %v8768, %v9284
        %v9286 = vpop.f32.mrf.mxu0
        %v9287 = vpop.f32.mrf.mxu0
        %v9288 = vadd.f32 %v8768, %v9287
        %v9289 = vpop.f32.mrf.mxu0
        %9290 = vmatprep.mubr.bf16.mxu0 0
        %9291 = vmatmul.mubr.bf16.gmra.mxu0 %v8674
        %v9292 = vpop.f32.mrf.mxu0
        %v9293 = vadd.f32 %v8768, %v9292
        %v9294 = vpop.f32.mrf.mxu0
        %v9295 = vpop.f32.mrf.mxu0
        %v9296 = vadd.f32 %v8768, %v9295
        %v9297 = vpop.f32.mrf.mxu0
        %9298 = vmatprep.mubr.bf16.mxu0 0
        %9299 = vmatmul.mubr.bf16.gmra.mxu0 %v8675
        %v9300 = vpop.f32.mrf.mxu0
        %v9301 = vadd.f32 %v8768, %v9300
        %v9302 = vpop.f32.mrf.mxu0
        %v9303 = vpop.f32.mrf.mxu0
        %v9304 = vadd.f32 %v8768, %v9303
        %v9305 = vpop.f32.mrf.mxu0
        %9306 = vmatprep.mubr.bf16.mxu0 0
        %9307 = vmatmul.mubr.bf16.gmra.mxu0 %v8676
        %v9308 = vpop.f32.mrf.mxu0
        %v9309 = vadd.f32 %v8768, %v9308
        %v9310 = vpop.f32.mrf.mxu0
        %v9311 = vpop.f32.mrf.mxu0
        %v9312 = vadd.f32 %v8768, %v9311
        %v9313 = vpop.f32.mrf.mxu0
        %9314 = vmatprep.mubr.bf16.mxu0 0
        %9315 = vmatmul.mubr.bf16.gmra.mxu0 %v8677
        %v9316 = vpop.f32.mrf.mxu0
        %v9317 = vadd.f32 %v8768, %v9316
        %v9318 = vpop.f32.mrf.mxu0
        %v9319 = vpop.f32.mrf.mxu0
        %v9320 = vadd.f32 %v8768, %v9319
        %v9321 = vpop.f32.mrf.mxu0
        %9322 = vmatprep.mubr.bf16.mxu0 0
        %9323 = vmatmul.mubr.bf16.gmra.mxu0 %v8678
        %v9324 = vpop.f32.mrf.mxu0
        %v9325 = vadd.f32 %v8768, %v9324
        %v9326 = vpop.f32.mrf.mxu0
        %v9327 = vpop.f32.mrf.mxu0
        %v9328 = vadd.f32 %v8768, %v9327
        %v9329 = vpop.f32.mrf.mxu0
        %9330 = vmatprep.mubr.bf16.mxu0 0
        %9331 = vmatmul.mubr.bf16.gmra.mxu0 %v8679
        %v9332 = vpop.f32.mrf.mxu0
        %v9333 = vadd.f32 %v8768, %v9332
        %v9334 = vpop.f32.mrf.mxu0
        %v9335 = vpop.f32.mrf.mxu0
        %v9336 = vadd.f32 %v8768, %v9335
        %v9337 = vpop.f32.mrf.mxu0
        %9338 = vmatprep.mubr.bf16.mxu0 0
        %9339 = vmatmul.mubr.bf16.gmra.mxu0 %v8680
        %v9340 = vpop.f32.mrf.mxu0
        %v9341 = vadd.f32 %v8768, %v9340
        %v9342 = vpop.f32.mrf.mxu0
        %v9343 = vpop.f32.mrf.mxu0
        %v9344 = vadd.f32 %v8768, %v9343
        %v9345 = vpop.f32.mrf.mxu0
        %9346 = vmatprep.mubr.bf16.mxu0 0
        %9347 = vmatmul.mubr.bf16.gmra.mxu0 %v8681
        %v9348 = vpop.f32.mrf.mxu0
        %v9349 = vadd.f32 %v8768, %v9348
        %v9350 = vpop.f32.mrf.mxu0
        %v9351 = vpop.f32.mrf.mxu0
        %v9352 = vadd.f32 %v8768, %v9351
        %v9353 = vpop.f32.mrf.mxu0
        %9354 = vmatprep.mubr.bf16.mxu0 0
        %9355 = vmatmul.mubr.bf16.gmra.mxu0 %v8682
        %v9356 = vpop.f32.mrf.mxu0
        %v9357 = vadd.f32 %v8768, %v9356
        %v9358 = vpop.f32.mrf.mxu0
        %v9359 = vpop.f32.mrf.mxu0
        %v9360 = vadd.f32 %v8768, %v9359
        %v9361 = vpop.f32.mrf.mxu0
        %9362 = vmatprep.mubr.bf16.mxu0 0
        %9363 = vmatmul.mubr.bf16.gmra.mxu0 %v8683
        %v9364 = vpop.f32.mrf.mxu0
        %v9365 = vadd.f32 %v8768, %v9364
        %v9366 = vpop.f32.mrf.mxu0
        %v9367 = vpop.f32.mrf.mxu0
        %v9368 = vadd.f32 %v8768, %v9367
        %v9369 = vpop.f32.mrf.mxu0
        %9370 = vmatprep.mubr.bf16.mxu0 0
        %9371 = vmatmul.mubr.bf16.gmra.mxu0 %v8684
        %v9372 = vpop.f32.mrf.mxu0
        %v9373 = vadd.f32 %v8768, %v9372
        %v9374 = vpop.f32.mrf.mxu0
        %v9375 = vpop.f32.mrf.mxu0
        %v9376 = vadd.f32 %v8768, %v9375
        %v9377 = vpop.f32.mrf.mxu0
        %9378 = vmatprep.mubr.bf16.mxu0 0
        %9379 = vmatmul.mubr.bf16.gmra.mxu0 %v8685
        %v9380 = vpop.f32.mrf.mxu0
        %v9381 = vadd.f32 %v8768, %v9380
        %v9382 = vpop.f32.mrf.mxu0
        %v9383 = vpop.f32.mrf.mxu0
        %v9384 = vadd.f32 %v8768, %v9383
        %v9385 = vpop.f32.mrf.mxu0
        %9386 = vmatprep.mubr.bf16.mxu0 0
        %9387 = vmatmul.mubr.bf16.gmra.mxu0 %v8686
        %v9388 = vpop.f32.mrf.mxu0
        %v9389 = vadd.f32 %v8768, %v9388
        %v9390 = vpop.f32.mrf.mxu0
        %v9391 = vpop.f32.mrf.mxu0
        %v9392 = vadd.f32 %v8768, %v9391
        %v9393 = vpop.f32.mrf.mxu0
        %9394 = vmatprep.mubr.bf16.mxu0 0
        %9395 = vmatmul.mubr.bf16.gmra.mxu0 %v8687
        %v9396 = vpop.f32.mrf.mxu0
        %v9397 = vadd.f32 %v8768, %v9396
        %v9398 = vpop.f32.mrf.mxu0
        %v9399 = vpop.f32.mrf.mxu0
        %v9400 = vadd.f32 %v8768, %v9399
        %v9401 = vpop.f32.mrf.mxu0
        %9402 = vmatprep.mubr.bf16.mxu0 0
        %9403 = vmatmul.mubr.bf16.gmra.mxu0 %v8688
        %v9404 = vpop.f32.mrf.mxu0
        %v9405 = vadd.f32 %v8768, %v9404
        %v9406 = vpop.f32.mrf.mxu0
        %v9407 = vpop.f32.mrf.mxu0
        %v9408 = vadd.f32 %v8768, %v9407
        %v9409 = vpop.f32.mrf.mxu0
        %9410 = vmatprep.mubr.bf16.mxu0 0
        %9411 = vmatmul.mubr.bf16.gmra.mxu0 %v8689
        %v9412 = vpop.f32.mrf.mxu0
        %v9413 = vadd.f32 %v8768, %v9412
        %v9414 = vpop.f32.mrf.mxu0
        %v9415 = vpop.f32.mrf.mxu0
        %v9416 = vadd.f32 %v8768, %v9415
        %v9417 = vpop.f32.mrf.mxu0
        %9418 = vmatprep.mubr.bf16.mxu0 0
        %9419 = vmatmul.mubr.bf16.gmra.mxu0 %v8690
        %v9420 = vpop.f32.mrf.mxu0
        %v9421 = vadd.f32 %v8768, %v9420
        %v9422 = vpop.f32.mrf.mxu0
        %v9423 = vpop.f32.mrf.mxu0
        %v9424 = vadd.f32 %v8768, %v9423
        %v9425 = vpop.f32.mrf.mxu0
        %9426 = vmatprep.mubr.bf16.mxu0 0
        %9427 = vmatmul.mubr.bf16.gmra.mxu0 %v8691
        %v9428 = vpop.f32.mrf.mxu0
        %v9429 = vadd.f32 %v8768, %v9428
        %v9430 = vpop.f32.mrf.mxu0
        %v9431 = vpop.f32.mrf.mxu0
        %v9432 = vadd.f32 %v8768, %v9431
        %v9433 = vpop.f32.mrf.mxu0
        %9434 = vmatprep.mubr.bf16.mxu0 0
        %9435 = vmatmul.mubr.bf16.gmra.mxu0 %v8692
        %v9436 = vpop.f32.mrf.mxu0
        %v9437 = vadd.f32 %v8768, %v9436
        %v9438 = vpop.f32.mrf.mxu0
        %v9439 = vpop.f32.mrf.mxu0
        %v9440 = vadd.f32 %v8768, %v9439
        %v9441 = vpop.f32.mrf.mxu0
        %9442 = vmatprep.mubr.bf16.mxu0 0
        %9443 = vmatmul.mubr.bf16.gmra.mxu0 %v8693
        %v9444 = vpop.f32.mrf.mxu0
        %v9445 = vadd.f32 %v8768, %v9444
        %v9446 = vpop.f32.mrf.mxu0
        %v9447 = vpop.f32.mrf.mxu0
        %v9448 = vadd.f32 %v8768, %v9447
        %v9449 = vpop.f32.mrf.mxu0
        %9450 = vmatprep.mubr.bf16.mxu0 0
        %9451 = vmatmul.mubr.bf16.gmra.mxu0 %v8694
        %v9452 = vpop.f32.mrf.mxu0
        %v9453 = vadd.f32 %v8768, %v9452
        %v9454 = vpop.f32.mrf.mxu0
        %v9455 = vpop.f32.mrf.mxu0
        %v9456 = vadd.f32 %v8768, %v9455
        %v9457 = vpop.f32.mrf.mxu0
        %9458 = vmatprep.mubr.bf16.mxu0 0
        %9459 = vmatmul.mubr.bf16.gmra.mxu0 %v8695
        %v9460 = vpop.f32.mrf.mxu0
        %v9461 = vadd.f32 %v8768, %v9460
        %v9462 = vpop.f32.mrf.mxu0
        %v9463 = vpop.f32.mrf.mxu0
        %v9464 = vadd.f32 %v8768, %v9463
        %v9465 = vpop.f32.mrf.mxu0
        %9466 = vmatprep.mubr.bf16.mxu0 0
        %9467 = vmatmul.mubr.bf16.gmra.mxu0 %v8696
        %v9468 = vpop.f32.mrf.mxu0
        %v9469 = vadd.f32 %v8768, %v9468
        %v9470 = vpop.f32.mrf.mxu0
        %v9471 = vpop.f32.mrf.mxu0
        %v9472 = vadd.f32 %v8768, %v9471
        %v9473 = vpop.f32.mrf.mxu0
        %9474 = vmatprep.mubr.bf16.mxu0 0
        %9475 = vmatmul.mubr.bf16.gmra.mxu0 %v8697
        %v9476 = vpop.f32.mrf.mxu0
        %v9477 = vadd.f32 %v8768, %v9476
        %v9478 = vpop.f32.mrf.mxu0
        %v9479 = vpop.f32.mrf.mxu0
        %v9480 = vadd.f32 %v8768, %v9479
        %v9481 = vpop.f32.mrf.mxu0
        %9482 = vmatprep.mubr.bf16.mxu0 0
        %9483 = vmatmul.mubr.bf16.gmra.mxu0 %v8698
        %v9484 = vpop.f32.mrf.mxu0
        %v9485 = vadd.f32 %v8768, %v9484
        %v9486 = vpop.f32.mrf.mxu0
        %v9487 = vpop.f32.mrf.mxu0
        %v9488 = vadd.f32 %v8768, %v9487
        %v9489 = vpop.f32.mrf.mxu0
        %9490 = vmatprep.mubr.bf16.mxu0 0
        %9491 = vmatmul.mubr.bf16.gmra.mxu0 %v8699
        %v9492 = vpop.f32.mrf.mxu0
        %v9493 = vadd.f32 %v8768, %v9492
        %v9494 = vpop.f32.mrf.mxu0
        %v9495 = vpop.f32.mrf.mxu0
        %v9496 = vadd.f32 %v8768, %v9495
        %v9497 = vpop.f32.mrf.mxu0
        %9498 = vmatprep.mubr.bf16.mxu0 0
        %9499 = vmatmul.mubr.bf16.gmra.mxu0 %v8700
        %v9500 = vpop.f32.mrf.mxu0
        %v9501 = vadd.f32 %v8768, %v9500
        %v9502 = vpop.f32.mrf.mxu0
        %v9503 = vpop.f32.mrf.mxu0
        %v9504 = vadd.f32 %v8768, %v9503
        %v9505 = vpop.f32.mrf.mxu0
        %9506 = vmatprep.mubr.bf16.mxu0 0
        %9507 = vmatmul.mubr.bf16.gmra.mxu0 %v8701
        %v9508 = vpop.f32.mrf.mxu0
        %v9509 = vadd.f32 %v8768, %v9508
        %v9510 = vpop.f32.mrf.mxu0
        %v9511 = vpop.f32.mrf.mxu0
        %v9512 = vadd.f32 %v8768, %v9511
        %v9513 = vpop.f32.mrf.mxu0
        %9514 = vmatprep.mubr.bf16.mxu0 0
        %9515 = vmatmul.mubr.bf16.gmra.mxu0 %v8702
        %v9516 = vpop.f32.mrf.mxu0
        %v9517 = vadd.f32 %v8768, %v9516
        %v9518 = vpop.f32.mrf.mxu0
        %v9519 = vpop.f32.mrf.mxu0
        %v9520 = vadd.f32 %v8768, %v9519
        %v9521 = vpop.f32.mrf.mxu0
        %9522 = vmatprep.mubr.bf16.mxu0 0
        %9523 = vmatmul.mubr.bf16.gmra.mxu0 %v8703
        %v9524 = vpop.f32.mrf.mxu0
        %v9525 = vadd.f32 %v8768, %v9524
        %v9526 = vpop.f32.mrf.mxu0
        %v9527 = vpop.f32.mrf.mxu0
        %v9528 = vadd.f32 %v8768, %v9527
        %v9529 = vpop.f32.mrf.mxu0
        %9530 = vmatprep.mubr.bf16.mxu0 0
        %9531 = vmatmul.mubr.bf16.gmra.mxu0 %v8704
        %v9532 = vpop.f32.mrf.mxu0
        %v9533 = vadd.f32 %v8768, %v9532
        %v9534 = vpop.f32.mrf.mxu0
        %v9535 = vpop.f32.mrf.mxu0
        %v9536 = vadd.f32 %v8768, %v9535
        %v9537 = vpop.f32.mrf.mxu0
        %9538 = vmatprep.mubr.bf16.mxu0 0
        %9539 = vmatmul.mubr.bf16.gmra.mxu0 %v8705
        %v9540 = vpop.f32.mrf.mxu0
        %v9541 = vadd.f32 %v8768, %v9540
        %v9542 = vpop.f32.mrf.mxu0
        %v9543 = vpop.f32.mrf.mxu0
        %v9544 = vadd.f32 %v8768, %v9543
        %v9545 = vpop.f32.mrf.mxu0
        %9546 = vmatprep.mubr.bf16.mxu0 0
        %9547 = vmatmul.mubr.bf16.gmra.mxu0 %v8706
        %v9548 = vpop.f32.mrf.mxu0
        %v9549 = vadd.f32 %v8768, %v9548
        %v9550 = vpop.f32.mrf.mxu0
        %v9551 = vpop.f32.mrf.mxu0
        %v9552 = vadd.f32 %v8768, %v9551
        %v9553 = vpop.f32.mrf.mxu0
        %9554 = vmatprep.mubr.bf16.mxu0 0
        %9555 = vmatmul.mubr.bf16.gmra.mxu0 %v8707
        %v9556 = vpop.f32.mrf.mxu0
        %v9557 = vadd.f32 %v8768, %v9556
        %v9558 = vpop.f32.mrf.mxu0
        %v9559 = vpop.f32.mrf.mxu0
        %v9560 = vadd.f32 %v8768, %v9559
        %v9561 = vpop.f32.mrf.mxu0
        %9562 = vmatprep.mubr.bf16.mxu0 0
        %9563 = vmatmul.mubr.bf16.gmra.mxu0 %v8708
        %v9564 = vpop.f32.mrf.mxu0
        %v9565 = vadd.f32 %v8768, %v9564
        %v9566 = vpop.f32.mrf.mxu0
        %v9567 = vpop.f32.mrf.mxu0
        %v9568 = vadd.f32 %v8768, %v9567
        %v9569 = vpop.f32.mrf.mxu0
        %9570 = vmatprep.mubr.bf16.mxu0 0
        %9571 = vmatmul.mubr.bf16.gmra.mxu0 %v8709
        %v9572 = vpop.f32.mrf.mxu0
        %v9573 = vadd.f32 %v8768, %v9572
        %v9574 = vpop.f32.mrf.mxu0
        %v9575 = vpop.f32.mrf.mxu0
        %v9576 = vadd.f32 %v8768, %v9575
        %v9577 = vpop.f32.mrf.mxu0
        %9578 = vmatprep.mubr.bf16.mxu0 0
        %9579 = vmatmul.mubr.bf16.gmra.mxu0 %v8710
        %v9580 = vpop.f32.mrf.mxu0
        %v9581 = vadd.f32 %v8768, %v9580
        %v9582 = vpop.f32.mrf.mxu0
        %v9583 = vpop.f32.mrf.mxu0
        %v9584 = vadd.f32 %v8768, %v9583
        %v9585 = vpop.f32.mrf.mxu0
        %9586 = vmatprep.mubr.bf16.mxu0 0
        %9587 = vmatmul.mubr.bf16.gmra.mxu0 %v8711
        %v9588 = vpop.f32.mrf.mxu0
        %v9589 = vadd.f32 %v8768, %v9588
        %v9590 = vpop.f32.mrf.mxu0
        %v9591 = vpop.f32.mrf.mxu0
        %v9592 = vadd.f32 %v8768, %v9591
        %v9593 = vpop.f32.mrf.mxu0
        %9594 = vmatprep.mubr.bf16.mxu0 0
        %9595 = vmatmul.mubr.bf16.gmra.mxu0 %v8712
        %v9596 = vpop.f32.mrf.mxu0
        %v9597 = vadd.f32 %v8768, %v9596
        %v9598 = vpop.f32.mrf.mxu0
        %v9599 = vpop.f32.mrf.mxu0
        %v9600 = vadd.f32 %v8768, %v9599
        %v9601 = vpop.f32.mrf.mxu0
        %9602 = vmatprep.mubr.bf16.mxu0 0
        %9603 = vmatmul.mubr.bf16.gmra.mxu0 %v8713
        %v9604 = vpop.f32.mrf.mxu0
        %v9605 = vadd.f32 %v8768, %v9604
        %v9606 = vpop.f32.mrf.mxu0
        %v9607 = vpop.f32.mrf.mxu0
        %v9608 = vadd.f32 %v8768, %v9607
        %v9609 = vpop.f32.mrf.mxu0
        %9610 = vmatprep.mubr.bf16.mxu0 0
        %9611 = vmatmul.mubr.bf16.gmra.mxu0 %v8714
        %v9612 = vpop.f32.mrf.mxu0
        %v9613 = vadd.f32 %v8768, %v9612
        %v9614 = vpop.f32.mrf.mxu0
        %v9615 = vpop.f32.mrf.mxu0
        %v9616 = vadd.f32 %v8768, %v9615
        %v9617 = vpop.f32.mrf.mxu0
        %9618 = vmatprep.mubr.bf16.mxu0 0
        %9619 = vmatmul.mubr.bf16.gmra.mxu0 %v8715
        %v9620 = vpop.f32.mrf.mxu0
        %v9621 = vadd.f32 %v8768, %v9620
        %v9622 = vpop.f32.mrf.mxu0
        %v9623 = vpop.f32.mrf.mxu0
        %v9624 = vadd.f32 %v8768, %v9623
        %v9625 = vpop.f32.mrf.mxu0
        %9626 = vmatprep.mubr.bf16.mxu0 0
        %9627 = vmatmul.mubr.bf16.gmra.mxu0 %v8716
        %v9628 = vpop.f32.mrf.mxu0
        %v9629 = vadd.f32 %v8768, %v9628
        %v9630 = vpop.f32.mrf.mxu0
        %v9631 = vpop.f32.mrf.mxu0
        %v9632 = vadd.f32 %v8768, %v9631
        %v9633 = vpop.f32.mrf.mxu0
        %9634 = vmatprep.mubr.bf16.mxu0 0
        %9635 = vmatmul.mubr.bf16.gmra.mxu0 %v8717
        %v9636 = vpop.f32.mrf.mxu0
        %v9637 = vadd.f32 %v8768, %v9636
        %v9638 = vpop.f32.mrf.mxu0
        %v9639 = vpop.f32.mrf.mxu0
        %v9640 = vadd.f32 %v8768, %v9639
        %v9641 = vpop.f32.mrf.mxu0
        %9642 = vmatprep.mubr.bf16.mxu0 0
        %9643 = vmatmul.mubr.bf16.gmra.mxu0 %v8718
        %v9644 = vpop.f32.mrf.mxu0
        %v9645 = vadd.f32 %v8768, %v9644
        %v9646 = vpop.f32.mrf.mxu0
        %v9647 = vpop.f32.mrf.mxu0
        %v9648 = vadd.f32 %v8768, %v9647
        %v9649 = vpop.f32.mrf.mxu0
        %9650 = vmatprep.mubr.bf16.mxu0 0
        %9651 = vmatmul.mubr.bf16.gmra.mxu0 %v8719
        %v9652 = vpop.f32.mrf.mxu0
        %v9653 = vadd.f32 %v8768, %v9652
        %v9654 = vpop.f32.mrf.mxu0
        %v9655 = vpop.f32.mrf.mxu0
        %v9656 = vadd.f32 %v8768, %v9655
        %v9657 = vpop.f32.mrf.mxu0
        %9658 = vmatprep.mubr.bf16.mxu0 0
        %9659 = vmatmul.mubr.bf16.gmra.mxu0 %v8720
        %v9660 = vpop.f32.mrf.mxu0
        %v9661 = vadd.f32 %v8768, %v9660
        %v9662 = vpop.f32.mrf.mxu0
        %v9663 = vpop.f32.mrf.mxu0
        %v9664 = vadd.f32 %v8768, %v9663
        %v9665 = vpop.f32.mrf.mxu0
        %9666 = vmatprep.mubr.bf16.mxu0 0
        %9667 = vmatmul.mubr.bf16.gmra.mxu0 %v8721
        %v9668 = vpop.f32.mrf.mxu0
        %v9669 = vadd.f32 %v8768, %v9668
        %v9670 = vpop.f32.mrf.mxu0
        %v9671 = vpop.f32.mrf.mxu0
        %v9672 = vadd.f32 %v8768, %v9671
        %v9673 = vpop.f32.mrf.mxu0
        %9674 = vmatprep.mubr.bf16.mxu0 0
        %9675 = vmatmul.mubr.bf16.gmra.mxu0 %v8722
        %v9676 = vpop.f32.mrf.mxu0
        %v9677 = vadd.f32 %v8768, %v9676
        %v9678 = vpop.f32.mrf.mxu0
        %v9679 = vpop.f32.mrf.mxu0
        %v9680 = vadd.f32 %v8768, %v9679
        %v9681 = vpop.f32.mrf.mxu0
        %9682 = vmatprep.mubr.bf16.mxu0 0
        %9683 = vmatmul.mubr.bf16.gmra.mxu0 %v8723
        %v9684 = vpop.f32.mrf.mxu0
        %v9685 = vadd.f32 %v8768, %v9684
        %v9686 = vpop.f32.mrf.mxu0
        %v9687 = vpop.f32.mrf.mxu0
        %v9688 = vadd.f32 %v8768, %v9687
        %v9689 = vpop.f32.mrf.mxu0
        %9690 = vmatprep.mubr.bf16.mxu0 0
        %9691 = vmatmul.mubr.bf16.gmra.mxu0 %v8724
        %v9692 = vpop.f32.mrf.mxu0
        %v9693 = vadd.f32 %v8768, %v9692
        %v9694 = vpop.f32.mrf.mxu0
        %v9695 = vpop.f32.mrf.mxu0
        %v9696 = vadd.f32 %v8768, %v9695
        %v9697 = vpop.f32.mrf.mxu0
        %9698 = vmatprep.mubr.bf16.mxu0 0
        %9699 = vmatmul.mubr.bf16.gmra.mxu0 %v8725
        %v9700 = vpop.f32.mrf.mxu0
        %v9701 = vadd.f32 %v8768, %v9700
        %v9702 = vpop.f32.mrf.mxu0
        %v9703 = vpop.f32.mrf.mxu0
        %v9704 = vadd.f32 %v8768, %v9703
        %v9705 = vpop.f32.mrf.mxu0
        %9706 = vmatprep.mubr.bf16.mxu0 0
        %9707 = vmatmul.mubr.bf16.gmra.mxu0 %v8726
        %v9708 = vpop.f32.mrf.mxu0
        %v9709 = vadd.f32 %v8768, %v9708
        %v9710 = vpop.f32.mrf.mxu0
        %v9711 = vpop.f32.mrf.mxu0
        %v9712 = vadd.f32 %v8768, %v9711
        %v9713 = vpop.f32.mrf.mxu0
        %9714 = vmatprep.mubr.bf16.mxu0 0
        %9715 = vmatmul.mubr.bf16.gmra.mxu0 %v8727
        %v9716 = vpop.f32.mrf.mxu0
        %v9717 = vadd.f32 %v8768, %v9716
        %v9718 = vpop.f32.mrf.mxu0
        %v9719 = vpop.f32.mrf.mxu0
        %v9720 = vadd.f32 %v8768, %v9719
        %v9721 = vpop.f32.mrf.mxu0
        %9722 = vmatprep.mubr.bf16.mxu0 0
        %9723 = vmatmul.mubr.bf16.gmra.mxu0 %v8728
        %v9724 = vpop.f32.mrf.mxu0
        %v9725 = vadd.f32 %v8768, %v9724
        %v9726 = vpop.f32.mrf.mxu0
        %v9727 = vpop.f32.mrf.mxu0
        %v9728 = vadd.f32 %v8768, %v9727
        %v9729 = vpop.f32.mrf.mxu0
        %9730 = vmatprep.mubr.bf16.mxu0 0
        %9731 = vmatmul.mubr.bf16.gmra.mxu0 %v8729
        %v9732 = vpop.f32.mrf.mxu0
        %v9733 = vadd.f32 %v8768, %v9732
        %v9734 = vpop.f32.mrf.mxu0
        %v9735 = vpop.f32.mrf.mxu0
        %v9736 = vadd.f32 %v8768, %v9735
        %v9737 = vpop.f32.mrf.mxu0
        %9738 = vmatprep.mubr.bf16.mxu0 0
        %9739 = vmatmul.mubr.bf16.gmra.mxu0 %v8730
        %v9740 = vpop.f32.mrf.mxu0
        %v9741 = vadd.f32 %v8768, %v9740
        %v9742 = vpop.f32.mrf.mxu0
        %v9743 = vpop.f32.mrf.mxu0
        %v9744 = vadd.f32 %v8768, %v9743
        %v9745 = vpop.f32.mrf.mxu0
        %9746 = vmatprep.mubr.bf16.mxu0 0
        %9747 = vmatmul.mubr.bf16.gmra.mxu0 %v8731
        %v9748 = vpop.f32.mrf.mxu0
        %v9749 = vadd.f32 %v8768, %v9748
        %v9750 = vpop.f32.mrf.mxu0
        %v9751 = vpop.f32.mrf.mxu0
        %v9752 = vadd.f32 %v8768, %v9751
        %v9753 = vpop.f32.mrf.mxu0
        %9754 = vmatprep.mubr.bf16.mxu0 0
        %9755 = vmatmul.mubr.bf16.gmra.mxu0 %v8732
        %v9756 = vpop.f32.mrf.mxu0
        %v9757 = vadd.f32 %v8768, %v9756
        %v9758 = vpop.f32.mrf.mxu0
        %v9759 = vpop.f32.mrf.mxu0
        %v9760 = vadd.f32 %v8768, %v9759
        %v9761 = vpop.f32.mrf.mxu0
        %9762 = vmatprep.mubr.bf16.mxu0 0
        %9763 = vmatmul.mubr.bf16.gmra.mxu0 %v8733
        %v9764 = vpop.f32.mrf.mxu0
        %v9765 = vadd.f32 %v8768, %v9764
        %v9766 = vpop.f32.mrf.mxu0
        %v9767 = vpop.f32.mrf.mxu0
        %v9768 = vadd.f32 %v8768, %v9767
        %v9769 = vpop.f32.mrf.mxu0
        %9770 = vmatprep.mubr.bf16.mxu0 0
        %9771 = vmatmul.mubr.bf16.gmra.mxu0 %v8734
        %v9772 = vpop.f32.mrf.mxu0
        %v9773 = vadd.f32 %v8768, %v9772
        %v9774 = vpop.f32.mrf.mxu0
        %v9775 = vpop.f32.mrf.mxu0
        %v9776 = vadd.f32 %v8768, %v9775
        %v9777 = vpop.f32.mrf.mxu0
        %9778 = vmatprep.mubr.bf16.mxu0 0
        %9779 = vmatmul.mubr.bf16.gmra.mxu0 %v8735
        %v9780 = vpop.f32.mrf.mxu0
        %v9781 = vadd.f32 %v8768, %v9780
        %v9782 = vpop.f32.mrf.mxu0
        %v9783 = vpop.f32.mrf.mxu0
        %v9784 = vadd.f32 %v8768, %v9783
        %v9785 = vpop.f32.mrf.mxu0
        %9786 = vmatprep.mubr.bf16.mxu0 0
        %9787 = vmatmul.mubr.bf16.gmra.mxu0 %v8736
        %v9788 = vpop.f32.mrf.mxu0
        %v9789 = vadd.f32 %v8768, %v9788
        %v9790 = vpop.f32.mrf.mxu0
        %v9791 = vpop.f32.mrf.mxu0
        %v9792 = vadd.f32 %v8768, %v9791
        %v9793 = vpop.f32.mrf.mxu0
        %9794 = vmatprep.mubr.bf16.mxu0 0
        %9795 = vmatmul.mubr.bf16.gmra.mxu0 %v8737
        %v9796 = vpop.f32.mrf.mxu0
        %v9797 = vadd.f32 %v8768, %v9796
        %v9798 = vpop.f32.mrf.mxu0
        %v9799 = vpop.f32.mrf.mxu0
        %v9800 = vadd.f32 %v8768, %v9799
        %v9801 = vpop.f32.mrf.mxu0
        %9802 = vmatprep.mubr.bf16.mxu0 0
        %9803 = vmatmul.mubr.bf16.gmra.mxu0 %v8738
        %v9804 = vpop.f32.mrf.mxu0
        %v9805 = vadd.f32 %v8768, %v9804
        %v9806 = vpop.f32.mrf.mxu0
        %v9807 = vpop.f32.mrf.mxu0
        %v9808 = vadd.f32 %v8768, %v9807
        %v9809 = vpop.f32.mrf.mxu0
        %9810 = vmatprep.mubr.bf16.mxu0 0
        %9811 = vmatmul.mubr.bf16.gmra.mxu0 %v8739
        %v9812 = vpop.f32.mrf.mxu0
        %v9813 = vadd.f32 %v8768, %v9812
        %v9814 = vpop.f32.mrf.mxu0
        %v9815 = vpop.f32.mrf.mxu0
        %v9816 = vadd.f32 %v8768, %v9815
        %v9817 = vpop.f32.mrf.mxu0
        %9818 = vmatprep.mubr.bf16.mxu0 0
        %9819 = vmatmul.mubr.bf16.gmra.mxu0 %v8740
        %v9820 = vpop.f32.mrf.mxu0
        %v9821 = vadd.f32 %v8768, %v9820
        %v9822 = vpop.f32.mrf.mxu0
        %v9823 = vpop.f32.mrf.mxu0
        %v9824 = vadd.f32 %v8768, %v9823
        %v9825 = vpop.f32.mrf.mxu0
        %9826 = vmatprep.mubr.bf16.mxu0 0
        %9827 = vmatmul.mubr.bf16.gmra.mxu0 %v8741
        %v9828 = vpop.f32.mrf.mxu0
        %v9829 = vadd.f32 %v8768, %v9828
        %v9830 = vpop.f32.mrf.mxu0
        %v9831 = vpop.f32.mrf.mxu0
        %v9832 = vadd.f32 %v8768, %v9831
        %v9833 = vpop.f32.mrf.mxu0
        %9834 = vmatprep.mubr.bf16.mxu0 0
        %9835 = vmatmul.mubr.bf16.gmra.mxu0 %v8742
        %v9836 = vpop.f32.mrf.mxu0
        %v9837 = vadd.f32 %v8768, %v9836
        %v9838 = vpop.f32.mrf.mxu0
        %v9839 = vpop.f32.mrf.mxu0
        %v9840 = vadd.f32 %v8768, %v9839
        %v9841 = vpop.f32.mrf.mxu0
        %9842 = vmatprep.mubr.bf16.mxu0 0
        %9843 = vmatmul.mubr.bf16.gmra.mxu0 %v8743
        %v9844 = vpop.f32.mrf.mxu0
        %v9845 = vadd.f32 %v8768, %v9844
        %v9846 = vpop.f32.mrf.mxu0
        %v9847 = vpop.f32.mrf.mxu0
        %v9848 = vadd.f32 %v8768, %v9847
        %v9849 = vpop.f32.mrf.mxu0
        %9850 = vmatprep.mubr.bf16.mxu0 0
        %9851 = vmatmul.mubr.bf16.gmra.mxu0 %v8744
        %v9852 = vpop.f32.mrf.mxu0
        %v9853 = vadd.f32 %v8768, %v9852
        %v9854 = vpop.f32.mrf.mxu0
        %v9855 = vpop.f32.mrf.mxu0
        %v9856 = vadd.f32 %v8768, %v9855
        %v9857 = vpop.f32.mrf.mxu0
        %9858 = vmatprep.mubr.bf16.mxu0 0
        %9859 = vmatmul.mubr.bf16.gmra.mxu0 %v8745
        %v9860 = vpop.f32.mrf.mxu0
        %v9861 = vadd.f32 %v8768, %v9860
        %v9862 = vpop.f32.mrf.mxu0
        %v9863 = vpop.f32.mrf.mxu0
        %v9864 = vadd.f32 %v8768, %v9863
        %v9865 = vpop.f32.mrf.mxu0
        %9866 = vmatprep.mubr.bf16.mxu0 0
        %9867 = vmatmul.mubr.bf16.gmra.mxu0 %v8746
        %v9868 = vpop.f32.mrf.mxu0
        %v9869 = vadd.f32 %v8768, %v9868
        %v9870 = vpop.f32.mrf.mxu0
        %v9871 = vpop.f32.mrf.mxu0
        %v9872 = vadd.f32 %v8768, %v9871
        %v9873 = vpop.f32.mrf.mxu0
        %9874 = vdwg.mxu0
        %v9875 = vmax.f32 %v8853, 0.0
        %v9876 = vmax.f32 %v8856, 0.0
        %v9877 = vmax.f32 %v8861, 0.0
        %v9878 = vmax.f32 %v8864, 0.0
        %v9879 = vmax.f32 %v8869, 0.0
        %v9880 = vmax.f32 %v8872, 0.0
        %v9881 = vmax.f32 %v8877, 0.0
        %v9882 = vmax.f32 %v8880, 0.0
        %v9883 = vmax.f32 %v8885, 0.0
        %v9884 = vmax.f32 %v8888, 0.0
        %v9885 = vmax.f32 %v8893, 0.0
        %v9886 = vmax.f32 %v8896, 0.0
        %v9887 = vmax.f32 %v8901, 0.0
        %v9888 = vmax.f32 %v8904, 0.0
        %v9889 = vmax.f32 %v8909, 0.0
        %v9890 = vmax.f32 %v8912, 0.0
        %v9891 = vmax.f32 %v8917, 0.0
        %v9892 = vmax.f32 %v8920, 0.0
        %v9893 = vmax.f32 %v8925, 0.0
        %v9894 = vmax.f32 %v8928, 0.0
        %v9895 = vmax.f32 %v8933, 0.0
        %v9896 = vmax.f32 %v8936, 0.0
        %v9897 = vmax.f32 %v8941, 0.0
        %v9898 = vmax.f32 %v8944, 0.0
        %v9899 = vmax.f32 %v8949, 0.0
        %v9900 = vmax.f32 %v8952, 0.0
        %v9901 = vmax.f32 %v8957, 0.0
        %v9902 = vmax.f32 %v8960, 0.0
        %v9903 = vmax.f32 %v8965, 0.0
        %v9904 = vmax.f32 %v8968, 0.0
        %v9905 = vmax.f32 %v8973, 0.0
        %v9906 = vmax.f32 %v8976, 0.0
        %v9907 = vmax.f32 %v8981, 0.0
        %v9908 = vmax.f32 %v8984, 0.0
        %v9909 = vmax.f32 %v8989, 0.0
        %v9910 = vmax.f32 %v8992, 0.0
        %v9911 = vmax.f32 %v8997, 0.0
        %v9912 = vmax.f32 %v9000, 0.0
        %v9913 = vmax.f32 %v9005, 0.0
        %v9914 = vmax.f32 %v9008, 0.0
        %v9915 = vmax.f32 %v9013, 0.0
        %v9916 = vmax.f32 %v9016, 0.0
        %v9917 = vmax.f32 %v9021, 0.0
        %v9918 = vmax.f32 %v9024, 0.0
        %v9919 = vmax.f32 %v9029, 0.0
        %v9920 = vmax.f32 %v9032, 0.0
        %v9921 = vmax.f32 %v9037, 0.0
        %v9922 = vmax.f32 %v9040, 0.0
        %v9923 = vmax.f32 %v9045, 0.0
        %v9924 = vmax.f32 %v9048, 0.0
        %v9925 = vmax.f32 %v9053, 0.0
        %v9926 = vmax.f32 %v9056, 0.0
        %v9927 = vmax.f32 %v9061, 0.0
        %v9928 = vmax.f32 %v9064, 0.0
        %v9929 = vmax.f32 %v9069, 0.0
        %v9930 = vmax.f32 %v9072, 0.0
        %v9931 = vmax.f32 %v9077, 0.0
        %v9932 = vmax.f32 %v9080, 0.0
        %v9933 = vmax.f32 %v9085, 0.0
        %v9934 = vmax.f32 %v9088, 0.0
        %v9935 = vmax.f32 %v9093, 0.0
        %v9936 = vmax.f32 %v9096, 0.0
        %v9937 = vmax.f32 %v9101, 0.0
        %v9938 = vmax.f32 %v9104, 0.0
        %v9939 = vmax.f32 %v9109, 0.0
        %v9940 = vmax.f32 %v9112, 0.0
        %v9941 = vmax.f32 %v9117, 0.0
        %v9942 = vmax.f32 %v9120, 0.0
        %v9943 = vmax.f32 %v9125, 0.0
        %v9944 = vmax.f32 %v9128, 0.0
        %v9945 = vmax.f32 %v9133, 0.0
        %v9946 = vmax.f32 %v9136, 0.0
        %v9947 = vmax.f32 %v9141, 0.0
        %v9948 = vmax.f32 %v9144, 0.0
        %v9949 = vmax.f32 %v9149, 0.0
        %v9950 = vmax.f32 %v9152, 0.0
        %v9951 = vmax.f32 %v9157, 0.0
        %v9952 = vmax.f32 %v9160, 0.0
        %v9953 = vmax.f32 %v9165, 0.0
        %v9954 = vmax.f32 %v9168, 0.0
        %v9955 = vmax.f32 %v9173, 0.0
        %v9956 = vmax.f32 %v9176, 0.0
        %v9957 = vmax.f32 %v9181, 0.0
        %v9958 = vmax.f32 %v9184, 0.0
        %v9959 = vmax.f32 %v9189, 0.0
        %v9960 = vmax.f32 %v9192, 0.0
        %v9961 = vmax.f32 %v9197, 0.0
        %v9962 = vmax.f32 %v9200, 0.0
        %v9963 = vmax.f32 %v9205, 0.0
        %v9964 = vmax.f32 %v9208, 0.0
        %v9965 = vmax.f32 %v9213, 0.0
        %v9966 = vmax.f32 %v9216, 0.0
        %v9967 = vmax.f32 %v9221, 0.0
        %v9968 = vmax.f32 %v9224, 0.0
        %v9969 = vmax.f32 %v9229, 0.0
        %v9970 = vmax.f32 %v9232, 0.0
        %v9971 = vmax.f32 %v9237, 0.0
        %v9972 = vmax.f32 %v9240, 0.0
        %v9973 = vmax.f32 %v9245, 0.0
        %v9974 = vmax.f32 %v9248, 0.0
        %v9975 = vmax.f32 %v9253, 0.0
        %v9976 = vmax.f32 %v9256, 0.0
        %v9977 = vmax.f32 %v9261, 0.0
        %v9978 = vmax.f32 %v9264, 0.0
        %v9979 = vmax.f32 %v9269, 0.0
        %v9980 = vmax.f32 %v9272, 0.0
        %v9981 = vmax.f32 %v9277, 0.0
        %v9982 = vmax.f32 %v9280, 0.0
        %v9983 = vmax.f32 %v9285, 0.0
        %v9984 = vmax.f32 %v9288, 0.0
        %v9985 = vmax.f32 %v9293, 0.0
        %v9986 = vmax.f32 %v9296, 0.0
        %v9987 = vmax.f32 %v9301, 0.0
        %v9988 = vmax.f32 %v9304, 0.0
        %v9989 = vmax.f32 %v9309, 0.0
        %v9990 = vmax.f32 %v9312, 0.0
        %v9991 = vmax.f32 %v9317, 0.0
        %v9992 = vmax.f32 %v9320, 0.0
        %v9993 = vmax.f32 %v9325, 0.0
        %v9994 = vmax.f32 %v9328, 0.0
        %v9995 = vmax.f32 %v9333, 0.0
        %v9996 = vmax.f32 %v9336, 0.0
        %v9997 = vmax.f32 %v9341, 0.0
        %v9998 = vmax.f32 %v9344, 0.0
        %v9999 = vmax.f32 %v9349, 0.0
        %v10000 = vmax.f32 %v9352, 0.0
        %v10001 = vmax.f32 %v9357, 0.0
        %v10002 = vmax.f32 %v9360, 0.0
        %v10003 = vmax.f32 %v9365, 0.0
        %v10004 = vmax.f32 %v9368, 0.0
        %v10005 = vmax.f32 %v9373, 0.0
        %v10006 = vmax.f32 %v9376, 0.0
        %v10007 = vmax.f32 %v9381, 0.0
        %v10008 = vmax.f32 %v9384, 0.0
        %v10009 = vmax.f32 %v9389, 0.0
        %v10010 = vmax.f32 %v9392, 0.0
        %v10011 = vmax.f32 %v9397, 0.0
        %v10012 = vmax.f32 %v9400, 0.0
        %v10013 = vmax.f32 %v9405, 0.0
        %v10014 = vmax.f32 %v9408, 0.0
        %v10015 = vmax.f32 %v9413, 0.0
        %v10016 = vmax.f32 %v9416, 0.0
        %v10017 = vmax.f32 %v9421, 0.0
        %v10018 = vmax.f32 %v9424, 0.0
        %v10019 = vmax.f32 %v9429, 0.0
        %v10020 = vmax.f32 %v9432, 0.0
        %v10021 = vmax.f32 %v9437, 0.0
        %v10022 = vmax.f32 %v9440, 0.0
        %v10023 = vmax.f32 %v9445, 0.0
        %v10024 = vmax.f32 %v9448, 0.0
        %v10025 = vmax.f32 %v9453, 0.0
        %v10026 = vmax.f32 %v9456, 0.0
        %v10027 = vmax.f32 %v9461, 0.0
        %v10028 = vmax.f32 %v9464, 0.0
        %v10029 = vmax.f32 %v9469, 0.0
        %v10030 = vmax.f32 %v9472, 0.0
        %v10031 = vmax.f32 %v9477, 0.0
        %v10032 = vmax.f32 %v9480, 0.0
        %v10033 = vmax.f32 %v9485, 0.0
        %v10034 = vmax.f32 %v9488, 0.0
        %v10035 = vmax.f32 %v9493, 0.0
        %v10036 = vmax.f32 %v9496, 0.0
        %v10037 = vmax.f32 %v9501, 0.0
        %v10038 = vmax.f32 %v9504, 0.0
        %v10039 = vmax.f32 %v9509, 0.0
        %v10040 = vmax.f32 %v9512, 0.0
        %v10041 = vmax.f32 %v9517, 0.0
        %v10042 = vmax.f32 %v9520, 0.0
        %v10043 = vmax.f32 %v9525, 0.0
        %v10044 = vmax.f32 %v9528, 0.0
        %v10045 = vmax.f32 %v9533, 0.0
        %v10046 = vmax.f32 %v9536, 0.0
        %v10047 = vmax.f32 %v9541, 0.0
        %v10048 = vmax.f32 %v9544, 0.0
        %v10049 = vmax.f32 %v9549, 0.0
        %v10050 = vmax.f32 %v9552, 0.0
        %v10051 = vmax.f32 %v9557, 0.0
        %v10052 = vmax.f32 %v9560, 0.0
        %v10053 = vmax.f32 %v9565, 0.0
        %v10054 = vmax.f32 %v9568, 0.0
        %v10055 = vmax.f32 %v9573, 0.0
        %v10056 = vmax.f32 %v9576, 0.0
        %v10057 = vmax.f32 %v9581, 0.0
        %v10058 = vmax.f32 %v9584, 0.0
        %v10059 = vmax.f32 %v9589, 0.0
        %v10060 = vmax.f32 %v9592, 0.0
        %v10061 = vmax.f32 %v9597, 0.0
        %v10062 = vmax.f32 %v9600, 0.0
        %v10063 = vmax.f32 %v9605, 0.0
        %v10064 = vmax.f32 %v9608, 0.0
        %v10065 = vmax.f32 %v9613, 0.0
        %v10066 = vmax.f32 %v9616, 0.0
        %v10067 = vmax.f32 %v9621, 0.0
        %v10068 = vmax.f32 %v9624, 0.0
        %v10069 = vmax.f32 %v9629, 0.0
        %v10070 = vmax.f32 %v9632, 0.0
        %v10071 = vmax.f32 %v9637, 0.0
        %v10072 = vmax.f32 %v9640, 0.0
        %v10073 = vmax.f32 %v9645, 0.0
        %v10074 = vmax.f32 %v9648, 0.0
        %v10075 = vmax.f32 %v9653, 0.0
        %v10076 = vmax.f32 %v9656, 0.0
        %v10077 = vmax.f32 %v9661, 0.0
        %v10078 = vmax.f32 %v9664, 0.0
        %v10079 = vmax.f32 %v9669, 0.0
        %v10080 = vmax.f32 %v9672, 0.0
        %v10081 = vmax.f32 %v9677, 0.0
        %v10082 = vmax.f32 %v9680, 0.0
        %v10083 = vmax.f32 %v9685, 0.0
        %v10084 = vmax.f32 %v9688, 0.0
        %v10085 = vmax.f32 %v9693, 0.0
        %v10086 = vmax.f32 %v9696, 0.0
        %v10087 = vmax.f32 %v9701, 0.0
        %v10088 = vmax.f32 %v9704, 0.0
        %v10089 = vmax.f32 %v9709, 0.0
        %v10090 = vmax.f32 %v9712, 0.0
        %v10091 = vmax.f32 %v9717, 0.0
        %v10092 = vmax.f32 %v9720, 0.0
        %v10093 = vmax.f32 %v9725, 0.0
        %v10094 = vmax.f32 %v9728, 0.0
        %v10095 = vmax.f32 %v9733, 0.0
        %v10096 = vmax.f32 %v9736, 0.0
        %v10097 = vmax.f32 %v9741, 0.0
        %v10098 = vmax.f32 %v9744, 0.0
        %v10099 = vmax.f32 %v9749, 0.0
        %v10100 = vmax.f32 %v9752, 0.0
        %v10101 = vmax.f32 %v9757, 0.0
        %v10102 = vmax.f32 %v9760, 0.0
        %v10103 = vmax.f32 %v9765, 0.0
        %v10104 = vmax.f32 %v9768, 0.0
        %v10105 = vmax.f32 %v9773, 0.0
        %v10106 = vmax.f32 %v9776, 0.0
        %v10107 = vmax.f32 %v9781, 0.0
        %v10108 = vmax.f32 %v9784, 0.0
        %v10109 = vmax.f32 %v9789, 0.0
        %v10110 = vmax.f32 %v9792, 0.0
        %v10111 = vmax.f32 %v9797, 0.0
        %v10112 = vmax.f32 %v9800, 0.0
        %v10113 = vmax.f32 %v9805, 0.0
        %v10114 = vmax.f32 %v9808, 0.0
        %v10115 = vmax.f32 %v9813, 0.0
        %v10116 = vmax.f32 %v9816, 0.0
        %v10117 = vmax.f32 %v9821, 0.0
        %v10118 = vmax.f32 %v9824, 0.0
        %v10119 = vmax.f32 %v9829, 0.0
        %v10120 = vmax.f32 %v9832, 0.0
        %v10121 = vmax.f32 %v9837, 0.0
        %v10122 = vmax.f32 %v9840, 0.0
        %v10123 = vmax.f32 %v9845, 0.0
        %v10124 = vmax.f32 %v9848, 0.0
        %v10125 = vmax.f32 %v9853, 0.0
        %v10126 = vmax.f32 %v9856, 0.0
        %v10127 = vmax.f32 %v9861, 0.0
        %v10128 = vmax.f32 %v9864, 0.0
        %v10129 = vmax.f32 %v9869, 0.0
        %v10130 = vmax.f32 %v9872, 0.0
        %v10131 = vpack.c.bf16 %v9876, %v9875
        %v10132 = vpack.c.bf16 %v9878, %v9877
        %v10133 = vpack.c.bf16 %v9880, %v9879
        %v10134 = vpack.c.bf16 %v9882, %v9881
        %v10135 = vpack.c.bf16 %v9884, %v9883
        %v10136 = vpack.c.bf16 %v9886, %v9885
        %v10137 = vpack.c.bf16 %v9888, %v9887
        %v10138 = vpack.c.bf16 %v9890, %v9889
        %v10139 = vpack.c.bf16 %v9892, %v9891
        %v10140 = vpack.c.bf16 %v9894, %v9893
        %v10141 = vpack.c.bf16 %v9896, %v9895
        %v10142 = vpack.c.bf16 %v9898, %v9897
        %v10143 = vpack.c.bf16 %v9900, %v9899
        %v10144 = vpack.c.bf16 %v9902, %v9901
        %v10145 = vpack.c.bf16 %v9904, %v9903
        %v10146 = vpack.c.bf16 %v9906, %v9905
        %v10147 = vpack.c.bf16 %v9908, %v9907
        %v10148 = vpack.c.bf16 %v9910, %v9909
        %v10149 = vpack.c.bf16 %v9912, %v9911
        %v10150 = vpack.c.bf16 %v9914, %v9913
        %v10151 = vpack.c.bf16 %v9916, %v9915
        %v10152 = vpack.c.bf16 %v9918, %v9917
        %v10153 = vpack.c.bf16 %v9920, %v9919
        %v10154 = vpack.c.bf16 %v9922, %v9921
        %v10155 = vpack.c.bf16 %v9924, %v9923
        %v10156 = vpack.c.bf16 %v9926, %v9925
        %v10157 = vpack.c.bf16 %v9928, %v9927
        %v10158 = vpack.c.bf16 %v9930, %v9929
        %v10159 = vpack.c.bf16 %v9932, %v9931
        %v10160 = vpack.c.bf16 %v9934, %v9933
        %v10161 = vpack.c.bf16 %v9936, %v9935
        %v10162 = vpack.c.bf16 %v9938, %v9937
        %v10163 = vpack.c.bf16 %v9940, %v9939
        %v10164 = vpack.c.bf16 %v9942, %v9941
        %v10165 = vpack.c.bf16 %v9944, %v9943
        %v10166 = vpack.c.bf16 %v9946, %v9945
        %v10167 = vpack.c.bf16 %v9948, %v9947
        %v10168 = vpack.c.bf16 %v9950, %v9949
        %v10169 = vpack.c.bf16 %v9952, %v9951
        %v10170 = vpack.c.bf16 %v9954, %v9953
        %v10171 = vpack.c.bf16 %v9956, %v9955
        %v10172 = vpack.c.bf16 %v9958, %v9957
        %v10173 = vpack.c.bf16 %v9960, %v9959
        %v10174 = vpack.c.bf16 %v9962, %v9961
        %v10175 = vpack.c.bf16 %v9964, %v9963
        %v10176 = vpack.c.bf16 %v9966, %v9965
        %v10177 = vpack.c.bf16 %v9968, %v9967
        %v10178 = vpack.c.bf16 %v9970, %v9969
        %v10179 = vpack.c.bf16 %v9972, %v9971
        %v10180 = vpack.c.bf16 %v9974, %v9973
        %v10181 = vpack.c.bf16 %v9976, %v9975
        %v10182 = vpack.c.bf16 %v9978, %v9977
        %v10183 = vpack.c.bf16 %v9980, %v9979
        %v10184 = vpack.c.bf16 %v9982, %v9981
        %v10185 = vpack.c.bf16 %v9984, %v9983
        %v10186 = vpack.c.bf16 %v9986, %v9985
        %v10187 = vpack.c.bf16 %v9988, %v9987
        %v10188 = vpack.c.bf16 %v9990, %v9989
        %v10189 = vpack.c.bf16 %v9992, %v9991
        %v10190 = vpack.c.bf16 %v9994, %v9993
        %v10191 = vpack.c.bf16 %v9996, %v9995
        %v10192 = vpack.c.bf16 %v9998, %v9997
        %v10193 = vpack.c.bf16 %v10000, %v9999
        %v10194 = vpack.c.bf16 %v10002, %v10001
        %v10195 = vpack.c.bf16 %v10004, %v10003
        %v10196 = vpack.c.bf16 %v10006, %v10005
        %v10197 = vpack.c.bf16 %v10008, %v10007
        %v10198 = vpack.c.bf16 %v10010, %v10009
        %v10199 = vpack.c.bf16 %v10012, %v10011
        %v10200 = vpack.c.bf16 %v10014, %v10013
        %v10201 = vpack.c.bf16 %v10016, %v10015
        %v10202 = vpack.c.bf16 %v10018, %v10017
        %v10203 = vpack.c.bf16 %v10020, %v10019
        %v10204 = vpack.c.bf16 %v10022, %v10021
        %v10205 = vpack.c.bf16 %v10024, %v10023
        %v10206 = vpack.c.bf16 %v10026, %v10025
        %v10207 = vpack.c.bf16 %v10028, %v10027
        %v10208 = vpack.c.bf16 %v10030, %v10029
        %v10209 = vpack.c.bf16 %v10032, %v10031
        %v10210 = vpack.c.bf16 %v10034, %v10033
        %v10211 = vpack.c.bf16 %v10036, %v10035
        %v10212 = vpack.c.bf16 %v10038, %v10037
        %v10213 = vpack.c.bf16 %v10040, %v10039
        %v10214 = vpack.c.bf16 %v10042, %v10041
        %v10215 = vpack.c.bf16 %v10044, %v10043
        %v10216 = vpack.c.bf16 %v10046, %v10045
        %v10217 = vpack.c.bf16 %v10048, %v10047
        %v10218 = vpack.c.bf16 %v10050, %v10049
        %v10219 = vpack.c.bf16 %v10052, %v10051
        %v10220 = vpack.c.bf16 %v10054, %v10053
        %v10221 = vpack.c.bf16 %v10056, %v10055
        %v10222 = vpack.c.bf16 %v10058, %v10057
        %v10223 = vpack.c.bf16 %v10060, %v10059
        %v10224 = vpack.c.bf16 %v10062, %v10061
        %v10225 = vpack.c.bf16 %v10064, %v10063
        %v10226 = vpack.c.bf16 %v10066, %v10065
        %v10227 = vpack.c.bf16 %v10068, %v10067
        %v10228 = vpack.c.bf16 %v10070, %v10069
        %v10229 = vpack.c.bf16 %v10072, %v10071
        %v10230 = vpack.c.bf16 %v10074, %v10073
        %v10231 = vpack.c.bf16 %v10076, %v10075
        %v10232 = vpack.c.bf16 %v10078, %v10077
        %v10233 = vpack.c.bf16 %v10080, %v10079
        %v10234 = vpack.c.bf16 %v10082, %v10081
        %v10235 = vpack.c.bf16 %v10084, %v10083
        %v10236 = vpack.c.bf16 %v10086, %v10085
        %v10237 = vpack.c.bf16 %v10088, %v10087
        %v10238 = vpack.c.bf16 %v10090, %v10089
        %v10239 = vpack.c.bf16 %v10092, %v10091
        %v10240 = vpack.c.bf16 %v10094, %v10093
        %v10241 = vpack.c.bf16 %v10096, %v10095
        %v10242 = vpack.c.bf16 %v10098, %v10097
        %v10243 = vpack.c.bf16 %v10100, %v10099
        %v10244 = vpack.c.bf16 %v10102, %v10101
        %v10245 = vpack.c.bf16 %v10104, %v10103
        %v10246 = vpack.c.bf16 %v10106, %v10105
        %v10247 = vpack.c.bf16 %v10108, %v10107
        %v10248 = vpack.c.bf16 %v10110, %v10109
        %v10249 = vpack.c.bf16 %v10112, %v10111
        %v10250 = vpack.c.bf16 %v10114, %v10113
        %v10251 = vpack.c.bf16 %v10116, %v10115
        %v10252 = vpack.c.bf16 %v10118, %v10117
        %v10253 = vpack.c.bf16 %v10120, %v10119
        %v10254 = vpack.c.bf16 %v10122, %v10121
        %v10255 = vpack.c.bf16 %v10124, %v10123
        %v10256 = vpack.c.bf16 %v10126, %v10125
        %v10257 = vpack.c.bf16 %v10128, %v10127
        %v10258 = vpack.c.bf16 %v10130, %v10129
        %v10261 = vsel %vm3193, %v10131, 4286644096
        %v10264 = vsel %vm3193, %v10132, 4286644096
        %v10266 = vmax.bf16 %v10261, %v10264
        %v10268 = vsel %vm3193, %v10133, 4286644096
        %v10270 = vmax.bf16 %v10266, %v10268
        %v10272 = vsel %vm3193, %v10134, 4286644096
        %v10274 = vmax.bf16 %v10270, %v10272
        %v10276 = vsel %vm3193, %v10135, 4286644096
        %v10278 = vmax.bf16 %v10274, %v10276
        %v10280 = vsel %vm3193, %v10136, 4286644096
        %v10282 = vmax.bf16 %v10278, %v10280
        %v10284 = vsel %vm3193, %v10137, 4286644096
        %v10286 = vmax.bf16 %v10282, %v10284
        %v10288 = vsel %vm3193, %v10138, 4286644096
        %v10290 = vmax.bf16 %v10286, %v10288
        %v10292 = vsel %vm3193, %v10139, 4286644096
        %v10294 = vmax.bf16 %v10290, %v10292
        %v10296 = vsel %vm3193, %v10140, 4286644096
        %v10298 = vmax.bf16 %v10294, %v10296
        %v10300 = vsel %vm3193, %v10141, 4286644096
        %v10302 = vmax.bf16 %v10298, %v10300
        %v10304 = vsel %vm3193, %v10142, 4286644096
        %v10306 = vmax.bf16 %v10302, %v10304
        %v10308 = vsel %vm3193, %v10143, 4286644096
        %v10310 = vmax.bf16 %v10306, %v10308
        %v10312 = vsel %vm3193, %v10144, 4286644096
        %v10314 = vmax.bf16 %v10310, %v10312
        %v10316 = vsel %vm3193, %v10145, 4286644096
        %v10318 = vmax.bf16 %v10314, %v10316
        %v10320 = vsel %vm3193, %v10146, 4286644096
        %v10322 = vmax.bf16 %v10318, %v10320
        %v10323 = vunpack.i.l.bf16 %v10322
        %v10324 = vunpack.i.h.bf16 %v10322
        %v10325 = vmax.f32 %v10323, %v10324
        %v10326 = vrot.slane %v10325, 4
        %v10327 = vmax.f32 %v10325, %v10326
        %v10328 = vrot.slane %v10327, 2
        %v10329 = vmax.f32 %v10327, %v10328
        %v10330 = vrot.slane %v10329, 1
        %v10331 = vmax.f32 %v10329, %v10330
        %v10332 = vpack.i.bf16 %v10331, %v10331
        %v10334 = vsel %vm3193, %v10147, 4286644096
        %v10337 = vsel %vm3193, %v10148, 4286644096
        %v10339 = vmax.bf16 %v10334, %v10337
        %v10341 = vsel %vm3193, %v10149, 4286644096
        %v10343 = vmax.bf16 %v10339, %v10341
        %v10345 = vsel %vm3193, %v10150, 4286644096
        %v10347 = vmax.bf16 %v10343, %v10345
        %v10349 = vsel %vm3193, %v10151, 4286644096
        %v10351 = vmax.bf16 %v10347, %v10349
        %v10353 = vsel %vm3193, %v10152, 4286644096
        %v10355 = vmax.bf16 %v10351, %v10353
        %v10357 = vsel %vm3193, %v10153, 4286644096
        %v10359 = vmax.bf16 %v10355, %v10357
        %v10361 = vsel %vm3193, %v10154, 4286644096
        %v10363 = vmax.bf16 %v10359, %v10361
        %v10365 = vsel %vm3193, %v10155, 4286644096
        %v10367 = vmax.bf16 %v10363, %v10365
        %v10369 = vsel %vm3193, %v10156, 4286644096
        %v10371 = vmax.bf16 %v10367, %v10369
        %v10373 = vsel %vm3193, %v10157, 4286644096
        %v10375 = vmax.bf16 %v10371, %v10373
        %v10377 = vsel %vm3193, %v10158, 4286644096
        %v10379 = vmax.bf16 %v10375, %v10377
        %v10381 = vsel %vm3193, %v10159, 4286644096
        %v10383 = vmax.bf16 %v10379, %v10381
        %v10385 = vsel %vm3193, %v10160, 4286644096
        %v10387 = vmax.bf16 %v10383, %v10385
        %v10389 = vsel %vm3193, %v10161, 4286644096
        %v10391 = vmax.bf16 %v10387, %v10389
        %v10393 = vsel %vm3193, %v10162, 4286644096
        %v10395 = vmax.bf16 %v10391, %v10393
        %v10396 = vunpack.i.l.bf16 %v10395
        %v10397 = vunpack.i.h.bf16 %v10395
        %v10398 = vmax.f32 %v10396, %v10397
        %v10399 = vrot.slane %v10398, 4
        %v10400 = vmax.f32 %v10398, %v10399
        %v10401 = vrot.slane %v10400, 2
        %v10402 = vmax.f32 %v10400, %v10401
        %v10403 = vrot.slane %v10402, 1
        %v10404 = vmax.f32 %v10402, %v10403
        %v10405 = vpack.i.bf16 %v10404, %v10404
        %v10407 = vsel %vm3193, %v10163, 4286644096
        %v10410 = vsel %vm3193, %v10164, 4286644096
        %v10412 = vmax.bf16 %v10407, %v10410
        %v10414 = vsel %vm3193, %v10165, 4286644096
        %v10416 = vmax.bf16 %v10412, %v10414
        %v10418 = vsel %vm3193, %v10166, 4286644096
        %v10420 = vmax.bf16 %v10416, %v10418
        %v10422 = vsel %vm3193, %v10167, 4286644096
        %v10424 = vmax.bf16 %v10420, %v10422
        %v10426 = vsel %vm3193, %v10168, 4286644096
        %v10428 = vmax.bf16 %v10424, %v10426
        %v10430 = vsel %vm3193, %v10169, 4286644096
        %v10432 = vmax.bf16 %v10428, %v10430
        %v10434 = vsel %vm3193, %v10170, 4286644096
        %v10436 = vmax.bf16 %v10432, %v10434
        %v10438 = vsel %vm3193, %v10171, 4286644096
        %v10440 = vmax.bf16 %v10436, %v10438
        %v10442 = vsel %vm3193, %v10172, 4286644096
        %v10444 = vmax.bf16 %v10440, %v10442
        %v10446 = vsel %vm3193, %v10173, 4286644096
        %v10448 = vmax.bf16 %v10444, %v10446
        %v10450 = vsel %vm3193, %v10174, 4286644096
        %v10452 = vmax.bf16 %v10448, %v10450
        %v10454 = vsel %vm3193, %v10175, 4286644096
        %v10456 = vmax.bf16 %v10452, %v10454
        %v10458 = vsel %vm3193, %v10176, 4286644096
        %v10460 = vmax.bf16 %v10456, %v10458
        %v10462 = vsel %vm3193, %v10177, 4286644096
        %v10464 = vmax.bf16 %v10460, %v10462
        %v10466 = vsel %vm3193, %v10178, 4286644096
        %v10468 = vmax.bf16 %v10464, %v10466
        %v10469 = vunpack.i.l.bf16 %v10468
        %v10470 = vunpack.i.h.bf16 %v10468
        %v10471 = vmax.f32 %v10469, %v10470
        %v10472 = vrot.slane %v10471, 4
        %v10473 = vmax.f32 %v10471, %v10472
        %v10474 = vrot.slane %v10473, 2
        %v10475 = vmax.f32 %v10473, %v10474
        %v10476 = vrot.slane %v10475, 1
        %v10477 = vmax.f32 %v10475, %v10476
        %v10478 = vpack.i.bf16 %v10477, %v10477
        %v10480 = vsel %vm3193, %v10179, 4286644096
        %v10483 = vsel %vm3193, %v10180, 4286644096
        %v10485 = vmax.bf16 %v10480, %v10483
        %v10487 = vsel %vm3193, %v10181, 4286644096
        %v10489 = vmax.bf16 %v10485, %v10487
        %v10491 = vsel %vm3193, %v10182, 4286644096
        %v10493 = vmax.bf16 %v10489, %v10491
        %v10495 = vsel %vm3193, %v10183, 4286644096
        %v10497 = vmax.bf16 %v10493, %v10495
        %v10499 = vsel %vm3193, %v10184, 4286644096
        %v10501 = vmax.bf16 %v10497, %v10499
        %v10503 = vsel %vm3193, %v10185, 4286644096
        %v10505 = vmax.bf16 %v10501, %v10503
        %v10507 = vsel %vm3193, %v10186, 4286644096
        %v10509 = vmax.bf16 %v10505, %v10507
        %v10511 = vsel %vm3193, %v10187, 4286644096
        %v10513 = vmax.bf16 %v10509, %v10511
        %v10515 = vsel %vm3193, %v10188, 4286644096
        %v10517 = vmax.bf16 %v10513, %v10515
        %v10519 = vsel %vm3193, %v10189, 4286644096
        %v10521 = vmax.bf16 %v10517, %v10519
        %v10523 = vsel %vm3193, %v10190, 4286644096
        %v10525 = vmax.bf16 %v10521, %v10523
        %v10527 = vsel %vm3193, %v10191, 4286644096
        %v10529 = vmax.bf16 %v10525, %v10527
        %v10531 = vsel %vm3193, %v10192, 4286644096
        %v10533 = vmax.bf16 %v10529, %v10531
        %v10535 = vsel %vm3193, %v10193, 4286644096
        %v10537 = vmax.bf16 %v10533, %v10535
        %v10539 = vsel %vm3193, %v10194, 4286644096
        %v10541 = vmax.bf16 %v10537, %v10539
        %v10542 = vunpack.i.l.bf16 %v10541
        %v10543 = vunpack.i.h.bf16 %v10541
        %v10544 = vmax.f32 %v10542, %v10543
        %v10545 = vrot.slane %v10544, 4
        %v10546 = vmax.f32 %v10544, %v10545
        %v10547 = vrot.slane %v10546, 2
        %v10548 = vmax.f32 %v10546, %v10547
        %v10549 = vrot.slane %v10548, 1
        %v10550 = vmax.f32 %v10548, %v10549
        %v10551 = vpack.i.bf16 %v10550, %v10550
        %v10553 = vsel %vm3193, %v10195, 4286644096
        %v10556 = vsel %vm3193, %v10196, 4286644096
        %v10558 = vmax.bf16 %v10553, %v10556
        %v10560 = vsel %vm3193, %v10197, 4286644096
        %v10562 = vmax.bf16 %v10558, %v10560
        %v10564 = vsel %vm3193, %v10198, 4286644096
        %v10566 = vmax.bf16 %v10562, %v10564
        %v10568 = vsel %vm3193, %v10199, 4286644096
        %v10570 = vmax.bf16 %v10566, %v10568
        %v10572 = vsel %vm3193, %v10200, 4286644096
        %v10574 = vmax.bf16 %v10570, %v10572
        %v10576 = vsel %vm3193, %v10201, 4286644096
        %v10578 = vmax.bf16 %v10574, %v10576
        %v10580 = vsel %vm3193, %v10202, 4286644096
        %v10582 = vmax.bf16 %v10578, %v10580
        %v10584 = vsel %vm3193, %v10203, 4286644096
        %v10586 = vmax.bf16 %v10582, %v10584
        %v10588 = vsel %vm3193, %v10204, 4286644096
        %v10590 = vmax.bf16 %v10586, %v10588
        %v10592 = vsel %vm3193, %v10205, 4286644096
        %v10594 = vmax.bf16 %v10590, %v10592
        %v10596 = vsel %vm3193, %v10206, 4286644096
        %v10598 = vmax.bf16 %v10594, %v10596
        %v10600 = vsel %vm3193, %v10207, 4286644096
        %v10602 = vmax.bf16 %v10598, %v10600
        %v10604 = vsel %vm3193, %v10208, 4286644096
        %v10606 = vmax.bf16 %v10602, %v10604
        %v10608 = vsel %vm3193, %v10209, 4286644096
        %v10610 = vmax.bf16 %v10606, %v10608
        %v10612 = vsel %vm3193, %v10210, 4286644096
        %v10614 = vmax.bf16 %v10610, %v10612
        %v10615 = vunpack.i.l.bf16 %v10614
        %v10616 = vunpack.i.h.bf16 %v10614
        %v10617 = vmax.f32 %v10615, %v10616
        %v10618 = vrot.slane %v10617, 4
        %v10619 = vmax.f32 %v10617, %v10618
        %v10620 = vrot.slane %v10619, 2
        %v10621 = vmax.f32 %v10619, %v10620
        %v10622 = vrot.slane %v10621, 1
        %v10623 = vmax.f32 %v10621, %v10622
        %v10624 = vpack.i.bf16 %v10623, %v10623
        %v10626 = vsel %vm3193, %v10211, 4286644096
        %v10629 = vsel %vm3193, %v10212, 4286644096
        %v10631 = vmax.bf16 %v10626, %v10629
        %v10633 = vsel %vm3193, %v10213, 4286644096
        %v10635 = vmax.bf16 %v10631, %v10633
        %v10637 = vsel %vm3193, %v10214, 4286644096
        %v10639 = vmax.bf16 %v10635, %v10637
        %v10641 = vsel %vm3193, %v10215, 4286644096
        %v10643 = vmax.bf16 %v10639, %v10641
        %v10645 = vsel %vm3193, %v10216, 4286644096
        %v10647 = vmax.bf16 %v10643, %v10645
        %v10649 = vsel %vm3193, %v10217, 4286644096
        %v10651 = vmax.bf16 %v10647, %v10649
        %v10653 = vsel %vm3193, %v10218, 4286644096
        %v10655 = vmax.bf16 %v10651, %v10653
        %v10657 = vsel %vm3193, %v10219, 4286644096
        %v10659 = vmax.bf16 %v10655, %v10657
        %v10661 = vsel %vm3193, %v10220, 4286644096
        %v10663 = vmax.bf16 %v10659, %v10661
        %v10665 = vsel %vm3193, %v10221, 4286644096
        %v10667 = vmax.bf16 %v10663, %v10665
        %v10669 = vsel %vm3193, %v10222, 4286644096
        %v10671 = vmax.bf16 %v10667, %v10669
        %v10673 = vsel %vm3193, %v10223, 4286644096
        %v10675 = vmax.bf16 %v10671, %v10673
        %v10677 = vsel %vm3193, %v10224, 4286644096
        %v10679 = vmax.bf16 %v10675, %v10677
        %v10681 = vsel %vm3193, %v10225, 4286644096
        %v10683 = vmax.bf16 %v10679, %v10681
        %v10685 = vsel %vm3193, %v10226, 4286644096
        %v10687 = vmax.bf16 %v10683, %v10685
        %v10688 = vunpack.i.l.bf16 %v10687
        %v10689 = vunpack.i.h.bf16 %v10687
        %v10690 = vmax.f32 %v10688, %v10689
        %v10691 = vrot.slane %v10690, 4
        %v10692 = vmax.f32 %v10690, %v10691
        %v10693 = vrot.slane %v10692, 2
        %v10694 = vmax.f32 %v10692, %v10693
        %v10695 = vrot.slane %v10694, 1
        %v10696 = vmax.f32 %v10694, %v10695
        %v10697 = vpack.i.bf16 %v10696, %v10696
        %v10699 = vsel %vm3193, %v10227, 4286644096
        %v10702 = vsel %vm3193, %v10228, 4286644096
        %v10704 = vmax.bf16 %v10699, %v10702
        %v10706 = vsel %vm3193, %v10229, 4286644096
        %v10708 = vmax.bf16 %v10704, %v10706
        %v10710 = vsel %vm3193, %v10230, 4286644096
        %v10712 = vmax.bf16 %v10708, %v10710
        %v10714 = vsel %vm3193, %v10231, 4286644096
        %v10716 = vmax.bf16 %v10712, %v10714
        %v10718 = vsel %vm3193, %v10232, 4286644096
        %v10720 = vmax.bf16 %v10716, %v10718
        %v10722 = vsel %vm3193, %v10233, 4286644096
        %v10724 = vmax.bf16 %v10720, %v10722
        %v10726 = vsel %vm3193, %v10234, 4286644096
        %v10728 = vmax.bf16 %v10724, %v10726
        %v10730 = vsel %vm3193, %v10235, 4286644096
        %v10732 = vmax.bf16 %v10728, %v10730
        %v10734 = vsel %vm3193, %v10236, 4286644096
        %v10736 = vmax.bf16 %v10732, %v10734
        %v10738 = vsel %vm3193, %v10237, 4286644096
        %v10740 = vmax.bf16 %v10736, %v10738
        %v10742 = vsel %vm3193, %v10238, 4286644096
        %v10744 = vmax.bf16 %v10740, %v10742
        %v10746 = vsel %vm3193, %v10239, 4286644096
        %v10748 = vmax.bf16 %v10744, %v10746
        %v10750 = vsel %vm3193, %v10240, 4286644096
        %v10752 = vmax.bf16 %v10748, %v10750
        %v10754 = vsel %vm3193, %v10241, 4286644096
        %v10756 = vmax.bf16 %v10752, %v10754
        %v10758 = vsel %vm3193, %v10242, 4286644096
        %v10760 = vmax.bf16 %v10756, %v10758
        %v10761 = vunpack.i.l.bf16 %v10760
        %v10762 = vunpack.i.h.bf16 %v10760
        %v10763 = vmax.f32 %v10761, %v10762
        %v10764 = vrot.slane %v10763, 4
        %v10765 = vmax.f32 %v10763, %v10764
        %v10766 = vrot.slane %v10765, 2
        %v10767 = vmax.f32 %v10765, %v10766
        %v10768 = vrot.slane %v10767, 1
        %v10769 = vmax.f32 %v10767, %v10768
        %v10770 = vpack.i.bf16 %v10769, %v10769
        %v10772 = vsel %vm3193, %v10243, 4286644096
        %v10775 = vsel %vm3193, %v10244, 4286644096
        %v10777 = vmax.bf16 %v10772, %v10775
        %v10779 = vsel %vm3193, %v10245, 4286644096
        %v10781 = vmax.bf16 %v10777, %v10779
        %v10783 = vsel %vm3193, %v10246, 4286644096
        %v10785 = vmax.bf16 %v10781, %v10783
        %v10787 = vsel %vm3193, %v10247, 4286644096
        %v10789 = vmax.bf16 %v10785, %v10787
        %v10791 = vsel %vm3193, %v10248, 4286644096
        %v10793 = vmax.bf16 %v10789, %v10791
        %v10795 = vsel %vm3193, %v10249, 4286644096
        %v10797 = vmax.bf16 %v10793, %v10795
        %v10799 = vsel %vm3193, %v10250, 4286644096
        %v10801 = vmax.bf16 %v10797, %v10799
        %v10803 = vsel %vm3193, %v10251, 4286644096
        %v10805 = vmax.bf16 %v10801, %v10803
        %v10807 = vsel %vm3193, %v10252, 4286644096
        %v10809 = vmax.bf16 %v10805, %v10807
        %v10811 = vsel %vm3193, %v10253, 4286644096
        %v10813 = vmax.bf16 %v10809, %v10811
        %v10815 = vsel %vm3193, %v10254, 4286644096
        %v10817 = vmax.bf16 %v10813, %v10815
        %v10819 = vsel %vm3193, %v10255, 4286644096
        %v10821 = vmax.bf16 %v10817, %v10819
        %v10823 = vsel %vm3193, %v10256, 4286644096
        %v10825 = vmax.bf16 %v10821, %v10823
        %v10827 = vsel %vm3193, %v10257, 4286644096
        %v10829 = vmax.bf16 %v10825, %v10827
        %v10831 = vsel %vm3193, %v10258, 4286644096
        %v10833 = vmax.bf16 %v10829, %v10831
        %v10834 = vunpack.i.l.bf16 %v10833
        %v10835 = vunpack.i.h.bf16 %v10833
        %v10836 = vmax.f32 %v10834, %v10835
        %v10837 = vrot.slane %v10836, 4
        %v10838 = vmax.f32 %v10836, %v10837
        %v10839 = vrot.slane %v10838, 2
        %v10840 = vmax.f32 %v10838, %v10839
        %v10841 = vrot.slane %v10840, 1
        %v10842 = vmax.f32 %v10840, %v10841
        %v10843 = vpack.i.bf16 %v10842, %v10842
        %p10844 = scmp.eq.s32.totalorder %s30, 0
        // Predicated region
        $region65: #{tpu_custom_call.1} parent=63 // pred_check
          %p10845 = pneg %p10844
        $region66: #{tpu_custom_call.1} parent=63 // pred_check_branch
          %10847 = sbr.rel (%p10845) target = $region68
        $region67: #{tpu_custom_call.1} parent=63 // pred_region
          %10848 = vst.msk [vmem:[%s405] sm:$0xff] %vm3193, -inf
        $region68: #{tpu_custom_call.1} parent=63 // pred_fallthru
          _
        %v10849 = vld [vmem:[%s405] sm:$0xff]
        %v10850 = vunpack.c.l.bf16 %v10332
        %v10851 = vunpack.c.l.bf16 %v10405
        %v10852 = vunpack.c.l.bf16 %v10478
        %v10853 = vunpack.c.l.bf16 %v10551
        %v10854 = vunpack.c.l.bf16 %v10624
        %v10855 = vunpack.c.l.bf16 %v10697
        %v10856 = vunpack.c.l.bf16 %v10770
        %v10857 = vunpack.c.l.bf16 %v10843
        %vm10866 = vcmask 1041409
        %v10867 = vsel %vm10866, %v10851, %v10850
        %vm10868 = vcmask 1042434
        %v10869 = vsel %vm10868, %v10852, %v10867
        %vm10870 = vcmask 1043459
        %v10871 = vsel %vm10870, %v10853, %v10869
        %vm10872 = vcmask 1044484
        %v10873 = vsel %vm10872, %v10854, %v10871
        %vm10874 = vcmask 1045509
        %v10875 = vsel %vm10874, %v10855, %v10873
        %vm10876 = vcmask 1046534
        %v10877 = vsel %vm10876, %v10856, %v10875
        %vm10878 = vcmask 1047559
        %v10879 = vsel %vm10878, %v10857, %v10877
        %v10881 = vmax.f32 %v10849, %v10879
        %10882 = vst.msk [vmem:[%s405] sm:$0xff] %vm3193, %v10881
        %s10883 = sand.u32 %s283, 1
        %s10884 = scalar_lea.sflag [#allocation3], %s10883
        %s10885 = sand.u32 %s283, 1
        %s10886 = smul.addr %s10885, 8
        %s10887 = scalar_lea.vmem [#allocation2], %s10886
        // Predicated region
        $region69: #{tpu_custom_call.1} parent=63 // pred_check
          %p10888 = pneg %p293
        $region70: #{tpu_custom_call.1} parent=63 // pred_check_branch
          %10890 = sbr.rel (%p10888) target = $region72
        $region71: #{tpu_custom_call.1} parent=63 // pred_region
          %s10892 = ssub.s32 128, 128
          %10893 = vsyncadd %s10884, %s10892
          %s10894 = smul.addr %s29, 128
          %s10895 = scalar_lea.hbm %s11, %s10894
          %s10897 = sshll.u32 %s10887, 4
          %s10898 = int_to_ptr.vmem [resolvable:$true] %s10897
          %10900 = dma.vmem_to_hbm [thread:$0]  %s10898, 128, %s10895, %s10884
        $region72: #{tpu_custom_call.1} parent=63 // pred_fallthru
          _
      $region64: #{tpu_custom_call.1} parent=5 // pred_fallthru
        _
      %p10901 = scmp.le.s32.totalorder 2, %s20
      // Predicated region
      $region73: #{tpu_custom_call.1} parent=5 // pred_check
        %p10902 = pneg %p10901
      $region74: #{tpu_custom_call.1} parent=5 // pred_check_branch
        %10904 = sbr.rel (%p10902) target = $region76
      $region75: #{tpu_custom_call.1} parent=5 // pred_region
        %s10905 = ssub.s32 %s20, 2
        // Predicated region
        $region77: #{tpu_custom_call.1} parent=75 // pred_check
          %p10906 = pneg %p299
        $region78: #{tpu_custom_call.1} parent=75 // pred_check_branch
          %10908 = sbr.rel (%p10906) target = $region80
        $region79: #{tpu_custom_call.1} parent=75 // pred_region
          %s10909 = sand.u32 %s284, 1
          %s10910 = scalar_lea.sflag [#allocation3], %s10909
          %s10911 = sand.u32 %s284, 1
          %s10912 = smul.addr %s10911, 8
          %s10913 = scalar_lea.vmem [#allocation2], %s10912
          %10914 = dma.done %s10910, 128
        $region80: #{tpu_custom_call.1} parent=75 // pred_fallthru
          _
      $region76: #{tpu_custom_call.1} parent=5 // pred_fallthru
        _
    $region6: #{tpu_custom_call.1} parent=1 // loop_footer
      %s24 = sadd.s32 1, %s20
    $region7: #{tpu_custom_call.1} parent=1 // loop_footer_branch
      %19 = sbr.rel target = $region3
    $region8: #{tpu_custom_call.1} parent=1 // loop_exit
      _
    %10915 = vsyncpa [#allocation3], 1
    %s10916 = scalar_lea.sflag [#allocation3], 1
    %10917 = vsyncpa %s10916, 1

</llo_original>
